<compile_context>
chip_gen: v5e
topology: v5e:2x2
jax: 0.10.0
libtpu: 0.0.40
codegen_flags: <defaults>
</compile_context>

<pallas_src>
import functools

import jax
import jax.numpy as jnp
from jax.experimental import pallas as pl
from jax.experimental.pallas import tpu as pltpu


# ---------------------------------------------------------------------------
# Kernel 1/2: fused valid conv (5x5) + bias + ReLU, one batch sample per step
# ---------------------------------------------------------------------------
def _conv_relu_kernel(w_ref, b_ref, x_ref, o_ref, *, kh, kw, row_stride, out_len):
    """w_ref: [KH*KW, OC, C] bf16 (VMEM-resident), b_ref: [OC, 1] f32,
    x_ref: [1, C, HWpad] bf16 (flattened image), o_ref: [1, OC, out_len] bf16
    with output lane m = oh*row_stride + ow (strided/channel-major layout)."""
    oc = o_ref.shape[1]
    acc = jnp.zeros((oc, out_len), jnp.float32)
    for i in range(kh):
        for j in range(kw):
            off = i * row_stride + j
            patch = x_ref[0, :, off:off + out_len]          # [C, out_len] bf16
            w_ij = w_ref[i * kw + j]                        # [OC, C]      bf16
            acc += jnp.dot(w_ij, patch, preferred_element_type=jnp.float32)
    acc += b_ref[...]                                       # [OC,1] broadcast
    o_ref[0] = jnp.maximum(acc, 0.0).astype(o_ref.dtype)


def conv2d_relu(x_nchw, weight, bias):
    """Valid conv + bias + ReLU.  x: [B,C,H,W], weight: [OC,C,KH,KW], bias: [OC].
    Returns [B, OC, OH, OW] in bfloat16 (channel-major, ready for pooling)."""
    B, C, H, W = x_nchw.shape
    OC, _, KH, KW = weight.shape
    OH, OW = H - KH + 1, W - KW + 1
    out_len = OH * W                                   # strided output lanes
    max_off = (KH - 1) * W + (KW - 1)
    hw_pad = pl.cdiv(max_off + out_len, 128) * 128     # lane-align flat image

    x_flat = x_nchw.astype(jnp.bfloat16).reshape(B, C, H * W)
    x_flat = jnp.pad(x_flat, ((0, 0), (0, 0), (0, hw_pad - H * W)))

    w_stack = (weight.transpose(2, 3, 0, 1)            # [KH,KW,OC,C]
               .reshape(KH * KW, OC, C).astype(jnp.bfloat16))
    b2d = bias.astype(jnp.float32).reshape(OC, 1)

    kernel = functools.partial(_conv_relu_kernel, kh=KH, kw=KW,
                               row_stride=W, out_len=out_len)
    out = pl.pallas_call(
        kernel,
        out_shape=jax.ShapeDtypeStruct((B, OC, out_len), jnp.bfloat16),
        grid=(B,),
        in_specs=[
            pl.BlockSpec((KH * KW, OC, C), lambda b: (0, 0, 0)),   # resident
            pl.BlockSpec((OC, 1), lambda b: (0, 0)),               # resident
            pl.BlockSpec((1, C, hw_pad), lambda b: (b, 0, 0)),
        ],
        out_specs=pl.BlockSpec((1, OC, out_len), lambda b: (b, 0, 0)),
        compiler_params=pltpu.CompilerParams(dimension_semantics=("parallel",)),
    )(w_stack, b2d, x_flat)

    # Un-stride: lane m = oh*W + ow  ->  [B, OC, OH, OW]  (cheap XLA glue).
    return out.reshape(B, OC, OH, W)[:, :, :, :OW]


def maxpool2x2(x):
    """MaxPool2d(2, 2) on NCHW — plain XLA glue (fuses into neighbors)."""
    B, C, H, W = x.shape
    return jnp.max(x.reshape(B, C, H // 2, 2, W // 2, 2), axis=(3, 5))


# ---------------------------------------------------------------------------
# Kernel 3: fused fc1 -> ReLU -> fc2 -> ReLU -> fc3
# ---------------------------------------------------------------------------
def _mlp_kernel(x_ref, w1_ref, b1_ref, w2_ref, b2_ref, w3_ref, b3_ref, o_ref):
    h0 = x_ref[...]                                                     # bf16
    h1 = jnp.dot(h0, w1_ref[...], preferred_element_type=jnp.float32) + b1_ref[...]
    h1 = jnp.maximum(h1, 0.0).astype(jnp.bfloat16)
    h2 = jnp.dot(h1, w2_ref[...], preferred_element_type=jnp.float32) + b2_ref[...]
    h2 = jnp.maximum(h2, 0.0).astype(jnp.bfloat16)
    h3 = jnp.dot(h2, w3_ref[...], preferred_element_type=jnp.float32) + b3_ref[...]
    o_ref[...] = h3.astype(o_ref.dtype)


def mlp3(x, w1, b1, w2, b2, w3, b3, *, block_b=128):
    B, K = x.shape
    N1, N2, N3 = w1.shape[0], w2.shape[0], w3.shape[0]
    tb = min(block_b, B)
    return pl.pallas_call(
        _mlp_kernel,
        out_shape=jax.ShapeDtypeStruct((B, N3), jnp.float32),
        grid=(pl.cdiv(B, tb),),
        in_specs=[
            pl.BlockSpec((tb, K), lambda i: (i, 0)),
            pl.BlockSpec((K, N1), lambda i: (0, 0)),
            pl.BlockSpec((1, N1), lambda i: (0, 0)),
            pl.BlockSpec((N1, N2), lambda i: (0, 0)),
            pl.BlockSpec((1, N2), lambda i: (0, 0)),
            pl.BlockSpec((N2, N3), lambda i: (0, 0)),
            pl.BlockSpec((1, N3), lambda i: (0, 0)),
        ],
        out_specs=pl.BlockSpec((tb, N3), lambda i: (i, 0)),
        compiler_params=pltpu.CompilerParams(dimension_semantics=("parallel",)),
    )(x.astype(jnp.bfloat16),
      w1.T.astype(jnp.bfloat16), b1.astype(jnp.float32).reshape(1, N1),
      w2.T.astype(jnp.bfloat16), b2.astype(jnp.float32).reshape(1, N2),
      w3.T.astype(jnp.bfloat16), b3.astype(jnp.float32).reshape(1, N3))


# ---------------------------------------------------------------------------
# Net forward (semantics of the PyTorch module)
# ---------------------------------------------------------------------------
def net_forward(x, params):
    y = conv2d_relu(x, params["w1"], params["b1"])     # [B, 6, 28, 28] bf16
    y = maxpool2x2(y)                                  # [B, 6, 14, 14]
    y = conv2d_relu(y, params["w2"], params["b2"])     # [B, 16, 10, 10]
    y = maxpool2x2(y)                                  # [B, 16, 5, 5]
    y = y.reshape(y.shape[0], -1)                      # [B, 400] (NCHW flatten)
    return mlp3(y, params["fw1"], params["fb1"],
                params["fw2"], params["fb2"],
                params["fw3"], params["fb3"])          # [B, 10] f32


# Pure-JAX f32 reference for a correctness sanity check.
def net_reference(x, params):
    dn = ("NCHW", "OIHW", "NCHW")
    y = jax.lax.conv_general_dilated(x, params["w1"], (1, 1), "VALID",
                                     dimension_numbers=dn)
    y = maxpool2x2(jax.nn.relu(y + params["b1"][None, :, None, None]))
    y = jax.lax.conv_general_dilated(y, params["w2"], (1, 1), "VALID",
                                     dimension_numbers=dn)
    y = maxpool2x2(jax.nn.relu(y + params["b2"][None, :, None, None]))
    y = y.reshape(y.shape[0], -1)
    y = jax.nn.relu(y @ params["fw1"].T + params["fb1"])
    y = jax.nn.relu(y @ params["fw2"].T + params["fb2"])
    return y @ params["fw3"].T + params["fb3"]


# ---------------------------------------------------------------------------
# Deterministic parameter init (PyTorch-like uniform(-1/sqrt(fan_in), +...))
# ---------------------------------------------------------------------------
def init_params(key):
    def uniform(k, shape, fan_in):
        bound = 1.0 / float(fan_in) ** 0.5
        return jax.random.uniform(k, shape, jnp.float32, -bound, bound)

    ks = jax.random.split(key, 10)
    return {
        "w1": uniform(ks[0], (6, 3, 5, 5), 3 * 5 * 5),
        "b1": uniform(ks[1], (6,), 3 * 5 * 5),
        "w2": uniform(ks[2], (16, 6, 5, 5), 6 * 5 * 5),
        "b2": uniform(ks[3], (16,), 6 * 5 * 5),
        "fw1": uniform(ks[4], (120, 400), 400),
        "fb1": uniform(ks[5], (120,), 400),
        "fw2": uniform(ks[6], (84, 120), 120),
        "fb2": uniform(ks[7], (84,), 120),
        "fw3": uniform(ks[8], (10, 84), 84),
        "fb3": uniform(ks[9], (10,), 84),
    }


if __name__ == "__main__":
    key = jax.random.PRNGKey(0)
    kx, kp = jax.random.split(key)
    # fc1 expects 16*5*5 features, which implies 32x32 spatial input.
    x = jax.random.normal(kx, (2, 3, 32, 32), jnp.float32)
    params = init_params(kp)

    out = jax.block_until_ready(jax.jit(net_forward)(x, params))
    assert out.shape == (2, 10), out.shape
    assert out.dtype == jnp.float32

    ref = jax.block_until_ready(jax.jit(net_reference)(x, params))
    err = float(jnp.max(jnp.abs(out - ref)))
    assert err < 5e-2, f"max abs error vs f32 reference: {err}"   # bf16 MXU tol
    print("KERNEL_OK")
</pallas_src>

<mosaic_0001>
module attributes {stable_mosaic.version = 11 : i64} {
  func.func @_conv_relu_kernel(%arg0: i32, %arg1: memref<25x6x3xbf16, #tpu.memory_space<vmem>>, %arg2: memref<6x1xf32, #tpu.memory_space<vmem>>, %arg3: memref<1x3x1152xbf16, #tpu.memory_space<vmem>>, %arg4: memref<1x6x896xbf16, #tpu.memory_space<vmem>>) attributes {dimension_semantics = [#tpu.dimension_semantics<parallel>], iteration_bounds = array<i64: 2>, scalar_prefetch = 0 : i64, scratch_operands = 0 : i64, tpu.core_type = #tpu.core_type<tc>, window_params = [{pipeline_mode = #tpu.pipeline_mode<synchronous>, transform_indices = @transform_0, window_bounds = array<i64: 25, 6, 3>}, {pipeline_mode = #tpu.pipeline_mode<synchronous>, transform_indices = @transform_1, window_bounds = array<i64: 6, 1>}, {transform_indices = @transform_2, window_bounds = array<i64: 1, 3, 1152>}, {transform_indices = @transform_3, window_bounds = array<i64: 1, 6, 896>}]} {
    %cst = arith.constant 0.000000e+00 : f32
    %0 = vector.broadcast %cst : f32 to vector<6x896xf32>
    %c0 = arith.constant 0 : index
    %c0_0 = arith.constant 0 : index
    %c0_1 = arith.constant 0 : index
    %1 = vector.load %arg3[%c0, %c0_0, %c0_1] : memref<1x3x1152xbf16, #tpu.memory_space<vmem>>, vector<1x3x896xbf16>
    %2 = vector.shape_cast %1 : vector<1x3x896xbf16> to vector<3x896xbf16>
    %c0_2 = arith.constant 0 : index
    %c0_3 = arith.constant 0 : index
    %c0_4 = arith.constant 0 : index
    %3 = vector.load %arg1[%c0_2, %c0_3, %c0_4] : memref<25x6x3xbf16, #tpu.memory_space<vmem>>, vector<1x6x3xbf16>
    %4 = vector.shape_cast %3 : vector<1x6x3xbf16> to vector<6x3xbf16>
    %cst_5 = arith.constant dense<0.000000e+00> : vector<6x896xf32>
    %5 = tpu.matmul %4, %2, %cst_5 {dimension_numbers = #tpu.dot_dimension_numbers<[1], [0], [0], [1], [0, 0, 1, 1], [], []>} : vector<6x3xbf16>, vector<3x896xbf16>, vector<6x896xf32> -> vector<6x896xf32>
    %6 = arith.addf %0, %5 : vector<6x896xf32>
    %c0_6 = arith.constant 0 : index
    %c0_7 = arith.constant 0 : index
    %c1 = arith.constant 1 : index
    %7 = vector.load %arg3[%c0_6, %c0_7, %c1] : memref<1x3x1152xbf16, #tpu.memory_space<vmem>>, vector<1x3x896xbf16>
    %8 = vector.shape_cast %7 : vector<1x3x896xbf16> to vector<3x896xbf16>
    %c1_8 = arith.constant 1 : index
    %c0_9 = arith.constant 0 : index
    %c0_10 = arith.constant 0 : index
    %9 = vector.load %arg1[%c1_8, %c0_9, %c0_10] : memref<25x6x3xbf16, #tpu.memory_space<vmem>>, vector<1x6x3xbf16>
    %10 = vector.shape_cast %9 : vector<1x6x3xbf16> to vector<6x3xbf16>
    %cst_11 = arith.constant dense<0.000000e+00> : vector<6x896xf32>
    %11 = tpu.matmul %10, %8, %cst_11 {dimension_numbers = #tpu.dot_dimension_numbers<[1], [0], [0], [1], [0, 0, 1, 1], [], []>} : vector<6x3xbf16>, vector<3x896xbf16>, vector<6x896xf32> -> vector<6x896xf32>
    %12 = arith.addf %6, %11 : vector<6x896xf32>
    %c0_12 = arith.constant 0 : index
    %c0_13 = arith.constant 0 : index
    %c2 = arith.constant 2 : index
    %13 = vector.load %arg3[%c0_12, %c0_13, %c2] : memref<1x3x1152xbf16, #tpu.memory_space<vmem>>, vector<1x3x896xbf16>
    %14 = vector.shape_cast %13 : vector<1x3x896xbf16> to vector<3x896xbf16>
    %c2_14 = arith.constant 2 : index
    %c0_15 = arith.constant 0 : index
    %c0_16 = arith.constant 0 : index
    %15 = vector.load %arg1[%c2_14, %c0_15, %c0_16] : memref<25x6x3xbf16, #tpu.memory_space<vmem>>, vector<1x6x3xbf16>
    %16 = vector.shape_cast %15 : vector<1x6x3xbf16> to vector<6x3xbf16>
    %cst_17 = arith.constant dense<0.000000e+00> : vector<6x896xf32>
    %17 = tpu.matmul %16, %14, %cst_17 {dimension_numbers = #tpu.dot_dimension_numbers<[1], [0], [0], [1], [0, 0, 1, 1], [], []>} : vector<6x3xbf16>, vector<3x896xbf16>, vector<6x896xf32> -> vector<6x896xf32>
    %18 = arith.addf %12, %17 : vector<6x896xf32>
    %c0_18 = arith.constant 0 : index
    %c0_19 = arith.constant 0 : index
    %c3 = arith.constant 3 : index
    %19 = vector.load %arg3[%c0_18, %c0_19, %c3] : memref<1x3x1152xbf16, #tpu.memory_space<vmem>>, vector<1x3x896xbf16>
    %20 = vector.shape_cast %19 : vector<1x3x896xbf16> to vector<3x896xbf16>
    %c3_20 = arith.constant 3 : index
    %c0_21 = arith.constant 0 : index
    %c0_22 = arith.constant 0 : index
    %21 = vector.load %arg1[%c3_20, %c0_21, %c0_22] : memref<25x6x3xbf16, #tpu.memory_space<vmem>>, vector<1x6x3xbf16>
    %22 = vector.shape_cast %21 : vector<1x6x3xbf16> to vector<6x3xbf16>
    %cst_23 = arith.constant dense<0.000000e+00> : vector<6x896xf32>
    %23 = tpu.matmul %22, %20, %cst_23 {dimension_numbers = #tpu.dot_dimension_numbers<[1], [0], [0], [1], [0, 0, 1, 1], [], []>} : vector<6x3xbf16>, vector<3x896xbf16>, vector<6x896xf32> -> vector<6x896xf32>
    %24 = arith.addf %18, %23 : vector<6x896xf32>
    %c0_24 = arith.constant 0 : index
    %c0_25 = arith.constant 0 : index
    %c4 = arith.constant 4 : index
    %25 = vector.load %arg3[%c0_24, %c0_25, %c4] : memref<1x3x1152xbf16, #tpu.memory_space<vmem>>, vector<1x3x896xbf16>
    %26 = vector.shape_cast %25 : vector<1x3x896xbf16> to vector<3x896xbf16>
    %c4_26 = arith.constant 4 : index
    %c0_27 = arith.constant 0 : index
    %c0_28 = arith.constant 0 : index
    %27 = vector.load %arg1[%c4_26, %c0_27, %c0_28] : memref<25x6x3xbf16, #tpu.memory_space<vmem>>, vector<1x6x3xbf16>
    %28 = vector.shape_cast %27 : vector<1x6x3xbf16> to vector<6x3xbf16>
    %cst_29 = arith.constant dense<0.000000e+00> : vector<6x896xf32>
    %29 = tpu.matmul %28, %26, %cst_29 {dimension_numbers = #tpu.dot_dimension_numbers<[1], [0], [0], [1], [0, 0, 1, 1], [], []>} : vector<6x3xbf16>, vector<3x896xbf16>, vector<6x896xf32> -> vector<6x896xf32>
    %30 = arith.addf %24, %29 : vector<6x896xf32>
    %c0_30 = arith.constant 0 : index
    %c0_31 = arith.constant 0 : index
    %c32 = arith.constant 32 : index
    %31 = vector.load %arg3[%c0_30, %c0_31, %c32] : memref<1x3x1152xbf16, #tpu.memory_space<vmem>>, vector<1x3x896xbf16>
    %32 = vector.shape_cast %31 : vector<1x3x896xbf16> to vector<3x896xbf16>
    %c5 = arith.constant 5 : index
    %c0_32 = arith.constant 0 : index
    %c0_33 = arith.constant 0 : index
    %33 = vector.load %arg1[%c5, %c0_32, %c0_33] : memref<25x6x3xbf16, #tpu.memory_space<vmem>>, vector<1x6x3xbf16>
    %34 = vector.shape_cast %33 : vector<1x6x3xbf16> to vector<6x3xbf16>
    %cst_34 = arith.constant dense<0.000000e+00> : vector<6x896xf32>
    %35 = tpu.matmul %34, %32, %cst_34 {dimension_numbers = #tpu.dot_dimension_numbers<[1], [0], [0], [1], [0, 0, 1, 1], [], []>} : vector<6x3xbf16>, vector<3x896xbf16>, vector<6x896xf32> -> vector<6x896xf32>
    %36 = arith.addf %30, %35 : vector<6x896xf32>
    %c0_35 = arith.constant 0 : index
    %c0_36 = arith.constant 0 : index
    %c33 = arith.constant 33 : index
    %37 = vector.load %arg3[%c0_35, %c0_36, %c33] : memref<1x3x1152xbf16, #tpu.memory_space<vmem>>, vector<1x3x896xbf16>
    %38 = vector.shape_cast %37 : vector<1x3x896xbf16> to vector<3x896xbf16>
    %c6 = arith.constant 6 : index
    %c0_37 = arith.constant 0 : index
    %c0_38 = arith.constant 0 : index
    %39 = vector.load %arg1[%c6, %c0_37, %c0_38] : memref<25x6x3xbf16, #tpu.memory_space<vmem>>, vector<1x6x3xbf16>
    %40 = vector.shape_cast %39 : vector<1x6x3xbf16> to vector<6x3xbf16>
    %cst_39 = arith.constant dense<0.000000e+00> : vector<6x896xf32>
    %41 = tpu.matmul %40, %38, %cst_39 {dimension_numbers = #tpu.dot_dimension_numbers<[1], [0], [0], [1], [0, 0, 1, 1], [], []>} : vector<6x3xbf16>, vector<3x896xbf16>, vector<6x896xf32> -> vector<6x896xf32>
    %42 = arith.addf %36, %41 : vector<6x896xf32>
    %c0_40 = arith.constant 0 : index
    %c0_41 = arith.constant 0 : index
    %c34 = arith.constant 34 : index
    %43 = vector.load %arg3[%c0_40, %c0_41, %c34] : memref<1x3x1152xbf16, #tpu.memory_space<vmem>>, vector<1x3x896xbf16>
    %44 = vector.shape_cast %43 : vector<1x3x896xbf16> to vector<3x896xbf16>
    %c7 = arith.constant 7 : index
    %c0_42 = arith.constant 0 : index
    %c0_43 = arith.constant 0 : index
    %45 = vector.load %arg1[%c7, %c0_42, %c0_43] : memref<25x6x3xbf16, #tpu.memory_space<vmem>>, vector<1x6x3xbf16>
    %46 = vector.shape_cast %45 : vector<1x6x3xbf16> to vector<6x3xbf16>
    %cst_44 = arith.constant dense<0.000000e+00> : vector<6x896xf32>
    %47 = tpu.matmul %46, %44, %cst_44 {dimension_numbers = #tpu.dot_dimension_numbers<[1], [0], [0], [1], [0, 0, 1, 1], [], []>} : vector<6x3xbf16>, vector<3x896xbf16>, vector<6x896xf32> -> vector<6x896xf32>
    %48 = arith.addf %42, %47 : vector<6x896xf32>
    %c0_45 = arith.constant 0 : index
    %c0_46 = arith.constant 0 : index
    %c35 = arith.constant 35 : index
    %49 = vector.load %arg3[%c0_45, %c0_46, %c35] : memref<1x3x1152xbf16, #tpu.memory_space<vmem>>, vector<1x3x896xbf16>
    %50 = vector.shape_cast %49 : vector<1x3x896xbf16> to vector<3x896xbf16>
    %c8 = arith.constant 8 : index
    %c0_47 = arith.constant 0 : index
    %c0_48 = arith.constant 0 : index
    %51 = vector.load %arg1[%c8, %c0_47, %c0_48] : memref<25x6x3xbf16, #tpu.memory_space<vmem>>, vector<1x6x3xbf16>
    %52 = vector.shape_cast %51 : vector<1x6x3xbf16> to vector<6x3xbf16>
    %cst_49 = arith.constant dense<0.000000e+00> : vector<6x896xf32>
    %53 = tpu.matmul %52, %50, %cst_49 {dimension_numbers = #tpu.dot_dimension_numbers<[1], [0], [0], [1], [0, 0, 1, 1], [], []>} : vector<6x3xbf16>, vector<3x896xbf16>, vector<6x896xf32> -> vector<6x896xf32>
    %54 = arith.addf %48, %53 : vector<6x896xf32>
    %c0_50 = arith.constant 0 : index
    %c0_51 = arith.constant 0 : index
    %c36 = arith.constant 36 : index
    %55 = vector.load %arg3[%c0_50, %c0_51, %c36] : memref<1x3x1152xbf16, #tpu.memory_space<vmem>>, vector<1x3x896xbf16>
    %56 = vector.shape_cast %55 : vector<1x3x896xbf16> to vector<3x896xbf16>
    %c9 = arith.constant 9 : index
    %c0_52 = arith.constant 0 : index
    %c0_53 = arith.constant 0 : index
    %57 = vector.load %arg1[%c9, %c0_52, %c0_53] : memref<25x6x3xbf16, #tpu.memory_space<vmem>>, vector<1x6x3xbf16>
    %58 = vector.shape_cast %57 : vector<1x6x3xbf16> to vector<6x3xbf16>
    %cst_54 = arith.constant dense<0.000000e+00> : vector<6x896xf32>
    %59 = tpu.matmul %58, %56, %cst_54 {dimension_numbers = #tpu.dot_dimension_numbers<[1], [0], [0], [1], [0, 0, 1, 1], [], []>} : vector<6x3xbf16>, vector<3x896xbf16>, vector<6x896xf32> -> vector<6x896xf32>
    %60 = arith.addf %54, %59 : vector<6x896xf32>
    %c0_55 = arith.constant 0 : index
    %c0_56 = arith.constant 0 : index
    %c64 = arith.constant 64 : index
    %61 = vector.load %arg3[%c0_55, %c0_56, %c64] : memref<1x3x1152xbf16, #tpu.memory_space<vmem>>, vector<1x3x896xbf16>
    %62 = vector.shape_cast %61 : vector<1x3x896xbf16> to vector<3x896xbf16>
    %c10 = arith.constant 10 : index
    %c0_57 = arith.constant 0 : index
    %c0_58 = arith.constant 0 : index
    %63 = vector.load %arg1[%c10, %c0_57, %c0_58] : memref<25x6x3xbf16, #tpu.memory_space<vmem>>, vector<1x6x3xbf16>
    %64 = vector.shape_cast %63 : vector<1x6x3xbf16> to vector<6x3xbf16>
    %cst_59 = arith.constant dense<0.000000e+00> : vector<6x896xf32>
    %65 = tpu.matmul %64, %62, %cst_59 {dimension_numbers = #tpu.dot_dimension_numbers<[1], [0], [0], [1], [0, 0, 1, 1], [], []>} : vector<6x3xbf16>, vector<3x896xbf16>, vector<6x896xf32> -> vector<6x896xf32>
    %66 = arith.addf %60, %65 : vector<6x896xf32>
    %c0_60 = arith.constant 0 : index
    %c0_61 = arith.constant 0 : index
    %c65 = arith.constant 65 : index
    %67 = vector.load %arg3[%c0_60, %c0_61, %c65] : memref<1x3x1152xbf16, #tpu.memory_space<vmem>>, vector<1x3x896xbf16>
    %68 = vector.shape_cast %67 : vector<1x3x896xbf16> to vector<3x896xbf16>
    %c11 = arith.constant 11 : index
    %c0_62 = arith.constant 0 : index
    %c0_63 = arith.constant 0 : index
    %69 = vector.load %arg1[%c11, %c0_62, %c0_63] : memref<25x6x3xbf16, #tpu.memory_space<vmem>>, vector<1x6x3xbf16>
    %70 = vector.shape_cast %69 : vector<1x6x3xbf16> to vector<6x3xbf16>
    %cst_64 = arith.constant dense<0.000000e+00> : vector<6x896xf32>
    %71 = tpu.matmul %70, %68, %cst_64 {dimension_numbers = #tpu.dot_dimension_numbers<[1], [0], [0], [1], [0, 0, 1, 1], [], []>} : vector<6x3xbf16>, vector<3x896xbf16>, vector<6x896xf32> -> vector<6x896xf32>
    %72 = arith.addf %66, %71 : vector<6x896xf32>
    %c0_65 = arith.constant 0 : index
    %c0_66 = arith.constant 0 : index
    %c66 = arith.constant 66 : index
    %73 = vector.load %arg3[%c0_65, %c0_66, %c66] : memref<1x3x1152xbf16, #tpu.memory_space<vmem>>, vector<1x3x896xbf16>
    %74 = vector.shape_cast %73 : vector<1x3x896xbf16> to vector<3x896xbf16>
    %c12 = arith.constant 12 : index
    %c0_67 = arith.constant 0 : index
    %c0_68 = arith.constant 0 : index
    %75 = vector.load %arg1[%c12, %c0_67, %c0_68] : memref<25x6x3xbf16, #tpu.memory_space<vmem>>, vector<1x6x3xbf16>
    %76 = vector.shape_cast %75 : vector<1x6x3xbf16> to vector<6x3xbf16>
    %cst_69 = arith.constant dense<0.000000e+00> : vector<6x896xf32>
    %77 = tpu.matmul %76, %74, %cst_69 {dimension_numbers = #tpu.dot_dimension_numbers<[1], [0], [0], [1], [0, 0, 1, 1], [], []>} : vector<6x3xbf16>, vector<3x896xbf16>, vector<6x896xf32> -> vector<6x896xf32>
    %78 = arith.addf %72, %77 : vector<6x896xf32>
    %c0_70 = arith.constant 0 : index
    %c0_71 = arith.constant 0 : index
    %c67 = arith.constant 67 : index
    %79 = vector.load %arg3[%c0_70, %c0_71, %c67] : memref<1x3x1152xbf16, #tpu.memory_space<vmem>>, vector<1x3x896xbf16>
    %80 = vector.shape_cast %79 : vector<1x3x896xbf16> to vector<3x896xbf16>
    %c13 = arith.constant 13 : index
    %c0_72 = arith.constant 0 : index
    %c0_73 = arith.constant 0 : index
    %81 = vector.load %arg1[%c13, %c0_72, %c0_73] : memref<25x6x3xbf16, #tpu.memory_space<vmem>>, vector<1x6x3xbf16>
    %82 = vector.shape_cast %81 : vector<1x6x3xbf16> to vector<6x3xbf16>
    %cst_74 = arith.constant dense<0.000000e+00> : vector<6x896xf32>
    %83 = tpu.matmul %82, %80, %cst_74 {dimension_numbers = #tpu.dot_dimension_numbers<[1], [0], [0], [1], [0, 0, 1, 1], [], []>} : vector<6x3xbf16>, vector<3x896xbf16>, vector<6x896xf32> -> vector<6x896xf32>
    %84 = arith.addf %78, %83 : vector<6x896xf32>
    %c0_75 = arith.constant 0 : index
    %c0_76 = arith.constant 0 : index
    %c68 = arith.constant 68 : index
    %85 = vector.load %arg3[%c0_75, %c0_76, %c68] : memref<1x3x1152xbf16, #tpu.memory_space<vmem>>, vector<1x3x896xbf16>
    %86 = vector.shape_cast %85 : vector<1x3x896xbf16> to vector<3x896xbf16>
    %c14 = arith.constant 14 : index
    %c0_77 = arith.constant 0 : index
    %c0_78 = arith.constant 0 : index
    %87 = vector.load %arg1[%c14, %c0_77, %c0_78] : memref<25x6x3xbf16, #tpu.memory_space<vmem>>, vector<1x6x3xbf16>
    %88 = vector.shape_cast %87 : vector<1x6x3xbf16> to vector<6x3xbf16>
    %cst_79 = arith.constant dense<0.000000e+00> : vector<6x896xf32>
    %89 = tpu.matmul %88, %86, %cst_79 {dimension_numbers = #tpu.dot_dimension_numbers<[1], [0], [0], [1], [0, 0, 1, 1], [], []>} : vector<6x3xbf16>, vector<3x896xbf16>, vector<6x896xf32> -> vector<6x896xf32>
    %90 = arith.addf %84, %89 : vector<6x896xf32>
    %c0_80 = arith.constant 0 : index
    %c0_81 = arith.constant 0 : index
    %c96 = arith.constant 96 : index
    %91 = vector.load %arg3[%c0_80, %c0_81, %c96] : memref<1x3x1152xbf16, #tpu.memory_space<vmem>>, vector<1x3x896xbf16>
    %92 = vector.shape_cast %91 : vector<1x3x896xbf16> to vector<3x896xbf16>
    %c15 = arith.constant 15 : index
    %c0_82 = arith.constant 0 : index
    %c0_83 = arith.constant 0 : index
    %93 = vector.load %arg1[%c15, %c0_82, %c0_83] : memref<25x6x3xbf16, #tpu.memory_space<vmem>>, vector<1x6x3xbf16>
    %94 = vector.shape_cast %93 : vector<1x6x3xbf16> to vector<6x3xbf16>
    %cst_84 = arith.constant dense<0.000000e+00> : vector<6x896xf32>
    %95 = tpu.matmul %94, %92, %cst_84 {dimension_numbers = #tpu.dot_dimension_numbers<[1], [0], [0], [1], [0, 0, 1, 1], [], []>} : vector<6x3xbf16>, vector<3x896xbf16>, vector<6x896xf32> -> vector<6x896xf32>
    %96 = arith.addf %90, %95 : vector<6x896xf32>
    %c0_85 = arith.constant 0 : index
    %c0_86 = arith.constant 0 : index
    %c97 = arith.constant 97 : index
    %97 = vector.load %arg3[%c0_85, %c0_86, %c97] : memref<1x3x1152xbf16, #tpu.memory_space<vmem>>, vector<1x3x896xbf16>
    %98 = vector.shape_cast %97 : vector<1x3x896xbf16> to vector<3x896xbf16>
    %c16 = arith.constant 16 : index
    %c0_87 = arith.constant 0 : index
    %c0_88 = arith.constant 0 : index
    %99 = vector.load %arg1[%c16, %c0_87, %c0_88] : memref<25x6x3xbf16, #tpu.memory_space<vmem>>, vector<1x6x3xbf16>
    %100 = vector.shape_cast %99 : vector<1x6x3xbf16> to vector<6x3xbf16>
    %cst_89 = arith.constant dense<0.000000e+00> : vector<6x896xf32>
    %101 = tpu.matmul %100, %98, %cst_89 {dimension_numbers = #tpu.dot_dimension_numbers<[1], [0], [0], [1], [0, 0, 1, 1], [], []>} : vector<6x3xbf16>, vector<3x896xbf16>, vector<6x896xf32> -> vector<6x896xf32>
    %102 = arith.addf %96, %101 : vector<6x896xf32>
    %c0_90 = arith.constant 0 : index
    %c0_91 = arith.constant 0 : index
    %c98 = arith.constant 98 : index
    %103 = vector.load %arg3[%c0_90, %c0_91, %c98] : memref<1x3x1152xbf16, #tpu.memory_space<vmem>>, vector<1x3x896xbf16>
    %104 = vector.shape_cast %103 : vector<1x3x896xbf16> to vector<3x896xbf16>
    %c17 = arith.constant 17 : index
    %c0_92 = arith.constant 0 : index
    %c0_93 = arith.constant 0 : index
    %105 = vector.load %arg1[%c17, %c0_92, %c0_93] : memref<25x6x3xbf16, #tpu.memory_space<vmem>>, vector<1x6x3xbf16>
    %106 = vector.shape_cast %105 : vector<1x6x3xbf16> to vector<6x3xbf16>
    %cst_94 = arith.constant dense<0.000000e+00> : vector<6x896xf32>
    %107 = tpu.matmul %106, %104, %cst_94 {dimension_numbers = #tpu.dot_dimension_numbers<[1], [0], [0], [1], [0, 0, 1, 1], [], []>} : vector<6x3xbf16>, vector<3x896xbf16>, vector<6x896xf32> -> vector<6x896xf32>
    %108 = arith.addf %102, %107 : vector<6x896xf32>
    %c0_95 = arith.constant 0 : index
    %c0_96 = arith.constant 0 : index
    %c99 = arith.constant 99 : index
    %109 = vector.load %arg3[%c0_95, %c0_96, %c99] : memref<1x3x1152xbf16, #tpu.memory_space<vmem>>, vector<1x3x896xbf16>
    %110 = vector.shape_cast %109 : vector<1x3x896xbf16> to vector<3x896xbf16>
    %c18 = arith.constant 18 : index
    %c0_97 = arith.constant 0 : index
    %c0_98 = arith.constant 0 : index
    %111 = vector.load %arg1[%c18, %c0_97, %c0_98] : memref<25x6x3xbf16, #tpu.memory_space<vmem>>, vector<1x6x3xbf16>
    %112 = vector.shape_cast %111 : vector<1x6x3xbf16> to vector<6x3xbf16>
    %cst_99 = arith.constant dense<0.000000e+00> : vector<6x896xf32>
    %113 = tpu.matmul %112, %110, %cst_99 {dimension_numbers = #tpu.dot_dimension_numbers<[1], [0], [0], [1], [0, 0, 1, 1], [], []>} : vector<6x3xbf16>, vector<3x896xbf16>, vector<6x896xf32> -> vector<6x896xf32>
    %114 = arith.addf %108, %113 : vector<6x896xf32>
    %c0_100 = arith.constant 0 : index
    %c0_101 = arith.constant 0 : index
    %c100 = arith.constant 100 : index
    %115 = vector.load %arg3[%c0_100, %c0_101, %c100] : memref<1x3x1152xbf16, #tpu.memory_space<vmem>>, vector<1x3x896xbf16>
    %116 = vector.shape_cast %115 : vector<1x3x896xbf16> to vector<3x896xbf16>
    %c19 = arith.constant 19 : index
    %c0_102 = arith.constant 0 : index
    %c0_103 = arith.constant 0 : index
    %117 = vector.load %arg1[%c19, %c0_102, %c0_103] : memref<25x6x3xbf16, #tpu.memory_space<vmem>>, vector<1x6x3xbf16>
    %118 = vector.shape_cast %117 : vector<1x6x3xbf16> to vector<6x3xbf16>
    %cst_104 = arith.constant dense<0.000000e+00> : vector<6x896xf32>
    %119 = tpu.matmul %118, %116, %cst_104 {dimension_numbers = #tpu.dot_dimension_numbers<[1], [0], [0], [1], [0, 0, 1, 1], [], []>} : vector<6x3xbf16>, vector<3x896xbf16>, vector<6x896xf32> -> vector<6x896xf32>
    %120 = arith.addf %114, %119 : vector<6x896xf32>
    %c0_105 = arith.constant 0 : index
    %c0_106 = arith.constant 0 : index
    %c128 = arith.constant 128 : index
    %121 = vector.load %arg3[%c0_105, %c0_106, %c128] : memref<1x3x1152xbf16, #tpu.memory_space<vmem>>, vector<1x3x896xbf16>
    %122 = vector.shape_cast %121 : vector<1x3x896xbf16> to vector<3x896xbf16>
    %c20 = arith.constant 20 : index
    %c0_107 = arith.constant 0 : index
    %c0_108 = arith.constant 0 : index
    %123 = vector.load %arg1[%c20, %c0_107, %c0_108] : memref<25x6x3xbf16, #tpu.memory_space<vmem>>, vector<1x6x3xbf16>
    %124 = vector.shape_cast %123 : vector<1x6x3xbf16> to vector<6x3xbf16>
    %cst_109 = arith.constant dense<0.000000e+00> : vector<6x896xf32>
    %125 = tpu.matmul %124, %122, %cst_109 {dimension_numbers = #tpu.dot_dimension_numbers<[1], [0], [0], [1], [0, 0, 1, 1], [], []>} : vector<6x3xbf16>, vector<3x896xbf16>, vector<6x896xf32> -> vector<6x896xf32>
    %126 = arith.addf %120, %125 : vector<6x896xf32>
    %c0_110 = arith.constant 0 : index
    %c0_111 = arith.constant 0 : index
    %c129 = arith.constant 129 : index
    %127 = vector.load %arg3[%c0_110, %c0_111, %c129] : memref<1x3x1152xbf16, #tpu.memory_space<vmem>>, vector<1x3x896xbf16>
    %128 = vector.shape_cast %127 : vector<1x3x896xbf16> to vector<3x896xbf16>
    %c21 = arith.constant 21 : index
    %c0_112 = arith.constant 0 : index
    %c0_113 = arith.constant 0 : index
    %129 = vector.load %arg1[%c21, %c0_112, %c0_113] : memref<25x6x3xbf16, #tpu.memory_space<vmem>>, vector<1x6x3xbf16>
    %130 = vector.shape_cast %129 : vector<1x6x3xbf16> to vector<6x3xbf16>
    %cst_114 = arith.constant dense<0.000000e+00> : vector<6x896xf32>
    %131 = tpu.matmul %130, %128, %cst_114 {dimension_numbers = #tpu.dot_dimension_numbers<[1], [0], [0], [1], [0, 0, 1, 1], [], []>} : vector<6x3xbf16>, vector<3x896xbf16>, vector<6x896xf32> -> vector<6x896xf32>
    %132 = arith.addf %126, %131 : vector<6x896xf32>
    %c0_115 = arith.constant 0 : index
    %c0_116 = arith.constant 0 : index
    %c130 = arith.constant 130 : index
    %133 = vector.load %arg3[%c0_115, %c0_116, %c130] : memref<1x3x1152xbf16, #tpu.memory_space<vmem>>, vector<1x3x896xbf16>
    %134 = vector.shape_cast %133 : vector<1x3x896xbf16> to vector<3x896xbf16>
    %c22 = arith.constant 22 : index
    %c0_117 = arith.constant 0 : index
    %c0_118 = arith.constant 0 : index
    %135 = vector.load %arg1[%c22, %c0_117, %c0_118] : memref<25x6x3xbf16, #tpu.memory_space<vmem>>, vector<1x6x3xbf16>
    %136 = vector.shape_cast %135 : vector<1x6x3xbf16> to vector<6x3xbf16>
    %cst_119 = arith.constant dense<0.000000e+00> : vector<6x896xf32>
    %137 = tpu.matmul %136, %134, %cst_119 {dimension_numbers = #tpu.dot_dimension_numbers<[1], [0], [0], [1], [0, 0, 1, 1], [], []>} : vector<6x3xbf16>, vector<3x896xbf16>, vector<6x896xf32> -> vector<6x896xf32>
    %138 = arith.addf %132, %137 : vector<6x896xf32>
    %c0_120 = arith.constant 0 : index
    %c0_121 = arith.constant 0 : index
    %c131 = arith.constant 131 : index
    %139 = vector.load %arg3[%c0_120, %c0_121, %c131] : memref<1x3x1152xbf16, #tpu.memory_space<vmem>>, vector<1x3x896xbf16>
    %140 = vector.shape_cast %139 : vector<1x3x896xbf16> to vector<3x896xbf16>
    %c23 = arith.constant 23 : index
    %c0_122 = arith.constant 0 : index
    %c0_123 = arith.constant 0 : index
    %141 = vector.load %arg1[%c23, %c0_122, %c0_123] : memref<25x6x3xbf16, #tpu.memory_space<vmem>>, vector<1x6x3xbf16>
    %142 = vector.shape_cast %141 : vector<1x6x3xbf16> to vector<6x3xbf16>
    %cst_124 = arith.constant dense<0.000000e+00> : vector<6x896xf32>
    %143 = tpu.matmul %142, %140, %cst_124 {dimension_numbers = #tpu.dot_dimension_numbers<[1], [0], [0], [1], [0, 0, 1, 1], [], []>} : vector<6x3xbf16>, vector<3x896xbf16>, vector<6x896xf32> -> vector<6x896xf32>
    %144 = arith.addf %138, %143 : vector<6x896xf32>
    %c0_125 = arith.constant 0 : index
    %c0_126 = arith.constant 0 : index
    %c132 = arith.constant 132 : index
    %145 = vector.load %arg3[%c0_125, %c0_126, %c132] : memref<1x3x1152xbf16, #tpu.memory_space<vmem>>, vector<1x3x896xbf16>
    %146 = vector.shape_cast %145 : vector<1x3x896xbf16> to vector<3x896xbf16>
    %c24 = arith.constant 24 : index
    %c0_127 = arith.constant 0 : index
    %c0_128 = arith.constant 0 : index
    %147 = vector.load %arg1[%c24, %c0_127, %c0_128] : memref<25x6x3xbf16, #tpu.memory_space<vmem>>, vector<1x6x3xbf16>
    %148 = vector.shape_cast %147 : vector<1x6x3xbf16> to vector<6x3xbf16>
    %cst_129 = arith.constant dense<0.000000e+00> : vector<6x896xf32>
    %149 = tpu.matmul %148, %146, %cst_129 {dimension_numbers = #tpu.dot_dimension_numbers<[1], [0], [0], [1], [0, 0, 1, 1], [], []>} : vector<6x3xbf16>, vector<3x896xbf16>, vector<6x896xf32> -> vector<6x896xf32>
    %150 = arith.addf %144, %149 : vector<6x896xf32>
    %c0_130 = arith.constant 0 : index
    %c0_131 = arith.constant 0 : index
    %151 = vector.load %arg2[%c0_130, %c0_131] : memref<6x1xf32, #tpu.memory_space<vmem>>, vector<6x1xf32>
    %152 = vector.broadcast %151 : vector<6x1xf32> to vector<6x896xf32>
    %153 = arith.addf %150, %152 : vector<6x896xf32>
    %cst_132 = arith.constant 0.000000e+00 : f32
    %154 = vector.broadcast %cst_132 : f32 to vector<6x896xf32>
    %155 = arith.maximumf %153, %154 : vector<6x896xf32>
    %156 = arith.truncf %155 : vector<6x896xf32> to vector<6x896xbf16>
    %c0_133 = arith.constant 0 : index
    %c0_134 = arith.constant 0 : index
    %c0_135 = arith.constant 0 : index
    %157 = vector.load %arg4[%c0_133, %c0_134, %c0_135] : memref<1x6x896xbf16, #tpu.memory_space<vmem>>, vector<1x6x896xbf16>
    %158 = vector.shape_cast %157 : vector<1x6x896xbf16> to vector<6x896xbf16>
    %159 = vector.shape_cast %156 : vector<6x896xbf16> to vector<1x6x896xbf16>
    tpu.vector_store %arg4[%c0_133, %c0_134, %c0_135], %159 {strides = array<i32>} : memref<1x6x896xbf16, #tpu.memory_space<vmem>>, vector<1x6x896xbf16>,
    return
  }
  func.func @transform_0(%arg0: i32) -> (i32, i32, i32) {
    %c0_i32 = arith.constant 0 : i32
    %c0_i32_0 = arith.constant 0 : i32
    %c0_i32_1 = arith.constant 0 : i32
    %c0_i32_2 = arith.constant 0 : i32
    return %c0_i32, %c0_i32_0, %c0_i32_1 : i32, i32, i32
  }
  func.func @transform_1(%arg0: i32) -> (i32, i32) {
    %c0_i32 = arith.constant 0 : i32
    %c0_i32_0 = arith.constant 0 : i32
    %c0_i32_1 = arith.constant 0 : i32
    return %c0_i32, %c0_i32_0 : i32, i32
  }
  func.func @transform_2(%arg0: i32) -> (i32, i32, i32) {
    %c0_i32 = arith.constant 0 : i32
    %c0_i32_0 = arith.constant 0 : i32
    %c0_i32_1 = arith.constant 0 : i32
    return %arg0, %c0_i32, %c0_i32_0 : i32, i32, i32
  }
  func.func @transform_3(%arg0: i32) -> (i32, i32, i32) {
    %c0_i32 = arith.constant 0 : i32
    %c0_i32_0 = arith.constant 0 : i32
    %c0_i32_1 = arith.constant 0 : i32
    return %arg0, %c0_i32, %c0_i32_0 : i32, i32, i32
  }
}

module attributes {stable_mosaic.version = 11 : i64} {
  func.func @_conv_relu_kernel(%arg0: i32, %arg1: memref<25x16x6xbf16, #tpu.memory_space<vmem>>, %arg2: memref<16x1xf32, #tpu.memory_space<vmem>>, %arg3: memref<1x6x256xbf16, #tpu.memory_space<vmem>>, %arg4: memref<1x16x140xbf16, #tpu.memory_space<vmem>>) attributes {dimension_semantics = [#tpu.dimension_semantics<parallel>], iteration_bounds = array<i64: 2>, scalar_prefetch = 0 : i64, scratch_operands = 0 : i64, tpu.core_type = #tpu.core_type<tc>, window_params = [{pipeline_mode = #tpu.pipeline_mode<synchronous>, transform_indices = @transform_0, window_bounds = array<i64: 25, 16, 6>}, {pipeline_mode = #tpu.pipeline_mode<synchronous>, transform_indices = @transform_1, window_bounds = array<i64: 16, 1>}, {transform_indices = @transform_2, window_bounds = array<i64: 1, 6, 256>}, {transform_indices = @transform_3, window_bounds = array<i64: 1, 16, 140>}]} {
    %cst = arith.constant 0.000000e+00 : f32
    %0 = vector.broadcast %cst : f32 to vector<16x140xf32>
    %c0 = arith.constant 0 : index
    %c0_0 = arith.constant 0 : index
    %c0_1 = arith.constant 0 : index
    %1 = vector.load %arg3[%c0, %c0_0, %c0_1] : memref<1x6x256xbf16, #tpu.memory_space<vmem>>, vector<1x6x140xbf16>
    %2 = vector.shape_cast %1 : vector<1x6x140xbf16> to vector<6x140xbf16>
    %c0_2 = arith.constant 0 : index
    %c0_3 = arith.constant 0 : index
    %c0_4 = arith.constant 0 : index
    %3 = vector.load %arg1[%c0_2, %c0_3, %c0_4] : memref<25x16x6xbf16, #tpu.memory_space<vmem>>, vector<1x16x6xbf16>
    %4 = vector.shape_cast %3 : vector<1x16x6xbf16> to vector<16x6xbf16>
    %cst_5 = arith.constant dense<0.000000e+00> : vector<16x140xf32>
    %5 = tpu.matmul %4, %2, %cst_5 {dimension_numbers = #tpu.dot_dimension_numbers<[1], [0], [0], [1], [0, 0, 1, 1], [], []>} : vector<16x6xbf16>, vector<6x140xbf16>, vector<16x140xf32> -> vector<16x140xf32>
    %6 = arith.addf %0, %5 : vector<16x140xf32>
    %c0_6 = arith.constant 0 : index
    %c0_7 = arith.constant 0 : index
    %c1 = arith.constant 1 : index
    %7 = vector.load %arg3[%c0_6, %c0_7, %c1] : memref<1x6x256xbf16, #tpu.memory_space<vmem>>, vector<1x6x140xbf16>
    %8 = vector.shape_cast %7 : vector<1x6x140xbf16> to vector<6x140xbf16>
    %c1_8 = arith.constant 1 : index
    %c0_9 = arith.constant 0 : index
    %c0_10 = arith.constant 0 : index
    %9 = vector.load %arg1[%c1_8, %c0_9, %c0_10] : memref<25x16x6xbf16, #tpu.memory_space<vmem>>, vector<1x16x6xbf16>
    %10 = vector.shape_cast %9 : vector<1x16x6xbf16> to vector<16x6xbf16>
    %cst_11 = arith.constant dense<0.000000e+00> : vector<16x140xf32>
    %11 = tpu.matmul %10, %8, %cst_11 {dimension_numbers = #tpu.dot_dimension_numbers<[1], [0], [0], [1], [0, 0, 1, 1], [], []>} : vector<16x6xbf16>, vector<6x140xbf16>, vector<16x140xf32> -> vector<16x140xf32>
    %12 = arith.addf %6, %11 : vector<16x140xf32>
    %c0_12 = arith.constant 0 : index
    %c0_13 = arith.constant 0 : index
    %c2 = arith.constant 2 : index
    %13 = vector.load %arg3[%c0_12, %c0_13, %c2] : memref<1x6x256xbf16, #tpu.memory_space<vmem>>, vector<1x6x140xbf16>
    %14 = vector.shape_cast %13 : vector<1x6x140xbf16> to vector<6x140xbf16>
    %c2_14 = arith.constant 2 : index
    %c0_15 = arith.constant 0 : index
    %c0_16 = arith.constant 0 : index
    %15 = vector.load %arg1[%c2_14, %c0_15, %c0_16] : memref<25x16x6xbf16, #tpu.memory_space<vmem>>, vector<1x16x6xbf16>
    %16 = vector.shape_cast %15 : vector<1x16x6xbf16> to vector<16x6xbf16>
    %cst_17 = arith.constant dense<0.000000e+00> : vector<16x140xf32>
    %17 = tpu.matmul %16, %14, %cst_17 {dimension_numbers = #tpu.dot_dimension_numbers<[1], [0], [0], [1], [0, 0, 1, 1], [], []>} : vector<16x6xbf16>, vector<6x140xbf16>, vector<16x140xf32> -> vector<16x140xf32>
    %18 = arith.addf %12, %17 : vector<16x140xf32>
    %c0_18 = arith.constant 0 : index
    %c0_19 = arith.constant 0 : index
    %c3 = arith.constant 3 : index
    %19 = vector.load %arg3[%c0_18, %c0_19, %c3] : memref<1x6x256xbf16, #tpu.memory_space<vmem>>, vector<1x6x140xbf16>
    %20 = vector.shape_cast %19 : vector<1x6x140xbf16> to vector<6x140xbf16>
    %c3_20 = arith.constant 3 : index
    %c0_21 = arith.constant 0 : index
    %c0_22 = arith.constant 0 : index
    %21 = vector.load %arg1[%c3_20, %c0_21, %c0_22] : memref<25x16x6xbf16, #tpu.memory_space<vmem>>, vector<1x16x6xbf16>
    %22 = vector.shape_cast %21 : vector<1x16x6xbf16> to vector<16x6xbf16>
    %cst_23 = arith.constant dense<0.000000e+00> : vector<16x140xf32>
    %23 = tpu.matmul %22, %20, %cst_23 {dimension_numbers = #tpu.dot_dimension_numbers<[1], [0], [0], [1], [0, 0, 1, 1], [], []>} : vector<16x6xbf16>, vector<6x140xbf16>, vector<16x140xf32> -> vector<16x140xf32>
    %24 = arith.addf %18, %23 : vector<16x140xf32>
    %c0_24 = arith.constant 0 : index
    %c0_25 = arith.constant 0 : index
    %c4 = arith.constant 4 : index
    %25 = vector.load %arg3[%c0_24, %c0_25, %c4] : memref<1x6x256xbf16, #tpu.memory_space<vmem>>, vector<1x6x140xbf16>
    %26 = vector.shape_cast %25 : vector<1x6x140xbf16> to vector<6x140xbf16>
    %c4_26 = arith.constant 4 : index
    %c0_27 = arith.constant 0 : index
    %c0_28 = arith.constant 0 : index
    %27 = vector.load %arg1[%c4_26, %c0_27, %c0_28] : memref<25x16x6xbf16, #tpu.memory_space<vmem>>, vector<1x16x6xbf16>
    %28 = vector.shape_cast %27 : vector<1x16x6xbf16> to vector<16x6xbf16>
    %cst_29 = arith.constant dense<0.000000e+00> : vector<16x140xf32>
    %29 = tpu.matmul %28, %26, %cst_29 {dimension_numbers = #tpu.dot_dimension_numbers<[1], [0], [0], [1], [0, 0, 1, 1], [], []>} : vector<16x6xbf16>, vector<6x140xbf16>, vector<16x140xf32> -> vector<16x140xf32>
    %30 = arith.addf %24, %29 : vector<16x140xf32>
    %c0_30 = arith.constant 0 : index
    %c0_31 = arith.constant 0 : index
    %c14 = arith.constant 14 : index
    %31 = vector.load %arg3[%c0_30, %c0_31, %c14] : memref<1x6x256xbf16, #tpu.memory_space<vmem>>, vector<1x6x140xbf16>
    %32 = vector.shape_cast %31 : vector<1x6x140xbf16> to vector<6x140xbf16>
    %c5 = arith.constant 5 : index
    %c0_32 = arith.constant 0 : index
    %c0_33 = arith.constant 0 : index
    %33 = vector.load %arg1[%c5, %c0_32, %c0_33] : memref<25x16x6xbf16, #tpu.memory_space<vmem>>, vector<1x16x6xbf16>
    %34 = vector.shape_cast %33 : vector<1x16x6xbf16> to vector<16x6xbf16>
    %cst_34 = arith.constant dense<0.000000e+00> : vector<16x140xf32>
    %35 = tpu.matmul %34, %32, %cst_34 {dimension_numbers = #tpu.dot_dimension_numbers<[1], [0], [0], [1], [0, 0, 1, 1], [], []>} : vector<16x6xbf16>, vector<6x140xbf16>, vector<16x140xf32> -> vector<16x140xf32>
    %36 = arith.addf %30, %35 : vector<16x140xf32>
    %c0_35 = arith.constant 0 : index
    %c0_36 = arith.constant 0 : index
    %c15 = arith.constant 15 : index
    %37 = vector.load %arg3[%c0_35, %c0_36, %c15] : memref<1x6x256xbf16, #tpu.memory_space<vmem>>, vector<1x6x140xbf16>
    %38 = vector.shape_cast %37 : vector<1x6x140xbf16> to vector<6x140xbf16>
    %c6 = arith.constant 6 : index
    %c0_37 = arith.constant 0 : index
    %c0_38 = arith.constant 0 : index
    %39 = vector.load %arg1[%c6, %c0_37, %c0_38] : memref<25x16x6xbf16, #tpu.memory_space<vmem>>, vector<1x16x6xbf16>
    %40 = vector.shape_cast %39 : vector<1x16x6xbf16> to vector<16x6xbf16>
    %cst_39 = arith.constant dense<0.000000e+00> : vector<16x140xf32>
    %41 = tpu.matmul %40, %38, %cst_39 {dimension_numbers = #tpu.dot_dimension_numbers<[1], [0], [0], [1], [0, 0, 1, 1], [], []>} : vector<16x6xbf16>, vector<6x140xbf16>, vector<16x140xf32> -> vector<16x140xf32>
    %42 = arith.addf %36, %41 : vector<16x140xf32>
    %c0_40 = arith.constant 0 : index
    %c0_41 = arith.constant 0 : index
    %c16 = arith.constant 16 : index
    %43 = vector.load %arg3[%c0_40, %c0_41, %c16] : memref<1x6x256xbf16, #tpu.memory_space<vmem>>, vector<1x6x140xbf16>
    %44 = vector.shape_cast %43 : vector<1x6x140xbf16> to vector<6x140xbf16>
    %c7 = arith.constant 7 : index
    %c0_42 = arith.constant 0 : index
    %c0_43 = arith.constant 0 : index
    %45 = vector.load %arg1[%c7, %c0_42, %c0_43] : memref<25x16x6xbf16, #tpu.memory_space<vmem>>, vector<1x16x6xbf16>
    %46 = vector.shape_cast %45 : vector<1x16x6xbf16> to vector<16x6xbf16>
    %cst_44 = arith.constant dense<0.000000e+00> : vector<16x140xf32>
    %47 = tpu.matmul %46, %44, %cst_44 {dimension_numbers = #tpu.dot_dimension_numbers<[1], [0], [0], [1], [0, 0, 1, 1], [], []>} : vector<16x6xbf16>, vector<6x140xbf16>, vector<16x140xf32> -> vector<16x140xf32>
    %48 = arith.addf %42, %47 : vector<16x140xf32>
    %c0_45 = arith.constant 0 : index
    %c0_46 = arith.constant 0 : index
    %c17 = arith.constant 17 : index
    %49 = vector.load %arg3[%c0_45, %c0_46, %c17] : memref<1x6x256xbf16, #tpu.memory_space<vmem>>, vector<1x6x140xbf16>
    %50 = vector.shape_cast %49 : vector<1x6x140xbf16> to vector<6x140xbf16>
    %c8 = arith.constant 8 : index
    %c0_47 = arith.constant 0 : index
    %c0_48 = arith.constant 0 : index
    %51 = vector.load %arg1[%c8, %c0_47, %c0_48] : memref<25x16x6xbf16, #tpu.memory_space<vmem>>, vector<1x16x6xbf16>
    %52 = vector.shape_cast %51 : vector<1x16x6xbf16> to vector<16x6xbf16>
    %cst_49 = arith.constant dense<0.000000e+00> : vector<16x140xf32>
    %53 = tpu.matmul %52, %50, %cst_49 {dimension_numbers = #tpu.dot_dimension_numbers<[1], [0], [0], [1], [0, 0, 1, 1], [], []>} : vector<16x6xbf16>, vector<6x140xbf16>, vector<16x140xf32> -> vector<16x140xf32>
    %54 = arith.addf %48, %53 : vector<16x140xf32>
    %c0_50 = arith.constant 0 : index
    %c0_51 = arith.constant 0 : index
    %c18 = arith.constant 18 : index
    %55 = vector.load %arg3[%c0_50, %c0_51, %c18] : memref<1x6x256xbf16, #tpu.memory_space<vmem>>, vector<1x6x140xbf16>
    %56 = vector.shape_cast %55 : vector<1x6x140xbf16> to vector<6x140xbf16>
    %c9 = arith.constant 9 : index
    %c0_52 = arith.constant 0 : index
    %c0_53 = arith.constant 0 : index
    %57 = vector.load %arg1[%c9, %c0_52, %c0_53] : memref<25x16x6xbf16, #tpu.memory_space<vmem>>, vector<1x16x6xbf16>
    %58 = vector.shape_cast %57 : vector<1x16x6xbf16> to vector<16x6xbf16>
    %cst_54 = arith.constant dense<0.000000e+00> : vector<16x140xf32>
    %59 = tpu.matmul %58, %56, %cst_54 {dimension_numbers = #tpu.dot_dimension_numbers<[1], [0], [0], [1], [0, 0, 1, 1], [], []>} : vector<16x6xbf16>, vector<6x140xbf16>, vector<16x140xf32> -> vector<16x140xf32>
    %60 = arith.addf %54, %59 : vector<16x140xf32>
    %c0_55 = arith.constant 0 : index
    %c0_56 = arith.constant 0 : index
    %c28 = arith.constant 28 : index
    %61 = vector.load %arg3[%c0_55, %c0_56, %c28] : memref<1x6x256xbf16, #tpu.memory_space<vmem>>, vector<1x6x140xbf16>
    %62 = vector.shape_cast %61 : vector<1x6x140xbf16> to vector<6x140xbf16>
    %c10 = arith.constant 10 : index
    %c0_57 = arith.constant 0 : index
    %c0_58 = arith.constant 0 : index
    %63 = vector.load %arg1[%c10, %c0_57, %c0_58] : memref<25x16x6xbf16, #tpu.memory_space<vmem>>, vector<1x16x6xbf16>
    %64 = vector.shape_cast %63 : vector<1x16x6xbf16> to vector<16x6xbf16>
    %cst_59 = arith.constant dense<0.000000e+00> : vector<16x140xf32>
    %65 = tpu.matmul %64, %62, %cst_59 {dimension_numbers = #tpu.dot_dimension_numbers<[1], [0], [0], [1], [0, 0, 1, 1], [], []>} : vector<16x6xbf16>, vector<6x140xbf16>, vector<16x140xf32> -> vector<16x140xf32>
    %66 = arith.addf %60, %65 : vector<16x140xf32>
    %c0_60 = arith.constant 0 : index
    %c0_61 = arith.constant 0 : index
    %c29 = arith.constant 29 : index
    %67 = vector.load %arg3[%c0_60, %c0_61, %c29] : memref<1x6x256xbf16, #tpu.memory_space<vmem>>, vector<1x6x140xbf16>
    %68 = vector.shape_cast %67 : vector<1x6x140xbf16> to vector<6x140xbf16>
    %c11 = arith.constant 11 : index
    %c0_62 = arith.constant 0 : index
    %c0_63 = arith.constant 0 : index
    %69 = vector.load %arg1[%c11, %c0_62, %c0_63] : memref<25x16x6xbf16, #tpu.memory_space<vmem>>, vector<1x16x6xbf16>
    %70 = vector.shape_cast %69 : vector<1x16x6xbf16> to vector<16x6xbf16>
    %cst_64 = arith.constant dense<0.000000e+00> : vector<16x140xf32>
    %71 = tpu.matmul %70, %68, %cst_64 {dimension_numbers = #tpu.dot_dimension_numbers<[1], [0], [0], [1], [0, 0, 1, 1], [], []>} : vector<16x6xbf16>, vector<6x140xbf16>, vector<16x140xf32> -> vector<16x140xf32>
    %72 = arith.addf %66, %71 : vector<16x140xf32>
    %c0_65 = arith.constant 0 : index
    %c0_66 = arith.constant 0 : index
    %c30 = arith.constant 30 : index
    %73 = vector.load %arg3[%c0_65, %c0_66, %c30] : memref<1x6x256xbf16, #tpu.memory_space<vmem>>, vector<1x6x140xbf16>
    %74 = vector.shape_cast %73 : vector<1x6x140xbf16> to vector<6x140xbf16>
    %c12 = arith.constant 12 : index
    %c0_67 = arith.constant 0 : index
    %c0_68 = arith.constant 0 : index
    %75 = vector.load %arg1[%c12, %c0_67, %c0_68] : memref<25x16x6xbf16, #tpu.memory_space<vmem>>, vector<1x16x6xbf16>
    %76 = vector.shape_cast %75 : vector<1x16x6xbf16> to vector<16x6xbf16>
    %cst_69 = arith.constant dense<0.000000e+00> : vector<16x140xf32>
    %77 = tpu.matmul %76, %74, %cst_69 {dimension_numbers = #tpu.dot_dimension_numbers<[1], [0], [0], [1], [0, 0, 1, 1], [], []>} : vector<16x6xbf16>, vector<6x140xbf16>, vector<16x140xf32> -> vector<16x140xf32>
    %78 = arith.addf %72, %77 : vector<16x140xf32>
    %c0_70 = arith.constant 0 : index
    %c0_71 = arith.constant 0 : index
    %c31 = arith.constant 31 : index
    %79 = vector.load %arg3[%c0_70, %c0_71, %c31] : memref<1x6x256xbf16, #tpu.memory_space<vmem>>, vector<1x6x140xbf16>
    %80 = vector.shape_cast %79 : vector<1x6x140xbf16> to vector<6x140xbf16>
    %c13 = arith.constant 13 : index
    %c0_72 = arith.constant 0 : index
    %c0_73 = arith.constant 0 : index
    %81 = vector.load %arg1[%c13, %c0_72, %c0_73] : memref<25x16x6xbf16, #tpu.memory_space<vmem>>, vector<1x16x6xbf16>
    %82 = vector.shape_cast %81 : vector<1x16x6xbf16> to vector<16x6xbf16>
    %cst_74 = arith.constant dense<0.000000e+00> : vector<16x140xf32>
    %83 = tpu.matmul %82, %80, %cst_74 {dimension_numbers = #tpu.dot_dimension_numbers<[1], [0], [0], [1], [0, 0, 1, 1], [], []>} : vector<16x6xbf16>, vector<6x140xbf16>, vector<16x140xf32> -> vector<16x140xf32>
    %84 = arith.addf %78, %83 : vector<16x140xf32>
    %c0_75 = arith.constant 0 : index
    %c0_76 = arith.constant 0 : index
    %c32 = arith.constant 32 : index
    %85 = vector.load %arg3[%c0_75, %c0_76, %c32] : memref<1x6x256xbf16, #tpu.memory_space<vmem>>, vector<1x6x140xbf16>
    %86 = vector.shape_cast %85 : vector<1x6x140xbf16> to vector<6x140xbf16>
    %c14_77 = arith.constant 14 : index
    %c0_78 = arith.constant 0 : index
    %c0_79 = arith.constant 0 : index
    %87 = vector.load %arg1[%c14_77, %c0_78, %c0_79] : memref<25x16x6xbf16, #tpu.memory_space<vmem>>, vector<1x16x6xbf16>
    %88 = vector.shape_cast %87 : vector<1x16x6xbf16> to vector<16x6xbf16>
    %cst_80 = arith.constant dense<0.000000e+00> : vector<16x140xf32>
    %89 = tpu.matmul %88, %86, %cst_80 {dimension_numbers = #tpu.dot_dimension_numbers<[1], [0], [0], [1], [0, 0, 1, 1], [], []>} : vector<16x6xbf16>, vector<6x140xbf16>, vector<16x140xf32> -> vector<16x140xf32>
    %90 = arith.addf %84, %89 : vector<16x140xf32>
    %c0_81 = arith.constant 0 : index
    %c0_82 = arith.constant 0 : index
    %c42 = arith.constant 42 : index
    %91 = vector.load %arg3[%c0_81, %c0_82, %c42] : memref<1x6x256xbf16, #tpu.memory_space<vmem>>, vector<1x6x140xbf16>
    %92 = vector.shape_cast %91 : vector<1x6x140xbf16> to vector<6x140xbf16>
    %c15_83 = arith.constant 15 : index
    %c0_84 = arith.constant 0 : index
    %c0_85 = arith.constant 0 : index
    %93 = vector.load %arg1[%c15_83, %c0_84, %c0_85] : memref<25x16x6xbf16, #tpu.memory_space<vmem>>, vector<1x16x6xbf16>
    %94 = vector.shape_cast %93 : vector<1x16x6xbf16> to vector<16x6xbf16>
    %cst_86 = arith.constant dense<0.000000e+00> : vector<16x140xf32>
    %95 = tpu.matmul %94, %92, %cst_86 {dimension_numbers = #tpu.dot_dimension_numbers<[1], [0], [0], [1], [0, 0, 1, 1], [], []>} : vector<16x6xbf16>, vector<6x140xbf16>, vector<16x140xf32> -> vector<16x140xf32>
    %96 = arith.addf %90, %95 : vector<16x140xf32>
    %c0_87 = arith.constant 0 : index
    %c0_88 = arith.constant 0 : index
    %c43 = arith.constant 43 : index
    %97 = vector.load %arg3[%c0_87, %c0_88, %c43] : memref<1x6x256xbf16, #tpu.memory_space<vmem>>, vector<1x6x140xbf16>
    %98 = vector.shape_cast %97 : vector<1x6x140xbf16> to vector<6x140xbf16>
    %c16_89 = arith.constant 16 : index
    %c0_90 = arith.constant 0 : index
    %c0_91 = arith.constant 0 : index
    %99 = vector.load %arg1[%c16_89, %c0_90, %c0_91] : memref<25x16x6xbf16, #tpu.memory_space<vmem>>, vector<1x16x6xbf16>
    %100 = vector.shape_cast %99 : vector<1x16x6xbf16> to vector<16x6xbf16>
    %cst_92 = arith.constant dense<0.000000e+00> : vector<16x140xf32>
    %101 = tpu.matmul %100, %98, %cst_92 {dimension_numbers = #tpu.dot_dimension_numbers<[1], [0], [0], [1], [0, 0, 1, 1], [], []>} : vector<16x6xbf16>, vector<6x140xbf16>, vector<16x140xf32> -> vector<16x140xf32>
    %102 = arith.addf %96, %101 : vector<16x140xf32>
    %c0_93 = arith.constant 0 : index
    %c0_94 = arith.constant 0 : index
    %c44 = arith.constant 44 : index
    %103 = vector.load %arg3[%c0_93, %c0_94, %c44] : memref<1x6x256xbf16, #tpu.memory_space<vmem>>, vector<1x6x140xbf16>
    %104 = vector.shape_cast %103 : vector<1x6x140xbf16> to vector<6x140xbf16>
    %c17_95 = arith.constant 17 : index
    %c0_96 = arith.constant 0 : index
    %c0_97 = arith.constant 0 : index
    %105 = vector.load %arg1[%c17_95, %c0_96, %c0_97] : memref<25x16x6xbf16, #tpu.memory_space<vmem>>, vector<1x16x6xbf16>
    %106 = vector.shape_cast %105 : vector<1x16x6xbf16> to vector<16x6xbf16>
    %cst_98 = arith.constant dense<0.000000e+00> : vector<16x140xf32>
    %107 = tpu.matmul %106, %104, %cst_98 {dimension_numbers = #tpu.dot_dimension_numbers<[1], [0], [0], [1], [0, 0, 1, 1], [], []>} : vector<16x6xbf16>, vector<6x140xbf16>, vector<16x140xf32> -> vector<16x140xf32>
    %108 = arith.addf %102, %107 : vector<16x140xf32>
    %c0_99 = arith.constant 0 : index
    %c0_100 = arith.constant 0 : index
    %c45 = arith.constant 45 : index
    %109 = vector.load %arg3[%c0_99, %c0_100, %c45] : memref<1x6x256xbf16, #tpu.memory_space<vmem>>, vector<1x6x140xbf16>
    %110 = vector.shape_cast %109 : vector<1x6x140xbf16> to vector<6x140xbf16>
    %c18_101 = arith.constant 18 : index
    %c0_102 = arith.constant 0 : index
    %c0_103 = arith.constant 0 : index
    %111 = vector.load %arg1[%c18_101, %c0_102, %c0_103] : memref<25x16x6xbf16, #tpu.memory_space<vmem>>, vector<1x16x6xbf16>
    %112 = vector.shape_cast %111 : vector<1x16x6xbf16> to vector<16x6xbf16>
    %cst_104 = arith.constant dense<0.000000e+00> : vector<16x140xf32>
    %113 = tpu.matmul %112, %110, %cst_104 {dimension_numbers = #tpu.dot_dimension_numbers<[1], [0], [0], [1], [0, 0, 1, 1], [], []>} : vector<16x6xbf16>, vector<6x140xbf16>, vector<16x140xf32> -> vector<16x140xf32>
    %114 = arith.addf %108, %113 : vector<16x140xf32>
    %c0_105 = arith.constant 0 : index
    %c0_106 = arith.constant 0 : index
    %c46 = arith.constant 46 : index
    %115 = vector.load %arg3[%c0_105, %c0_106, %c46] : memref<1x6x256xbf16, #tpu.memory_space<vmem>>, vector<1x6x140xbf16>
    %116 = vector.shape_cast %115 : vector<1x6x140xbf16> to vector<6x140xbf16>
    %c19 = arith.constant 19 : index
    %c0_107 = arith.constant 0 : index
    %c0_108 = arith.constant 0 : index
    %117 = vector.load %arg1[%c19, %c0_107, %c0_108] : memref<25x16x6xbf16, #tpu.memory_space<vmem>>, vector<1x16x6xbf16>
    %118 = vector.shape_cast %117 : vector<1x16x6xbf16> to vector<16x6xbf16>
    %cst_109 = arith.constant dense<0.000000e+00> : vector<16x140xf32>
    %119 = tpu.matmul %118, %116, %cst_109 {dimension_numbers = #tpu.dot_dimension_numbers<[1], [0], [0], [1], [0, 0, 1, 1], [], []>} : vector<16x6xbf16>, vector<6x140xbf16>, vector<16x140xf32> -> vector<16x140xf32>
    %120 = arith.addf %114, %119 : vector<16x140xf32>
    %c0_110 = arith.constant 0 : index
    %c0_111 = arith.constant 0 : index
    %c56 = arith.constant 56 : index
    %121 = vector.load %arg3[%c0_110, %c0_111, %c56] : memref<1x6x256xbf16, #tpu.memory_space<vmem>>, vector<1x6x140xbf16>
    %122 = vector.shape_cast %121 : vector<1x6x140xbf16> to vector<6x140xbf16>
    %c20 = arith.constant 20 : index
    %c0_112 = arith.constant 0 : index
    %c0_113 = arith.constant 0 : index
    %123 = vector.load %arg1[%c20, %c0_112, %c0_113] : memref<25x16x6xbf16, #tpu.memory_space<vmem>>, vector<1x16x6xbf16>
    %124 = vector.shape_cast %123 : vector<1x16x6xbf16> to vector<16x6xbf16>
    %cst_114 = arith.constant dense<0.000000e+00> : vector<16x140xf32>
    %125 = tpu.matmul %124, %122, %cst_114 {dimension_numbers = #tpu.dot_dimension_numbers<[1], [0], [0], [1], [0, 0, 1, 1], [], []>} : vector<16x6xbf16>, vector<6x140xbf16>, vector<16x140xf32> -> vector<16x140xf32>
    %126 = arith.addf %120, %125 : vector<16x140xf32>
    %c0_115 = arith.constant 0 : index
    %c0_116 = arith.constant 0 : index
    %c57 = arith.constant 57 : index
    %127 = vector.load %arg3[%c0_115, %c0_116, %c57] : memref<1x6x256xbf16, #tpu.memory_space<vmem>>, vector<1x6x140xbf16>
    %128 = vector.shape_cast %127 : vector<1x6x140xbf16> to vector<6x140xbf16>
    %c21 = arith.constant 21 : index
    %c0_117 = arith.constant 0 : index
    %c0_118 = arith.constant 0 : index
    %129 = vector.load %arg1[%c21, %c0_117, %c0_118] : memref<25x16x6xbf16, #tpu.memory_space<vmem>>, vector<1x16x6xbf16>
    %130 = vector.shape_cast %129 : vector<1x16x6xbf16> to vector<16x6xbf16>
    %cst_119 = arith.constant dense<0.000000e+00> : vector<16x140xf32>
    %131 = tpu.matmul %130, %128, %cst_119 {dimension_numbers = #tpu.dot_dimension_numbers<[1], [0], [0], [1], [0, 0, 1, 1], [], []>} : vector<16x6xbf16>, vector<6x140xbf16>, vector<16x140xf32> -> vector<16x140xf32>
    %132 = arith.addf %126, %131 : vector<16x140xf32>
    %c0_120 = arith.constant 0 : index
    %c0_121 = arith.constant 0 : index
    %c58 = arith.constant 58 : index
    %133 = vector.load %arg3[%c0_120, %c0_121, %c58] : memref<1x6x256xbf16, #tpu.memory_space<vmem>>, vector<1x6x140xbf16>
    %134 = vector.shape_cast %133 : vector<1x6x140xbf16> to vector<6x140xbf16>
    %c22 = arith.constant 22 : index
    %c0_122 = arith.constant 0 : index
    %c0_123 = arith.constant 0 : index
    %135 = vector.load %arg1[%c22, %c0_122, %c0_123] : memref<25x16x6xbf16, #tpu.memory_space<vmem>>, vector<1x16x6xbf16>
    %136 = vector.shape_cast %135 : vector<1x16x6xbf16> to vector<16x6xbf16>
    %cst_124 = arith.constant dense<0.000000e+00> : vector<16x140xf32>
    %137 = tpu.matmul %136, %134, %cst_124 {dimension_numbers = #tpu.dot_dimension_numbers<[1], [0], [0], [1], [0, 0, 1, 1], [], []>} : vector<16x6xbf16>, vector<6x140xbf16>, vector<16x140xf32> -> vector<16x140xf32>
    %138 = arith.addf %132, %137 : vector<16x140xf32>
    %c0_125 = arith.constant 0 : index
    %c0_126 = arith.constant 0 : index
    %c59 = arith.constant 59 : index
    %139 = vector.load %arg3[%c0_125, %c0_126, %c59] : memref<1x6x256xbf16, #tpu.memory_space<vmem>>, vector<1x6x140xbf16>
    %140 = vector.shape_cast %139 : vector<1x6x140xbf16> to vector<6x140xbf16>
    %c23 = arith.constant 23 : index
    %c0_127 = arith.constant 0 : index
    %c0_128 = arith.constant 0 : index
    %141 = vector.load %arg1[%c23, %c0_127, %c0_128] : memref<25x16x6xbf16, #tpu.memory_space<vmem>>, vector<1x16x6xbf16>
    %142 = vector.shape_cast %141 : vector<1x16x6xbf16> to vector<16x6xbf16>
    %cst_129 = arith.constant dense<0.000000e+00> : vector<16x140xf32>
    %143 = tpu.matmul %142, %140, %cst_129 {dimension_numbers = #tpu.dot_dimension_numbers<[1], [0], [0], [1], [0, 0, 1, 1], [], []>} : vector<16x6xbf16>, vector<6x140xbf16>, vector<16x140xf32> -> vector<16x140xf32>
    %144 = arith.addf %138, %143 : vector<16x140xf32>
    %c0_130 = arith.constant 0 : index
    %c0_131 = arith.constant 0 : index
    %c60 = arith.constant 60 : index
    %145 = vector.load %arg3[%c0_130, %c0_131, %c60] : memref<1x6x256xbf16, #tpu.memory_space<vmem>>, vector<1x6x140xbf16>
    %146 = vector.shape_cast %145 : vector<1x6x140xbf16> to vector<6x140xbf16>
    %c24 = arith.constant 24 : index
    %c0_132 = arith.constant 0 : index
    %c0_133 = arith.constant 0 : index
    %147 = vector.load %arg1[%c24, %c0_132, %c0_133] : memref<25x16x6xbf16, #tpu.memory_space<vmem>>, vector<1x16x6xbf16>
    %148 = vector.shape_cast %147 : vector<1x16x6xbf16> to vector<16x6xbf16>
    %cst_134 = arith.constant dense<0.000000e+00> : vector<16x140xf32>
    %149 = tpu.matmul %148, %146, %cst_134 {dimension_numbers = #tpu.dot_dimension_numbers<[1], [0], [0], [1], [0, 0, 1, 1], [], []>} : vector<16x6xbf16>, vector<6x140xbf16>, vector<16x140xf32> -> vector<16x140xf32>
    %150 = arith.addf %144, %149 : vector<16x140xf32>
    %c0_135 = arith.constant 0 : index
    %c0_136 = arith.constant 0 : index
    %151 = vector.load %arg2[%c0_135, %c0_136] : memref<16x1xf32, #tpu.memory_space<vmem>>, vector<16x1xf32>
    %152 = vector.broadcast %151 : vector<16x1xf32> to vector<16x140xf32>
    %153 = arith.addf %150, %152 : vector<16x140xf32>
    %cst_137 = arith.constant 0.000000e+00 : f32
    %154 = vector.broadcast %cst_137 : f32 to vector<16x140xf32>
    %155 = arith.maximumf %153, %154 : vector<16x140xf32>
    %156 = arith.truncf %155 : vector<16x140xf32> to vector<16x140xbf16>
    %c0_138 = arith.constant 0 : index
    %c0_139 = arith.constant 0 : index
    %c0_140 = arith.constant 0 : index
    %157 = vector.load %arg4[%c0_138, %c0_139, %c0_140] : memref<1x16x140xbf16, #tpu.memory_space<vmem>>, vector<1x16x140xbf16>
    %158 = vector.shape_cast %157 : vector<1x16x140xbf16> to vector<16x140xbf16>
    %159 = vector.shape_cast %156 : vector<16x140xbf16> to vector<1x16x140xbf16>
    tpu.vector_store %arg4[%c0_138, %c0_139, %c0_140], %159 {strides = array<i32>} : memref<1x16x140xbf16, #tpu.memory_space<vmem>>, vector<1x16x140xbf16>,
    return
  }
  func.func @transform_0(%arg0: i32) -> (i32, i32, i32) {
    %c0_i32 = arith.constant 0 : i32
    %c0_i32_0 = arith.constant 0 : i32
    %c0_i32_1 = arith.constant 0 : i32
    %c0_i32_2 = arith.constant 0 : i32
    return %c0_i32, %c0_i32_0, %c0_i32_1 : i32, i32, i32
  }
  func.func @transform_1(%arg0: i32) -> (i32, i32) {
    %c0_i32 = arith.constant 0 : i32
    %c0_i32_0 = arith.constant 0 : i32
    %c0_i32_1 = arith.constant 0 : i32
    return %c0_i32, %c0_i32_0 : i32, i32
  }
  func.func @transform_2(%arg0: i32) -> (i32, i32, i32) {
    %c0_i32 = arith.constant 0 : i32
    %c0_i32_0 = arith.constant 0 : i32
    %c0_i32_1 = arith.constant 0 : i32
    return %arg0, %c0_i32, %c0_i32_0 : i32, i32, i32
  }
  func.func @transform_3(%arg0: i32) -> (i32, i32, i32) {
    %c0_i32 = arith.constant 0 : i32
    %c0_i32_0 = arith.constant 0 : i32
    %c0_i32_1 = arith.constant 0 : i32
    return %arg0, %c0_i32, %c0_i32_0 : i32, i32, i32
  }
}

module attributes {stable_mosaic.version = 11 : i64} {
  func.func @_mlp_kernel(%arg0: i32, %arg1: memref<2x400xbf16, #tpu.memory_space<vmem>>, %arg2: memref<400x120xbf16, #tpu.memory_space<vmem>>, %arg3: memref<1x120xf32, #tpu.memory_space<vmem>>, %arg4: memref<120x84xbf16, #tpu.memory_space<vmem>>, %arg5: memref<1x84xf32, #tpu.memory_space<vmem>>, %arg6: memref<84x10xbf16, #tpu.memory_space<vmem>>, %arg7: memref<1x10xf32, #tpu.memory_space<vmem>>, %arg8: memref<2x10xf32, #tpu.memory_space<vmem>>) attributes {dimension_semantics = [#tpu.dimension_semantics<parallel>], iteration_bounds = array<i64: 1>, scalar_prefetch = 0 : i64, scratch_operands = 0 : i64, tpu.core_type = #tpu.core_type<tc>, window_params = [{transform_indices = @transform_0, window_bounds = array<i64: 2, 400>}, {pipeline_mode = #tpu.pipeline_mode<synchronous>, transform_indices = @transform_1, window_bounds = array<i64: 400, 120>}, {pipeline_mode = #tpu.pipeline_mode<synchronous>, transform_indices = @transform_2, window_bounds = array<i64: 1, 120>}, {pipeline_mode = #tpu.pipeline_mode<synchronous>, transform_indices = @transform_3, window_bounds = array<i64: 120, 84>}, {pipeline_mode = #tpu.pipeline_mode<synchronous>, transform_indices = @transform_4, window_bounds = array<i64: 1, 84>}, {pipeline_mode = #tpu.pipeline_mode<synchronous>, transform_indices = @transform_5, window_bounds = array<i64: 84, 10>}, {pipeline_mode = #tpu.pipeline_mode<synchronous>, transform_indices = @transform_6, window_bounds = array<i64: 1, 10>}, {transform_indices = @transform_7, window_bounds = array<i64: 2, 10>}]} {
    %c0 = arith.constant 0 : index
    %c0_0 = arith.constant 0 : index
    %0 = vector.load %arg1[%c0, %c0_0] : memref<2x400xbf16, #tpu.memory_space<vmem>>, vector<2x400xbf16>
    %c0_1 = arith.constant 0 : index
    %c0_2 = arith.constant 0 : index
    %1 = vector.load %arg2[%c0_1, %c0_2] : memref<400x120xbf16, #tpu.memory_space<vmem>>, vector<400x120xbf16>
    %cst = arith.constant dense<0.000000e+00> : vector<2x120xf32>
    %2 = tpu.matmul %0, %1, %cst {dimension_numbers = #tpu.dot_dimension_numbers<[1], [0], [0], [1], [0, 0, 1, 1], [], []>} : vector<2x400xbf16>, vector<400x120xbf16>, vector<2x120xf32> -> vector<2x120xf32>
    %c0_3 = arith.constant 0 : index
    %c0_4 = arith.constant 0 : index
    %3 = vector.load %arg3[%c0_3, %c0_4] : memref<1x120xf32, #tpu.memory_space<vmem>>, vector<1x120xf32>
    %4 = vector.broadcast %3 : vector<1x120xf32> to vector<2x120xf32>
    %5 = arith.addf %2, %4 : vector<2x120xf32>
    %cst_5 = arith.constant 0.000000e+00 : f32
    %6 = vector.broadcast %cst_5 : f32 to vector<2x120xf32>
    %7 = arith.maximumf %5, %6 : vector<2x120xf32>
    %8 = arith.truncf %7 : vector<2x120xf32> to vector<2x120xbf16>
    %c0_6 = arith.constant 0 : index
    %c0_7 = arith.constant 0 : index
    %9 = vector.load %arg4[%c0_6, %c0_7] : memref<120x84xbf16, #tpu.memory_space<vmem>>, vector<120x84xbf16>
    %cst_8 = arith.constant dense<0.000000e+00> : vector<2x84xf32>
    %10 = tpu.matmul %8, %9, %cst_8 {dimension_numbers = #tpu.dot_dimension_numbers<[1], [0], [0], [1], [0, 0, 1, 1], [], []>} : vector<2x120xbf16>, vector<120x84xbf16>, vector<2x84xf32> -> vector<2x84xf32>
    %c0_9 = arith.constant 0 : index
    %c0_10 = arith.constant 0 : index
    %11 = vector.load %arg5[%c0_9, %c0_10] : memref<1x84xf32, #tpu.memory_space<vmem>>, vector<1x84xf32>
    %12 = vector.broadcast %11 : vector<1x84xf32> to vector<2x84xf32>
    %13 = arith.addf %10, %12 : vector<2x84xf32>
    %cst_11 = arith.constant 0.000000e+00 : f32
    %14 = vector.broadcast %cst_11 : f32 to vector<2x84xf32>
    %15 = arith.maximumf %13, %14 : vector<2x84xf32>
    %16 = arith.truncf %15 : vector<2x84xf32> to vector<2x84xbf16>
    %c0_12 = arith.constant 0 : index
    %c0_13 = arith.constant 0 : index
    %17 = vector.load %arg6[%c0_12, %c0_13] : memref<84x10xbf16, #tpu.memory_space<vmem>>, vector<84x10xbf16>
    %cst_14 = arith.constant dense<0.000000e+00> : vector<2x10xf32>
    %18 = tpu.matmul %16, %17, %cst_14 {dimension_numbers = #tpu.dot_dimension_numbers<[1], [0], [0], [1], [0, 0, 1, 1], [], []>} : vector<2x84xbf16>, vector<84x10xbf16>, vector<2x10xf32> -> vector<2x10xf32>
    %c0_15 = arith.constant 0 : index
    %c0_16 = arith.constant 0 : index
    %19 = vector.load %arg7[%c0_15, %c0_16] : memref<1x10xf32, #tpu.memory_space<vmem>>, vector<1x10xf32>
    %20 = vector.broadcast %19 : vector<1x10xf32> to vector<2x10xf32>
    %21 = arith.addf %18, %20 : vector<2x10xf32>
    %c0_17 = arith.constant 0 : index
    %c0_18 = arith.constant 0 : index
    %22 = vector.load %arg8[%c0_17, %c0_18] : memref<2x10xf32, #tpu.memory_space<vmem>>, vector<2x10xf32>
    tpu.vector_store %arg8[%c0_17, %c0_18], %21 {strides = array<i32>} : memref<2x10xf32, #tpu.memory_space<vmem>>, vector<2x10xf32>,
    return
  }
  func.func @transform_0(%arg0: i32) -> (i32, i32) {
    %c0_i32 = arith.constant 0 : i32
    %c0_i32_0 = arith.constant 0 : i32
    return %arg0, %c0_i32 : i32, i32
  }
  func.func @transform_1(%arg0: i32) -> (i32, i32) {
    %c0_i32 = arith.constant 0 : i32
    %c0_i32_0 = arith.constant 0 : i32
    %c0_i32_1 = arith.constant 0 : i32
    return %c0_i32, %c0_i32_0 : i32, i32
  }
  func.func @transform_2(%arg0: i32) -> (i32, i32) {
    %c0_i32 = arith.constant 0 : i32
    %c0_i32_0 = arith.constant 0 : i32
    %c0_i32_1 = arith.constant 0 : i32
    return %c0_i32, %c0_i32_0 : i32, i32
  }
  func.func @transform_3(%arg0: i32) -> (i32, i32) {
    %c0_i32 = arith.constant 0 : i32
    %c0_i32_0 = arith.constant 0 : i32
    %c0_i32_1 = arith.constant 0 : i32
    return %c0_i32, %c0_i32_0 : i32, i32
  }
  func.func @transform_4(%arg0: i32) -> (i32, i32) {
    %c0_i32 = arith.constant 0 : i32
    %c0_i32_0 = arith.constant 0 : i32
    %c0_i32_1 = arith.constant 0 : i32
    return %c0_i32, %c0_i32_0 : i32, i32
  }
  func.func @transform_5(%arg0: i32) -> (i32, i32) {
    %c0_i32 = arith.constant 0 : i32
    %c0_i32_0 = arith.constant 0 : i32
    %c0_i32_1 = arith.constant 0 : i32
    return %c0_i32, %c0_i32_0 : i32, i32
  }
  func.func @transform_6(%arg0: i32) -> (i32, i32) {
    %c0_i32 = arith.constant 0 : i32
    %c0_i32_0 = arith.constant 0 : i32
    %c0_i32_1 = arith.constant 0 : i32
    return %c0_i32, %c0_i32_0 : i32, i32
  }
  func.func @transform_7(%arg0: i32) -> (i32, i32) {
    %c0_i32 = arith.constant 0 : i32
    %c0_i32_0 = arith.constant 0 : i32
    return %arg0, %c0_i32 : i32, i32
  }
}

</mosaic_0001>

<llo_original>
// kernel: net_forward.4
$region0: #{net_forward.4}
  #allocation0 [shape = 'u32[]', space=smem, size = 0x4, offset = 0x4, fixed_abs, tag = 'smem constant byte address 0x4 - core index']
  #allocation1 [shape = 'u32[72,128]{1,0:T(1,128)}', space=vmem, size = 0x9000, scoped, tag = 'internal scratch']
  %s0 = inlined_call_operand.vmem [shape: bf16[25,16,6], index: 0, kind: input, shape index: {}]
  %s1 = inlined_call_operand.vmem [shape: f32[16,1], index: 1, kind: input, shape index: {}]
  %s2 = inlined_call_operand.vmem [shape: bf16[2,6,256], index: 2, kind: input, shape index: {}]
  %s3 = inlined_call_operand.vmem [shape: bf16[2,16,140], index: 3, kind: output, shape index: {}]
  %s4 = sld [smem:[#allocation0]]
  $region45: #{net_forward.4} parent=0
    _
  %s6 = ssub.s32 1, %s4
  %s7 = scalar_select 0, %s6, %s4
  loop: start=0, step=1, limit=4
  $region2: #{net_forward.4} parent=0 // loop_pre_header
    _
  $region3: #{net_forward.4} parent=0 // loop_header
    %s9 = sphi 0, %s13
    %p10 = scmp.ge.s32.totalorder %s9, 4
    %s17 = sphi 0, %s17
    %s19 = sphi 0, %s17
    %s20 = sphi 0, %s19
    %s34 = sphi 0, %s20
    %s38 = sphi 0, %s38
    %s40 = sphi 0, %s38
    %s41 = sphi 0, %s40
    %s55 = sphi 0, %s41
    %s61 = sphi 0, %s63
    %s64 = sphi 0, %s61
    %s65 = sphi 0, %s64
    %s81 = sphi 0, %s65
    %s87 = sphi 0, %s89
    %s90 = sphi 0, %s87
    %s91 = sphi 0, %s90
    %s107 = sphi 0, %s91
  $region4: #{net_forward.4} parent=0 // loop_header_branch
    %12 = sbr.rel (%p10) target = $region8
  $region5: #{net_forward.4} parent=0 // loop_body
    %s14 = ssub.s32 %s9, 1
    %s15 = ssub.s32 %s9, 2
    %s16 = sadd.s32 %s9, 1
    %s18 = sadd.s32 %s17, 1
    %p21 = scmp.eq.s32.totalorder %s9, 1
    %p22 = scmp.ne.s32.totalorder %s17, %s19
    %p23 = scmp.eq.s32.totalorder %s9, 0
    %p24 = por %p22, %p23
    %p25 = scmp.ne.s32.totalorder %s17, %s19
    %p26 = scmp.eq.s32.totalorder %s14, 1
    %p27 = por %p25, %p26
    %p28 = scmp.ne.s32.totalorder %s19, %s20
    %p29 = scmp.eq.s32.totalorder %s14, 0
    %p30 = por %p28, %p29
    %p31 = scmp.ne.s32.totalorder %s19, %s20
    %p32 = scmp.eq.s32.totalorder %s15, 1
    %p33 = por %p31, %p32
    %p35 = scmp.ne.s32.totalorder %s20, %s34
    %p36 = scmp.eq.s32.totalorder %s15, 0
    %p37 = por %p35, %p36
    %s39 = sadd.s32 %s38, 1
    %p42 = scmp.eq.s32.totalorder %s9, 1
    %p43 = scmp.ne.s32.totalorder %s38, %s40
    %p44 = scmp.eq.s32.totalorder %s9, 0
    %p45 = por %p43, %p44
    %p46 = scmp.ne.s32.totalorder %s38, %s40
    %p47 = scmp.eq.s32.totalorder %s14, 1
    %p48 = por %p46, %p47
    %p49 = scmp.ne.s32.totalorder %s40, %s41
    %p50 = scmp.eq.s32.totalorder %s14, 0
    %p51 = por %p49, %p50
    %p52 = scmp.ne.s32.totalorder %s40, %s41
    %p53 = scmp.eq.s32.totalorder %s15, 1
    %p54 = por %p52, %p53
    %p56 = scmp.ne.s32.totalorder %s41, %s55
    %p57 = scmp.eq.s32.totalorder %s15, 0
    %p58 = por %p56, %p57
    %s59 = ssub.s32 %s9, %s16
    %p60 = scmp.eq.s32.totalorder %s59, 0
    %s62 = sadd.s32 %s61, 1
    %s63 = scalar_select %p60, %s61, %s62
    %p66 = pneg %p60
    %p67 = scmp.eq.s32.totalorder %s9, 1
    %p68 = por %p66, %p67
    %p69 = scmp.ne.s32.totalorder %s61, %s64
    %p70 = scmp.eq.s32.totalorder %s9, 0
    %p71 = por %p69, %p70
    %p72 = scmp.ne.s32.totalorder %s61, %s64
    %p73 = scmp.eq.s32.totalorder %s14, 1
    %p74 = por %p72, %p73
    %p75 = scmp.ne.s32.totalorder %s64, %s65
    %p76 = scmp.eq.s32.totalorder %s14, 0
    %p77 = por %p75, %p76
    %p78 = scmp.ne.s32.totalorder %s64, %s65
    %p79 = scmp.eq.s32.totalorder %s15, 1
    %p80 = por %p78, %p79
    %p82 = scmp.ne.s32.totalorder %s65, %s81
    %p83 = scmp.eq.s32.totalorder %s15, 0
    %p84 = por %p82, %p83
    %s85 = ssub.s32 %s9, %s16
    %p86 = scmp.eq.s32.totalorder %s85, 0
    %s88 = sadd.s32 %s87, 1
    %s89 = scalar_select %p86, %s87, %s88
    %p92 = pneg %p86
    %p93 = scmp.eq.s32.totalorder %s9, 1
    %p94 = por %p92, %p93
    %p95 = scmp.ne.s32.totalorder %s87, %s90
    %p96 = scmp.eq.s32.totalorder %s9, 0
    %p97 = por %p95, %p96
    %p98 = scmp.ne.s32.totalorder %s87, %s90
    %p99 = scmp.eq.s32.totalorder %s14, 1
    %p100 = por %p98, %p99
    %p101 = scmp.ne.s32.totalorder %s90, %s91
    %p102 = scmp.eq.s32.totalorder %s14, 0
    %p103 = por %p101, %p102
    %p104 = scmp.ne.s32.totalorder %s90, %s91
    %p105 = scmp.eq.s32.totalorder %s15, 1
    %p106 = por %p104, %p105
    %p108 = scmp.ne.s32.totalorder %s91, %s107
    %p109 = scmp.eq.s32.totalorder %s15, 0
    %p110 = por %p108, %p109
    %p111 = scmp.le.s32.totalorder 1, %s9
    %p112 = scmp.lt.s32.totalorder %s9, 3
    %p113 = pnand %p111, %p112
    %p114 = pneg %p113
    // Predicated region
    $region9: #{net_forward.4} parent=5 // pred_check
      _
    $region10: #{net_forward.4} parent=5 // pred_check_branch
      %116 = sbr.rel (%p113) target = $region12
    $region11: #{net_forward.4} parent=5 // pred_region
      %s117 = ssub.s32 %s9, 1
      // Predicated region
      $region13: #{net_forward.4} parent=11 // pred_check
        %p118 = pneg %p30
      $region14: #{net_forward.4} parent=11 // pred_check_branch
        %120 = sbr.rel (%p118) target = $region16
      $region15: #{net_forward.4} parent=11 // pred_region
        _
      $region16: #{net_forward.4} parent=11 // pred_fallthru
        _
      // Predicated region
      $region17: #{net_forward.4} parent=11 // pred_check
        %p121 = pneg %p51
      $region18: #{net_forward.4} parent=11 // pred_check_branch
        %123 = sbr.rel (%p121) target = $region20
      $region19: #{net_forward.4} parent=11 // pred_region
        _
      $region20: #{net_forward.4} parent=11 // pred_fallthru
        _
    $region12: #{net_forward.4} parent=5 // pred_fallthru
      _
    %p124 = scmp.lt.s32.totalorder %s9, 2
    // Predicated region
    $region21: #{net_forward.4} parent=5 // pred_check
      %p125 = pneg %p124
    $region22: #{net_forward.4} parent=5 // pred_check_branch
      %127 = sbr.rel (%p125) target = $region24
    $region23: #{net_forward.4} parent=5 // pred_region
      // Predicated region
      $region25: #{net_forward.4} parent=23 // pred_check
        %p128 = pneg %p71
      $region26: #{net_forward.4} parent=23 // pred_check_branch
        %130 = sbr.rel (%p128) target = $region28
      $region27: #{net_forward.4} parent=23 // pred_region
        %p131 = scmp.lt.s32.totalorder %s9, 1
        %s132 = scalar_select %p131, %s9, 1
        %s133 = smul.addr %s132, 2
        %s134 = smul.addr %s133, 4
        %s135 = scalar_lea.vmem %s2, %s134
      $region28: #{net_forward.4} parent=23 // pred_fallthru
        _
    $region24: #{net_forward.4} parent=5 // pred_fallthru
      _
    %p136 = scmp.le.s32.totalorder 1, %s9
    %p137 = scmp.lt.s32.totalorder %s9, 3
    %p138 = pnand %p136, %p137
    %p139 = pneg %p138
    // Predicated region
    $region29: #{net_forward.4} parent=5 // pred_check
      _
    $region30: #{net_forward.4} parent=5 // pred_check_branch
      %141 = sbr.rel (%p138) target = $region32
    $region31: #{net_forward.4} parent=5 // pred_region
      %s142 = ssub.s32 %s9, 1
      %p143 = pneg %p30
      %p144 = pneg %p27
      %p145 = pneg %p51
      %p146 = pneg %p48
      %p147 = scmp.lt.s32.totalorder %s14, 1
      %s148 = scalar_select %p147, %s14, 1
      %s149 = smul.addr %s148, 2
      %s150 = smul.addr %s149, 4
      %s151 = scalar_lea.vmem %s2, %s150
      %p152 = pneg %p77
      %p153 = pneg %p74
      %p154 = pneg %p103
      %p155 = pneg %p100
      %p156 = scmp.lt.s32.totalorder %s14, 1
      %s157 = scalar_select %p156, %s14, 1
      %s158 = smul.addr %s157, 4
      %s159 = smul.addr %s158, 4
      %s160 = scalar_lea.vmem %s3, %s159
      %p161 = scmp.lt.s32.totalorder %s14, 1
      %s162 = scalar_select %p161, %s14, 1
      %s163 = smul.addr %s162, 2
      %s164 = smul.addr %s163, 4
      %s165 = scalar_lea.vmem %s2, %s164
      %p166 = scmp.lt.s32.totalorder %s14, 1
      %s167 = scalar_select %p166, %s14, 1
      %s168 = smul.addr %s167, 4
      %s169 = smul.addr %s168, 4
      %s170 = scalar_lea.vmem %s3, %s169
      %v172 = vld [vmem:[%s165] sm:$0x77]
      %v173 = vld [vmem:[%s0] sm:$0xf]
      %v174 = vld [vmem:[%s0 + $0x4] sm:$0xf]
      %s175 = scalar_lea.vmem %s0, 8
      %v176 = vld [vmem:[%s175] sm:$0xf]
      %v177 = vld [vmem:[%s175 + $0x4] sm:$0xf]
      %v180 = vunpack.c.l.b16 %v176
      %v181 = vunpack.c.l.b16 %v177
      %v182 = vpack.c.b16 %v181, %v180
      %v184 = vunpack.c.l.b16 %v172
      %v185 = vunpack.c.h.b16 %v172
      %v186 = vpack.c.b16 %v184, %v184
      %v187 = vpack.c.b16 %v185, %v185
      %188 = vrot.lane.b32.xlu0 %v186, 127
      %v189 = vpop.permute.xlu0 %188
      %190 = vrot.lane.b32.xlu0 %v187, 127
      %v191 = vpop.permute.xlu0 %190
      %vm192 = vcmask 1039360
      %v193 = vsel %vm192, %v189, %v191
      %vm194 = vcmask 48128
      %v196 = vsel %vm194, %v182, 0
      %vm198 = vcmask 1042432
      %v200 = vsel %vm198, %v193, 0
      %v203 = vsel %vm198, %v191, 0
      %205 = vmatpush.bf16.msra.mxu0 0
      %206 = vmatpush.bf16.msra.mxu0 0
      %207 = vmatpush.bf16.msra.mxu0 0
      %208 = vmatpush.bf16.msra.mxu0 0
      %209 = vmatpush.bf16.msra.mxu0 0
      %210 = vmatpush.bf16.msra.mxu0 0
      %211 = vmatpush.bf16.msra.mxu0 0
      %212 = vmatpush.bf16.msra.mxu0 %v200
      %213 = vmatmul.bf16.gmra.mxu0 %v196
      %v214 = vpop.f32.mrf.mxu0
      %v215 = vadd.f32 0.0, %v214
      %v216 = vpop.f32.mrf.mxu0
      %v217 = vadd.f32 0.0, %v216
      %218 = vdwg.mxu0
      %219 = vmatpush.bf16.msra.mxu0 0
      %220 = vmatpush.bf16.msra.mxu0 0
      %221 = vmatpush.bf16.msra.mxu0 0
      %222 = vmatpush.bf16.msra.mxu0 0
      %223 = vmatpush.bf16.msra.mxu0 0
      %224 = vmatpush.bf16.msra.mxu0 0
      %225 = vmatpush.bf16.msra.mxu0 0
      %226 = vmatpush.bf16.msra.mxu0 %v203
      %227 = vmatmul.bf16.gmra.mxu0 %v196
      %v228 = vpop.f32.mrf.mxu0
      %v229 = vadd.f32 0.0, %v228
      %v230 = vpop.f32.mrf.mxu0
      %v231 = vadd.f32 0.0, %v230
      %232 = vdwg.mxu0
      %v235 = vunpack.c.l.b16 %v173
      %v236 = vunpack.c.l.b16 %v174
      %v237 = vpack.c.b16 %v236, %v235
      %v239 = vsel %vm194, %v237, 0
      %v242 = vsel %vm198, %v186, 0
      %v245 = vsel %vm198, %v187, 0
      %247 = vmatpush.bf16.msra.mxu0 0
      %248 = vmatpush.bf16.msra.mxu0 0
      %249 = vmatpush.bf16.msra.mxu0 0
      %250 = vmatpush.bf16.msra.mxu0 0
      %251 = vmatpush.bf16.msra.mxu0 0
      %252 = vmatpush.bf16.msra.mxu0 0
      %253 = vmatpush.bf16.msra.mxu0 0
      %254 = vmatpush.bf16.msra.mxu0 %v242
      %255 = vmatmul.bf16.gmra.mxu0 %v239
      %v256 = vpop.f32.mrf.mxu0
      %v257 = vadd.f32 %v215, %v256
      %v258 = vpop.f32.mrf.mxu0
      %v259 = vadd.f32 %v217, %v258
      %260 = vdwg.mxu0
      %261 = vmatpush.bf16.msra.mxu0 0
      %262 = vmatpush.bf16.msra.mxu0 0
      %263 = vmatpush.bf16.msra.mxu0 0
      %264 = vmatpush.bf16.msra.mxu0 0
      %265 = vmatpush.bf16.msra.mxu0 0
      %266 = vmatpush.bf16.msra.mxu0 0
      %267 = vmatpush.bf16.msra.mxu0 0
      %268 = vmatpush.bf16.msra.mxu0 %v245
      %269 = vmatmul.bf16.gmra.mxu0 %v239
      %v270 = vpop.f32.mrf.mxu0
      %v271 = vadd.f32 %v229, %v270
      %v272 = vpop.f32.mrf.mxu0
      %v273 = vadd.f32 %v231, %v272
      %274 = vdwg.mxu0
      %s275 = scalar_lea.vmem %s0, 16
      %v276 = vld [vmem:[%s275] sm:$0xf]
      %v277 = vld [vmem:[%s275 + $0x4] sm:$0xf]
      %v280 = vunpack.c.l.b16 %v276
      %v281 = vunpack.c.l.b16 %v277
      %v282 = vpack.c.b16 %v281, %v280
      %283 = vrot.lane.b32.xlu0 %v186, 126
      %v284 = vpop.permute.xlu0 %283
      %285 = vrot.lane.b32.xlu0 %v187, 126
      %v286 = vpop.permute.xlu0 %285
      %vm287 = vcmask 1031168
      %v288 = vsel %vm287, %v284, %v286
      %v290 = vsel %vm194, %v282, 0
      %v293 = vsel %vm198, %v288, 0
      %v296 = vsel %vm198, %v286, 0
      %298 = vmatpush.bf16.msra.mxu0 0
      %299 = vmatpush.bf16.msra.mxu0 0
      %300 = vmatpush.bf16.msra.mxu0 0
      %301 = vmatpush.bf16.msra.mxu0 0
      %302 = vmatpush.bf16.msra.mxu0 0
      %303 = vmatpush.bf16.msra.mxu0 0
      %304 = vmatpush.bf16.msra.mxu0 0
      %305 = vmatpush.bf16.msra.mxu0 %v293
      %306 = vmatmul.bf16.gmra.mxu0 %v290
      %v307 = vpop.f32.mrf.mxu0
      %v308 = vadd.f32 0.0, %v307
      %v309 = vpop.f32.mrf.mxu0
      %v310 = vadd.f32 0.0, %v309
      %311 = vdwg.mxu0
      %312 = vmatpush.bf16.msra.mxu0 0
      %313 = vmatpush.bf16.msra.mxu0 0
      %314 = vmatpush.bf16.msra.mxu0 0
      %315 = vmatpush.bf16.msra.mxu0 0
      %316 = vmatpush.bf16.msra.mxu0 0
      %317 = vmatpush.bf16.msra.mxu0 0
      %318 = vmatpush.bf16.msra.mxu0 0
      %319 = vmatpush.bf16.msra.mxu0 %v296
      %320 = vmatmul.bf16.gmra.mxu0 %v290
      %v321 = vpop.f32.mrf.mxu0
      %v322 = vadd.f32 0.0, %v321
      %v323 = vpop.f32.mrf.mxu0
      %v324 = vadd.f32 0.0, %v323
      %325 = vdwg.mxu0
      %v326 = vadd.f32 %v257, %v308
      %v327 = vadd.f32 %v271, %v322
      %v328 = vadd.f32 %v259, %v310
      %v329 = vadd.f32 %v273, %v324
      %s330 = scalar_lea.vmem %s0, 24
      %v331 = vld [vmem:[%s330] sm:$0xf]
      %v332 = vld [vmem:[%s330 + $0x4] sm:$0xf]
      %v335 = vunpack.c.l.b16 %v331
      %v336 = vunpack.c.l.b16 %v332
      %v337 = vpack.c.b16 %v336, %v335
      %338 = vrot.lane.b32.xlu0 %v186, 125
      %v339 = vpop.permute.xlu0 %338
      %340 = vrot.lane.b32.xlu0 %v187, 125
      %v341 = vpop.permute.xlu0 %340
      %vm342 = vcmask 1022976
      %v343 = vsel %vm342, %v339, %v341
      %v345 = vsel %vm194, %v337, 0
      %v348 = vsel %vm198, %v343, 0
      %v351 = vsel %vm198, %v341, 0
      %353 = vmatpush.bf16.msra.mxu0 0
      %354 = vmatpush.bf16.msra.mxu0 0
      %355 = vmatpush.bf16.msra.mxu0 0
      %356 = vmatpush.bf16.msra.mxu0 0
      %357 = vmatpush.bf16.msra.mxu0 0
      %358 = vmatpush.bf16.msra.mxu0 0
      %359 = vmatpush.bf16.msra.mxu0 0
      %360 = vmatpush.bf16.msra.mxu0 %v348
      %361 = vmatmul.bf16.gmra.mxu0 %v345
      %v362 = vpop.f32.mrf.mxu0
      %v363 = vadd.f32 0.0, %v362
      %v364 = vpop.f32.mrf.mxu0
      %v365 = vadd.f32 0.0, %v364
      %366 = vdwg.mxu0
      %367 = vmatpush.bf16.msra.mxu0 0
      %368 = vmatpush.bf16.msra.mxu0 0
      %369 = vmatpush.bf16.msra.mxu0 0
      %370 = vmatpush.bf16.msra.mxu0 0
      %371 = vmatpush.bf16.msra.mxu0 0
      %372 = vmatpush.bf16.msra.mxu0 0
      %373 = vmatpush.bf16.msra.mxu0 0
      %374 = vmatpush.bf16.msra.mxu0 %v351
      %375 = vmatmul.bf16.gmra.mxu0 %v345
      %v376 = vpop.f32.mrf.mxu0
      %v377 = vadd.f32 0.0, %v376
      %v378 = vpop.f32.mrf.mxu0
      %v379 = vadd.f32 0.0, %v378
      %380 = vdwg.mxu0
      %v381 = vadd.f32 %v326, %v363
      %v382 = vadd.f32 %v327, %v377
      %v383 = vadd.f32 %v328, %v365
      %v384 = vadd.f32 %v329, %v379
      %s385 = scalar_lea.vmem %s0, 32
      %v386 = vld [vmem:[%s385] sm:$0xf]
      %v387 = vld [vmem:[%s385 + $0x4] sm:$0xf]
      %v390 = vunpack.c.l.b16 %v386
      %v391 = vunpack.c.l.b16 %v387
      %v392 = vpack.c.b16 %v391, %v390
      %393 = vrot.lane.b32.xlu0 %v186, 124
      %v394 = vpop.permute.xlu0 %393
      %395 = vrot.lane.b32.xlu0 %v187, 124
      %v396 = vpop.permute.xlu0 %395
      %vm397 = vcmask 1014784
      %v398 = vsel %vm397, %v394, %v396
      %v400 = vsel %vm194, %v392, 0
      %v403 = vsel %vm198, %v398, 0
      %v406 = vsel %vm198, %v396, 0
      %408 = vmatpush.bf16.msra.mxu0 0
      %409 = vmatpush.bf16.msra.mxu0 0
      %410 = vmatpush.bf16.msra.mxu0 0
      %411 = vmatpush.bf16.msra.mxu0 0
      %412 = vmatpush.bf16.msra.mxu0 0
      %413 = vmatpush.bf16.msra.mxu0 0
      %414 = vmatpush.bf16.msra.mxu0 0
      %415 = vmatpush.bf16.msra.mxu0 %v403
      %416 = vmatmul.bf16.gmra.mxu0 %v400
      %v417 = vpop.f32.mrf.mxu0
      %v418 = vadd.f32 0.0, %v417
      %v419 = vpop.f32.mrf.mxu0
      %v420 = vadd.f32 0.0, %v419
      %421 = vdwg.mxu0
      %422 = vmatpush.bf16.msra.mxu0 0
      %423 = vmatpush.bf16.msra.mxu0 0
      %424 = vmatpush.bf16.msra.mxu0 0
      %425 = vmatpush.bf16.msra.mxu0 0
      %426 = vmatpush.bf16.msra.mxu0 0
      %427 = vmatpush.bf16.msra.mxu0 0
      %428 = vmatpush.bf16.msra.mxu0 0
      %429 = vmatpush.bf16.msra.mxu0 %v406
      %430 = vmatmul.bf16.gmra.mxu0 %v400
      %v431 = vpop.f32.mrf.mxu0
      %v432 = vadd.f32 0.0, %v431
      %v433 = vpop.f32.mrf.mxu0
      %v434 = vadd.f32 0.0, %v433
      %435 = vdwg.mxu0
      %v436 = vadd.f32 %v381, %v418
      %v437 = vadd.f32 %v382, %v432
      %v438 = vadd.f32 %v383, %v420
      %v439 = vadd.f32 %v384, %v434
      %s440 = scalar_lea.vmem %s0, 40
      %v441 = vld [vmem:[%s440] sm:$0xf]
      %v442 = vld [vmem:[%s440 + $0x4] sm:$0xf]
      %v445 = vunpack.c.l.b16 %v441
      %v446 = vunpack.c.l.b16 %v442
      %v447 = vpack.c.b16 %v446, %v445
      %448 = vrot.lane.b32.xlu0 %v186, 114
      %v449 = vpop.permute.xlu0 %448
      %450 = vrot.lane.b32.xlu0 %v187, 114
      %v451 = vpop.permute.xlu0 %450
      %vm452 = vcmask 932864
      %v453 = vsel %vm452, %v449, %v451
      %v455 = vsel %vm194, %v447, 0
      %v458 = vsel %vm198, %v453, 0
      %v461 = vsel %vm198, %v451, 0
      %463 = vmatpush.bf16.msra.mxu0 0
      %464 = vmatpush.bf16.msra.mxu0 0
      %465 = vmatpush.bf16.msra.mxu0 0
      %466 = vmatpush.bf16.msra.mxu0 0
      %467 = vmatpush.bf16.msra.mxu0 0
      %468 = vmatpush.bf16.msra.mxu0 0
      %469 = vmatpush.bf16.msra.mxu0 0
      %470 = vmatpush.bf16.msra.mxu0 %v458
      %471 = vmatmul.bf16.gmra.mxu0 %v455
      %v472 = vpop.f32.mrf.mxu0
      %v473 = vadd.f32 0.0, %v472
      %v474 = vpop.f32.mrf.mxu0
      %v475 = vadd.f32 0.0, %v474
      %476 = vdwg.mxu0
      %477 = vmatpush.bf16.msra.mxu0 0
      %478 = vmatpush.bf16.msra.mxu0 0
      %479 = vmatpush.bf16.msra.mxu0 0
      %480 = vmatpush.bf16.msra.mxu0 0
      %481 = vmatpush.bf16.msra.mxu0 0
      %482 = vmatpush.bf16.msra.mxu0 0
      %483 = vmatpush.bf16.msra.mxu0 0
      %484 = vmatpush.bf16.msra.mxu0 %v461
      %485 = vmatmul.bf16.gmra.mxu0 %v455
      %v486 = vpop.f32.mrf.mxu0
      %v487 = vadd.f32 0.0, %v486
      %v488 = vpop.f32.mrf.mxu0
      %v489 = vadd.f32 0.0, %v488
      %490 = vdwg.mxu0
      %v491 = vadd.f32 %v436, %v473
      %v492 = vadd.f32 %v437, %v487
      %v493 = vadd.f32 %v438, %v475
      %v494 = vadd.f32 %v439, %v489
      %s495 = scalar_lea.vmem %s0, 48
      %v496 = vld [vmem:[%s495] sm:$0xf]
      %v497 = vld [vmem:[%s495 + $0x4] sm:$0xf]
      %v500 = vunpack.c.l.b16 %v496
      %v501 = vunpack.c.l.b16 %v497
      %v502 = vpack.c.b16 %v501, %v500
      %503 = vrot.lane.b32.xlu0 %v186, 113
      %v504 = vpop.permute.xlu0 %503
      %505 = vrot.lane.b32.xlu0 %v187, 113
      %v506 = vpop.permute.xlu0 %505
      %vm507 = vcmask 924672
      %v508 = vsel %vm507, %v504, %v506
      %v510 = vsel %vm194, %v502, 0
      %v513 = vsel %vm198, %v508, 0
      %v516 = vsel %vm198, %v506, 0
      %518 = vmatpush.bf16.msra.mxu0 0
      %519 = vmatpush.bf16.msra.mxu0 0
      %520 = vmatpush.bf16.msra.mxu0 0
      %521 = vmatpush.bf16.msra.mxu0 0
      %522 = vmatpush.bf16.msra.mxu0 0
      %523 = vmatpush.bf16.msra.mxu0 0
      %524 = vmatpush.bf16.msra.mxu0 0
      %525 = vmatpush.bf16.msra.mxu0 %v513
      %526 = vmatmul.bf16.gmra.mxu0 %v510
      %v527 = vpop.f32.mrf.mxu0
      %v528 = vadd.f32 0.0, %v527
      %v529 = vpop.f32.mrf.mxu0
      %v530 = vadd.f32 0.0, %v529
      %531 = vdwg.mxu0
      %532 = vmatpush.bf16.msra.mxu0 0
      %533 = vmatpush.bf16.msra.mxu0 0
      %534 = vmatpush.bf16.msra.mxu0 0
      %535 = vmatpush.bf16.msra.mxu0 0
      %536 = vmatpush.bf16.msra.mxu0 0
      %537 = vmatpush.bf16.msra.mxu0 0
      %538 = vmatpush.bf16.msra.mxu0 0
      %539 = vmatpush.bf16.msra.mxu0 %v516
      %540 = vmatmul.bf16.gmra.mxu0 %v510
      %v541 = vpop.f32.mrf.mxu0
      %v542 = vadd.f32 0.0, %v541
      %v543 = vpop.f32.mrf.mxu0
      %v544 = vadd.f32 0.0, %v543
      %545 = vdwg.mxu0
      %v546 = vadd.f32 %v491, %v528
      %v547 = vadd.f32 %v492, %v542
      %v548 = vadd.f32 %v493, %v530
      %v549 = vadd.f32 %v494, %v544
      %s550 = scalar_lea.vmem %s0, 56
      %v551 = vld [vmem:[%s550] sm:$0xf]
      %v552 = vld [vmem:[%s550 + $0x4] sm:$0xf]
      %v555 = vunpack.c.l.b16 %v551
      %v556 = vunpack.c.l.b16 %v552
      %v557 = vpack.c.b16 %v556, %v555
      %558 = vrot.lane.b32.xlu0 %v186, 112
      %v559 = vpop.permute.xlu0 %558
      %560 = vrot.lane.b32.xlu0 %v187, 112
      %v561 = vpop.permute.xlu0 %560
      %vm562 = vcmask 916480
      %v563 = vsel %vm562, %v559, %v561
      %v565 = vsel %vm194, %v557, 0
      %v568 = vsel %vm198, %v563, 0
      %v571 = vsel %vm198, %v561, 0
      %573 = vmatpush.bf16.msra.mxu0 0
      %574 = vmatpush.bf16.msra.mxu0 0
      %575 = vmatpush.bf16.msra.mxu0 0
      %576 = vmatpush.bf16.msra.mxu0 0
      %577 = vmatpush.bf16.msra.mxu0 0
      %578 = vmatpush.bf16.msra.mxu0 0
      %579 = vmatpush.bf16.msra.mxu0 0
      %580 = vmatpush.bf16.msra.mxu0 %v568
      %581 = vmatmul.bf16.gmra.mxu0 %v565
      %v582 = vpop.f32.mrf.mxu0
      %v583 = vadd.f32 0.0, %v582
      %v584 = vpop.f32.mrf.mxu0
      %v585 = vadd.f32 0.0, %v584
      %586 = vdwg.mxu0
      %587 = vmatpush.bf16.msra.mxu0 0
      %588 = vmatpush.bf16.msra.mxu0 0
      %589 = vmatpush.bf16.msra.mxu0 0
      %590 = vmatpush.bf16.msra.mxu0 0
      %591 = vmatpush.bf16.msra.mxu0 0
      %592 = vmatpush.bf16.msra.mxu0 0
      %593 = vmatpush.bf16.msra.mxu0 0
      %594 = vmatpush.bf16.msra.mxu0 %v571
      %595 = vmatmul.bf16.gmra.mxu0 %v565
      %v596 = vpop.f32.mrf.mxu0
      %v597 = vadd.f32 0.0, %v596
      %v598 = vpop.f32.mrf.mxu0
      %v599 = vadd.f32 0.0, %v598
      %600 = vdwg.mxu0
      %v601 = vadd.f32 %v546, %v583
      %v602 = vadd.f32 %v547, %v597
      %v603 = vadd.f32 %v548, %v585
      %v604 = vadd.f32 %v549, %v599
      %s605 = scalar_lea.vmem %s0, 64
      %v606 = vld [vmem:[%s605] sm:$0xf]
      %v607 = vld [vmem:[%s605 + $0x4] sm:$0xf]
      %v610 = vunpack.c.l.b16 %v606
      %v611 = vunpack.c.l.b16 %v607
      %v612 = vpack.c.b16 %v611, %v610
      %613 = vrot.lane.b32.xlu0 %v186, 111
      %v614 = vpop.permute.xlu0 %613
      %615 = vrot.lane.b32.xlu0 %v187, 111
      %v616 = vpop.permute.xlu0 %615
      %vm617 = vcmask 908288
      %v618 = vsel %vm617, %v614, %v616
      %v620 = vsel %vm194, %v612, 0
      %v623 = vsel %vm198, %v618, 0
      %v626 = vsel %vm198, %v616, 0
      %628 = vmatpush.bf16.msra.mxu0 0
      %629 = vmatpush.bf16.msra.mxu0 0
      %630 = vmatpush.bf16.msra.mxu0 0
      %631 = vmatpush.bf16.msra.mxu0 0
      %632 = vmatpush.bf16.msra.mxu0 0
      %633 = vmatpush.bf16.msra.mxu0 0
      %634 = vmatpush.bf16.msra.mxu0 0
      %635 = vmatpush.bf16.msra.mxu0 %v623
      %636 = vmatmul.bf16.gmra.mxu0 %v620
      %v637 = vpop.f32.mrf.mxu0
      %v638 = vadd.f32 0.0, %v637
      %v639 = vpop.f32.mrf.mxu0
      %v640 = vadd.f32 0.0, %v639
      %641 = vdwg.mxu0
      %642 = vmatpush.bf16.msra.mxu0 0
      %643 = vmatpush.bf16.msra.mxu0 0
      %644 = vmatpush.bf16.msra.mxu0 0
      %645 = vmatpush.bf16.msra.mxu0 0
      %646 = vmatpush.bf16.msra.mxu0 0
      %647 = vmatpush.bf16.msra.mxu0 0
      %648 = vmatpush.bf16.msra.mxu0 0
      %649 = vmatpush.bf16.msra.mxu0 %v626
      %650 = vmatmul.bf16.gmra.mxu0 %v620
      %v651 = vpop.f32.mrf.mxu0
      %v652 = vadd.f32 0.0, %v651
      %v653 = vpop.f32.mrf.mxu0
      %v654 = vadd.f32 0.0, %v653
      %655 = vdwg.mxu0
      %v656 = vadd.f32 %v601, %v638
      %v657 = vadd.f32 %v602, %v652
      %v658 = vadd.f32 %v603, %v640
      %v659 = vadd.f32 %v604, %v654
      %s660 = scalar_lea.vmem %s0, 72
      %v661 = vld [vmem:[%s660] sm:$0xf]
      %v662 = vld [vmem:[%s660 + $0x4] sm:$0xf]
      %v665 = vunpack.c.l.b16 %v661
      %v666 = vunpack.c.l.b16 %v662
      %v667 = vpack.c.b16 %v666, %v665
      %668 = vrot.lane.b32.xlu0 %v186, 110
      %v669 = vpop.permute.xlu0 %668
      %670 = vrot.lane.b32.xlu0 %v187, 110
      %v671 = vpop.permute.xlu0 %670
      %vm672 = vcmask 900096
      %v673 = vsel %vm672, %v669, %v671
      %v675 = vsel %vm194, %v667, 0
      %v678 = vsel %vm198, %v673, 0
      %v681 = vsel %vm198, %v671, 0
      %683 = vmatpush.bf16.msra.mxu0 0
      %684 = vmatpush.bf16.msra.mxu0 0
      %685 = vmatpush.bf16.msra.mxu0 0
      %686 = vmatpush.bf16.msra.mxu0 0
      %687 = vmatpush.bf16.msra.mxu0 0
      %688 = vmatpush.bf16.msra.mxu0 0
      %689 = vmatpush.bf16.msra.mxu0 0
      %690 = vmatpush.bf16.msra.mxu0 %v678
      %691 = vmatmul.bf16.gmra.mxu0 %v675
      %v692 = vpop.f32.mrf.mxu0
      %v693 = vadd.f32 0.0, %v692
      %v694 = vpop.f32.mrf.mxu0
      %v695 = vadd.f32 0.0, %v694
      %696 = vdwg.mxu0
      %697 = vmatpush.bf16.msra.mxu0 0
      %698 = vmatpush.bf16.msra.mxu0 0
      %699 = vmatpush.bf16.msra.mxu0 0
      %700 = vmatpush.bf16.msra.mxu0 0
      %701 = vmatpush.bf16.msra.mxu0 0
      %702 = vmatpush.bf16.msra.mxu0 0
      %703 = vmatpush.bf16.msra.mxu0 0
      %704 = vmatpush.bf16.msra.mxu0 %v681
      %705 = vmatmul.bf16.gmra.mxu0 %v675
      %v706 = vpop.f32.mrf.mxu0
      %v707 = vadd.f32 0.0, %v706
      %v708 = vpop.f32.mrf.mxu0
      %v709 = vadd.f32 0.0, %v708
      %710 = vdwg.mxu0
      %v711 = vadd.f32 %v656, %v693
      %v712 = vadd.f32 %v657, %v707
      %v713 = vadd.f32 %v658, %v695
      %v714 = vadd.f32 %v659, %v709
      %s715 = scalar_lea.vmem %s0, 80
      %v716 = vld [vmem:[%s715] sm:$0xf]
      %v717 = vld [vmem:[%s715 + $0x4] sm:$0xf]
      %v720 = vunpack.c.l.b16 %v716
      %v721 = vunpack.c.l.b16 %v717
      %v722 = vpack.c.b16 %v721, %v720
      %723 = vrot.lane.b32.xlu0 %v186, 100
      %v724 = vpop.permute.xlu0 %723
      %725 = vrot.lane.b32.xlu0 %v187, 100
      %v726 = vpop.permute.xlu0 %725
      %vm727 = vcmask 818176
      %v728 = vsel %vm727, %v724, %v726
      %v730 = vsel %vm194, %v722, 0
      %v733 = vsel %vm198, %v728, 0
      %v736 = vsel %vm198, %v726, 0
      %738 = vmatpush.bf16.msra.mxu0 0
      %739 = vmatpush.bf16.msra.mxu0 0
      %740 = vmatpush.bf16.msra.mxu0 0
      %741 = vmatpush.bf16.msra.mxu0 0
      %742 = vmatpush.bf16.msra.mxu0 0
      %743 = vmatpush.bf16.msra.mxu0 0
      %744 = vmatpush.bf16.msra.mxu0 0
      %745 = vmatpush.bf16.msra.mxu0 %v733
      %746 = vmatmul.bf16.gmra.mxu0 %v730
      %v747 = vpop.f32.mrf.mxu0
      %v748 = vadd.f32 0.0, %v747
      %v749 = vpop.f32.mrf.mxu0
      %v750 = vadd.f32 0.0, %v749
      %751 = vdwg.mxu0
      %752 = vmatpush.bf16.msra.mxu0 0
      %753 = vmatpush.bf16.msra.mxu0 0
      %754 = vmatpush.bf16.msra.mxu0 0
      %755 = vmatpush.bf16.msra.mxu0 0
      %756 = vmatpush.bf16.msra.mxu0 0
      %757 = vmatpush.bf16.msra.mxu0 0
      %758 = vmatpush.bf16.msra.mxu0 0
      %759 = vmatpush.bf16.msra.mxu0 %v736
      %760 = vmatmul.bf16.gmra.mxu0 %v730
      %v761 = vpop.f32.mrf.mxu0
      %v762 = vadd.f32 0.0, %v761
      %v763 = vpop.f32.mrf.mxu0
      %v764 = vadd.f32 0.0, %v763
      %765 = vdwg.mxu0
      %v766 = vadd.f32 %v711, %v748
      %v767 = vadd.f32 %v712, %v762
      %v768 = vadd.f32 %v713, %v750
      %v769 = vadd.f32 %v714, %v764
      %s770 = scalar_lea.vmem %s0, 88
      %v771 = vld [vmem:[%s770] sm:$0xf]
      %v772 = vld [vmem:[%s770 + $0x4] sm:$0xf]
      %v775 = vunpack.c.l.b16 %v771
      %v776 = vunpack.c.l.b16 %v772
      %v777 = vpack.c.b16 %v776, %v775
      %778 = vrot.lane.b32.xlu0 %v186, 99
      %v779 = vpop.permute.xlu0 %778
      %780 = vrot.lane.b32.xlu0 %v187, 99
      %v781 = vpop.permute.xlu0 %780
      %vm782 = vcmask 809984
      %v783 = vsel %vm782, %v779, %v781
      %v785 = vsel %vm194, %v777, 0
      %v788 = vsel %vm198, %v783, 0
      %v791 = vsel %vm198, %v781, 0
      %793 = vmatpush.bf16.msra.mxu0 0
      %794 = vmatpush.bf16.msra.mxu0 0
      %795 = vmatpush.bf16.msra.mxu0 0
      %796 = vmatpush.bf16.msra.mxu0 0
      %797 = vmatpush.bf16.msra.mxu0 0
      %798 = vmatpush.bf16.msra.mxu0 0
      %799 = vmatpush.bf16.msra.mxu0 0
      %800 = vmatpush.bf16.msra.mxu0 %v788
      %801 = vmatmul.bf16.gmra.mxu0 %v785
      %v802 = vpop.f32.mrf.mxu0
      %v803 = vadd.f32 0.0, %v802
      %v804 = vpop.f32.mrf.mxu0
      %v805 = vadd.f32 0.0, %v804
      %806 = vdwg.mxu0
      %807 = vmatpush.bf16.msra.mxu0 0
      %808 = vmatpush.bf16.msra.mxu0 0
      %809 = vmatpush.bf16.msra.mxu0 0
      %810 = vmatpush.bf16.msra.mxu0 0
      %811 = vmatpush.bf16.msra.mxu0 0
      %812 = vmatpush.bf16.msra.mxu0 0
      %813 = vmatpush.bf16.msra.mxu0 0
      %814 = vmatpush.bf16.msra.mxu0 %v791
      %815 = vmatmul.bf16.gmra.mxu0 %v785
      %v816 = vpop.f32.mrf.mxu0
      %v817 = vadd.f32 0.0, %v816
      %v818 = vpop.f32.mrf.mxu0
      %v819 = vadd.f32 0.0, %v818
      %820 = vdwg.mxu0
      %v821 = vadd.f32 %v766, %v803
      %v822 = vadd.f32 %v767, %v817
      %v823 = vadd.f32 %v768, %v805
      %v824 = vadd.f32 %v769, %v819
      %s825 = scalar_lea.vmem %s0, 96
      %v826 = vld [vmem:[%s825] sm:$0xf]
      %v827 = vld [vmem:[%s825 + $0x4] sm:$0xf]
      %v830 = vunpack.c.l.b16 %v826
      %v831 = vunpack.c.l.b16 %v827
      %v832 = vpack.c.b16 %v831, %v830
      %833 = vrot.lane.b32.xlu0 %v186, 98
      %v834 = vpop.permute.xlu0 %833
      %835 = vrot.lane.b32.xlu0 %v187, 98
      %v836 = vpop.permute.xlu0 %835
      %vm837 = vcmask 801792
      %v838 = vsel %vm837, %v834, %v836
      %v840 = vsel %vm194, %v832, 0
      %v843 = vsel %vm198, %v838, 0
      %v846 = vsel %vm198, %v836, 0
      %848 = vmatpush.bf16.msra.mxu0 0
      %849 = vmatpush.bf16.msra.mxu0 0
      %850 = vmatpush.bf16.msra.mxu0 0
      %851 = vmatpush.bf16.msra.mxu0 0
      %852 = vmatpush.bf16.msra.mxu0 0
      %853 = vmatpush.bf16.msra.mxu0 0
      %854 = vmatpush.bf16.msra.mxu0 0
      %855 = vmatpush.bf16.msra.mxu0 %v843
      %856 = vmatmul.bf16.gmra.mxu0 %v840
      %v857 = vpop.f32.mrf.mxu0
      %v858 = vadd.f32 0.0, %v857
      %v859 = vpop.f32.mrf.mxu0
      %v860 = vadd.f32 0.0, %v859
      %861 = vdwg.mxu0
      %862 = vmatpush.bf16.msra.mxu0 0
      %863 = vmatpush.bf16.msra.mxu0 0
      %864 = vmatpush.bf16.msra.mxu0 0
      %865 = vmatpush.bf16.msra.mxu0 0
      %866 = vmatpush.bf16.msra.mxu0 0
      %867 = vmatpush.bf16.msra.mxu0 0
      %868 = vmatpush.bf16.msra.mxu0 0
      %869 = vmatpush.bf16.msra.mxu0 %v846
      %870 = vmatmul.bf16.gmra.mxu0 %v840
      %v871 = vpop.f32.mrf.mxu0
      %v872 = vadd.f32 0.0, %v871
      %v873 = vpop.f32.mrf.mxu0
      %v874 = vadd.f32 0.0, %v873
      %875 = vdwg.mxu0
      %v876 = vadd.f32 %v821, %v858
      %v877 = vadd.f32 %v822, %v872
      %v878 = vadd.f32 %v823, %v860
      %v879 = vadd.f32 %v824, %v874
      %s880 = scalar_lea.vmem %s0, 104
      %v881 = vld [vmem:[%s880] sm:$0xf]
      %v882 = vld [vmem:[%s880 + $0x4] sm:$0xf]
      %v885 = vunpack.c.l.b16 %v881
      %v886 = vunpack.c.l.b16 %v882
      %v887 = vpack.c.b16 %v886, %v885
      %888 = vrot.lane.b32.xlu0 %v186, 97
      %v889 = vpop.permute.xlu0 %888
      %890 = vrot.lane.b32.xlu0 %v187, 97
      %v891 = vpop.permute.xlu0 %890
      %vm892 = vcmask 793600
      %v893 = vsel %vm892, %v889, %v891
      %v895 = vsel %vm194, %v887, 0
      %v898 = vsel %vm198, %v893, 0
      %v901 = vsel %vm198, %v891, 0
      %903 = vmatpush.bf16.msra.mxu0 0
      %904 = vmatpush.bf16.msra.mxu0 0
      %905 = vmatpush.bf16.msra.mxu0 0
      %906 = vmatpush.bf16.msra.mxu0 0
      %907 = vmatpush.bf16.msra.mxu0 0
      %908 = vmatpush.bf16.msra.mxu0 0
      %909 = vmatpush.bf16.msra.mxu0 0
      %910 = vmatpush.bf16.msra.mxu0 %v898
      %911 = vmatmul.bf16.gmra.mxu0 %v895
      %v912 = vpop.f32.mrf.mxu0
      %v913 = vadd.f32 0.0, %v912
      %v914 = vpop.f32.mrf.mxu0
      %v915 = vadd.f32 0.0, %v914
      %916 = vdwg.mxu0
      %917 = vmatpush.bf16.msra.mxu0 0
      %918 = vmatpush.bf16.msra.mxu0 0
      %919 = vmatpush.bf16.msra.mxu0 0
      %920 = vmatpush.bf16.msra.mxu0 0
      %921 = vmatpush.bf16.msra.mxu0 0
      %922 = vmatpush.bf16.msra.mxu0 0
      %923 = vmatpush.bf16.msra.mxu0 0
      %924 = vmatpush.bf16.msra.mxu0 %v901
      %925 = vmatmul.bf16.gmra.mxu0 %v895
      %v926 = vpop.f32.mrf.mxu0
      %v927 = vadd.f32 0.0, %v926
      %v928 = vpop.f32.mrf.mxu0
      %v929 = vadd.f32 0.0, %v928
      %930 = vdwg.mxu0
      %v931 = vadd.f32 %v876, %v913
      %v932 = vadd.f32 %v877, %v927
      %v933 = vadd.f32 %v878, %v915
      %v934 = vadd.f32 %v879, %v929
      %s935 = scalar_lea.vmem %s0, 112
      %v936 = vld [vmem:[%s935] sm:$0xf]
      %v937 = vld [vmem:[%s935 + $0x4] sm:$0xf]
      %v940 = vunpack.c.l.b16 %v936
      %v941 = vunpack.c.l.b16 %v937
      %v942 = vpack.c.b16 %v941, %v940
      %943 = vrot.lane.b32.xlu0 %v186, 96
      %v944 = vpop.permute.xlu0 %943
      %945 = vrot.lane.b32.xlu0 %v187, 96
      %v946 = vpop.permute.xlu0 %945
      %vm947 = vcmask 785408
      %v948 = vsel %vm947, %v944, %v946
      %v950 = vsel %vm194, %v942, 0
      %v953 = vsel %vm198, %v948, 0
      %v956 = vsel %vm198, %v946, 0
      %958 = vmatpush.bf16.msra.mxu0 0
      %959 = vmatpush.bf16.msra.mxu0 0
      %960 = vmatpush.bf16.msra.mxu0 0
      %961 = vmatpush.bf16.msra.mxu0 0
      %962 = vmatpush.bf16.msra.mxu0 0
      %963 = vmatpush.bf16.msra.mxu0 0
      %964 = vmatpush.bf16.msra.mxu0 0
      %965 = vmatpush.bf16.msra.mxu0 %v953
      %966 = vmatmul.bf16.gmra.mxu0 %v950
      %v967 = vpop.f32.mrf.mxu0
      %v968 = vadd.f32 0.0, %v967
      %v969 = vpop.f32.mrf.mxu0
      %v970 = vadd.f32 0.0, %v969
      %971 = vdwg.mxu0
      %972 = vmatpush.bf16.msra.mxu0 0
      %973 = vmatpush.bf16.msra.mxu0 0
      %974 = vmatpush.bf16.msra.mxu0 0
      %975 = vmatpush.bf16.msra.mxu0 0
      %976 = vmatpush.bf16.msra.mxu0 0
      %977 = vmatpush.bf16.msra.mxu0 0
      %978 = vmatpush.bf16.msra.mxu0 0
      %979 = vmatpush.bf16.msra.mxu0 %v956
      %980 = vmatmul.bf16.gmra.mxu0 %v950
      %v981 = vpop.f32.mrf.mxu0
      %v982 = vadd.f32 0.0, %v981
      %v983 = vpop.f32.mrf.mxu0
      %v984 = vadd.f32 0.0, %v983
      %985 = vdwg.mxu0
      %v986 = vadd.f32 %v931, %v968
      %v987 = vadd.f32 %v932, %v982
      %v988 = vadd.f32 %v933, %v970
      %v989 = vadd.f32 %v934, %v984
      %s990 = scalar_lea.vmem %s0, 120
      %v991 = vld [vmem:[%s990] sm:$0xf]
      %v992 = vld [vmem:[%s990 + $0x4] sm:$0xf]
      %v995 = vunpack.c.l.b16 %v991
      %v996 = vunpack.c.l.b16 %v992
      %v997 = vpack.c.b16 %v996, %v995
      %998 = vrot.lane.b32.xlu0 %v186, 86
      %v999 = vpop.permute.xlu0 %998
      %1000 = vrot.lane.b32.xlu0 %v187, 86
      %v1001 = vpop.permute.xlu0 %1000
      %vm1002 = vcmask 703488
      %v1003 = vsel %vm1002, %v999, %v1001
      %v1005 = vsel %vm194, %v997, 0
      %v1008 = vsel %vm198, %v1003, 0
      %v1011 = vsel %vm198, %v1001, 0
      %1013 = vmatpush.bf16.msra.mxu0 0
      %1014 = vmatpush.bf16.msra.mxu0 0
      %1015 = vmatpush.bf16.msra.mxu0 0
      %1016 = vmatpush.bf16.msra.mxu0 0
      %1017 = vmatpush.bf16.msra.mxu0 0
      %1018 = vmatpush.bf16.msra.mxu0 0
      %1019 = vmatpush.bf16.msra.mxu0 0
      %1020 = vmatpush.bf16.msra.mxu0 %v1008
      %1021 = vmatmul.bf16.gmra.mxu0 %v1005
      %v1022 = vpop.f32.mrf.mxu0
      %v1023 = vadd.f32 0.0, %v1022
      %v1024 = vpop.f32.mrf.mxu0
      %v1025 = vadd.f32 0.0, %v1024
      %1026 = vdwg.mxu0
      %1027 = vmatpush.bf16.msra.mxu0 0
      %1028 = vmatpush.bf16.msra.mxu0 0
      %1029 = vmatpush.bf16.msra.mxu0 0
      %1030 = vmatpush.bf16.msra.mxu0 0
      %1031 = vmatpush.bf16.msra.mxu0 0
      %1032 = vmatpush.bf16.msra.mxu0 0
      %1033 = vmatpush.bf16.msra.mxu0 0
      %1034 = vmatpush.bf16.msra.mxu0 %v1011
      %1035 = vmatmul.bf16.gmra.mxu0 %v1005
      %v1036 = vpop.f32.mrf.mxu0
      %v1037 = vadd.f32 0.0, %v1036
      %v1038 = vpop.f32.mrf.mxu0
      %v1039 = vadd.f32 0.0, %v1038
      %1040 = vdwg.mxu0
      %v1041 = vadd.f32 %v986, %v1023
      %v1042 = vadd.f32 %v987, %v1037
      %v1043 = vadd.f32 %v988, %v1025
      %v1044 = vadd.f32 %v989, %v1039
      %s1045 = scalar_lea.vmem %s0, 128
      %v1046 = vld [vmem:[%s1045] sm:$0xf]
      %v1047 = vld [vmem:[%s1045 + $0x4] sm:$0xf]
      %v1050 = vunpack.c.l.b16 %v1046
      %v1051 = vunpack.c.l.b16 %v1047
      %v1052 = vpack.c.b16 %v1051, %v1050
      %1053 = vrot.lane.b32.xlu0 %v186, 85
      %v1054 = vpop.permute.xlu0 %1053
      %1055 = vrot.lane.b32.xlu0 %v187, 85
      %v1056 = vpop.permute.xlu0 %1055
      %vm1057 = vcmask 695296
      %v1058 = vsel %vm1057, %v1054, %v1056
      %v1060 = vsel %vm194, %v1052, 0
      %v1063 = vsel %vm198, %v1058, 0
      %v1066 = vsel %vm198, %v1056, 0
      %1068 = vmatpush.bf16.msra.mxu0 0
      %1069 = vmatpush.bf16.msra.mxu0 0
      %1070 = vmatpush.bf16.msra.mxu0 0
      %1071 = vmatpush.bf16.msra.mxu0 0
      %1072 = vmatpush.bf16.msra.mxu0 0
      %1073 = vmatpush.bf16.msra.mxu0 0
      %1074 = vmatpush.bf16.msra.mxu0 0
      %1075 = vmatpush.bf16.msra.mxu0 %v1063
      %1076 = vmatmul.bf16.gmra.mxu0 %v1060
      %v1077 = vpop.f32.mrf.mxu0
      %v1078 = vadd.f32 0.0, %v1077
      %v1079 = vpop.f32.mrf.mxu0
      %v1080 = vadd.f32 0.0, %v1079
      %1081 = vdwg.mxu0
      %1082 = vmatpush.bf16.msra.mxu0 0
      %1083 = vmatpush.bf16.msra.mxu0 0
      %1084 = vmatpush.bf16.msra.mxu0 0
      %1085 = vmatpush.bf16.msra.mxu0 0
      %1086 = vmatpush.bf16.msra.mxu0 0
      %1087 = vmatpush.bf16.msra.mxu0 0
      %1088 = vmatpush.bf16.msra.mxu0 0
      %1089 = vmatpush.bf16.msra.mxu0 %v1066
      %1090 = vmatmul.bf16.gmra.mxu0 %v1060
      %v1091 = vpop.f32.mrf.mxu0
      %v1092 = vadd.f32 0.0, %v1091
      %v1093 = vpop.f32.mrf.mxu0
      %v1094 = vadd.f32 0.0, %v1093
      %1095 = vdwg.mxu0
      %v1096 = vadd.f32 %v1041, %v1078
      %v1097 = vadd.f32 %v1042, %v1092
      %v1098 = vadd.f32 %v1043, %v1080
      %v1099 = vadd.f32 %v1044, %v1094
      %s1100 = scalar_lea.vmem %s0, 136
      %v1101 = vld [vmem:[%s1100] sm:$0xf]
      %v1102 = vld [vmem:[%s1100 + $0x4] sm:$0xf]
      %v1105 = vunpack.c.l.b16 %v1101
      %v1106 = vunpack.c.l.b16 %v1102
      %v1107 = vpack.c.b16 %v1106, %v1105
      %1108 = vrot.lane.b32.xlu0 %v186, 84
      %v1109 = vpop.permute.xlu0 %1108
      %1110 = vrot.lane.b32.xlu0 %v187, 84
      %v1111 = vpop.permute.xlu0 %1110
      %vm1112 = vcmask 687104
      %v1113 = vsel %vm1112, %v1109, %v1111
      %v1115 = vsel %vm194, %v1107, 0
      %v1118 = vsel %vm198, %v1113, 0
      %v1121 = vsel %vm198, %v1111, 0
      %1123 = vmatpush.bf16.msra.mxu0 0
      %1124 = vmatpush.bf16.msra.mxu0 0
      %1125 = vmatpush.bf16.msra.mxu0 0
      %1126 = vmatpush.bf16.msra.mxu0 0
      %1127 = vmatpush.bf16.msra.mxu0 0
      %1128 = vmatpush.bf16.msra.mxu0 0
      %1129 = vmatpush.bf16.msra.mxu0 0
      %1130 = vmatpush.bf16.msra.mxu0 %v1118
      %1131 = vmatmul.bf16.gmra.mxu0 %v1115
      %v1132 = vpop.f32.mrf.mxu0
      %v1133 = vadd.f32 0.0, %v1132
      %v1134 = vpop.f32.mrf.mxu0
      %v1135 = vadd.f32 0.0, %v1134
      %1136 = vdwg.mxu0
      %1137 = vmatpush.bf16.msra.mxu0 0
      %1138 = vmatpush.bf16.msra.mxu0 0
      %1139 = vmatpush.bf16.msra.mxu0 0
      %1140 = vmatpush.bf16.msra.mxu0 0
      %1141 = vmatpush.bf16.msra.mxu0 0
      %1142 = vmatpush.bf16.msra.mxu0 0
      %1143 = vmatpush.bf16.msra.mxu0 0
      %1144 = vmatpush.bf16.msra.mxu0 %v1121
      %1145 = vmatmul.bf16.gmra.mxu0 %v1115
      %v1146 = vpop.f32.mrf.mxu0
      %v1147 = vadd.f32 0.0, %v1146
      %v1148 = vpop.f32.mrf.mxu0
      %v1149 = vadd.f32 0.0, %v1148
      %1150 = vdwg.mxu0
      %v1151 = vadd.f32 %v1096, %v1133
      %v1152 = vadd.f32 %v1097, %v1147
      %v1153 = vadd.f32 %v1098, %v1135
      %v1154 = vadd.f32 %v1099, %v1149
      %s1155 = scalar_lea.vmem %s0, 144
      %v1156 = vld [vmem:[%s1155] sm:$0xf]
      %v1157 = vld [vmem:[%s1155 + $0x4] sm:$0xf]
      %v1160 = vunpack.c.l.b16 %v1156
      %v1161 = vunpack.c.l.b16 %v1157
      %v1162 = vpack.c.b16 %v1161, %v1160
      %1163 = vrot.lane.b32.xlu0 %v186, 83
      %v1164 = vpop.permute.xlu0 %1163
      %1165 = vrot.lane.b32.xlu0 %v187, 83
      %v1166 = vpop.permute.xlu0 %1165
      %vm1167 = vcmask 678912
      %v1168 = vsel %vm1167, %v1164, %v1166
      %v1170 = vsel %vm194, %v1162, 0
      %v1173 = vsel %vm198, %v1168, 0
      %v1176 = vsel %vm198, %v1166, 0
      %1178 = vmatpush.bf16.msra.mxu0 0
      %1179 = vmatpush.bf16.msra.mxu0 0
      %1180 = vmatpush.bf16.msra.mxu0 0
      %1181 = vmatpush.bf16.msra.mxu0 0
      %1182 = vmatpush.bf16.msra.mxu0 0
      %1183 = vmatpush.bf16.msra.mxu0 0
      %1184 = vmatpush.bf16.msra.mxu0 0
      %1185 = vmatpush.bf16.msra.mxu0 %v1173
      %1186 = vmatmul.bf16.gmra.mxu0 %v1170
      %v1187 = vpop.f32.mrf.mxu0
      %v1188 = vadd.f32 0.0, %v1187
      %v1189 = vpop.f32.mrf.mxu0
      %v1190 = vadd.f32 0.0, %v1189
      %1191 = vdwg.mxu0
      %1192 = vmatpush.bf16.msra.mxu0 0
      %1193 = vmatpush.bf16.msra.mxu0 0
      %1194 = vmatpush.bf16.msra.mxu0 0
      %1195 = vmatpush.bf16.msra.mxu0 0
      %1196 = vmatpush.bf16.msra.mxu0 0
      %1197 = vmatpush.bf16.msra.mxu0 0
      %1198 = vmatpush.bf16.msra.mxu0 0
      %1199 = vmatpush.bf16.msra.mxu0 %v1176
      %1200 = vmatmul.bf16.gmra.mxu0 %v1170
      %v1201 = vpop.f32.mrf.mxu0
      %v1202 = vadd.f32 0.0, %v1201
      %v1203 = vpop.f32.mrf.mxu0
      %v1204 = vadd.f32 0.0, %v1203
      %1205 = vdwg.mxu0
      %v1206 = vadd.f32 %v1151, %v1188
      %v1207 = vadd.f32 %v1152, %v1202
      %v1208 = vadd.f32 %v1153, %v1190
      %v1209 = vadd.f32 %v1154, %v1204
      %s1210 = scalar_lea.vmem %s0, 152
      %v1211 = vld [vmem:[%s1210] sm:$0xf]
      %v1212 = vld [vmem:[%s1210 + $0x4] sm:$0xf]
      %v1215 = vunpack.c.l.b16 %v1211
      %v1216 = vunpack.c.l.b16 %v1212
      %v1217 = vpack.c.b16 %v1216, %v1215
      %1218 = vrot.lane.b32.xlu0 %v186, 82
      %v1219 = vpop.permute.xlu0 %1218
      %1220 = vrot.lane.b32.xlu0 %v187, 82
      %v1221 = vpop.permute.xlu0 %1220
      %vm1222 = vcmask 670720
      %v1223 = vsel %vm1222, %v1219, %v1221
      %v1225 = vsel %vm194, %v1217, 0
      %v1228 = vsel %vm198, %v1223, 0
      %v1231 = vsel %vm198, %v1221, 0
      %1233 = vmatpush.bf16.msra.mxu0 0
      %1234 = vmatpush.bf16.msra.mxu0 0
      %1235 = vmatpush.bf16.msra.mxu0 0
      %1236 = vmatpush.bf16.msra.mxu0 0
      %1237 = vmatpush.bf16.msra.mxu0 0
      %1238 = vmatpush.bf16.msra.mxu0 0
      %1239 = vmatpush.bf16.msra.mxu0 0
      %1240 = vmatpush.bf16.msra.mxu0 %v1228
      %1241 = vmatmul.bf16.gmra.mxu0 %v1225
      %v1242 = vpop.f32.mrf.mxu0
      %v1243 = vadd.f32 0.0, %v1242
      %v1244 = vpop.f32.mrf.mxu0
      %v1245 = vadd.f32 0.0, %v1244
      %1246 = vdwg.mxu0
      %1247 = vmatpush.bf16.msra.mxu0 0
      %1248 = vmatpush.bf16.msra.mxu0 0
      %1249 = vmatpush.bf16.msra.mxu0 0
      %1250 = vmatpush.bf16.msra.mxu0 0
      %1251 = vmatpush.bf16.msra.mxu0 0
      %1252 = vmatpush.bf16.msra.mxu0 0
      %1253 = vmatpush.bf16.msra.mxu0 0
      %1254 = vmatpush.bf16.msra.mxu0 %v1231
      %1255 = vmatmul.bf16.gmra.mxu0 %v1225
      %v1256 = vpop.f32.mrf.mxu0
      %v1257 = vadd.f32 0.0, %v1256
      %v1258 = vpop.f32.mrf.mxu0
      %v1259 = vadd.f32 0.0, %v1258
      %1260 = vdwg.mxu0
      %v1261 = vadd.f32 %v1206, %v1243
      %v1262 = vadd.f32 %v1207, %v1257
      %v1263 = vadd.f32 %v1208, %v1245
      %v1264 = vadd.f32 %v1209, %v1259
      %s1265 = scalar_lea.vmem %s0, 160
      %v1266 = vld [vmem:[%s1265] sm:$0xf]
      %v1267 = vld [vmem:[%s1265 + $0x4] sm:$0xf]
      %v1270 = vunpack.c.l.b16 %v1266
      %v1271 = vunpack.c.l.b16 %v1267
      %v1272 = vpack.c.b16 %v1271, %v1270
      %1273 = vrot.lane.b32.xlu0 %v186, 72
      %v1274 = vpop.permute.xlu0 %1273
      %1275 = vrot.lane.b32.xlu0 %v187, 72
      %v1276 = vpop.permute.xlu0 %1275
      %vm1277 = vcmask 588800
      %v1278 = vsel %vm1277, %v1274, %v1276
      %v1280 = vsel %vm194, %v1272, 0
      %v1283 = vsel %vm198, %v1278, 0
      %v1286 = vsel %vm198, %v1276, 0
      %1288 = vmatpush.bf16.msra.mxu0 0
      %1289 = vmatpush.bf16.msra.mxu0 0
      %1290 = vmatpush.bf16.msra.mxu0 0
      %1291 = vmatpush.bf16.msra.mxu0 0
      %1292 = vmatpush.bf16.msra.mxu0 0
      %1293 = vmatpush.bf16.msra.mxu0 0
      %1294 = vmatpush.bf16.msra.mxu0 0
      %1295 = vmatpush.bf16.msra.mxu0 %v1283
      %1296 = vmatmul.bf16.gmra.mxu0 %v1280
      %v1297 = vpop.f32.mrf.mxu0
      %v1298 = vadd.f32 0.0, %v1297
      %v1299 = vpop.f32.mrf.mxu0
      %v1300 = vadd.f32 0.0, %v1299
      %1301 = vdwg.mxu0
      %1302 = vmatpush.bf16.msra.mxu0 0
      %1303 = vmatpush.bf16.msra.mxu0 0
      %1304 = vmatpush.bf16.msra.mxu0 0
      %1305 = vmatpush.bf16.msra.mxu0 0
      %1306 = vmatpush.bf16.msra.mxu0 0
      %1307 = vmatpush.bf16.msra.mxu0 0
      %1308 = vmatpush.bf16.msra.mxu0 0
      %1309 = vmatpush.bf16.msra.mxu0 %v1286
      %1310 = vmatmul.bf16.gmra.mxu0 %v1280
      %v1311 = vpop.f32.mrf.mxu0
      %v1312 = vadd.f32 0.0, %v1311
      %v1313 = vpop.f32.mrf.mxu0
      %v1314 = vadd.f32 0.0, %v1313
      %1315 = vdwg.mxu0
      %v1316 = vadd.f32 %v1261, %v1298
      %v1317 = vadd.f32 %v1262, %v1312
      %v1318 = vadd.f32 %v1263, %v1300
      %v1319 = vadd.f32 %v1264, %v1314
      %s1320 = scalar_lea.vmem %s0, 168
      %v1321 = vld [vmem:[%s1320] sm:$0xf]
      %v1322 = vld [vmem:[%s1320 + $0x4] sm:$0xf]
      %v1325 = vunpack.c.l.b16 %v1321
      %v1326 = vunpack.c.l.b16 %v1322
      %v1327 = vpack.c.b16 %v1326, %v1325
      %1328 = vrot.lane.b32.xlu0 %v186, 71
      %v1329 = vpop.permute.xlu0 %1328
      %1330 = vrot.lane.b32.xlu0 %v187, 71
      %v1331 = vpop.permute.xlu0 %1330
      %vm1332 = vcmask 580608
      %v1333 = vsel %vm1332, %v1329, %v1331
      %v1335 = vsel %vm194, %v1327, 0
      %v1338 = vsel %vm198, %v1333, 0
      %v1341 = vsel %vm198, %v1331, 0
      %1343 = vmatpush.bf16.msra.mxu0 0
      %1344 = vmatpush.bf16.msra.mxu0 0
      %1345 = vmatpush.bf16.msra.mxu0 0
      %1346 = vmatpush.bf16.msra.mxu0 0
      %1347 = vmatpush.bf16.msra.mxu0 0
      %1348 = vmatpush.bf16.msra.mxu0 0
      %1349 = vmatpush.bf16.msra.mxu0 0
      %1350 = vmatpush.bf16.msra.mxu0 %v1338
      %1351 = vmatmul.bf16.gmra.mxu0 %v1335
      %v1352 = vpop.f32.mrf.mxu0
      %v1353 = vadd.f32 0.0, %v1352
      %v1354 = vpop.f32.mrf.mxu0
      %v1355 = vadd.f32 0.0, %v1354
      %1356 = vdwg.mxu0
      %1357 = vmatpush.bf16.msra.mxu0 0
      %1358 = vmatpush.bf16.msra.mxu0 0
      %1359 = vmatpush.bf16.msra.mxu0 0
      %1360 = vmatpush.bf16.msra.mxu0 0
      %1361 = vmatpush.bf16.msra.mxu0 0
      %1362 = vmatpush.bf16.msra.mxu0 0
      %1363 = vmatpush.bf16.msra.mxu0 0
      %1364 = vmatpush.bf16.msra.mxu0 %v1341
      %1365 = vmatmul.bf16.gmra.mxu0 %v1335
      %v1366 = vpop.f32.mrf.mxu0
      %v1367 = vadd.f32 0.0, %v1366
      %v1368 = vpop.f32.mrf.mxu0
      %v1369 = vadd.f32 0.0, %v1368
      %1370 = vdwg.mxu0
      %v1371 = vadd.f32 %v1316, %v1353
      %v1372 = vadd.f32 %v1317, %v1367
      %v1373 = vadd.f32 %v1318, %v1355
      %v1374 = vadd.f32 %v1319, %v1369
      %s1375 = scalar_lea.vmem %s0, 176
      %v1376 = vld [vmem:[%s1375] sm:$0xf]
      %v1377 = vld [vmem:[%s1375 + $0x4] sm:$0xf]
      %v1380 = vunpack.c.l.b16 %v1376
      %v1381 = vunpack.c.l.b16 %v1377
      %v1382 = vpack.c.b16 %v1381, %v1380
      %1383 = vrot.lane.b32.xlu0 %v186, 70
      %v1384 = vpop.permute.xlu0 %1383
      %1385 = vrot.lane.b32.xlu0 %v187, 70
      %v1386 = vpop.permute.xlu0 %1385
      %vm1387 = vcmask 572416
      %v1388 = vsel %vm1387, %v1384, %v1386
      %v1390 = vsel %vm194, %v1382, 0
      %v1393 = vsel %vm198, %v1388, 0
      %v1396 = vsel %vm198, %v1386, 0
      %1398 = vmatpush.bf16.msra.mxu0 0
      %1399 = vmatpush.bf16.msra.mxu0 0
      %1400 = vmatpush.bf16.msra.mxu0 0
      %1401 = vmatpush.bf16.msra.mxu0 0
      %1402 = vmatpush.bf16.msra.mxu0 0
      %1403 = vmatpush.bf16.msra.mxu0 0
      %1404 = vmatpush.bf16.msra.mxu0 0
      %1405 = vmatpush.bf16.msra.mxu0 %v1393
      %1406 = vmatmul.bf16.gmra.mxu0 %v1390
      %v1407 = vpop.f32.mrf.mxu0
      %v1408 = vadd.f32 0.0, %v1407
      %v1409 = vpop.f32.mrf.mxu0
      %v1410 = vadd.f32 0.0, %v1409
      %1411 = vdwg.mxu0
      %1412 = vmatpush.bf16.msra.mxu0 0
      %1413 = vmatpush.bf16.msra.mxu0 0
      %1414 = vmatpush.bf16.msra.mxu0 0
      %1415 = vmatpush.bf16.msra.mxu0 0
      %1416 = vmatpush.bf16.msra.mxu0 0
      %1417 = vmatpush.bf16.msra.mxu0 0
      %1418 = vmatpush.bf16.msra.mxu0 0
      %1419 = vmatpush.bf16.msra.mxu0 %v1396
      %1420 = vmatmul.bf16.gmra.mxu0 %v1390
      %v1421 = vpop.f32.mrf.mxu0
      %v1422 = vadd.f32 0.0, %v1421
      %v1423 = vpop.f32.mrf.mxu0
      %v1424 = vadd.f32 0.0, %v1423
      %1425 = vdwg.mxu0
      %v1426 = vadd.f32 %v1371, %v1408
      %v1427 = vadd.f32 %v1372, %v1422
      %v1428 = vadd.f32 %v1373, %v1410
      %v1429 = vadd.f32 %v1374, %v1424
      %s1430 = scalar_lea.vmem %s0, 184
      %v1431 = vld [vmem:[%s1430] sm:$0xf]
      %v1432 = vld [vmem:[%s1430 + $0x4] sm:$0xf]
      %v1435 = vunpack.c.l.b16 %v1431
      %v1436 = vunpack.c.l.b16 %v1432
      %v1437 = vpack.c.b16 %v1436, %v1435
      %1438 = vrot.lane.b32.xlu0 %v186, 69
      %v1439 = vpop.permute.xlu0 %1438
      %1440 = vrot.lane.b32.xlu0 %v187, 69
      %v1441 = vpop.permute.xlu0 %1440
      %vm1442 = vcmask 564224
      %v1443 = vsel %vm1442, %v1439, %v1441
      %v1445 = vsel %vm194, %v1437, 0
      %v1448 = vsel %vm198, %v1443, 0
      %v1451 = vsel %vm198, %v1441, 0
      %1453 = vmatpush.bf16.msra.mxu0 0
      %1454 = vmatpush.bf16.msra.mxu0 0
      %1455 = vmatpush.bf16.msra.mxu0 0
      %1456 = vmatpush.bf16.msra.mxu0 0
      %1457 = vmatpush.bf16.msra.mxu0 0
      %1458 = vmatpush.bf16.msra.mxu0 0
      %1459 = vmatpush.bf16.msra.mxu0 0
      %1460 = vmatpush.bf16.msra.mxu0 %v1448
      %1461 = vmatmul.bf16.gmra.mxu0 %v1445
      %v1462 = vpop.f32.mrf.mxu0
      %v1463 = vadd.f32 0.0, %v1462
      %v1464 = vpop.f32.mrf.mxu0
      %v1465 = vadd.f32 0.0, %v1464
      %1466 = vdwg.mxu0
      %1467 = vmatpush.bf16.msra.mxu0 0
      %1468 = vmatpush.bf16.msra.mxu0 0
      %1469 = vmatpush.bf16.msra.mxu0 0
      %1470 = vmatpush.bf16.msra.mxu0 0
      %1471 = vmatpush.bf16.msra.mxu0 0
      %1472 = vmatpush.bf16.msra.mxu0 0
      %1473 = vmatpush.bf16.msra.mxu0 0
      %1474 = vmatpush.bf16.msra.mxu0 %v1451
      %1475 = vmatmul.bf16.gmra.mxu0 %v1445
      %v1476 = vpop.f32.mrf.mxu0
      %v1477 = vadd.f32 0.0, %v1476
      %v1478 = vpop.f32.mrf.mxu0
      %v1479 = vadd.f32 0.0, %v1478
      %1480 = vdwg.mxu0
      %v1481 = vadd.f32 %v1426, %v1463
      %v1482 = vadd.f32 %v1427, %v1477
      %v1483 = vadd.f32 %v1428, %v1465
      %v1484 = vadd.f32 %v1429, %v1479
      %s1485 = scalar_lea.vmem %s0, 192
      %v1486 = vld [vmem:[%s1485] sm:$0xf]
      %v1487 = vld [vmem:[%s1485 + $0x4] sm:$0xf]
      %v1490 = vunpack.c.l.b16 %v1486
      %v1491 = vunpack.c.l.b16 %v1487
      %v1492 = vpack.c.b16 %v1491, %v1490
      %1493 = vrot.lane.b32.xlu0 %v186, 68
      %v1494 = vpop.permute.xlu0 %1493
      %1495 = vrot.lane.b32.xlu0 %v187, 68
      %v1496 = vpop.permute.xlu0 %1495
      %vm1497 = vcmask 556032
      %v1498 = vsel %vm1497, %v1494, %v1496
      %v1500 = vsel %vm194, %v1492, 0
      %v1503 = vsel %vm198, %v1498, 0
      %v1506 = vsel %vm198, %v1496, 0
      %1508 = vmatpush.bf16.msra.mxu0 0
      %1509 = vmatpush.bf16.msra.mxu0 0
      %1510 = vmatpush.bf16.msra.mxu0 0
      %1511 = vmatpush.bf16.msra.mxu0 0
      %1512 = vmatpush.bf16.msra.mxu0 0
      %1513 = vmatpush.bf16.msra.mxu0 0
      %1514 = vmatpush.bf16.msra.mxu0 0
      %1515 = vmatpush.bf16.msra.mxu0 %v1503
      %1516 = vmatmul.bf16.gmra.mxu0 %v1500
      %v1517 = vpop.f32.mrf.mxu0
      %v1518 = vadd.f32 0.0, %v1517
      %v1519 = vpop.f32.mrf.mxu0
      %v1520 = vadd.f32 0.0, %v1519
      %1521 = vdwg.mxu0
      %1522 = vmatpush.bf16.msra.mxu0 0
      %1523 = vmatpush.bf16.msra.mxu0 0
      %1524 = vmatpush.bf16.msra.mxu0 0
      %1525 = vmatpush.bf16.msra.mxu0 0
      %1526 = vmatpush.bf16.msra.mxu0 0
      %1527 = vmatpush.bf16.msra.mxu0 0
      %1528 = vmatpush.bf16.msra.mxu0 0
      %1529 = vmatpush.bf16.msra.mxu0 %v1506
      %1530 = vmatmul.bf16.gmra.mxu0 %v1500
      %v1531 = vpop.f32.mrf.mxu0
      %v1532 = vadd.f32 0.0, %v1531
      %v1533 = vpop.f32.mrf.mxu0
      %v1534 = vadd.f32 0.0, %v1533
      %1535 = vdwg.mxu0
      %v1536 = vadd.f32 %v1481, %v1518
      %v1537 = vadd.f32 %v1482, %v1532
      %v1538 = vadd.f32 %v1483, %v1520
      %v1539 = vadd.f32 %v1484, %v1534
      %v1540 = vld [vmem:[%s1] sm:$0xff]
      %v1541 = vld [vmem:[%s1 + $0x8] sm:$0xff]
      %1543 = vset.pattern.permute.xlu0 0
      %1544 = vperm.xlu0 %1543, %v1540
      %v1545 = vpop.permute.xlu0 %1544
      %1548 = vset.pattern.permute.xlu0 0
      %1549 = vperm.xlu0 %1548, %v1541
      %v1550 = vpop.permute.xlu0 %1549
      %v1552 = vadd.f32 %v1536, %v1545
      %v1553 = vadd.f32 %v1537, %v1545
      %v1554 = vadd.f32 %v1538, %v1550
      %v1555 = vadd.f32 %v1539, %v1550
      %v1556 = vmax.f32 %v1552, 0.0
      %v1557 = vmax.f32 %v1553, 0.0
      %v1558 = vmax.f32 %v1554, 0.0
      %v1559 = vmax.f32 %v1555, 0.0
      %v1560 = vpack.c.bf16 %v1557, %v1556
      %v1561 = vpack.c.bf16 %v1559, %v1558
      %vm1562 = vcmask 1043456
      %vm1563 = vcmask 97284
      %vm1564 = vmor %vm1563, %vm1562
      %1565 = vst.msk [vmem:[%s170] sm:$0xff] %vm1564, %v1560
      %1566 = vst.msk [vmem:[%s170 + $0x8] sm:$0xff] %vm1564, %v1561
      %p1567 = scmp.lt.s32.totalorder %s14, 1
      %s1568 = scalar_select %p1567, %s14, 1
      %s1569 = smul.addr %s1568, 4
      %s1570 = smul.addr %s1569, 4
      %s1571 = scalar_lea.vmem %s3, %s1570
      // Predicated region
      $region33: #{net_forward.4} parent=31 // pred_check
        %p1572 = pneg %p100
      $region34: #{net_forward.4} parent=31 // pred_check_branch
        %1574 = sbr.rel (%p1572) target = $region36
      $region35: #{net_forward.4} parent=31 // pred_region
        _
      $region36: #{net_forward.4} parent=31 // pred_fallthru
        _
    $region32: #{net_forward.4} parent=5 // pred_fallthru
      _
    %p1575 = scmp.le.s32.totalorder 2, %s9
    // Predicated region
    $region37: #{net_forward.4} parent=5 // pred_check
      %p1576 = pneg %p1575
    $region38: #{net_forward.4} parent=5 // pred_check_branch
      %1578 = sbr.rel (%p1576) target = $region40
    $region39: #{net_forward.4} parent=5 // pred_region
      %s1579 = ssub.s32 %s9, 2
      // Predicated region
      $region41: #{net_forward.4} parent=39 // pred_check
        %p1580 = pneg %p106
      $region42: #{net_forward.4} parent=39 // pred_check_branch
        %1582 = sbr.rel (%p1580) target = $region44
      $region43: #{net_forward.4} parent=39 // pred_region
        %p1583 = scmp.lt.s32.totalorder %s15, 1
        %s1584 = scalar_select %p1583, %s15, 1
        %s1585 = smul.addr %s1584, 4
        %s1586 = smul.addr %s1585, 4
        %s1587 = scalar_lea.vmem %s3, %s1586
      $region44: #{net_forward.4} parent=39 // pred_fallthru
        _
    $region40: #{net_forward.4} parent=5 // pred_fallthru
      _
  $region6: #{net_forward.4} parent=0 // loop_footer
    %s13 = sadd.s32 1, %s9
  $region7: #{net_forward.4} parent=0 // loop_footer_branch
    %8 = sbr.rel target = $region3
  $region8: #{net_forward.4} parent=0 // loop_exit
    _

// kernel: net_forward.3
$region0: #{net_forward.3}
  #allocation0 [shape = 'u32[]', space=smem, size = 0x4, offset = 0x4, fixed_abs, tag = 'smem constant byte address 0x4 - core index']
  #allocation1 [shape = 'u32[72,128]{1,0:T(1,128)}', space=vmem, size = 0x9000, scoped, tag = 'internal scratch']
  %s0 = inlined_call_operand.vmem [shape: bf16[25,6,3], index: 0, kind: input, shape index: {}]
  %s1 = inlined_call_operand.vmem [shape: f32[6,1], index: 1, kind: input, shape index: {}]
  %s2 = inlined_call_operand.vmem [shape: bf16[2,3,1152], index: 2, kind: input, shape index: {}]
  %s3 = inlined_call_operand.vmem [shape: bf16[2,6,896], index: 3, kind: output, shape index: {}]
  %s4 = sld [smem:[#allocation0]]
  $region45: #{net_forward.3} parent=0
    _
  %s6 = ssub.s32 1, %s4
  %s7 = scalar_select 0, %s6, %s4
  loop: start=0, step=1, limit=4
  $region2: #{net_forward.3} parent=0 // loop_pre_header
    _
  $region3: #{net_forward.3} parent=0 // loop_header
    %s9 = sphi 0, %s13
    %p10 = scmp.ge.s32.totalorder %s9, 4
    %s17 = sphi 0, %s17
    %s19 = sphi 0, %s17
    %s20 = sphi 0, %s19
    %s34 = sphi 0, %s20
    %s38 = sphi 0, %s38
    %s40 = sphi 0, %s38
    %s41 = sphi 0, %s40
    %s55 = sphi 0, %s41
    %s61 = sphi 0, %s63
    %s64 = sphi 0, %s61
    %s65 = sphi 0, %s64
    %s81 = sphi 0, %s65
    %s87 = sphi 0, %s89
    %s90 = sphi 0, %s87
    %s91 = sphi 0, %s90
    %s107 = sphi 0, %s91
  $region4: #{net_forward.3} parent=0 // loop_header_branch
    %12 = sbr.rel (%p10) target = $region8
  $region5: #{net_forward.3} parent=0 // loop_body
    %s14 = ssub.s32 %s9, 1
    %s15 = ssub.s32 %s9, 2
    %s16 = sadd.s32 %s9, 1
    %s18 = sadd.s32 %s17, 1
    %p21 = scmp.eq.s32.totalorder %s9, 1
    %p22 = scmp.ne.s32.totalorder %s17, %s19
    %p23 = scmp.eq.s32.totalorder %s9, 0
    %p24 = por %p22, %p23
    %p25 = scmp.ne.s32.totalorder %s17, %s19
    %p26 = scmp.eq.s32.totalorder %s14, 1
    %p27 = por %p25, %p26
    %p28 = scmp.ne.s32.totalorder %s19, %s20
    %p29 = scmp.eq.s32.totalorder %s14, 0
    %p30 = por %p28, %p29
    %p31 = scmp.ne.s32.totalorder %s19, %s20
    %p32 = scmp.eq.s32.totalorder %s15, 1
    %p33 = por %p31, %p32
    %p35 = scmp.ne.s32.totalorder %s20, %s34
    %p36 = scmp.eq.s32.totalorder %s15, 0
    %p37 = por %p35, %p36
    %s39 = sadd.s32 %s38, 1
    %p42 = scmp.eq.s32.totalorder %s9, 1
    %p43 = scmp.ne.s32.totalorder %s38, %s40
    %p44 = scmp.eq.s32.totalorder %s9, 0
    %p45 = por %p43, %p44
    %p46 = scmp.ne.s32.totalorder %s38, %s40
    %p47 = scmp.eq.s32.totalorder %s14, 1
    %p48 = por %p46, %p47
    %p49 = scmp.ne.s32.totalorder %s40, %s41
    %p50 = scmp.eq.s32.totalorder %s14, 0
    %p51 = por %p49, %p50
    %p52 = scmp.ne.s32.totalorder %s40, %s41
    %p53 = scmp.eq.s32.totalorder %s15, 1
    %p54 = por %p52, %p53
    %p56 = scmp.ne.s32.totalorder %s41, %s55
    %p57 = scmp.eq.s32.totalorder %s15, 0
    %p58 = por %p56, %p57
    %s59 = ssub.s32 %s9, %s16
    %p60 = scmp.eq.s32.totalorder %s59, 0
    %s62 = sadd.s32 %s61, 1
    %s63 = scalar_select %p60, %s61, %s62
    %p66 = pneg %p60
    %p67 = scmp.eq.s32.totalorder %s9, 1
    %p68 = por %p66, %p67
    %p69 = scmp.ne.s32.totalorder %s61, %s64
    %p70 = scmp.eq.s32.totalorder %s9, 0
    %p71 = por %p69, %p70
    %p72 = scmp.ne.s32.totalorder %s61, %s64
    %p73 = scmp.eq.s32.totalorder %s14, 1
    %p74 = por %p72, %p73
    %p75 = scmp.ne.s32.totalorder %s64, %s65
    %p76 = scmp.eq.s32.totalorder %s14, 0
    %p77 = por %p75, %p76
    %p78 = scmp.ne.s32.totalorder %s64, %s65
    %p79 = scmp.eq.s32.totalorder %s15, 1
    %p80 = por %p78, %p79
    %p82 = scmp.ne.s32.totalorder %s65, %s81
    %p83 = scmp.eq.s32.totalorder %s15, 0
    %p84 = por %p82, %p83
    %s85 = ssub.s32 %s9, %s16
    %p86 = scmp.eq.s32.totalorder %s85, 0
    %s88 = sadd.s32 %s87, 1
    %s89 = scalar_select %p86, %s87, %s88
    %p92 = pneg %p86
    %p93 = scmp.eq.s32.totalorder %s9, 1
    %p94 = por %p92, %p93
    %p95 = scmp.ne.s32.totalorder %s87, %s90
    %p96 = scmp.eq.s32.totalorder %s9, 0
    %p97 = por %p95, %p96
    %p98 = scmp.ne.s32.totalorder %s87, %s90
    %p99 = scmp.eq.s32.totalorder %s14, 1
    %p100 = por %p98, %p99
    %p101 = scmp.ne.s32.totalorder %s90, %s91
    %p102 = scmp.eq.s32.totalorder %s14, 0
    %p103 = por %p101, %p102
    %p104 = scmp.ne.s32.totalorder %s90, %s91
    %p105 = scmp.eq.s32.totalorder %s15, 1
    %p106 = por %p104, %p105
    %p108 = scmp.ne.s32.totalorder %s91, %s107
    %p109 = scmp.eq.s32.totalorder %s15, 0
    %p110 = por %p108, %p109
    %p111 = scmp.le.s32.totalorder 1, %s9
    %p112 = scmp.lt.s32.totalorder %s9, 3
    %p113 = pnand %p111, %p112
    %p114 = pneg %p113
    // Predicated region
    $region9: #{net_forward.3} parent=5 // pred_check
      _
    $region10: #{net_forward.3} parent=5 // pred_check_branch
      %116 = sbr.rel (%p113) target = $region12
    $region11: #{net_forward.3} parent=5 // pred_region
      %s117 = ssub.s32 %s9, 1
      // Predicated region
      $region13: #{net_forward.3} parent=11 // pred_check
        %p118 = pneg %p30
      $region14: #{net_forward.3} parent=11 // pred_check_branch
        %120 = sbr.rel (%p118) target = $region16
      $region15: #{net_forward.3} parent=11 // pred_region
        _
      $region16: #{net_forward.3} parent=11 // pred_fallthru
        _
      // Predicated region
      $region17: #{net_forward.3} parent=11 // pred_check
        %p121 = pneg %p51
      $region18: #{net_forward.3} parent=11 // pred_check_branch
        %123 = sbr.rel (%p121) target = $region20
      $region19: #{net_forward.3} parent=11 // pred_region
        _
      $region20: #{net_forward.3} parent=11 // pred_fallthru
        _
    $region12: #{net_forward.3} parent=5 // pred_fallthru
      _
    %p124 = scmp.lt.s32.totalorder %s9, 2
    // Predicated region
    $region21: #{net_forward.3} parent=5 // pred_check
      %p125 = pneg %p124
    $region22: #{net_forward.3} parent=5 // pred_check_branch
      %127 = sbr.rel (%p125) target = $region24
    $region23: #{net_forward.3} parent=5 // pred_region
      // Predicated region
      $region25: #{net_forward.3} parent=23 // pred_check
        %p128 = pneg %p71
      $region26: #{net_forward.3} parent=23 // pred_check_branch
        %130 = sbr.rel (%p128) target = $region28
      $region27: #{net_forward.3} parent=23 // pred_region
        %p131 = scmp.lt.s32.totalorder %s9, 1
        %s132 = scalar_select %p131, %s9, 1
        %s133 = smul.addr %s132, 9
        %s134 = smul.addr %s133, 2
        %s135 = scalar_lea.vmem %s2, %s134
      $region28: #{net_forward.3} parent=23 // pred_fallthru
        _
    $region24: #{net_forward.3} parent=5 // pred_fallthru
      _
    %p136 = scmp.le.s32.totalorder 1, %s9
    %p137 = scmp.lt.s32.totalorder %s9, 3
    %p138 = pnand %p136, %p137
    %p139 = pneg %p138
    // Predicated region
    $region29: #{net_forward.3} parent=5 // pred_check
      _
    $region30: #{net_forward.3} parent=5 // pred_check_branch
      %141 = sbr.rel (%p138) target = $region32
    $region31: #{net_forward.3} parent=5 // pred_region
      %s142 = ssub.s32 %s9, 1
      %p143 = pneg %p30
      %p144 = pneg %p27
      %p145 = pneg %p51
      %p146 = pneg %p48
      %p147 = scmp.lt.s32.totalorder %s14, 1
      %s148 = scalar_select %p147, %s14, 1
      %s149 = smul.addr %s148, 9
      %s150 = smul.addr %s149, 2
      %s151 = scalar_lea.vmem %s2, %s150
      %p152 = pneg %p77
      %p153 = pneg %p74
      %p154 = pneg %p103
      %p155 = pneg %p100
      %p156 = scmp.lt.s32.totalorder %s14, 1
      %s157 = scalar_select %p156, %s14, 1
      %s158 = smul.addr %s157, 7
      %s159 = smul.addr %s158, 4
      %s160 = scalar_lea.vmem %s3, %s159
      %p161 = scmp.lt.s32.totalorder %s14, 1
      %s162 = scalar_select %p161, %s14, 1
      %s163 = smul.addr %s162, 9
      %s164 = smul.addr %s163, 2
      %s165 = scalar_lea.vmem %s2, %s164
      %p166 = scmp.lt.s32.totalorder %s14, 1
      %s167 = scalar_select %p166, %s14, 1
      %s168 = smul.addr %s167, 7
      %s169 = smul.addr %s168, 4
      %s170 = scalar_lea.vmem %s3, %s169
      %v172 = vld [vmem:[%s165] sm:$0xff]
      %v173 = vld [vmem:[%s165 + $0x8] sm:$0x3f]
      %v174 = vld [vmem:[%s0] sm:$0x7]
      %v175 = vld [vmem:[%s165 + $0x8] sm:$0xff]
      %s176 = scalar_lea.vmem %s0, 4
      %v177 = vld [vmem:[%s176] sm:$0x7]
      %179 = vst [vmem:[#allocation1] ss:$4 sm:$0xff] %v172
      %s181 = scalar_lea.vmem [#allocation1], 32
      %182 = vst [vmem:[%s181] ss:$4 sm:$0xff] %v175
      %v183 = vld.sshfl [vmem:[#allocation1] sm:$0xff pattern:$0x73625140]
      %v185 = vld.sshfl [vmem:[#allocation1 + $0x8] sm:$0xff pattern:$0x73625140]
      %v187 = vld.sshfl [vmem:[#allocation1 + $0x10] sm:$0xff pattern:$0x73625140]
      %v189 = vld.sshfl [vmem:[#allocation1 + $0x18] sm:$0xff pattern:$0x73625140]
      %v191 = vld.sshfl [vmem:[#allocation1 + $0x20] sm:$0xff pattern:$0x73625140]
      %v193 = vld.sshfl [vmem:[#allocation1 + $0x28] sm:$0xff pattern:$0x73625140]
      %v195 = vld.sshfl [vmem:[#allocation1 + $0x30] sm:$0xff pattern:$0x73625140]
      %v197 = vld.sshfl [vmem:[#allocation1 + $0x38] sm:$0xff pattern:$0x73625140]
      %199 = vrot.lane.b32.xlu0 %v183, 127
      %v200 = vpop.permute.xlu0 %199
      %201 = vrot.lane.b32.xlu0 %v185, 127
      %v202 = vpop.permute.xlu0 %201
      %203 = vrot.lane.b32.xlu0 %v187, 127
      %v204 = vpop.permute.xlu0 %203
      %205 = vrot.lane.b32.xlu0 %v189, 127
      %v206 = vpop.permute.xlu0 %205
      %207 = vrot.lane.b32.xlu0 %v191, 127
      %v208 = vpop.permute.xlu0 %207
      %209 = vrot.lane.b32.xlu0 %v193, 127
      %v210 = vpop.permute.xlu0 %209
      %211 = vrot.lane.b32.xlu0 %v195, 127
      %v212 = vpop.permute.xlu0 %211
      %213 = vrot.lane.b32.xlu0 %v197, 127
      %v214 = vpop.permute.xlu0 %213
      %vm215 = vcmask 1039360
      %v216 = vsel %vm215, %v200, %v202
      %v217 = vsel %vm215, %v202, %v204
      %v218 = vsel %vm215, %v204, %v206
      %v219 = vsel %vm215, %v206, %v208
      %v220 = vsel %vm215, %v208, %v210
      %v221 = vsel %vm215, %v210, %v212
      %v222 = vsel %vm215, %v212, %v214
      %vm223 = vcmask 23552
      %v225 = vsel %vm223, %v177, 0
      %vm227 = vcmask 1040384
      %vm228 = vcmask 1041408
      %v229 = vsel %vm227, 4294967295, 65535
      %v230 = vsel %vm228, %v229, 0
      %v232 = vand.u32 %v216, %v230
      %v235 = vand.u32 %v217, %v230
      %v238 = vand.u32 %v218, %v230
      %v241 = vand.u32 %v219, %v230
      %v244 = vand.u32 %v220, %v230
      %v247 = vand.u32 %v221, %v230
      %v250 = vand.u32 %v222, %v230
      %252 = vmatpush.bf16.msra.mxu0 0
      %253 = vmatpush.bf16.msra.mxu0 0
      %254 = vmatpush.bf16.msra.mxu0 0
      %255 = vmatpush.bf16.msra.mxu0 0
      %256 = vmatpush.bf16.msra.mxu0 0
      %257 = vmatpush.bf16.msra.mxu0 0
      %258 = vmatpush.bf16.msra.mxu0 0
      %259 = vmatpush.bf16.msra.mxu0 %v232
      %260 = vmatmul.bf16.gmra.mxu0 %v225
      %v261 = vpop.f32.mrf.mxu0
      %v262 = vadd.f32 0.0, %v261
      %v263 = vpop.f32.mrf.mxu0
      %264 = vdwg.mxu0
      %265 = vmatpush.bf16.msra.mxu0 0
      %266 = vmatpush.bf16.msra.mxu0 0
      %267 = vmatpush.bf16.msra.mxu0 0
      %268 = vmatpush.bf16.msra.mxu0 0
      %269 = vmatpush.bf16.msra.mxu0 0
      %270 = vmatpush.bf16.msra.mxu0 0
      %271 = vmatpush.bf16.msra.mxu0 0
      %272 = vmatpush.bf16.msra.mxu0 %v235
      %273 = vmatmul.bf16.gmra.mxu0 %v225
      %v274 = vpop.f32.mrf.mxu0
      %v275 = vadd.f32 0.0, %v274
      %v276 = vpop.f32.mrf.mxu0
      %277 = vdwg.mxu0
      %278 = vmatpush.bf16.msra.mxu0 0
      %279 = vmatpush.bf16.msra.mxu0 0
      %280 = vmatpush.bf16.msra.mxu0 0
      %281 = vmatpush.bf16.msra.mxu0 0
      %282 = vmatpush.bf16.msra.mxu0 0
      %283 = vmatpush.bf16.msra.mxu0 0
      %284 = vmatpush.bf16.msra.mxu0 0
      %285 = vmatpush.bf16.msra.mxu0 %v238
      %286 = vmatmul.bf16.gmra.mxu0 %v225
      %v287 = vpop.f32.mrf.mxu0
      %v288 = vadd.f32 0.0, %v287
      %v289 = vpop.f32.mrf.mxu0
      %290 = vdwg.mxu0
      %291 = vmatpush.bf16.msra.mxu0 0
      %292 = vmatpush.bf16.msra.mxu0 0
      %293 = vmatpush.bf16.msra.mxu0 0
      %294 = vmatpush.bf16.msra.mxu0 0
      %295 = vmatpush.bf16.msra.mxu0 0
      %296 = vmatpush.bf16.msra.mxu0 0
      %297 = vmatpush.bf16.msra.mxu0 0
      %298 = vmatpush.bf16.msra.mxu0 %v241
      %299 = vmatmul.bf16.gmra.mxu0 %v225
      %v300 = vpop.f32.mrf.mxu0
      %v301 = vadd.f32 0.0, %v300
      %v302 = vpop.f32.mrf.mxu0
      %303 = vdwg.mxu0
      %304 = vmatpush.bf16.msra.mxu0 0
      %305 = vmatpush.bf16.msra.mxu0 0
      %306 = vmatpush.bf16.msra.mxu0 0
      %307 = vmatpush.bf16.msra.mxu0 0
      %308 = vmatpush.bf16.msra.mxu0 0
      %309 = vmatpush.bf16.msra.mxu0 0
      %310 = vmatpush.bf16.msra.mxu0 0
      %311 = vmatpush.bf16.msra.mxu0 %v244
      %312 = vmatmul.bf16.gmra.mxu0 %v225
      %v313 = vpop.f32.mrf.mxu0
      %v314 = vadd.f32 0.0, %v313
      %v315 = vpop.f32.mrf.mxu0
      %316 = vdwg.mxu0
      %317 = vmatpush.bf16.msra.mxu0 0
      %318 = vmatpush.bf16.msra.mxu0 0
      %319 = vmatpush.bf16.msra.mxu0 0
      %320 = vmatpush.bf16.msra.mxu0 0
      %321 = vmatpush.bf16.msra.mxu0 0
      %322 = vmatpush.bf16.msra.mxu0 0
      %323 = vmatpush.bf16.msra.mxu0 0
      %324 = vmatpush.bf16.msra.mxu0 %v247
      %325 = vmatmul.bf16.gmra.mxu0 %v225
      %v326 = vpop.f32.mrf.mxu0
      %v327 = vadd.f32 0.0, %v326
      %v328 = vpop.f32.mrf.mxu0
      %329 = vdwg.mxu0
      %330 = vmatpush.bf16.msra.mxu0 0
      %331 = vmatpush.bf16.msra.mxu0 0
      %332 = vmatpush.bf16.msra.mxu0 0
      %333 = vmatpush.bf16.msra.mxu0 0
      %334 = vmatpush.bf16.msra.mxu0 0
      %335 = vmatpush.bf16.msra.mxu0 0
      %336 = vmatpush.bf16.msra.mxu0 0
      %337 = vmatpush.bf16.msra.mxu0 %v250
      %338 = vmatmul.bf16.gmra.mxu0 %v225
      %v339 = vpop.f32.mrf.mxu0
      %v340 = vadd.f32 0.0, %v339
      %v341 = vpop.f32.mrf.mxu0
      %342 = vdwg.mxu0
      %343 = vst [vmem:[#allocation1] ss:$4 sm:$0xff] %v172
      %s345 = scalar_lea.vmem [#allocation1], 32
      %346 = vst [vmem:[%s345] ss:$4 sm:$0xff] %v173
      %v347 = vld.sshfl [vmem:[#allocation1] sm:$0xff pattern:$0x73625140]
      %v348 = vld.sshfl [vmem:[#allocation1 + $0x8] sm:$0xff pattern:$0x73625140]
      %v349 = vld.sshfl [vmem:[#allocation1 + $0x10] sm:$0xff pattern:$0x73625140]
      %v350 = vld.sshfl [vmem:[#allocation1 + $0x18] sm:$0xff pattern:$0x73625140]
      %v351 = vld.sshfl [vmem:[#allocation1 + $0x20] sm:$0xff pattern:$0x73625140]
      %v352 = vld.sshfl [vmem:[#allocation1 + $0x28] sm:$0xff pattern:$0x73625140]
      %v353 = vld.sshfl [vmem:[#allocation1 + $0x30] sm:$0xff pattern:$0x73625140]
      %v355 = vsel %vm223, %v174, 0
      %v357 = vand.u32 %v347, %v230
      %v359 = vand.u32 %v348, %v230
      %v361 = vand.u32 %v349, %v230
      %v363 = vand.u32 %v350, %v230
      %v365 = vand.u32 %v351, %v230
      %v367 = vand.u32 %v352, %v230
      %v369 = vand.u32 %v353, %v230
      %371 = vmatpush.bf16.msra.mxu0 0
      %372 = vmatpush.bf16.msra.mxu0 0
      %373 = vmatpush.bf16.msra.mxu0 0
      %374 = vmatpush.bf16.msra.mxu0 0
      %375 = vmatpush.bf16.msra.mxu0 0
      %376 = vmatpush.bf16.msra.mxu0 0
      %377 = vmatpush.bf16.msra.mxu0 0
      %378 = vmatpush.bf16.msra.mxu0 %v357
      %379 = vmatmul.bf16.gmra.mxu0 %v355
      %v380 = vpop.f32.mrf.mxu0
      %v381 = vadd.f32 %v262, %v380
      %v382 = vpop.f32.mrf.mxu0
      %383 = vdwg.mxu0
      %384 = vmatpush.bf16.msra.mxu0 0
      %385 = vmatpush.bf16.msra.mxu0 0
      %386 = vmatpush.bf16.msra.mxu0 0
      %387 = vmatpush.bf16.msra.mxu0 0
      %388 = vmatpush.bf16.msra.mxu0 0
      %389 = vmatpush.bf16.msra.mxu0 0
      %390 = vmatpush.bf16.msra.mxu0 0
      %391 = vmatpush.bf16.msra.mxu0 %v359
      %392 = vmatmul.bf16.gmra.mxu0 %v355
      %v393 = vpop.f32.mrf.mxu0
      %v394 = vadd.f32 %v275, %v393
      %v395 = vpop.f32.mrf.mxu0
      %396 = vdwg.mxu0
      %397 = vmatpush.bf16.msra.mxu0 0
      %398 = vmatpush.bf16.msra.mxu0 0
      %399 = vmatpush.bf16.msra.mxu0 0
      %400 = vmatpush.bf16.msra.mxu0 0
      %401 = vmatpush.bf16.msra.mxu0 0
      %402 = vmatpush.bf16.msra.mxu0 0
      %403 = vmatpush.bf16.msra.mxu0 0
      %404 = vmatpush.bf16.msra.mxu0 %v361
      %405 = vmatmul.bf16.gmra.mxu0 %v355
      %v406 = vpop.f32.mrf.mxu0
      %v407 = vadd.f32 %v288, %v406
      %v408 = vpop.f32.mrf.mxu0
      %409 = vdwg.mxu0
      %410 = vmatpush.bf16.msra.mxu0 0
      %411 = vmatpush.bf16.msra.mxu0 0
      %412 = vmatpush.bf16.msra.mxu0 0
      %413 = vmatpush.bf16.msra.mxu0 0
      %414 = vmatpush.bf16.msra.mxu0 0
      %415 = vmatpush.bf16.msra.mxu0 0
      %416 = vmatpush.bf16.msra.mxu0 0
      %417 = vmatpush.bf16.msra.mxu0 %v363
      %418 = vmatmul.bf16.gmra.mxu0 %v355
      %v419 = vpop.f32.mrf.mxu0
      %v420 = vadd.f32 %v301, %v419
      %v421 = vpop.f32.mrf.mxu0
      %422 = vdwg.mxu0
      %423 = vmatpush.bf16.msra.mxu0 0
      %424 = vmatpush.bf16.msra.mxu0 0
      %425 = vmatpush.bf16.msra.mxu0 0
      %426 = vmatpush.bf16.msra.mxu0 0
      %427 = vmatpush.bf16.msra.mxu0 0
      %428 = vmatpush.bf16.msra.mxu0 0
      %429 = vmatpush.bf16.msra.mxu0 0
      %430 = vmatpush.bf16.msra.mxu0 %v365
      %431 = vmatmul.bf16.gmra.mxu0 %v355
      %v432 = vpop.f32.mrf.mxu0
      %v433 = vadd.f32 %v314, %v432
      %v434 = vpop.f32.mrf.mxu0
      %435 = vdwg.mxu0
      %436 = vmatpush.bf16.msra.mxu0 0
      %437 = vmatpush.bf16.msra.mxu0 0
      %438 = vmatpush.bf16.msra.mxu0 0
      %439 = vmatpush.bf16.msra.mxu0 0
      %440 = vmatpush.bf16.msra.mxu0 0
      %441 = vmatpush.bf16.msra.mxu0 0
      %442 = vmatpush.bf16.msra.mxu0 0
      %443 = vmatpush.bf16.msra.mxu0 %v367
      %444 = vmatmul.bf16.gmra.mxu0 %v355
      %v445 = vpop.f32.mrf.mxu0
      %v446 = vadd.f32 %v327, %v445
      %v447 = vpop.f32.mrf.mxu0
      %448 = vdwg.mxu0
      %449 = vmatpush.bf16.msra.mxu0 0
      %450 = vmatpush.bf16.msra.mxu0 0
      %451 = vmatpush.bf16.msra.mxu0 0
      %452 = vmatpush.bf16.msra.mxu0 0
      %453 = vmatpush.bf16.msra.mxu0 0
      %454 = vmatpush.bf16.msra.mxu0 0
      %455 = vmatpush.bf16.msra.mxu0 0
      %456 = vmatpush.bf16.msra.mxu0 %v369
      %457 = vmatmul.bf16.gmra.mxu0 %v355
      %v458 = vpop.f32.mrf.mxu0
      %v459 = vadd.f32 %v340, %v458
      %v460 = vpop.f32.mrf.mxu0
      %461 = vdwg.mxu0
      %v462 = vld [vmem:[%s165] sm:$0xff]
      %v463 = vld [vmem:[%s165 + $0x8] sm:$0xff]
      %s464 = scalar_lea.vmem %s0, 8
      %v465 = vld [vmem:[%s464] sm:$0x7]
      %467 = vst [vmem:[#allocation1] ss:$4 sm:$0xff] %v462
      %s469 = scalar_lea.vmem [#allocation1], 32
      %470 = vst [vmem:[%s469] ss:$4 sm:$0xff] %v463
      %v471 = vld.sshfl [vmem:[#allocation1] sm:$0xff pattern:$0x73625140]
      %v473 = vld.sshfl [vmem:[#allocation1 + $0x8] sm:$0xff pattern:$0x73625140]
      %v475 = vld.sshfl [vmem:[#allocation1 + $0x10] sm:$0xff pattern:$0x73625140]
      %v477 = vld.sshfl [vmem:[#allocation1 + $0x18] sm:$0xff pattern:$0x73625140]
      %v479 = vld.sshfl [vmem:[#allocation1 + $0x20] sm:$0xff pattern:$0x73625140]
      %v481 = vld.sshfl [vmem:[#allocation1 + $0x28] sm:$0xff pattern:$0x73625140]
      %v483 = vld.sshfl [vmem:[#allocation1 + $0x30] sm:$0xff pattern:$0x73625140]
      %v485 = vld.sshfl [vmem:[#allocation1 + $0x38] sm:$0xff pattern:$0x73625140]
      %487 = vrot.lane.b32.xlu0 %v471, 126
      %v488 = vpop.permute.xlu0 %487
      %489 = vrot.lane.b32.xlu0 %v473, 126
      %v490 = vpop.permute.xlu0 %489
      %491 = vrot.lane.b32.xlu0 %v475, 126
      %v492 = vpop.permute.xlu0 %491
      %493 = vrot.lane.b32.xlu0 %v477, 126
      %v494 = vpop.permute.xlu0 %493
      %495 = vrot.lane.b32.xlu0 %v479, 126
      %v496 = vpop.permute.xlu0 %495
      %497 = vrot.lane.b32.xlu0 %v481, 126
      %v498 = vpop.permute.xlu0 %497
      %499 = vrot.lane.b32.xlu0 %v483, 126
      %v500 = vpop.permute.xlu0 %499
      %501 = vrot.lane.b32.xlu0 %v485, 126
      %v502 = vpop.permute.xlu0 %501
      %vm503 = vcmask 1031168
      %v504 = vsel %vm503, %v488, %v490
      %v505 = vsel %vm503, %v490, %v492
      %v506 = vsel %vm503, %v492, %v494
      %v507 = vsel %vm503, %v494, %v496
      %v508 = vsel %vm503, %v496, %v498
      %v509 = vsel %vm503, %v498, %v500
      %v510 = vsel %vm503, %v500, %v502
      %v512 = vsel %vm223, %v465, 0
      %v515 = vand.u32 %v504, %v230
      %v518 = vand.u32 %v505, %v230
      %v521 = vand.u32 %v506, %v230
      %v524 = vand.u32 %v507, %v230
      %v527 = vand.u32 %v508, %v230
      %v530 = vand.u32 %v509, %v230
      %v533 = vand.u32 %v510, %v230
      %535 = vmatpush.bf16.msra.mxu0 0
      %536 = vmatpush.bf16.msra.mxu0 0
      %537 = vmatpush.bf16.msra.mxu0 0
      %538 = vmatpush.bf16.msra.mxu0 0
      %539 = vmatpush.bf16.msra.mxu0 0
      %540 = vmatpush.bf16.msra.mxu0 0
      %541 = vmatpush.bf16.msra.mxu0 0
      %542 = vmatpush.bf16.msra.mxu0 %v515
      %543 = vmatmul.bf16.gmra.mxu0 %v512
      %v544 = vpop.f32.mrf.mxu0
      %v545 = vadd.f32 0.0, %v544
      %v546 = vpop.f32.mrf.mxu0
      %547 = vdwg.mxu0
      %548 = vmatpush.bf16.msra.mxu0 0
      %549 = vmatpush.bf16.msra.mxu0 0
      %550 = vmatpush.bf16.msra.mxu0 0
      %551 = vmatpush.bf16.msra.mxu0 0
      %552 = vmatpush.bf16.msra.mxu0 0
      %553 = vmatpush.bf16.msra.mxu0 0
      %554 = vmatpush.bf16.msra.mxu0 0
      %555 = vmatpush.bf16.msra.mxu0 %v518
      %556 = vmatmul.bf16.gmra.mxu0 %v512
      %v557 = vpop.f32.mrf.mxu0
      %v558 = vadd.f32 0.0, %v557
      %v559 = vpop.f32.mrf.mxu0
      %560 = vdwg.mxu0
      %561 = vmatpush.bf16.msra.mxu0 0
      %562 = vmatpush.bf16.msra.mxu0 0
      %563 = vmatpush.bf16.msra.mxu0 0
      %564 = vmatpush.bf16.msra.mxu0 0
      %565 = vmatpush.bf16.msra.mxu0 0
      %566 = vmatpush.bf16.msra.mxu0 0
      %567 = vmatpush.bf16.msra.mxu0 0
      %568 = vmatpush.bf16.msra.mxu0 %v521
      %569 = vmatmul.bf16.gmra.mxu0 %v512
      %v570 = vpop.f32.mrf.mxu0
      %v571 = vadd.f32 0.0, %v570
      %v572 = vpop.f32.mrf.mxu0
      %573 = vdwg.mxu0
      %574 = vmatpush.bf16.msra.mxu0 0
      %575 = vmatpush.bf16.msra.mxu0 0
      %576 = vmatpush.bf16.msra.mxu0 0
      %577 = vmatpush.bf16.msra.mxu0 0
      %578 = vmatpush.bf16.msra.mxu0 0
      %579 = vmatpush.bf16.msra.mxu0 0
      %580 = vmatpush.bf16.msra.mxu0 0
      %581 = vmatpush.bf16.msra.mxu0 %v524
      %582 = vmatmul.bf16.gmra.mxu0 %v512
      %v583 = vpop.f32.mrf.mxu0
      %v584 = vadd.f32 0.0, %v583
      %v585 = vpop.f32.mrf.mxu0
      %586 = vdwg.mxu0
      %587 = vmatpush.bf16.msra.mxu0 0
      %588 = vmatpush.bf16.msra.mxu0 0
      %589 = vmatpush.bf16.msra.mxu0 0
      %590 = vmatpush.bf16.msra.mxu0 0
      %591 = vmatpush.bf16.msra.mxu0 0
      %592 = vmatpush.bf16.msra.mxu0 0
      %593 = vmatpush.bf16.msra.mxu0 0
      %594 = vmatpush.bf16.msra.mxu0 %v527
      %595 = vmatmul.bf16.gmra.mxu0 %v512
      %v596 = vpop.f32.mrf.mxu0
      %v597 = vadd.f32 0.0, %v596
      %v598 = vpop.f32.mrf.mxu0
      %599 = vdwg.mxu0
      %600 = vmatpush.bf16.msra.mxu0 0
      %601 = vmatpush.bf16.msra.mxu0 0
      %602 = vmatpush.bf16.msra.mxu0 0
      %603 = vmatpush.bf16.msra.mxu0 0
      %604 = vmatpush.bf16.msra.mxu0 0
      %605 = vmatpush.bf16.msra.mxu0 0
      %606 = vmatpush.bf16.msra.mxu0 0
      %607 = vmatpush.bf16.msra.mxu0 %v530
      %608 = vmatmul.bf16.gmra.mxu0 %v512
      %v609 = vpop.f32.mrf.mxu0
      %v610 = vadd.f32 0.0, %v609
      %v611 = vpop.f32.mrf.mxu0
      %612 = vdwg.mxu0
      %613 = vmatpush.bf16.msra.mxu0 0
      %614 = vmatpush.bf16.msra.mxu0 0
      %615 = vmatpush.bf16.msra.mxu0 0
      %616 = vmatpush.bf16.msra.mxu0 0
      %617 = vmatpush.bf16.msra.mxu0 0
      %618 = vmatpush.bf16.msra.mxu0 0
      %619 = vmatpush.bf16.msra.mxu0 0
      %620 = vmatpush.bf16.msra.mxu0 %v533
      %621 = vmatmul.bf16.gmra.mxu0 %v512
      %v622 = vpop.f32.mrf.mxu0
      %v623 = vadd.f32 0.0, %v622
      %v624 = vpop.f32.mrf.mxu0
      %625 = vdwg.mxu0
      %v626 = vadd.f32 %v381, %v545
      %v627 = vadd.f32 %v394, %v558
      %v628 = vadd.f32 %v407, %v571
      %v629 = vadd.f32 %v420, %v584
      %v630 = vadd.f32 %v433, %v597
      %v631 = vadd.f32 %v446, %v610
      %v632 = vadd.f32 %v459, %v623
      %v633 = vld [vmem:[%s165] sm:$0xff]
      %v634 = vld [vmem:[%s165 + $0x8] sm:$0xff]
      %s635 = scalar_lea.vmem %s0, 12
      %v636 = vld [vmem:[%s635] sm:$0x7]
      %638 = vst [vmem:[#allocation1] ss:$4 sm:$0xff] %v633
      %s640 = scalar_lea.vmem [#allocation1], 32
      %641 = vst [vmem:[%s640] ss:$4 sm:$0xff] %v634
      %v642 = vld.sshfl [vmem:[#allocation1] sm:$0xff pattern:$0x73625140]
      %v644 = vld.sshfl [vmem:[#allocation1 + $0x8] sm:$0xff pattern:$0x73625140]
      %v646 = vld.sshfl [vmem:[#allocation1 + $0x10] sm:$0xff pattern:$0x73625140]
      %v648 = vld.sshfl [vmem:[#allocation1 + $0x18] sm:$0xff pattern:$0x73625140]
      %v650 = vld.sshfl [vmem:[#allocation1 + $0x20] sm:$0xff pattern:$0x73625140]
      %v652 = vld.sshfl [vmem:[#allocation1 + $0x28] sm:$0xff pattern:$0x73625140]
      %v654 = vld.sshfl [vmem:[#allocation1 + $0x30] sm:$0xff pattern:$0x73625140]
      %v656 = vld.sshfl [vmem:[#allocation1 + $0x38] sm:$0xff pattern:$0x73625140]
      %658 = vrot.lane.b32.xlu0 %v642, 125
      %v659 = vpop.permute.xlu0 %658
      %660 = vrot.lane.b32.xlu0 %v644, 125
      %v661 = vpop.permute.xlu0 %660
      %662 = vrot.lane.b32.xlu0 %v646, 125
      %v663 = vpop.permute.xlu0 %662
      %664 = vrot.lane.b32.xlu0 %v648, 125
      %v665 = vpop.permute.xlu0 %664
      %666 = vrot.lane.b32.xlu0 %v650, 125
      %v667 = vpop.permute.xlu0 %666
      %668 = vrot.lane.b32.xlu0 %v652, 125
      %v669 = vpop.permute.xlu0 %668
      %670 = vrot.lane.b32.xlu0 %v654, 125
      %v671 = vpop.permute.xlu0 %670
      %672 = vrot.lane.b32.xlu0 %v656, 125
      %v673 = vpop.permute.xlu0 %672
      %vm674 = vcmask 1022976
      %v675 = vsel %vm674, %v659, %v661
      %v676 = vsel %vm674, %v661, %v663
      %v677 = vsel %vm674, %v663, %v665
      %v678 = vsel %vm674, %v665, %v667
      %v679 = vsel %vm674, %v667, %v669
      %v680 = vsel %vm674, %v669, %v671
      %v681 = vsel %vm674, %v671, %v673
      %v683 = vsel %vm223, %v636, 0
      %v686 = vand.u32 %v675, %v230
      %v689 = vand.u32 %v676, %v230
      %v692 = vand.u32 %v677, %v230
      %v695 = vand.u32 %v678, %v230
      %v698 = vand.u32 %v679, %v230
      %v701 = vand.u32 %v680, %v230
      %v704 = vand.u32 %v681, %v230
      %706 = vmatpush.bf16.msra.mxu0 0
      %707 = vmatpush.bf16.msra.mxu0 0
      %708 = vmatpush.bf16.msra.mxu0 0
      %709 = vmatpush.bf16.msra.mxu0 0
      %710 = vmatpush.bf16.msra.mxu0 0
      %711 = vmatpush.bf16.msra.mxu0 0
      %712 = vmatpush.bf16.msra.mxu0 0
      %713 = vmatpush.bf16.msra.mxu0 %v686
      %714 = vmatmul.bf16.gmra.mxu0 %v683
      %v715 = vpop.f32.mrf.mxu0
      %v716 = vadd.f32 0.0, %v715
      %v717 = vpop.f32.mrf.mxu0
      %718 = vdwg.mxu0
      %719 = vmatpush.bf16.msra.mxu0 0
      %720 = vmatpush.bf16.msra.mxu0 0
      %721 = vmatpush.bf16.msra.mxu0 0
      %722 = vmatpush.bf16.msra.mxu0 0
      %723 = vmatpush.bf16.msra.mxu0 0
      %724 = vmatpush.bf16.msra.mxu0 0
      %725 = vmatpush.bf16.msra.mxu0 0
      %726 = vmatpush.bf16.msra.mxu0 %v689
      %727 = vmatmul.bf16.gmra.mxu0 %v683
      %v728 = vpop.f32.mrf.mxu0
      %v729 = vadd.f32 0.0, %v728
      %v730 = vpop.f32.mrf.mxu0
      %731 = vdwg.mxu0
      %732 = vmatpush.bf16.msra.mxu0 0
      %733 = vmatpush.bf16.msra.mxu0 0
      %734 = vmatpush.bf16.msra.mxu0 0
      %735 = vmatpush.bf16.msra.mxu0 0
      %736 = vmatpush.bf16.msra.mxu0 0
      %737 = vmatpush.bf16.msra.mxu0 0
      %738 = vmatpush.bf16.msra.mxu0 0
      %739 = vmatpush.bf16.msra.mxu0 %v692
      %740 = vmatmul.bf16.gmra.mxu0 %v683
      %v741 = vpop.f32.mrf.mxu0
      %v742 = vadd.f32 0.0, %v741
      %v743 = vpop.f32.mrf.mxu0
      %744 = vdwg.mxu0
      %745 = vmatpush.bf16.msra.mxu0 0
      %746 = vmatpush.bf16.msra.mxu0 0
      %747 = vmatpush.bf16.msra.mxu0 0
      %748 = vmatpush.bf16.msra.mxu0 0
      %749 = vmatpush.bf16.msra.mxu0 0
      %750 = vmatpush.bf16.msra.mxu0 0
      %751 = vmatpush.bf16.msra.mxu0 0
      %752 = vmatpush.bf16.msra.mxu0 %v695
      %753 = vmatmul.bf16.gmra.mxu0 %v683
      %v754 = vpop.f32.mrf.mxu0
      %v755 = vadd.f32 0.0, %v754
      %v756 = vpop.f32.mrf.mxu0
      %757 = vdwg.mxu0
      %758 = vmatpush.bf16.msra.mxu0 0
      %759 = vmatpush.bf16.msra.mxu0 0
      %760 = vmatpush.bf16.msra.mxu0 0
      %761 = vmatpush.bf16.msra.mxu0 0
      %762 = vmatpush.bf16.msra.mxu0 0
      %763 = vmatpush.bf16.msra.mxu0 0
      %764 = vmatpush.bf16.msra.mxu0 0
      %765 = vmatpush.bf16.msra.mxu0 %v698
      %766 = vmatmul.bf16.gmra.mxu0 %v683
      %v767 = vpop.f32.mrf.mxu0
      %v768 = vadd.f32 0.0, %v767
      %v769 = vpop.f32.mrf.mxu0
      %770 = vdwg.mxu0
      %771 = vmatpush.bf16.msra.mxu0 0
      %772 = vmatpush.bf16.msra.mxu0 0
      %773 = vmatpush.bf16.msra.mxu0 0
      %774 = vmatpush.bf16.msra.mxu0 0
      %775 = vmatpush.bf16.msra.mxu0 0
      %776 = vmatpush.bf16.msra.mxu0 0
      %777 = vmatpush.bf16.msra.mxu0 0
      %778 = vmatpush.bf16.msra.mxu0 %v701
      %779 = vmatmul.bf16.gmra.mxu0 %v683
      %v780 = vpop.f32.mrf.mxu0
      %v781 = vadd.f32 0.0, %v780
      %v782 = vpop.f32.mrf.mxu0
      %783 = vdwg.mxu0
      %784 = vmatpush.bf16.msra.mxu0 0
      %785 = vmatpush.bf16.msra.mxu0 0
      %786 = vmatpush.bf16.msra.mxu0 0
      %787 = vmatpush.bf16.msra.mxu0 0
      %788 = vmatpush.bf16.msra.mxu0 0
      %789 = vmatpush.bf16.msra.mxu0 0
      %790 = vmatpush.bf16.msra.mxu0 0
      %791 = vmatpush.bf16.msra.mxu0 %v704
      %792 = vmatmul.bf16.gmra.mxu0 %v683
      %v793 = vpop.f32.mrf.mxu0
      %v794 = vadd.f32 0.0, %v793
      %v795 = vpop.f32.mrf.mxu0
      %796 = vdwg.mxu0
      %v797 = vadd.f32 %v626, %v716
      %v798 = vadd.f32 %v627, %v729
      %v799 = vadd.f32 %v628, %v742
      %v800 = vadd.f32 %v629, %v755
      %v801 = vadd.f32 %v630, %v768
      %v802 = vadd.f32 %v631, %v781
      %v803 = vadd.f32 %v632, %v794
      %v804 = vld [vmem:[%s165] sm:$0xff]
      %v805 = vld [vmem:[%s165 + $0x8] sm:$0xff]
      %s806 = scalar_lea.vmem %s0, 16
      %v807 = vld [vmem:[%s806] sm:$0x7]
      %809 = vst [vmem:[#allocation1] ss:$4 sm:$0xff] %v804
      %s811 = scalar_lea.vmem [#allocation1], 32
      %812 = vst [vmem:[%s811] ss:$4 sm:$0xff] %v805
      %v813 = vld.sshfl [vmem:[#allocation1] sm:$0xff pattern:$0x73625140]
      %v815 = vld.sshfl [vmem:[#allocation1 + $0x8] sm:$0xff pattern:$0x73625140]
      %v817 = vld.sshfl [vmem:[#allocation1 + $0x10] sm:$0xff pattern:$0x73625140]
      %v819 = vld.sshfl [vmem:[#allocation1 + $0x18] sm:$0xff pattern:$0x73625140]
      %v821 = vld.sshfl [vmem:[#allocation1 + $0x20] sm:$0xff pattern:$0x73625140]
      %v823 = vld.sshfl [vmem:[#allocation1 + $0x28] sm:$0xff pattern:$0x73625140]
      %v825 = vld.sshfl [vmem:[#allocation1 + $0x30] sm:$0xff pattern:$0x73625140]
      %v827 = vld.sshfl [vmem:[#allocation1 + $0x38] sm:$0xff pattern:$0x73625140]
      %829 = vrot.lane.b32.xlu0 %v813, 124
      %v830 = vpop.permute.xlu0 %829
      %831 = vrot.lane.b32.xlu0 %v815, 124
      %v832 = vpop.permute.xlu0 %831
      %833 = vrot.lane.b32.xlu0 %v817, 124
      %v834 = vpop.permute.xlu0 %833
      %835 = vrot.lane.b32.xlu0 %v819, 124
      %v836 = vpop.permute.xlu0 %835
      %837 = vrot.lane.b32.xlu0 %v821, 124
      %v838 = vpop.permute.xlu0 %837
      %839 = vrot.lane.b32.xlu0 %v823, 124
      %v840 = vpop.permute.xlu0 %839
      %841 = vrot.lane.b32.xlu0 %v825, 124
      %v842 = vpop.permute.xlu0 %841
      %843 = vrot.lane.b32.xlu0 %v827, 124
      %v844 = vpop.permute.xlu0 %843
      %vm845 = vcmask 1014784
      %v846 = vsel %vm845, %v830, %v832
      %v847 = vsel %vm845, %v832, %v834
      %v848 = vsel %vm845, %v834, %v836
      %v849 = vsel %vm845, %v836, %v838
      %v850 = vsel %vm845, %v838, %v840
      %v851 = vsel %vm845, %v840, %v842
      %v852 = vsel %vm845, %v842, %v844
      %v854 = vsel %vm223, %v807, 0
      %v857 = vand.u32 %v846, %v230
      %v860 = vand.u32 %v847, %v230
      %v863 = vand.u32 %v848, %v230
      %v866 = vand.u32 %v849, %v230
      %v869 = vand.u32 %v850, %v230
      %v872 = vand.u32 %v851, %v230
      %v875 = vand.u32 %v852, %v230
      %877 = vmatpush.bf16.msra.mxu0 0
      %878 = vmatpush.bf16.msra.mxu0 0
      %879 = vmatpush.bf16.msra.mxu0 0
      %880 = vmatpush.bf16.msra.mxu0 0
      %881 = vmatpush.bf16.msra.mxu0 0
      %882 = vmatpush.bf16.msra.mxu0 0
      %883 = vmatpush.bf16.msra.mxu0 0
      %884 = vmatpush.bf16.msra.mxu0 %v857
      %885 = vmatmul.bf16.gmra.mxu0 %v854
      %v886 = vpop.f32.mrf.mxu0
      %v887 = vadd.f32 0.0, %v886
      %v888 = vpop.f32.mrf.mxu0
      %889 = vdwg.mxu0
      %890 = vmatpush.bf16.msra.mxu0 0
      %891 = vmatpush.bf16.msra.mxu0 0
      %892 = vmatpush.bf16.msra.mxu0 0
      %893 = vmatpush.bf16.msra.mxu0 0
      %894 = vmatpush.bf16.msra.mxu0 0
      %895 = vmatpush.bf16.msra.mxu0 0
      %896 = vmatpush.bf16.msra.mxu0 0
      %897 = vmatpush.bf16.msra.mxu0 %v860
      %898 = vmatmul.bf16.gmra.mxu0 %v854
      %v899 = vpop.f32.mrf.mxu0
      %v900 = vadd.f32 0.0, %v899
      %v901 = vpop.f32.mrf.mxu0
      %902 = vdwg.mxu0
      %903 = vmatpush.bf16.msra.mxu0 0
      %904 = vmatpush.bf16.msra.mxu0 0
      %905 = vmatpush.bf16.msra.mxu0 0
      %906 = vmatpush.bf16.msra.mxu0 0
      %907 = vmatpush.bf16.msra.mxu0 0
      %908 = vmatpush.bf16.msra.mxu0 0
      %909 = vmatpush.bf16.msra.mxu0 0
      %910 = vmatpush.bf16.msra.mxu0 %v863
      %911 = vmatmul.bf16.gmra.mxu0 %v854
      %v912 = vpop.f32.mrf.mxu0
      %v913 = vadd.f32 0.0, %v912
      %v914 = vpop.f32.mrf.mxu0
      %915 = vdwg.mxu0
      %916 = vmatpush.bf16.msra.mxu0 0
      %917 = vmatpush.bf16.msra.mxu0 0
      %918 = vmatpush.bf16.msra.mxu0 0
      %919 = vmatpush.bf16.msra.mxu0 0
      %920 = vmatpush.bf16.msra.mxu0 0
      %921 = vmatpush.bf16.msra.mxu0 0
      %922 = vmatpush.bf16.msra.mxu0 0
      %923 = vmatpush.bf16.msra.mxu0 %v866
      %924 = vmatmul.bf16.gmra.mxu0 %v854
      %v925 = vpop.f32.mrf.mxu0
      %v926 = vadd.f32 0.0, %v925
      %v927 = vpop.f32.mrf.mxu0
      %928 = vdwg.mxu0
      %929 = vmatpush.bf16.msra.mxu0 0
      %930 = vmatpush.bf16.msra.mxu0 0
      %931 = vmatpush.bf16.msra.mxu0 0
      %932 = vmatpush.bf16.msra.mxu0 0
      %933 = vmatpush.bf16.msra.mxu0 0
      %934 = vmatpush.bf16.msra.mxu0 0
      %935 = vmatpush.bf16.msra.mxu0 0
      %936 = vmatpush.bf16.msra.mxu0 %v869
      %937 = vmatmul.bf16.gmra.mxu0 %v854
      %v938 = vpop.f32.mrf.mxu0
      %v939 = vadd.f32 0.0, %v938
      %v940 = vpop.f32.mrf.mxu0
      %941 = vdwg.mxu0
      %942 = vmatpush.bf16.msra.mxu0 0
      %943 = vmatpush.bf16.msra.mxu0 0
      %944 = vmatpush.bf16.msra.mxu0 0
      %945 = vmatpush.bf16.msra.mxu0 0
      %946 = vmatpush.bf16.msra.mxu0 0
      %947 = vmatpush.bf16.msra.mxu0 0
      %948 = vmatpush.bf16.msra.mxu0 0
      %949 = vmatpush.bf16.msra.mxu0 %v872
      %950 = vmatmul.bf16.gmra.mxu0 %v854
      %v951 = vpop.f32.mrf.mxu0
      %v952 = vadd.f32 0.0, %v951
      %v953 = vpop.f32.mrf.mxu0
      %954 = vdwg.mxu0
      %955 = vmatpush.bf16.msra.mxu0 0
      %956 = vmatpush.bf16.msra.mxu0 0
      %957 = vmatpush.bf16.msra.mxu0 0
      %958 = vmatpush.bf16.msra.mxu0 0
      %959 = vmatpush.bf16.msra.mxu0 0
      %960 = vmatpush.bf16.msra.mxu0 0
      %961 = vmatpush.bf16.msra.mxu0 0
      %962 = vmatpush.bf16.msra.mxu0 %v875
      %963 = vmatmul.bf16.gmra.mxu0 %v854
      %v964 = vpop.f32.mrf.mxu0
      %v965 = vadd.f32 0.0, %v964
      %v966 = vpop.f32.mrf.mxu0
      %967 = vdwg.mxu0
      %v968 = vadd.f32 %v797, %v887
      %v969 = vadd.f32 %v798, %v900
      %v970 = vadd.f32 %v799, %v913
      %v971 = vadd.f32 %v800, %v926
      %v972 = vadd.f32 %v801, %v939
      %v973 = vadd.f32 %v802, %v952
      %v974 = vadd.f32 %v803, %v965
      %v975 = vld [vmem:[%s165] sm:$0xff]
      %v976 = vld [vmem:[%s165 + $0x8] sm:$0xff]
      %s977 = scalar_lea.vmem %s0, 20
      %v978 = vld [vmem:[%s977] sm:$0x7]
      %980 = vst [vmem:[#allocation1] ss:$4 sm:$0xff] %v975
      %s982 = scalar_lea.vmem [#allocation1], 32
      %983 = vst [vmem:[%s982] ss:$4 sm:$0xff] %v976
      %v984 = vld.sshfl [vmem:[#allocation1] sm:$0xff pattern:$0x73625140]
      %v986 = vld.sshfl [vmem:[#allocation1 + $0x8] sm:$0xff pattern:$0x73625140]
      %v988 = vld.sshfl [vmem:[#allocation1 + $0x10] sm:$0xff pattern:$0x73625140]
      %v990 = vld.sshfl [vmem:[#allocation1 + $0x18] sm:$0xff pattern:$0x73625140]
      %v992 = vld.sshfl [vmem:[#allocation1 + $0x20] sm:$0xff pattern:$0x73625140]
      %v994 = vld.sshfl [vmem:[#allocation1 + $0x28] sm:$0xff pattern:$0x73625140]
      %v996 = vld.sshfl [vmem:[#allocation1 + $0x30] sm:$0xff pattern:$0x73625140]
      %v998 = vld.sshfl [vmem:[#allocation1 + $0x38] sm:$0xff pattern:$0x73625140]
      %1000 = vrot.lane.b32.xlu0 %v984, 96
      %v1001 = vpop.permute.xlu0 %1000
      %1002 = vrot.lane.b32.xlu0 %v986, 96
      %v1003 = vpop.permute.xlu0 %1002
      %1004 = vrot.lane.b32.xlu0 %v988, 96
      %v1005 = vpop.permute.xlu0 %1004
      %1006 = vrot.lane.b32.xlu0 %v990, 96
      %v1007 = vpop.permute.xlu0 %1006
      %1008 = vrot.lane.b32.xlu0 %v992, 96
      %v1009 = vpop.permute.xlu0 %1008
      %1010 = vrot.lane.b32.xlu0 %v994, 96
      %v1011 = vpop.permute.xlu0 %1010
      %1012 = vrot.lane.b32.xlu0 %v996, 96
      %v1013 = vpop.permute.xlu0 %1012
      %1014 = vrot.lane.b32.xlu0 %v998, 96
      %v1015 = vpop.permute.xlu0 %1014
      %vm1016 = vcmask 785408
      %v1017 = vsel %vm1016, %v1001, %v1003
      %v1018 = vsel %vm1016, %v1003, %v1005
      %v1019 = vsel %vm1016, %v1005, %v1007
      %v1020 = vsel %vm1016, %v1007, %v1009
      %v1021 = vsel %vm1016, %v1009, %v1011
      %v1022 = vsel %vm1016, %v1011, %v1013
      %v1023 = vsel %vm1016, %v1013, %v1015
      %v1025 = vsel %vm223, %v978, 0
      %v1028 = vand.u32 %v1017, %v230
      %v1031 = vand.u32 %v1018, %v230
      %v1034 = vand.u32 %v1019, %v230
      %v1037 = vand.u32 %v1020, %v230
      %v1040 = vand.u32 %v1021, %v230
      %v1043 = vand.u32 %v1022, %v230
      %v1046 = vand.u32 %v1023, %v230
      %1048 = vmatpush.bf16.msra.mxu0 0
      %1049 = vmatpush.bf16.msra.mxu0 0
      %1050 = vmatpush.bf16.msra.mxu0 0
      %1051 = vmatpush.bf16.msra.mxu0 0
      %1052 = vmatpush.bf16.msra.mxu0 0
      %1053 = vmatpush.bf16.msra.mxu0 0
      %1054 = vmatpush.bf16.msra.mxu0 0
      %1055 = vmatpush.bf16.msra.mxu0 %v1028
      %1056 = vmatmul.bf16.gmra.mxu0 %v1025
      %v1057 = vpop.f32.mrf.mxu0
      %v1058 = vadd.f32 0.0, %v1057
      %v1059 = vpop.f32.mrf.mxu0
      %1060 = vdwg.mxu0
      %1061 = vmatpush.bf16.msra.mxu0 0
      %1062 = vmatpush.bf16.msra.mxu0 0
      %1063 = vmatpush.bf16.msra.mxu0 0
      %1064 = vmatpush.bf16.msra.mxu0 0
      %1065 = vmatpush.bf16.msra.mxu0 0
      %1066 = vmatpush.bf16.msra.mxu0 0
      %1067 = vmatpush.bf16.msra.mxu0 0
      %1068 = vmatpush.bf16.msra.mxu0 %v1031
      %1069 = vmatmul.bf16.gmra.mxu0 %v1025
      %v1070 = vpop.f32.mrf.mxu0
      %v1071 = vadd.f32 0.0, %v1070
      %v1072 = vpop.f32.mrf.mxu0
      %1073 = vdwg.mxu0
      %1074 = vmatpush.bf16.msra.mxu0 0
      %1075 = vmatpush.bf16.msra.mxu0 0
      %1076 = vmatpush.bf16.msra.mxu0 0
      %1077 = vmatpush.bf16.msra.mxu0 0
      %1078 = vmatpush.bf16.msra.mxu0 0
      %1079 = vmatpush.bf16.msra.mxu0 0
      %1080 = vmatpush.bf16.msra.mxu0 0
      %1081 = vmatpush.bf16.msra.mxu0 %v1034
      %1082 = vmatmul.bf16.gmra.mxu0 %v1025
      %v1083 = vpop.f32.mrf.mxu0
      %v1084 = vadd.f32 0.0, %v1083
      %v1085 = vpop.f32.mrf.mxu0
      %1086 = vdwg.mxu0
      %1087 = vmatpush.bf16.msra.mxu0 0
      %1088 = vmatpush.bf16.msra.mxu0 0
      %1089 = vmatpush.bf16.msra.mxu0 0
      %1090 = vmatpush.bf16.msra.mxu0 0
      %1091 = vmatpush.bf16.msra.mxu0 0
      %1092 = vmatpush.bf16.msra.mxu0 0
      %1093 = vmatpush.bf16.msra.mxu0 0
      %1094 = vmatpush.bf16.msra.mxu0 %v1037
      %1095 = vmatmul.bf16.gmra.mxu0 %v1025
      %v1096 = vpop.f32.mrf.mxu0
      %v1097 = vadd.f32 0.0, %v1096
      %v1098 = vpop.f32.mrf.mxu0
      %1099 = vdwg.mxu0
      %1100 = vmatpush.bf16.msra.mxu0 0
      %1101 = vmatpush.bf16.msra.mxu0 0
      %1102 = vmatpush.bf16.msra.mxu0 0
      %1103 = vmatpush.bf16.msra.mxu0 0
      %1104 = vmatpush.bf16.msra.mxu0 0
      %1105 = vmatpush.bf16.msra.mxu0 0
      %1106 = vmatpush.bf16.msra.mxu0 0
      %1107 = vmatpush.bf16.msra.mxu0 %v1040
      %1108 = vmatmul.bf16.gmra.mxu0 %v1025
      %v1109 = vpop.f32.mrf.mxu0
      %v1110 = vadd.f32 0.0, %v1109
      %v1111 = vpop.f32.mrf.mxu0
      %1112 = vdwg.mxu0
      %1113 = vmatpush.bf16.msra.mxu0 0
      %1114 = vmatpush.bf16.msra.mxu0 0
      %1115 = vmatpush.bf16.msra.mxu0 0
      %1116 = vmatpush.bf16.msra.mxu0 0
      %1117 = vmatpush.bf16.msra.mxu0 0
      %1118 = vmatpush.bf16.msra.mxu0 0
      %1119 = vmatpush.bf16.msra.mxu0 0
      %1120 = vmatpush.bf16.msra.mxu0 %v1043
      %1121 = vmatmul.bf16.gmra.mxu0 %v1025
      %v1122 = vpop.f32.mrf.mxu0
      %v1123 = vadd.f32 0.0, %v1122
      %v1124 = vpop.f32.mrf.mxu0
      %1125 = vdwg.mxu0
      %1126 = vmatpush.bf16.msra.mxu0 0
      %1127 = vmatpush.bf16.msra.mxu0 0
      %1128 = vmatpush.bf16.msra.mxu0 0
      %1129 = vmatpush.bf16.msra.mxu0 0
      %1130 = vmatpush.bf16.msra.mxu0 0
      %1131 = vmatpush.bf16.msra.mxu0 0
      %1132 = vmatpush.bf16.msra.mxu0 0
      %1133 = vmatpush.bf16.msra.mxu0 %v1046
      %1134 = vmatmul.bf16.gmra.mxu0 %v1025
      %v1135 = vpop.f32.mrf.mxu0
      %v1136 = vadd.f32 0.0, %v1135
      %v1137 = vpop.f32.mrf.mxu0
      %1138 = vdwg.mxu0
      %v1139 = vadd.f32 %v968, %v1058
      %v1140 = vadd.f32 %v969, %v1071
      %v1141 = vadd.f32 %v970, %v1084
      %v1142 = vadd.f32 %v971, %v1097
      %v1143 = vadd.f32 %v972, %v1110
      %v1144 = vadd.f32 %v973, %v1123
      %v1145 = vadd.f32 %v974, %v1136
      %v1146 = vld [vmem:[%s165] sm:$0xff]
      %v1147 = vld [vmem:[%s165 + $0x8] sm:$0xff]
      %s1148 = scalar_lea.vmem %s0, 24
      %v1149 = vld [vmem:[%s1148] sm:$0x7]
      %1151 = vst [vmem:[#allocation1] ss:$4 sm:$0xff] %v1146
      %s1153 = scalar_lea.vmem [#allocation1], 32
      %1154 = vst [vmem:[%s1153] ss:$4 sm:$0xff] %v1147
      %v1155 = vld.sshfl [vmem:[#allocation1] sm:$0xff pattern:$0x73625140]
      %v1157 = vld.sshfl [vmem:[#allocation1 + $0x8] sm:$0xff pattern:$0x73625140]
      %v1159 = vld.sshfl [vmem:[#allocation1 + $0x10] sm:$0xff pattern:$0x73625140]
      %v1161 = vld.sshfl [vmem:[#allocation1 + $0x18] sm:$0xff pattern:$0x73625140]
      %v1163 = vld.sshfl [vmem:[#allocation1 + $0x20] sm:$0xff pattern:$0x73625140]
      %v1165 = vld.sshfl [vmem:[#allocation1 + $0x28] sm:$0xff pattern:$0x73625140]
      %v1167 = vld.sshfl [vmem:[#allocation1 + $0x30] sm:$0xff pattern:$0x73625140]
      %v1169 = vld.sshfl [vmem:[#allocation1 + $0x38] sm:$0xff pattern:$0x73625140]
      %1171 = vrot.lane.b32.xlu0 %v1155, 95
      %v1172 = vpop.permute.xlu0 %1171
      %1173 = vrot.lane.b32.xlu0 %v1157, 95
      %v1174 = vpop.permute.xlu0 %1173
      %1175 = vrot.lane.b32.xlu0 %v1159, 95
      %v1176 = vpop.permute.xlu0 %1175
      %1177 = vrot.lane.b32.xlu0 %v1161, 95
      %v1178 = vpop.permute.xlu0 %1177
      %1179 = vrot.lane.b32.xlu0 %v1163, 95
      %v1180 = vpop.permute.xlu0 %1179
      %1181 = vrot.lane.b32.xlu0 %v1165, 95
      %v1182 = vpop.permute.xlu0 %1181
      %1183 = vrot.lane.b32.xlu0 %v1167, 95
      %v1184 = vpop.permute.xlu0 %1183
      %1185 = vrot.lane.b32.xlu0 %v1169, 95
      %v1186 = vpop.permute.xlu0 %1185
      %vm1187 = vcmask 777216
      %v1188 = vsel %vm1187, %v1172, %v1174
      %v1189 = vsel %vm1187, %v1174, %v1176
      %v1190 = vsel %vm1187, %v1176, %v1178
      %v1191 = vsel %vm1187, %v1178, %v1180
      %v1192 = vsel %vm1187, %v1180, %v1182
      %v1193 = vsel %vm1187, %v1182, %v1184
      %v1194 = vsel %vm1187, %v1184, %v1186
      %v1196 = vsel %vm223, %v1149, 0
      %v1199 = vand.u32 %v1188, %v230
      %v1202 = vand.u32 %v1189, %v230
      %v1205 = vand.u32 %v1190, %v230
      %v1208 = vand.u32 %v1191, %v230
      %v1211 = vand.u32 %v1192, %v230
      %v1214 = vand.u32 %v1193, %v230
      %v1217 = vand.u32 %v1194, %v230
      %1219 = vmatpush.bf16.msra.mxu0 0
      %1220 = vmatpush.bf16.msra.mxu0 0
      %1221 = vmatpush.bf16.msra.mxu0 0
      %1222 = vmatpush.bf16.msra.mxu0 0
      %1223 = vmatpush.bf16.msra.mxu0 0
      %1224 = vmatpush.bf16.msra.mxu0 0
      %1225 = vmatpush.bf16.msra.mxu0 0
      %1226 = vmatpush.bf16.msra.mxu0 %v1199
      %1227 = vmatmul.bf16.gmra.mxu0 %v1196
      %v1228 = vpop.f32.mrf.mxu0
      %v1229 = vadd.f32 0.0, %v1228
      %v1230 = vpop.f32.mrf.mxu0
      %1231 = vdwg.mxu0
      %1232 = vmatpush.bf16.msra.mxu0 0
      %1233 = vmatpush.bf16.msra.mxu0 0
      %1234 = vmatpush.bf16.msra.mxu0 0
      %1235 = vmatpush.bf16.msra.mxu0 0
      %1236 = vmatpush.bf16.msra.mxu0 0
      %1237 = vmatpush.bf16.msra.mxu0 0
      %1238 = vmatpush.bf16.msra.mxu0 0
      %1239 = vmatpush.bf16.msra.mxu0 %v1202
      %1240 = vmatmul.bf16.gmra.mxu0 %v1196
      %v1241 = vpop.f32.mrf.mxu0
      %v1242 = vadd.f32 0.0, %v1241
      %v1243 = vpop.f32.mrf.mxu0
      %1244 = vdwg.mxu0
      %1245 = vmatpush.bf16.msra.mxu0 0
      %1246 = vmatpush.bf16.msra.mxu0 0
      %1247 = vmatpush.bf16.msra.mxu0 0
      %1248 = vmatpush.bf16.msra.mxu0 0
      %1249 = vmatpush.bf16.msra.mxu0 0
      %1250 = vmatpush.bf16.msra.mxu0 0
      %1251 = vmatpush.bf16.msra.mxu0 0
      %1252 = vmatpush.bf16.msra.mxu0 %v1205
      %1253 = vmatmul.bf16.gmra.mxu0 %v1196
      %v1254 = vpop.f32.mrf.mxu0
      %v1255 = vadd.f32 0.0, %v1254
      %v1256 = vpop.f32.mrf.mxu0
      %1257 = vdwg.mxu0
      %1258 = vmatpush.bf16.msra.mxu0 0
      %1259 = vmatpush.bf16.msra.mxu0 0
      %1260 = vmatpush.bf16.msra.mxu0 0
      %1261 = vmatpush.bf16.msra.mxu0 0
      %1262 = vmatpush.bf16.msra.mxu0 0
      %1263 = vmatpush.bf16.msra.mxu0 0
      %1264 = vmatpush.bf16.msra.mxu0 0
      %1265 = vmatpush.bf16.msra.mxu0 %v1208
      %1266 = vmatmul.bf16.gmra.mxu0 %v1196
      %v1267 = vpop.f32.mrf.mxu0
      %v1268 = vadd.f32 0.0, %v1267
      %v1269 = vpop.f32.mrf.mxu0
      %1270 = vdwg.mxu0
      %1271 = vmatpush.bf16.msra.mxu0 0
      %1272 = vmatpush.bf16.msra.mxu0 0
      %1273 = vmatpush.bf16.msra.mxu0 0
      %1274 = vmatpush.bf16.msra.mxu0 0
      %1275 = vmatpush.bf16.msra.mxu0 0
      %1276 = vmatpush.bf16.msra.mxu0 0
      %1277 = vmatpush.bf16.msra.mxu0 0
      %1278 = vmatpush.bf16.msra.mxu0 %v1211
      %1279 = vmatmul.bf16.gmra.mxu0 %v1196
      %v1280 = vpop.f32.mrf.mxu0
      %v1281 = vadd.f32 0.0, %v1280
      %v1282 = vpop.f32.mrf.mxu0
      %1283 = vdwg.mxu0
      %1284 = vmatpush.bf16.msra.mxu0 0
      %1285 = vmatpush.bf16.msra.mxu0 0
      %1286 = vmatpush.bf16.msra.mxu0 0
      %1287 = vmatpush.bf16.msra.mxu0 0
      %1288 = vmatpush.bf16.msra.mxu0 0
      %1289 = vmatpush.bf16.msra.mxu0 0
      %1290 = vmatpush.bf16.msra.mxu0 0
      %1291 = vmatpush.bf16.msra.mxu0 %v1214
      %1292 = vmatmul.bf16.gmra.mxu0 %v1196
      %v1293 = vpop.f32.mrf.mxu0
      %v1294 = vadd.f32 0.0, %v1293
      %v1295 = vpop.f32.mrf.mxu0
      %1296 = vdwg.mxu0
      %1297 = vmatpush.bf16.msra.mxu0 0
      %1298 = vmatpush.bf16.msra.mxu0 0
      %1299 = vmatpush.bf16.msra.mxu0 0
      %1300 = vmatpush.bf16.msra.mxu0 0
      %1301 = vmatpush.bf16.msra.mxu0 0
      %1302 = vmatpush.bf16.msra.mxu0 0
      %1303 = vmatpush.bf16.msra.mxu0 0
      %1304 = vmatpush.bf16.msra.mxu0 %v1217
      %1305 = vmatmul.bf16.gmra.mxu0 %v1196
      %v1306 = vpop.f32.mrf.mxu0
      %v1307 = vadd.f32 0.0, %v1306
      %v1308 = vpop.f32.mrf.mxu0
      %1309 = vdwg.mxu0
      %v1310 = vadd.f32 %v1139, %v1229
      %v1311 = vadd.f32 %v1140, %v1242
      %v1312 = vadd.f32 %v1141, %v1255
      %v1313 = vadd.f32 %v1142, %v1268
      %v1314 = vadd.f32 %v1143, %v1281
      %v1315 = vadd.f32 %v1144, %v1294
      %v1316 = vadd.f32 %v1145, %v1307
      %v1317 = vld [vmem:[%s165] sm:$0xff]
      %v1318 = vld [vmem:[%s165 + $0x8] sm:$0xff]
      %s1319 = scalar_lea.vmem %s0, 28
      %v1320 = vld [vmem:[%s1319] sm:$0x7]
      %1322 = vst [vmem:[#allocation1] ss:$4 sm:$0xff] %v1317
      %s1324 = scalar_lea.vmem [#allocation1], 32
      %1325 = vst [vmem:[%s1324] ss:$4 sm:$0xff] %v1318
      %v1326 = vld.sshfl [vmem:[#allocation1] sm:$0xff pattern:$0x73625140]
      %v1328 = vld.sshfl [vmem:[#allocation1 + $0x8] sm:$0xff pattern:$0x73625140]
      %v1330 = vld.sshfl [vmem:[#allocation1 + $0x10] sm:$0xff pattern:$0x73625140]
      %v1332 = vld.sshfl [vmem:[#allocation1 + $0x18] sm:$0xff pattern:$0x73625140]
      %v1334 = vld.sshfl [vmem:[#allocation1 + $0x20] sm:$0xff pattern:$0x73625140]
      %v1336 = vld.sshfl [vmem:[#allocation1 + $0x28] sm:$0xff pattern:$0x73625140]
      %v1338 = vld.sshfl [vmem:[#allocation1 + $0x30] sm:$0xff pattern:$0x73625140]
      %v1340 = vld.sshfl [vmem:[#allocation1 + $0x38] sm:$0xff pattern:$0x73625140]
      %1342 = vrot.lane.b32.xlu0 %v1326, 94
      %v1343 = vpop.permute.xlu0 %1342
      %1344 = vrot.lane.b32.xlu0 %v1328, 94
      %v1345 = vpop.permute.xlu0 %1344
      %1346 = vrot.lane.b32.xlu0 %v1330, 94
      %v1347 = vpop.permute.xlu0 %1346
      %1348 = vrot.lane.b32.xlu0 %v1332, 94
      %v1349 = vpop.permute.xlu0 %1348
      %1350 = vrot.lane.b32.xlu0 %v1334, 94
      %v1351 = vpop.permute.xlu0 %1350
      %1352 = vrot.lane.b32.xlu0 %v1336, 94
      %v1353 = vpop.permute.xlu0 %1352
      %1354 = vrot.lane.b32.xlu0 %v1338, 94
      %v1355 = vpop.permute.xlu0 %1354
      %1356 = vrot.lane.b32.xlu0 %v1340, 94
      %v1357 = vpop.permute.xlu0 %1356
      %vm1358 = vcmask 769024
      %v1359 = vsel %vm1358, %v1343, %v1345
      %v1360 = vsel %vm1358, %v1345, %v1347
      %v1361 = vsel %vm1358, %v1347, %v1349
      %v1362 = vsel %vm1358, %v1349, %v1351
      %v1363 = vsel %vm1358, %v1351, %v1353
      %v1364 = vsel %vm1358, %v1353, %v1355
      %v1365 = vsel %vm1358, %v1355, %v1357
      %v1367 = vsel %vm223, %v1320, 0
      %v1370 = vand.u32 %v1359, %v230
      %v1373 = vand.u32 %v1360, %v230
      %v1376 = vand.u32 %v1361, %v230
      %v1379 = vand.u32 %v1362, %v230
      %v1382 = vand.u32 %v1363, %v230
      %v1385 = vand.u32 %v1364, %v230
      %v1388 = vand.u32 %v1365, %v230
      %1390 = vmatpush.bf16.msra.mxu0 0
      %1391 = vmatpush.bf16.msra.mxu0 0
      %1392 = vmatpush.bf16.msra.mxu0 0
      %1393 = vmatpush.bf16.msra.mxu0 0
      %1394 = vmatpush.bf16.msra.mxu0 0
      %1395 = vmatpush.bf16.msra.mxu0 0
      %1396 = vmatpush.bf16.msra.mxu0 0
      %1397 = vmatpush.bf16.msra.mxu0 %v1370
      %1398 = vmatmul.bf16.gmra.mxu0 %v1367
      %v1399 = vpop.f32.mrf.mxu0
      %v1400 = vadd.f32 0.0, %v1399
      %v1401 = vpop.f32.mrf.mxu0
      %1402 = vdwg.mxu0
      %1403 = vmatpush.bf16.msra.mxu0 0
      %1404 = vmatpush.bf16.msra.mxu0 0
      %1405 = vmatpush.bf16.msra.mxu0 0
      %1406 = vmatpush.bf16.msra.mxu0 0
      %1407 = vmatpush.bf16.msra.mxu0 0
      %1408 = vmatpush.bf16.msra.mxu0 0
      %1409 = vmatpush.bf16.msra.mxu0 0
      %1410 = vmatpush.bf16.msra.mxu0 %v1373
      %1411 = vmatmul.bf16.gmra.mxu0 %v1367
      %v1412 = vpop.f32.mrf.mxu0
      %v1413 = vadd.f32 0.0, %v1412
      %v1414 = vpop.f32.mrf.mxu0
      %1415 = vdwg.mxu0
      %1416 = vmatpush.bf16.msra.mxu0 0
      %1417 = vmatpush.bf16.msra.mxu0 0
      %1418 = vmatpush.bf16.msra.mxu0 0
      %1419 = vmatpush.bf16.msra.mxu0 0
      %1420 = vmatpush.bf16.msra.mxu0 0
      %1421 = vmatpush.bf16.msra.mxu0 0
      %1422 = vmatpush.bf16.msra.mxu0 0
      %1423 = vmatpush.bf16.msra.mxu0 %v1376
      %1424 = vmatmul.bf16.gmra.mxu0 %v1367
      %v1425 = vpop.f32.mrf.mxu0
      %v1426 = vadd.f32 0.0, %v1425
      %v1427 = vpop.f32.mrf.mxu0
      %1428 = vdwg.mxu0
      %1429 = vmatpush.bf16.msra.mxu0 0
      %1430 = vmatpush.bf16.msra.mxu0 0
      %1431 = vmatpush.bf16.msra.mxu0 0
      %1432 = vmatpush.bf16.msra.mxu0 0
      %1433 = vmatpush.bf16.msra.mxu0 0
      %1434 = vmatpush.bf16.msra.mxu0 0
      %1435 = vmatpush.bf16.msra.mxu0 0
      %1436 = vmatpush.bf16.msra.mxu0 %v1379
      %1437 = vmatmul.bf16.gmra.mxu0 %v1367
      %v1438 = vpop.f32.mrf.mxu0
      %v1439 = vadd.f32 0.0, %v1438
      %v1440 = vpop.f32.mrf.mxu0
      %1441 = vdwg.mxu0
      %1442 = vmatpush.bf16.msra.mxu0 0
      %1443 = vmatpush.bf16.msra.mxu0 0
      %1444 = vmatpush.bf16.msra.mxu0 0
      %1445 = vmatpush.bf16.msra.mxu0 0
      %1446 = vmatpush.bf16.msra.mxu0 0
      %1447 = vmatpush.bf16.msra.mxu0 0
      %1448 = vmatpush.bf16.msra.mxu0 0
      %1449 = vmatpush.bf16.msra.mxu0 %v1382
      %1450 = vmatmul.bf16.gmra.mxu0 %v1367
      %v1451 = vpop.f32.mrf.mxu0
      %v1452 = vadd.f32 0.0, %v1451
      %v1453 = vpop.f32.mrf.mxu0
      %1454 = vdwg.mxu0
      %1455 = vmatpush.bf16.msra.mxu0 0
      %1456 = vmatpush.bf16.msra.mxu0 0
      %1457 = vmatpush.bf16.msra.mxu0 0
      %1458 = vmatpush.bf16.msra.mxu0 0
      %1459 = vmatpush.bf16.msra.mxu0 0
      %1460 = vmatpush.bf16.msra.mxu0 0
      %1461 = vmatpush.bf16.msra.mxu0 0
      %1462 = vmatpush.bf16.msra.mxu0 %v1385
      %1463 = vmatmul.bf16.gmra.mxu0 %v1367
      %v1464 = vpop.f32.mrf.mxu0
      %v1465 = vadd.f32 0.0, %v1464
      %v1466 = vpop.f32.mrf.mxu0
      %1467 = vdwg.mxu0
      %1468 = vmatpush.bf16.msra.mxu0 0
      %1469 = vmatpush.bf16.msra.mxu0 0
      %1470 = vmatpush.bf16.msra.mxu0 0
      %1471 = vmatpush.bf16.msra.mxu0 0
      %1472 = vmatpush.bf16.msra.mxu0 0
      %1473 = vmatpush.bf16.msra.mxu0 0
      %1474 = vmatpush.bf16.msra.mxu0 0
      %1475 = vmatpush.bf16.msra.mxu0 %v1388
      %1476 = vmatmul.bf16.gmra.mxu0 %v1367
      %v1477 = vpop.f32.mrf.mxu0
      %v1478 = vadd.f32 0.0, %v1477
      %v1479 = vpop.f32.mrf.mxu0
      %1480 = vdwg.mxu0
      %v1481 = vadd.f32 %v1310, %v1400
      %v1482 = vadd.f32 %v1311, %v1413
      %v1483 = vadd.f32 %v1312, %v1426
      %v1484 = vadd.f32 %v1313, %v1439
      %v1485 = vadd.f32 %v1314, %v1452
      %v1486 = vadd.f32 %v1315, %v1465
      %v1487 = vadd.f32 %v1316, %v1478
      %v1488 = vld [vmem:[%s165] sm:$0xff]
      %v1489 = vld [vmem:[%s165 + $0x8] sm:$0xff]
      %s1490 = scalar_lea.vmem %s0, 32
      %v1491 = vld [vmem:[%s1490] sm:$0x7]
      %1493 = vst [vmem:[#allocation1] ss:$4 sm:$0xff] %v1488
      %s1495 = scalar_lea.vmem [#allocation1], 32
      %1496 = vst [vmem:[%s1495] ss:$4 sm:$0xff] %v1489
      %v1497 = vld.sshfl [vmem:[#allocation1] sm:$0xff pattern:$0x73625140]
      %v1499 = vld.sshfl [vmem:[#allocation1 + $0x8] sm:$0xff pattern:$0x73625140]
      %v1501 = vld.sshfl [vmem:[#allocation1 + $0x10] sm:$0xff pattern:$0x73625140]
      %v1503 = vld.sshfl [vmem:[#allocation1 + $0x18] sm:$0xff pattern:$0x73625140]
      %v1505 = vld.sshfl [vmem:[#allocation1 + $0x20] sm:$0xff pattern:$0x73625140]
      %v1507 = vld.sshfl [vmem:[#allocation1 + $0x28] sm:$0xff pattern:$0x73625140]
      %v1509 = vld.sshfl [vmem:[#allocation1 + $0x30] sm:$0xff pattern:$0x73625140]
      %v1511 = vld.sshfl [vmem:[#allocation1 + $0x38] sm:$0xff pattern:$0x73625140]
      %1513 = vrot.lane.b32.xlu0 %v1497, 93
      %v1514 = vpop.permute.xlu0 %1513
      %1515 = vrot.lane.b32.xlu0 %v1499, 93
      %v1516 = vpop.permute.xlu0 %1515
      %1517 = vrot.lane.b32.xlu0 %v1501, 93
      %v1518 = vpop.permute.xlu0 %1517
      %1519 = vrot.lane.b32.xlu0 %v1503, 93
      %v1520 = vpop.permute.xlu0 %1519
      %1521 = vrot.lane.b32.xlu0 %v1505, 93
      %v1522 = vpop.permute.xlu0 %1521
      %1523 = vrot.lane.b32.xlu0 %v1507, 93
      %v1524 = vpop.permute.xlu0 %1523
      %1525 = vrot.lane.b32.xlu0 %v1509, 93
      %v1526 = vpop.permute.xlu0 %1525
      %1527 = vrot.lane.b32.xlu0 %v1511, 93
      %v1528 = vpop.permute.xlu0 %1527
      %vm1529 = vcmask 760832
      %v1530 = vsel %vm1529, %v1514, %v1516
      %v1531 = vsel %vm1529, %v1516, %v1518
      %v1532 = vsel %vm1529, %v1518, %v1520
      %v1533 = vsel %vm1529, %v1520, %v1522
      %v1534 = vsel %vm1529, %v1522, %v1524
      %v1535 = vsel %vm1529, %v1524, %v1526
      %v1536 = vsel %vm1529, %v1526, %v1528
      %v1538 = vsel %vm223, %v1491, 0
      %v1541 = vand.u32 %v1530, %v230
      %v1544 = vand.u32 %v1531, %v230
      %v1547 = vand.u32 %v1532, %v230
      %v1550 = vand.u32 %v1533, %v230
      %v1553 = vand.u32 %v1534, %v230
      %v1556 = vand.u32 %v1535, %v230
      %v1559 = vand.u32 %v1536, %v230
      %1561 = vmatpush.bf16.msra.mxu0 0
      %1562 = vmatpush.bf16.msra.mxu0 0
      %1563 = vmatpush.bf16.msra.mxu0 0
      %1564 = vmatpush.bf16.msra.mxu0 0
      %1565 = vmatpush.bf16.msra.mxu0 0
      %1566 = vmatpush.bf16.msra.mxu0 0
      %1567 = vmatpush.bf16.msra.mxu0 0
      %1568 = vmatpush.bf16.msra.mxu0 %v1541
      %1569 = vmatmul.bf16.gmra.mxu0 %v1538
      %v1570 = vpop.f32.mrf.mxu0
      %v1571 = vadd.f32 0.0, %v1570
      %v1572 = vpop.f32.mrf.mxu0
      %1573 = vdwg.mxu0
      %1574 = vmatpush.bf16.msra.mxu0 0
      %1575 = vmatpush.bf16.msra.mxu0 0
      %1576 = vmatpush.bf16.msra.mxu0 0
      %1577 = vmatpush.bf16.msra.mxu0 0
      %1578 = vmatpush.bf16.msra.mxu0 0
      %1579 = vmatpush.bf16.msra.mxu0 0
      %1580 = vmatpush.bf16.msra.mxu0 0
      %1581 = vmatpush.bf16.msra.mxu0 %v1544
      %1582 = vmatmul.bf16.gmra.mxu0 %v1538
      %v1583 = vpop.f32.mrf.mxu0
      %v1584 = vadd.f32 0.0, %v1583
      %v1585 = vpop.f32.mrf.mxu0
      %1586 = vdwg.mxu0
      %1587 = vmatpush.bf16.msra.mxu0 0
      %1588 = vmatpush.bf16.msra.mxu0 0
      %1589 = vmatpush.bf16.msra.mxu0 0
      %1590 = vmatpush.bf16.msra.mxu0 0
      %1591 = vmatpush.bf16.msra.mxu0 0
      %1592 = vmatpush.bf16.msra.mxu0 0
      %1593 = vmatpush.bf16.msra.mxu0 0
      %1594 = vmatpush.bf16.msra.mxu0 %v1547
      %1595 = vmatmul.bf16.gmra.mxu0 %v1538
      %v1596 = vpop.f32.mrf.mxu0
      %v1597 = vadd.f32 0.0, %v1596
      %v1598 = vpop.f32.mrf.mxu0
      %1599 = vdwg.mxu0
      %1600 = vmatpush.bf16.msra.mxu0 0
      %1601 = vmatpush.bf16.msra.mxu0 0
      %1602 = vmatpush.bf16.msra.mxu0 0
      %1603 = vmatpush.bf16.msra.mxu0 0
      %1604 = vmatpush.bf16.msra.mxu0 0
      %1605 = vmatpush.bf16.msra.mxu0 0
      %1606 = vmatpush.bf16.msra.mxu0 0
      %1607 = vmatpush.bf16.msra.mxu0 %v1550
      %1608 = vmatmul.bf16.gmra.mxu0 %v1538
      %v1609 = vpop.f32.mrf.mxu0
      %v1610 = vadd.f32 0.0, %v1609
      %v1611 = vpop.f32.mrf.mxu0
      %1612 = vdwg.mxu0
      %1613 = vmatpush.bf16.msra.mxu0 0
      %1614 = vmatpush.bf16.msra.mxu0 0
      %1615 = vmatpush.bf16.msra.mxu0 0
      %1616 = vmatpush.bf16.msra.mxu0 0
      %1617 = vmatpush.bf16.msra.mxu0 0
      %1618 = vmatpush.bf16.msra.mxu0 0
      %1619 = vmatpush.bf16.msra.mxu0 0
      %1620 = vmatpush.bf16.msra.mxu0 %v1553
      %1621 = vmatmul.bf16.gmra.mxu0 %v1538
      %v1622 = vpop.f32.mrf.mxu0
      %v1623 = vadd.f32 0.0, %v1622
      %v1624 = vpop.f32.mrf.mxu0
      %1625 = vdwg.mxu0
      %1626 = vmatpush.bf16.msra.mxu0 0
      %1627 = vmatpush.bf16.msra.mxu0 0
      %1628 = vmatpush.bf16.msra.mxu0 0
      %1629 = vmatpush.bf16.msra.mxu0 0
      %1630 = vmatpush.bf16.msra.mxu0 0
      %1631 = vmatpush.bf16.msra.mxu0 0
      %1632 = vmatpush.bf16.msra.mxu0 0
      %1633 = vmatpush.bf16.msra.mxu0 %v1556
      %1634 = vmatmul.bf16.gmra.mxu0 %v1538
      %v1635 = vpop.f32.mrf.mxu0
      %v1636 = vadd.f32 0.0, %v1635
      %v1637 = vpop.f32.mrf.mxu0
      %1638 = vdwg.mxu0
      %1639 = vmatpush.bf16.msra.mxu0 0
      %1640 = vmatpush.bf16.msra.mxu0 0
      %1641 = vmatpush.bf16.msra.mxu0 0
      %1642 = vmatpush.bf16.msra.mxu0 0
      %1643 = vmatpush.bf16.msra.mxu0 0
      %1644 = vmatpush.bf16.msra.mxu0 0
      %1645 = vmatpush.bf16.msra.mxu0 0
      %1646 = vmatpush.bf16.msra.mxu0 %v1559
      %1647 = vmatmul.bf16.gmra.mxu0 %v1538
      %v1648 = vpop.f32.mrf.mxu0
      %v1649 = vadd.f32 0.0, %v1648
      %v1650 = vpop.f32.mrf.mxu0
      %1651 = vdwg.mxu0
      %v1652 = vadd.f32 %v1481, %v1571
      %v1653 = vadd.f32 %v1482, %v1584
      %v1654 = vadd.f32 %v1483, %v1597
      %v1655 = vadd.f32 %v1484, %v1610
      %v1656 = vadd.f32 %v1485, %v1623
      %v1657 = vadd.f32 %v1486, %v1636
      %v1658 = vadd.f32 %v1487, %v1649
      %v1659 = vld [vmem:[%s165] sm:$0xff]
      %v1660 = vld [vmem:[%s165 + $0x8] sm:$0xff]
      %s1661 = scalar_lea.vmem %s0, 36
      %v1662 = vld [vmem:[%s1661] sm:$0x7]
      %1664 = vst [vmem:[#allocation1] ss:$4 sm:$0xff] %v1659
      %s1666 = scalar_lea.vmem [#allocation1], 32
      %1667 = vst [vmem:[%s1666] ss:$4 sm:$0xff] %v1660
      %v1668 = vld.sshfl [vmem:[#allocation1] sm:$0xff pattern:$0x73625140]
      %v1670 = vld.sshfl [vmem:[#allocation1 + $0x8] sm:$0xff pattern:$0x73625140]
      %v1672 = vld.sshfl [vmem:[#allocation1 + $0x10] sm:$0xff pattern:$0x73625140]
      %v1674 = vld.sshfl [vmem:[#allocation1 + $0x18] sm:$0xff pattern:$0x73625140]
      %v1676 = vld.sshfl [vmem:[#allocation1 + $0x20] sm:$0xff pattern:$0x73625140]
      %v1678 = vld.sshfl [vmem:[#allocation1 + $0x28] sm:$0xff pattern:$0x73625140]
      %v1680 = vld.sshfl [vmem:[#allocation1 + $0x30] sm:$0xff pattern:$0x73625140]
      %v1682 = vld.sshfl [vmem:[#allocation1 + $0x38] sm:$0xff pattern:$0x73625140]
      %1684 = vrot.lane.b32.xlu0 %v1668, 92
      %v1685 = vpop.permute.xlu0 %1684
      %1686 = vrot.lane.b32.xlu0 %v1670, 92
      %v1687 = vpop.permute.xlu0 %1686
      %1688 = vrot.lane.b32.xlu0 %v1672, 92
      %v1689 = vpop.permute.xlu0 %1688
      %1690 = vrot.lane.b32.xlu0 %v1674, 92
      %v1691 = vpop.permute.xlu0 %1690
      %1692 = vrot.lane.b32.xlu0 %v1676, 92
      %v1693 = vpop.permute.xlu0 %1692
      %1694 = vrot.lane.b32.xlu0 %v1678, 92
      %v1695 = vpop.permute.xlu0 %1694
      %1696 = vrot.lane.b32.xlu0 %v1680, 92
      %v1697 = vpop.permute.xlu0 %1696
      %1698 = vrot.lane.b32.xlu0 %v1682, 92
      %v1699 = vpop.permute.xlu0 %1698
      %vm1700 = vcmask 752640
      %v1701 = vsel %vm1700, %v1685, %v1687
      %v1702 = vsel %vm1700, %v1687, %v1689
      %v1703 = vsel %vm1700, %v1689, %v1691
      %v1704 = vsel %vm1700, %v1691, %v1693
      %v1705 = vsel %vm1700, %v1693, %v1695
      %v1706 = vsel %vm1700, %v1695, %v1697
      %v1707 = vsel %vm1700, %v1697, %v1699
      %v1709 = vsel %vm223, %v1662, 0
      %v1712 = vand.u32 %v1701, %v230
      %v1715 = vand.u32 %v1702, %v230
      %v1718 = vand.u32 %v1703, %v230
      %v1721 = vand.u32 %v1704, %v230
      %v1724 = vand.u32 %v1705, %v230
      %v1727 = vand.u32 %v1706, %v230
      %v1730 = vand.u32 %v1707, %v230
      %1732 = vmatpush.bf16.msra.mxu0 0
      %1733 = vmatpush.bf16.msra.mxu0 0
      %1734 = vmatpush.bf16.msra.mxu0 0
      %1735 = vmatpush.bf16.msra.mxu0 0
      %1736 = vmatpush.bf16.msra.mxu0 0
      %1737 = vmatpush.bf16.msra.mxu0 0
      %1738 = vmatpush.bf16.msra.mxu0 0
      %1739 = vmatpush.bf16.msra.mxu0 %v1712
      %1740 = vmatmul.bf16.gmra.mxu0 %v1709
      %v1741 = vpop.f32.mrf.mxu0
      %v1742 = vadd.f32 0.0, %v1741
      %v1743 = vpop.f32.mrf.mxu0
      %1744 = vdwg.mxu0
      %1745 = vmatpush.bf16.msra.mxu0 0
      %1746 = vmatpush.bf16.msra.mxu0 0
      %1747 = vmatpush.bf16.msra.mxu0 0
      %1748 = vmatpush.bf16.msra.mxu0 0
      %1749 = vmatpush.bf16.msra.mxu0 0
      %1750 = vmatpush.bf16.msra.mxu0 0
      %1751 = vmatpush.bf16.msra.mxu0 0
      %1752 = vmatpush.bf16.msra.mxu0 %v1715
      %1753 = vmatmul.bf16.gmra.mxu0 %v1709
      %v1754 = vpop.f32.mrf.mxu0
      %v1755 = vadd.f32 0.0, %v1754
      %v1756 = vpop.f32.mrf.mxu0
      %1757 = vdwg.mxu0
      %1758 = vmatpush.bf16.msra.mxu0 0
      %1759 = vmatpush.bf16.msra.mxu0 0
      %1760 = vmatpush.bf16.msra.mxu0 0
      %1761 = vmatpush.bf16.msra.mxu0 0
      %1762 = vmatpush.bf16.msra.mxu0 0
      %1763 = vmatpush.bf16.msra.mxu0 0
      %1764 = vmatpush.bf16.msra.mxu0 0
      %1765 = vmatpush.bf16.msra.mxu0 %v1718
      %1766 = vmatmul.bf16.gmra.mxu0 %v1709
      %v1767 = vpop.f32.mrf.mxu0
      %v1768 = vadd.f32 0.0, %v1767
      %v1769 = vpop.f32.mrf.mxu0
      %1770 = vdwg.mxu0
      %1771 = vmatpush.bf16.msra.mxu0 0
      %1772 = vmatpush.bf16.msra.mxu0 0
      %1773 = vmatpush.bf16.msra.mxu0 0
      %1774 = vmatpush.bf16.msra.mxu0 0
      %1775 = vmatpush.bf16.msra.mxu0 0
      %1776 = vmatpush.bf16.msra.mxu0 0
      %1777 = vmatpush.bf16.msra.mxu0 0
      %1778 = vmatpush.bf16.msra.mxu0 %v1721
      %1779 = vmatmul.bf16.gmra.mxu0 %v1709
      %v1780 = vpop.f32.mrf.mxu0
      %v1781 = vadd.f32 0.0, %v1780
      %v1782 = vpop.f32.mrf.mxu0
      %1783 = vdwg.mxu0
      %1784 = vmatpush.bf16.msra.mxu0 0
      %1785 = vmatpush.bf16.msra.mxu0 0
      %1786 = vmatpush.bf16.msra.mxu0 0
      %1787 = vmatpush.bf16.msra.mxu0 0
      %1788 = vmatpush.bf16.msra.mxu0 0
      %1789 = vmatpush.bf16.msra.mxu0 0
      %1790 = vmatpush.bf16.msra.mxu0 0
      %1791 = vmatpush.bf16.msra.mxu0 %v1724
      %1792 = vmatmul.bf16.gmra.mxu0 %v1709
      %v1793 = vpop.f32.mrf.mxu0
      %v1794 = vadd.f32 0.0, %v1793
      %v1795 = vpop.f32.mrf.mxu0
      %1796 = vdwg.mxu0
      %1797 = vmatpush.bf16.msra.mxu0 0
      %1798 = vmatpush.bf16.msra.mxu0 0
      %1799 = vmatpush.bf16.msra.mxu0 0
      %1800 = vmatpush.bf16.msra.mxu0 0
      %1801 = vmatpush.bf16.msra.mxu0 0
      %1802 = vmatpush.bf16.msra.mxu0 0
      %1803 = vmatpush.bf16.msra.mxu0 0
      %1804 = vmatpush.bf16.msra.mxu0 %v1727
      %1805 = vmatmul.bf16.gmra.mxu0 %v1709
      %v1806 = vpop.f32.mrf.mxu0
      %v1807 = vadd.f32 0.0, %v1806
      %v1808 = vpop.f32.mrf.mxu0
      %1809 = vdwg.mxu0
      %1810 = vmatpush.bf16.msra.mxu0 0
      %1811 = vmatpush.bf16.msra.mxu0 0
      %1812 = vmatpush.bf16.msra.mxu0 0
      %1813 = vmatpush.bf16.msra.mxu0 0
      %1814 = vmatpush.bf16.msra.mxu0 0
      %1815 = vmatpush.bf16.msra.mxu0 0
      %1816 = vmatpush.bf16.msra.mxu0 0
      %1817 = vmatpush.bf16.msra.mxu0 %v1730
      %1818 = vmatmul.bf16.gmra.mxu0 %v1709
      %v1819 = vpop.f32.mrf.mxu0
      %v1820 = vadd.f32 0.0, %v1819
      %v1821 = vpop.f32.mrf.mxu0
      %1822 = vdwg.mxu0
      %v1823 = vadd.f32 %v1652, %v1742
      %v1824 = vadd.f32 %v1653, %v1755
      %v1825 = vadd.f32 %v1654, %v1768
      %v1826 = vadd.f32 %v1655, %v1781
      %v1827 = vadd.f32 %v1656, %v1794
      %v1828 = vadd.f32 %v1657, %v1807
      %v1829 = vadd.f32 %v1658, %v1820
      %v1830 = vld [vmem:[%s165] sm:$0xff]
      %v1831 = vld [vmem:[%s165 + $0x8] sm:$0xff]
      %s1832 = scalar_lea.vmem %s0, 40
      %v1833 = vld [vmem:[%s1832] sm:$0x7]
      %1835 = vst [vmem:[#allocation1] ss:$4 sm:$0xff] %v1830
      %s1837 = scalar_lea.vmem [#allocation1], 32
      %1838 = vst [vmem:[%s1837] ss:$4 sm:$0xff] %v1831
      %v1839 = vld.sshfl [vmem:[#allocation1] sm:$0xff pattern:$0x73625140]
      %v1841 = vld.sshfl [vmem:[#allocation1 + $0x8] sm:$0xff pattern:$0x73625140]
      %v1843 = vld.sshfl [vmem:[#allocation1 + $0x10] sm:$0xff pattern:$0x73625140]
      %v1845 = vld.sshfl [vmem:[#allocation1 + $0x18] sm:$0xff pattern:$0x73625140]
      %v1847 = vld.sshfl [vmem:[#allocation1 + $0x20] sm:$0xff pattern:$0x73625140]
      %v1849 = vld.sshfl [vmem:[#allocation1 + $0x28] sm:$0xff pattern:$0x73625140]
      %v1851 = vld.sshfl [vmem:[#allocation1 + $0x30] sm:$0xff pattern:$0x73625140]
      %v1853 = vld.sshfl [vmem:[#allocation1 + $0x38] sm:$0xff pattern:$0x73625140]
      %1855 = vrot.lane.b32.xlu0 %v1839, 64
      %v1856 = vpop.permute.xlu0 %1855
      %1857 = vrot.lane.b32.xlu0 %v1841, 64
      %v1858 = vpop.permute.xlu0 %1857
      %1859 = vrot.lane.b32.xlu0 %v1843, 64
      %v1860 = vpop.permute.xlu0 %1859
      %1861 = vrot.lane.b32.xlu0 %v1845, 64
      %v1862 = vpop.permute.xlu0 %1861
      %1863 = vrot.lane.b32.xlu0 %v1847, 64
      %v1864 = vpop.permute.xlu0 %1863
      %1865 = vrot.lane.b32.xlu0 %v1849, 64
      %v1866 = vpop.permute.xlu0 %1865
      %1867 = vrot.lane.b32.xlu0 %v1851, 64
      %v1868 = vpop.permute.xlu0 %1867
      %1869 = vrot.lane.b32.xlu0 %v1853, 64
      %v1870 = vpop.permute.xlu0 %1869
      %vm1871 = vcmask 523264
      %v1872 = vsel %vm1871, %v1856, %v1858
      %v1873 = vsel %vm1871, %v1858, %v1860
      %v1874 = vsel %vm1871, %v1860, %v1862
      %v1875 = vsel %vm1871, %v1862, %v1864
      %v1876 = vsel %vm1871, %v1864, %v1866
      %v1877 = vsel %vm1871, %v1866, %v1868
      %v1878 = vsel %vm1871, %v1868, %v1870
      %v1880 = vsel %vm223, %v1833, 0
      %v1883 = vand.u32 %v1872, %v230
      %v1886 = vand.u32 %v1873, %v230
      %v1889 = vand.u32 %v1874, %v230
      %v1892 = vand.u32 %v1875, %v230
      %v1895 = vand.u32 %v1876, %v230
      %v1898 = vand.u32 %v1877, %v230
      %v1901 = vand.u32 %v1878, %v230
      %1903 = vmatpush.bf16.msra.mxu0 0
      %1904 = vmatpush.bf16.msra.mxu0 0
      %1905 = vmatpush.bf16.msra.mxu0 0
      %1906 = vmatpush.bf16.msra.mxu0 0
      %1907 = vmatpush.bf16.msra.mxu0 0
      %1908 = vmatpush.bf16.msra.mxu0 0
      %1909 = vmatpush.bf16.msra.mxu0 0
      %1910 = vmatpush.bf16.msra.mxu0 %v1883
      %1911 = vmatmul.bf16.gmra.mxu0 %v1880
      %v1912 = vpop.f32.mrf.mxu0
      %v1913 = vadd.f32 0.0, %v1912
      %v1914 = vpop.f32.mrf.mxu0
      %1915 = vdwg.mxu0
      %1916 = vmatpush.bf16.msra.mxu0 0
      %1917 = vmatpush.bf16.msra.mxu0 0
      %1918 = vmatpush.bf16.msra.mxu0 0
      %1919 = vmatpush.bf16.msra.mxu0 0
      %1920 = vmatpush.bf16.msra.mxu0 0
      %1921 = vmatpush.bf16.msra.mxu0 0
      %1922 = vmatpush.bf16.msra.mxu0 0
      %1923 = vmatpush.bf16.msra.mxu0 %v1886
      %1924 = vmatmul.bf16.gmra.mxu0 %v1880
      %v1925 = vpop.f32.mrf.mxu0
      %v1926 = vadd.f32 0.0, %v1925
      %v1927 = vpop.f32.mrf.mxu0
      %1928 = vdwg.mxu0
      %1929 = vmatpush.bf16.msra.mxu0 0
      %1930 = vmatpush.bf16.msra.mxu0 0
      %1931 = vmatpush.bf16.msra.mxu0 0
      %1932 = vmatpush.bf16.msra.mxu0 0
      %1933 = vmatpush.bf16.msra.mxu0 0
      %1934 = vmatpush.bf16.msra.mxu0 0
      %1935 = vmatpush.bf16.msra.mxu0 0
      %1936 = vmatpush.bf16.msra.mxu0 %v1889
      %1937 = vmatmul.bf16.gmra.mxu0 %v1880
      %v1938 = vpop.f32.mrf.mxu0
      %v1939 = vadd.f32 0.0, %v1938
      %v1940 = vpop.f32.mrf.mxu0
      %1941 = vdwg.mxu0
      %1942 = vmatpush.bf16.msra.mxu0 0
      %1943 = vmatpush.bf16.msra.mxu0 0
      %1944 = vmatpush.bf16.msra.mxu0 0
      %1945 = vmatpush.bf16.msra.mxu0 0
      %1946 = vmatpush.bf16.msra.mxu0 0
      %1947 = vmatpush.bf16.msra.mxu0 0
      %1948 = vmatpush.bf16.msra.mxu0 0
      %1949 = vmatpush.bf16.msra.mxu0 %v1892
      %1950 = vmatmul.bf16.gmra.mxu0 %v1880
      %v1951 = vpop.f32.mrf.mxu0
      %v1952 = vadd.f32 0.0, %v1951
      %v1953 = vpop.f32.mrf.mxu0
      %1954 = vdwg.mxu0
      %1955 = vmatpush.bf16.msra.mxu0 0
      %1956 = vmatpush.bf16.msra.mxu0 0
      %1957 = vmatpush.bf16.msra.mxu0 0
      %1958 = vmatpush.bf16.msra.mxu0 0
      %1959 = vmatpush.bf16.msra.mxu0 0
      %1960 = vmatpush.bf16.msra.mxu0 0
      %1961 = vmatpush.bf16.msra.mxu0 0
      %1962 = vmatpush.bf16.msra.mxu0 %v1895
      %1963 = vmatmul.bf16.gmra.mxu0 %v1880
      %v1964 = vpop.f32.mrf.mxu0
      %v1965 = vadd.f32 0.0, %v1964
      %v1966 = vpop.f32.mrf.mxu0
      %1967 = vdwg.mxu0
      %1968 = vmatpush.bf16.msra.mxu0 0
      %1969 = vmatpush.bf16.msra.mxu0 0
      %1970 = vmatpush.bf16.msra.mxu0 0
      %1971 = vmatpush.bf16.msra.mxu0 0
      %1972 = vmatpush.bf16.msra.mxu0 0
      %1973 = vmatpush.bf16.msra.mxu0 0
      %1974 = vmatpush.bf16.msra.mxu0 0
      %1975 = vmatpush.bf16.msra.mxu0 %v1898
      %1976 = vmatmul.bf16.gmra.mxu0 %v1880
      %v1977 = vpop.f32.mrf.mxu0
      %v1978 = vadd.f32 0.0, %v1977
      %v1979 = vpop.f32.mrf.mxu0
      %1980 = vdwg.mxu0
      %1981 = vmatpush.bf16.msra.mxu0 0
      %1982 = vmatpush.bf16.msra.mxu0 0
      %1983 = vmatpush.bf16.msra.mxu0 0
      %1984 = vmatpush.bf16.msra.mxu0 0
      %1985 = vmatpush.bf16.msra.mxu0 0
      %1986 = vmatpush.bf16.msra.mxu0 0
      %1987 = vmatpush.bf16.msra.mxu0 0
      %1988 = vmatpush.bf16.msra.mxu0 %v1901
      %1989 = vmatmul.bf16.gmra.mxu0 %v1880
      %v1990 = vpop.f32.mrf.mxu0
      %v1991 = vadd.f32 0.0, %v1990
      %v1992 = vpop.f32.mrf.mxu0
      %1993 = vdwg.mxu0
      %v1994 = vadd.f32 %v1823, %v1913
      %v1995 = vadd.f32 %v1824, %v1926
      %v1996 = vadd.f32 %v1825, %v1939
      %v1997 = vadd.f32 %v1826, %v1952
      %v1998 = vadd.f32 %v1827, %v1965
      %v1999 = vadd.f32 %v1828, %v1978
      %v2000 = vadd.f32 %v1829, %v1991
      %v2001 = vld [vmem:[%s165] sm:$0xff]
      %v2002 = vld [vmem:[%s165 + $0x8] sm:$0xff]
      %s2003 = scalar_lea.vmem %s0, 44
      %v2004 = vld [vmem:[%s2003] sm:$0x7]
      %2006 = vst [vmem:[#allocation1] ss:$4 sm:$0xff] %v2001
      %s2008 = scalar_lea.vmem [#allocation1], 32
      %2009 = vst [vmem:[%s2008] ss:$4 sm:$0xff] %v2002
      %v2010 = vld.sshfl [vmem:[#allocation1] sm:$0xff pattern:$0x73625140]
      %v2012 = vld.sshfl [vmem:[#allocation1 + $0x8] sm:$0xff pattern:$0x73625140]
      %v2014 = vld.sshfl [vmem:[#allocation1 + $0x10] sm:$0xff pattern:$0x73625140]
      %v2016 = vld.sshfl [vmem:[#allocation1 + $0x18] sm:$0xff pattern:$0x73625140]
      %v2018 = vld.sshfl [vmem:[#allocation1 + $0x20] sm:$0xff pattern:$0x73625140]
      %v2020 = vld.sshfl [vmem:[#allocation1 + $0x28] sm:$0xff pattern:$0x73625140]
      %v2022 = vld.sshfl [vmem:[#allocation1 + $0x30] sm:$0xff pattern:$0x73625140]
      %v2024 = vld.sshfl [vmem:[#allocation1 + $0x38] sm:$0xff pattern:$0x73625140]
      %2026 = vrot.lane.b32.xlu0 %v2010, 63
      %v2027 = vpop.permute.xlu0 %2026
      %2028 = vrot.lane.b32.xlu0 %v2012, 63
      %v2029 = vpop.permute.xlu0 %2028
      %2030 = vrot.lane.b32.xlu0 %v2014, 63
      %v2031 = vpop.permute.xlu0 %2030
      %2032 = vrot.lane.b32.xlu0 %v2016, 63
      %v2033 = vpop.permute.xlu0 %2032
      %2034 = vrot.lane.b32.xlu0 %v2018, 63
      %v2035 = vpop.permute.xlu0 %2034
      %2036 = vrot.lane.b32.xlu0 %v2020, 63
      %v2037 = vpop.permute.xlu0 %2036
      %2038 = vrot.lane.b32.xlu0 %v2022, 63
      %v2039 = vpop.permute.xlu0 %2038
      %2040 = vrot.lane.b32.xlu0 %v2024, 63
      %v2041 = vpop.permute.xlu0 %2040
      %vm2042 = vcmask 515072
      %v2043 = vsel %vm2042, %v2027, %v2029
      %v2044 = vsel %vm2042, %v2029, %v2031
      %v2045 = vsel %vm2042, %v2031, %v2033
      %v2046 = vsel %vm2042, %v2033, %v2035
      %v2047 = vsel %vm2042, %v2035, %v2037
      %v2048 = vsel %vm2042, %v2037, %v2039
      %v2049 = vsel %vm2042, %v2039, %v2041
      %v2051 = vsel %vm223, %v2004, 0
      %v2054 = vand.u32 %v2043, %v230
      %v2057 = vand.u32 %v2044, %v230
      %v2060 = vand.u32 %v2045, %v230
      %v2063 = vand.u32 %v2046, %v230
      %v2066 = vand.u32 %v2047, %v230
      %v2069 = vand.u32 %v2048, %v230
      %v2072 = vand.u32 %v2049, %v230
      %2074 = vmatpush.bf16.msra.mxu0 0
      %2075 = vmatpush.bf16.msra.mxu0 0
      %2076 = vmatpush.bf16.msra.mxu0 0
      %2077 = vmatpush.bf16.msra.mxu0 0
      %2078 = vmatpush.bf16.msra.mxu0 0
      %2079 = vmatpush.bf16.msra.mxu0 0
      %2080 = vmatpush.bf16.msra.mxu0 0
      %2081 = vmatpush.bf16.msra.mxu0 %v2054
      %2082 = vmatmul.bf16.gmra.mxu0 %v2051
      %v2083 = vpop.f32.mrf.mxu0
      %v2084 = vadd.f32 0.0, %v2083
      %v2085 = vpop.f32.mrf.mxu0
      %2086 = vdwg.mxu0
      %2087 = vmatpush.bf16.msra.mxu0 0
      %2088 = vmatpush.bf16.msra.mxu0 0
      %2089 = vmatpush.bf16.msra.mxu0 0
      %2090 = vmatpush.bf16.msra.mxu0 0
      %2091 = vmatpush.bf16.msra.mxu0 0
      %2092 = vmatpush.bf16.msra.mxu0 0
      %2093 = vmatpush.bf16.msra.mxu0 0
      %2094 = vmatpush.bf16.msra.mxu0 %v2057
      %2095 = vmatmul.bf16.gmra.mxu0 %v2051
      %v2096 = vpop.f32.mrf.mxu0
      %v2097 = vadd.f32 0.0, %v2096
      %v2098 = vpop.f32.mrf.mxu0
      %2099 = vdwg.mxu0
      %2100 = vmatpush.bf16.msra.mxu0 0
      %2101 = vmatpush.bf16.msra.mxu0 0
      %2102 = vmatpush.bf16.msra.mxu0 0
      %2103 = vmatpush.bf16.msra.mxu0 0
      %2104 = vmatpush.bf16.msra.mxu0 0
      %2105 = vmatpush.bf16.msra.mxu0 0
      %2106 = vmatpush.bf16.msra.mxu0 0
      %2107 = vmatpush.bf16.msra.mxu0 %v2060
      %2108 = vmatmul.bf16.gmra.mxu0 %v2051
      %v2109 = vpop.f32.mrf.mxu0
      %v2110 = vadd.f32 0.0, %v2109
      %v2111 = vpop.f32.mrf.mxu0
      %2112 = vdwg.mxu0
      %2113 = vmatpush.bf16.msra.mxu0 0
      %2114 = vmatpush.bf16.msra.mxu0 0
      %2115 = vmatpush.bf16.msra.mxu0 0
      %2116 = vmatpush.bf16.msra.mxu0 0
      %2117 = vmatpush.bf16.msra.mxu0 0
      %2118 = vmatpush.bf16.msra.mxu0 0
      %2119 = vmatpush.bf16.msra.mxu0 0
      %2120 = vmatpush.bf16.msra.mxu0 %v2063
      %2121 = vmatmul.bf16.gmra.mxu0 %v2051
      %v2122 = vpop.f32.mrf.mxu0
      %v2123 = vadd.f32 0.0, %v2122
      %v2124 = vpop.f32.mrf.mxu0
      %2125 = vdwg.mxu0
      %2126 = vmatpush.bf16.msra.mxu0 0
      %2127 = vmatpush.bf16.msra.mxu0 0
      %2128 = vmatpush.bf16.msra.mxu0 0
      %2129 = vmatpush.bf16.msra.mxu0 0
      %2130 = vmatpush.bf16.msra.mxu0 0
      %2131 = vmatpush.bf16.msra.mxu0 0
      %2132 = vmatpush.bf16.msra.mxu0 0
      %2133 = vmatpush.bf16.msra.mxu0 %v2066
      %2134 = vmatmul.bf16.gmra.mxu0 %v2051
      %v2135 = vpop.f32.mrf.mxu0
      %v2136 = vadd.f32 0.0, %v2135
      %v2137 = vpop.f32.mrf.mxu0
      %2138 = vdwg.mxu0
      %2139 = vmatpush.bf16.msra.mxu0 0
      %2140 = vmatpush.bf16.msra.mxu0 0
      %2141 = vmatpush.bf16.msra.mxu0 0
      %2142 = vmatpush.bf16.msra.mxu0 0
      %2143 = vmatpush.bf16.msra.mxu0 0
      %2144 = vmatpush.bf16.msra.mxu0 0
      %2145 = vmatpush.bf16.msra.mxu0 0
      %2146 = vmatpush.bf16.msra.mxu0 %v2069
      %2147 = vmatmul.bf16.gmra.mxu0 %v2051
      %v2148 = vpop.f32.mrf.mxu0
      %v2149 = vadd.f32 0.0, %v2148
      %v2150 = vpop.f32.mrf.mxu0
      %2151 = vdwg.mxu0
      %2152 = vmatpush.bf16.msra.mxu0 0
      %2153 = vmatpush.bf16.msra.mxu0 0
      %2154 = vmatpush.bf16.msra.mxu0 0
      %2155 = vmatpush.bf16.msra.mxu0 0
      %2156 = vmatpush.bf16.msra.mxu0 0
      %2157 = vmatpush.bf16.msra.mxu0 0
      %2158 = vmatpush.bf16.msra.mxu0 0
      %2159 = vmatpush.bf16.msra.mxu0 %v2072
      %2160 = vmatmul.bf16.gmra.mxu0 %v2051
      %v2161 = vpop.f32.mrf.mxu0
      %v2162 = vadd.f32 0.0, %v2161
      %v2163 = vpop.f32.mrf.mxu0
      %2164 = vdwg.mxu0
      %v2165 = vadd.f32 %v1994, %v2084
      %v2166 = vadd.f32 %v1995, %v2097
      %v2167 = vadd.f32 %v1996, %v2110
      %v2168 = vadd.f32 %v1997, %v2123
      %v2169 = vadd.f32 %v1998, %v2136
      %v2170 = vadd.f32 %v1999, %v2149
      %v2171 = vadd.f32 %v2000, %v2162
      %v2172 = vld [vmem:[%s165] sm:$0xff]
      %v2173 = vld [vmem:[%s165 + $0x8] sm:$0xff]
      %s2174 = scalar_lea.vmem %s0, 48
      %v2175 = vld [vmem:[%s2174] sm:$0x7]
      %2177 = vst [vmem:[#allocation1] ss:$4 sm:$0xff] %v2172
      %s2179 = scalar_lea.vmem [#allocation1], 32
      %2180 = vst [vmem:[%s2179] ss:$4 sm:$0xff] %v2173
      %v2181 = vld.sshfl [vmem:[#allocation1] sm:$0xff pattern:$0x73625140]
      %v2183 = vld.sshfl [vmem:[#allocation1 + $0x8] sm:$0xff pattern:$0x73625140]
      %v2185 = vld.sshfl [vmem:[#allocation1 + $0x10] sm:$0xff pattern:$0x73625140]
      %v2187 = vld.sshfl [vmem:[#allocation1 + $0x18] sm:$0xff pattern:$0x73625140]
      %v2189 = vld.sshfl [vmem:[#allocation1 + $0x20] sm:$0xff pattern:$0x73625140]
      %v2191 = vld.sshfl [vmem:[#allocation1 + $0x28] sm:$0xff pattern:$0x73625140]
      %v2193 = vld.sshfl [vmem:[#allocation1 + $0x30] sm:$0xff pattern:$0x73625140]
      %v2195 = vld.sshfl [vmem:[#allocation1 + $0x38] sm:$0xff pattern:$0x73625140]
      %2197 = vrot.lane.b32.xlu0 %v2181, 62
      %v2198 = vpop.permute.xlu0 %2197
      %2199 = vrot.lane.b32.xlu0 %v2183, 62
      %v2200 = vpop.permute.xlu0 %2199
      %2201 = vrot.lane.b32.xlu0 %v2185, 62
      %v2202 = vpop.permute.xlu0 %2201
      %2203 = vrot.lane.b32.xlu0 %v2187, 62
      %v2204 = vpop.permute.xlu0 %2203
      %2205 = vrot.lane.b32.xlu0 %v2189, 62
      %v2206 = vpop.permute.xlu0 %2205
      %2207 = vrot.lane.b32.xlu0 %v2191, 62
      %v2208 = vpop.permute.xlu0 %2207
      %2209 = vrot.lane.b32.xlu0 %v2193, 62
      %v2210 = vpop.permute.xlu0 %2209
      %2211 = vrot.lane.b32.xlu0 %v2195, 62
      %v2212 = vpop.permute.xlu0 %2211
      %vm2213 = vcmask 506880
      %v2214 = vsel %vm2213, %v2198, %v2200
      %v2215 = vsel %vm2213, %v2200, %v2202
      %v2216 = vsel %vm2213, %v2202, %v2204
      %v2217 = vsel %vm2213, %v2204, %v2206
      %v2218 = vsel %vm2213, %v2206, %v2208
      %v2219 = vsel %vm2213, %v2208, %v2210
      %v2220 = vsel %vm2213, %v2210, %v2212
      %v2222 = vsel %vm223, %v2175, 0
      %v2225 = vand.u32 %v2214, %v230
      %v2228 = vand.u32 %v2215, %v230
      %v2231 = vand.u32 %v2216, %v230
      %v2234 = vand.u32 %v2217, %v230
      %v2237 = vand.u32 %v2218, %v230
      %v2240 = vand.u32 %v2219, %v230
      %v2243 = vand.u32 %v2220, %v230
      %2245 = vmatpush.bf16.msra.mxu0 0
      %2246 = vmatpush.bf16.msra.mxu0 0
      %2247 = vmatpush.bf16.msra.mxu0 0
      %2248 = vmatpush.bf16.msra.mxu0 0
      %2249 = vmatpush.bf16.msra.mxu0 0
      %2250 = vmatpush.bf16.msra.mxu0 0
      %2251 = vmatpush.bf16.msra.mxu0 0
      %2252 = vmatpush.bf16.msra.mxu0 %v2225
      %2253 = vmatmul.bf16.gmra.mxu0 %v2222
      %v2254 = vpop.f32.mrf.mxu0
      %v2255 = vadd.f32 0.0, %v2254
      %v2256 = vpop.f32.mrf.mxu0
      %2257 = vdwg.mxu0
      %2258 = vmatpush.bf16.msra.mxu0 0
      %2259 = vmatpush.bf16.msra.mxu0 0
      %2260 = vmatpush.bf16.msra.mxu0 0
      %2261 = vmatpush.bf16.msra.mxu0 0
      %2262 = vmatpush.bf16.msra.mxu0 0
      %2263 = vmatpush.bf16.msra.mxu0 0
      %2264 = vmatpush.bf16.msra.mxu0 0
      %2265 = vmatpush.bf16.msra.mxu0 %v2228
      %2266 = vmatmul.bf16.gmra.mxu0 %v2222
      %v2267 = vpop.f32.mrf.mxu0
      %v2268 = vadd.f32 0.0, %v2267
      %v2269 = vpop.f32.mrf.mxu0
      %2270 = vdwg.mxu0
      %2271 = vmatpush.bf16.msra.mxu0 0
      %2272 = vmatpush.bf16.msra.mxu0 0
      %2273 = vmatpush.bf16.msra.mxu0 0
      %2274 = vmatpush.bf16.msra.mxu0 0
      %2275 = vmatpush.bf16.msra.mxu0 0
      %2276 = vmatpush.bf16.msra.mxu0 0
      %2277 = vmatpush.bf16.msra.mxu0 0
      %2278 = vmatpush.bf16.msra.mxu0 %v2231
      %2279 = vmatmul.bf16.gmra.mxu0 %v2222
      %v2280 = vpop.f32.mrf.mxu0
      %v2281 = vadd.f32 0.0, %v2280
      %v2282 = vpop.f32.mrf.mxu0
      %2283 = vdwg.mxu0
      %2284 = vmatpush.bf16.msra.mxu0 0
      %2285 = vmatpush.bf16.msra.mxu0 0
      %2286 = vmatpush.bf16.msra.mxu0 0
      %2287 = vmatpush.bf16.msra.mxu0 0
      %2288 = vmatpush.bf16.msra.mxu0 0
      %2289 = vmatpush.bf16.msra.mxu0 0
      %2290 = vmatpush.bf16.msra.mxu0 0
      %2291 = vmatpush.bf16.msra.mxu0 %v2234
      %2292 = vmatmul.bf16.gmra.mxu0 %v2222
      %v2293 = vpop.f32.mrf.mxu0
      %v2294 = vadd.f32 0.0, %v2293
      %v2295 = vpop.f32.mrf.mxu0
      %2296 = vdwg.mxu0
      %2297 = vmatpush.bf16.msra.mxu0 0
      %2298 = vmatpush.bf16.msra.mxu0 0
      %2299 = vmatpush.bf16.msra.mxu0 0
      %2300 = vmatpush.bf16.msra.mxu0 0
      %2301 = vmatpush.bf16.msra.mxu0 0
      %2302 = vmatpush.bf16.msra.mxu0 0
      %2303 = vmatpush.bf16.msra.mxu0 0
      %2304 = vmatpush.bf16.msra.mxu0 %v2237
      %2305 = vmatmul.bf16.gmra.mxu0 %v2222
      %v2306 = vpop.f32.mrf.mxu0
      %v2307 = vadd.f32 0.0, %v2306
      %v2308 = vpop.f32.mrf.mxu0
      %2309 = vdwg.mxu0
      %2310 = vmatpush.bf16.msra.mxu0 0
      %2311 = vmatpush.bf16.msra.mxu0 0
      %2312 = vmatpush.bf16.msra.mxu0 0
      %2313 = vmatpush.bf16.msra.mxu0 0
      %2314 = vmatpush.bf16.msra.mxu0 0
      %2315 = vmatpush.bf16.msra.mxu0 0
      %2316 = vmatpush.bf16.msra.mxu0 0
      %2317 = vmatpush.bf16.msra.mxu0 %v2240
      %2318 = vmatmul.bf16.gmra.mxu0 %v2222
      %v2319 = vpop.f32.mrf.mxu0
      %v2320 = vadd.f32 0.0, %v2319
      %v2321 = vpop.f32.mrf.mxu0
      %2322 = vdwg.mxu0
      %2323 = vmatpush.bf16.msra.mxu0 0
      %2324 = vmatpush.bf16.msra.mxu0 0
      %2325 = vmatpush.bf16.msra.mxu0 0
      %2326 = vmatpush.bf16.msra.mxu0 0
      %2327 = vmatpush.bf16.msra.mxu0 0
      %2328 = vmatpush.bf16.msra.mxu0 0
      %2329 = vmatpush.bf16.msra.mxu0 0
      %2330 = vmatpush.bf16.msra.mxu0 %v2243
      %2331 = vmatmul.bf16.gmra.mxu0 %v2222
      %v2332 = vpop.f32.mrf.mxu0
      %v2333 = vadd.f32 0.0, %v2332
      %v2334 = vpop.f32.mrf.mxu0
      %2335 = vdwg.mxu0
      %v2336 = vadd.f32 %v2165, %v2255
      %v2337 = vadd.f32 %v2166, %v2268
      %v2338 = vadd.f32 %v2167, %v2281
      %v2339 = vadd.f32 %v2168, %v2294
      %v2340 = vadd.f32 %v2169, %v2307
      %v2341 = vadd.f32 %v2170, %v2320
      %v2342 = vadd.f32 %v2171, %v2333
      %v2343 = vld [vmem:[%s165] sm:$0xff]
      %v2344 = vld [vmem:[%s165 + $0x8] sm:$0xff]
      %s2345 = scalar_lea.vmem %s0, 52
      %v2346 = vld [vmem:[%s2345] sm:$0x7]
      %2348 = vst [vmem:[#allocation1] ss:$4 sm:$0xff] %v2343
      %s2350 = scalar_lea.vmem [#allocation1], 32
      %2351 = vst [vmem:[%s2350] ss:$4 sm:$0xff] %v2344
      %v2352 = vld.sshfl [vmem:[#allocation1] sm:$0xff pattern:$0x73625140]
      %v2354 = vld.sshfl [vmem:[#allocation1 + $0x8] sm:$0xff pattern:$0x73625140]
      %v2356 = vld.sshfl [vmem:[#allocation1 + $0x10] sm:$0xff pattern:$0x73625140]
      %v2358 = vld.sshfl [vmem:[#allocation1 + $0x18] sm:$0xff pattern:$0x73625140]
      %v2360 = vld.sshfl [vmem:[#allocation1 + $0x20] sm:$0xff pattern:$0x73625140]
      %v2362 = vld.sshfl [vmem:[#allocation1 + $0x28] sm:$0xff pattern:$0x73625140]
      %v2364 = vld.sshfl [vmem:[#allocation1 + $0x30] sm:$0xff pattern:$0x73625140]
      %v2366 = vld.sshfl [vmem:[#allocation1 + $0x38] sm:$0xff pattern:$0x73625140]
      %2368 = vrot.lane.b32.xlu0 %v2352, 61
      %v2369 = vpop.permute.xlu0 %2368
      %2370 = vrot.lane.b32.xlu0 %v2354, 61
      %v2371 = vpop.permute.xlu0 %2370
      %2372 = vrot.lane.b32.xlu0 %v2356, 61
      %v2373 = vpop.permute.xlu0 %2372
      %2374 = vrot.lane.b32.xlu0 %v2358, 61
      %v2375 = vpop.permute.xlu0 %2374
      %2376 = vrot.lane.b32.xlu0 %v2360, 61
      %v2377 = vpop.permute.xlu0 %2376
      %2378 = vrot.lane.b32.xlu0 %v2362, 61
      %v2379 = vpop.permute.xlu0 %2378
      %2380 = vrot.lane.b32.xlu0 %v2364, 61
      %v2381 = vpop.permute.xlu0 %2380
      %2382 = vrot.lane.b32.xlu0 %v2366, 61
      %v2383 = vpop.permute.xlu0 %2382
      %vm2384 = vcmask 498688
      %v2385 = vsel %vm2384, %v2369, %v2371
      %v2386 = vsel %vm2384, %v2371, %v2373
      %v2387 = vsel %vm2384, %v2373, %v2375
      %v2388 = vsel %vm2384, %v2375, %v2377
      %v2389 = vsel %vm2384, %v2377, %v2379
      %v2390 = vsel %vm2384, %v2379, %v2381
      %v2391 = vsel %vm2384, %v2381, %v2383
      %v2393 = vsel %vm223, %v2346, 0
      %v2396 = vand.u32 %v2385, %v230
      %v2399 = vand.u32 %v2386, %v230
      %v2402 = vand.u32 %v2387, %v230
      %v2405 = vand.u32 %v2388, %v230
      %v2408 = vand.u32 %v2389, %v230
      %v2411 = vand.u32 %v2390, %v230
      %v2414 = vand.u32 %v2391, %v230
      %2416 = vmatpush.bf16.msra.mxu0 0
      %2417 = vmatpush.bf16.msra.mxu0 0
      %2418 = vmatpush.bf16.msra.mxu0 0
      %2419 = vmatpush.bf16.msra.mxu0 0
      %2420 = vmatpush.bf16.msra.mxu0 0
      %2421 = vmatpush.bf16.msra.mxu0 0
      %2422 = vmatpush.bf16.msra.mxu0 0
      %2423 = vmatpush.bf16.msra.mxu0 %v2396
      %2424 = vmatmul.bf16.gmra.mxu0 %v2393
      %v2425 = vpop.f32.mrf.mxu0
      %v2426 = vadd.f32 0.0, %v2425
      %v2427 = vpop.f32.mrf.mxu0
      %2428 = vdwg.mxu0
      %2429 = vmatpush.bf16.msra.mxu0 0
      %2430 = vmatpush.bf16.msra.mxu0 0
      %2431 = vmatpush.bf16.msra.mxu0 0
      %2432 = vmatpush.bf16.msra.mxu0 0
      %2433 = vmatpush.bf16.msra.mxu0 0
      %2434 = vmatpush.bf16.msra.mxu0 0
      %2435 = vmatpush.bf16.msra.mxu0 0
      %2436 = vmatpush.bf16.msra.mxu0 %v2399
      %2437 = vmatmul.bf16.gmra.mxu0 %v2393
      %v2438 = vpop.f32.mrf.mxu0
      %v2439 = vadd.f32 0.0, %v2438
      %v2440 = vpop.f32.mrf.mxu0
      %2441 = vdwg.mxu0
      %2442 = vmatpush.bf16.msra.mxu0 0
      %2443 = vmatpush.bf16.msra.mxu0 0
      %2444 = vmatpush.bf16.msra.mxu0 0
      %2445 = vmatpush.bf16.msra.mxu0 0
      %2446 = vmatpush.bf16.msra.mxu0 0
      %2447 = vmatpush.bf16.msra.mxu0 0
      %2448 = vmatpush.bf16.msra.mxu0 0
      %2449 = vmatpush.bf16.msra.mxu0 %v2402
      %2450 = vmatmul.bf16.gmra.mxu0 %v2393
      %v2451 = vpop.f32.mrf.mxu0
      %v2452 = vadd.f32 0.0, %v2451
      %v2453 = vpop.f32.mrf.mxu0
      %2454 = vdwg.mxu0
      %2455 = vmatpush.bf16.msra.mxu0 0
      %2456 = vmatpush.bf16.msra.mxu0 0
      %2457 = vmatpush.bf16.msra.mxu0 0
      %2458 = vmatpush.bf16.msra.mxu0 0
      %2459 = vmatpush.bf16.msra.mxu0 0
      %2460 = vmatpush.bf16.msra.mxu0 0
      %2461 = vmatpush.bf16.msra.mxu0 0
      %2462 = vmatpush.bf16.msra.mxu0 %v2405
      %2463 = vmatmul.bf16.gmra.mxu0 %v2393
      %v2464 = vpop.f32.mrf.mxu0
      %v2465 = vadd.f32 0.0, %v2464
      %v2466 = vpop.f32.mrf.mxu0
      %2467 = vdwg.mxu0
      %2468 = vmatpush.bf16.msra.mxu0 0
      %2469 = vmatpush.bf16.msra.mxu0 0
      %2470 = vmatpush.bf16.msra.mxu0 0
      %2471 = vmatpush.bf16.msra.mxu0 0
      %2472 = vmatpush.bf16.msra.mxu0 0
      %2473 = vmatpush.bf16.msra.mxu0 0
      %2474 = vmatpush.bf16.msra.mxu0 0
      %2475 = vmatpush.bf16.msra.mxu0 %v2408
      %2476 = vmatmul.bf16.gmra.mxu0 %v2393
      %v2477 = vpop.f32.mrf.mxu0
      %v2478 = vadd.f32 0.0, %v2477
      %v2479 = vpop.f32.mrf.mxu0
      %2480 = vdwg.mxu0
      %2481 = vmatpush.bf16.msra.mxu0 0
      %2482 = vmatpush.bf16.msra.mxu0 0
      %2483 = vmatpush.bf16.msra.mxu0 0
      %2484 = vmatpush.bf16.msra.mxu0 0
      %2485 = vmatpush.bf16.msra.mxu0 0
      %2486 = vmatpush.bf16.msra.mxu0 0
      %2487 = vmatpush.bf16.msra.mxu0 0
      %2488 = vmatpush.bf16.msra.mxu0 %v2411
      %2489 = vmatmul.bf16.gmra.mxu0 %v2393
      %v2490 = vpop.f32.mrf.mxu0
      %v2491 = vadd.f32 0.0, %v2490
      %v2492 = vpop.f32.mrf.mxu0
      %2493 = vdwg.mxu0
      %2494 = vmatpush.bf16.msra.mxu0 0
      %2495 = vmatpush.bf16.msra.mxu0 0
      %2496 = vmatpush.bf16.msra.mxu0 0
      %2497 = vmatpush.bf16.msra.mxu0 0
      %2498 = vmatpush.bf16.msra.mxu0 0
      %2499 = vmatpush.bf16.msra.mxu0 0
      %2500 = vmatpush.bf16.msra.mxu0 0
      %2501 = vmatpush.bf16.msra.mxu0 %v2414
      %2502 = vmatmul.bf16.gmra.mxu0 %v2393
      %v2503 = vpop.f32.mrf.mxu0
      %v2504 = vadd.f32 0.0, %v2503
      %v2505 = vpop.f32.mrf.mxu0
      %2506 = vdwg.mxu0
      %v2507 = vadd.f32 %v2336, %v2426
      %v2508 = vadd.f32 %v2337, %v2439
      %v2509 = vadd.f32 %v2338, %v2452
      %v2510 = vadd.f32 %v2339, %v2465
      %v2511 = vadd.f32 %v2340, %v2478
      %v2512 = vadd.f32 %v2341, %v2491
      %v2513 = vadd.f32 %v2342, %v2504
      %v2514 = vld [vmem:[%s165] sm:$0xff]
      %v2515 = vld [vmem:[%s165 + $0x8] sm:$0xff]
      %s2516 = scalar_lea.vmem %s0, 56
      %v2517 = vld [vmem:[%s2516] sm:$0x7]
      %2519 = vst [vmem:[#allocation1] ss:$4 sm:$0xff] %v2514
      %s2521 = scalar_lea.vmem [#allocation1], 32
      %2522 = vst [vmem:[%s2521] ss:$4 sm:$0xff] %v2515
      %v2523 = vld.sshfl [vmem:[#allocation1] sm:$0xff pattern:$0x73625140]
      %v2525 = vld.sshfl [vmem:[#allocation1 + $0x8] sm:$0xff pattern:$0x73625140]
      %v2527 = vld.sshfl [vmem:[#allocation1 + $0x10] sm:$0xff pattern:$0x73625140]
      %v2529 = vld.sshfl [vmem:[#allocation1 + $0x18] sm:$0xff pattern:$0x73625140]
      %v2531 = vld.sshfl [vmem:[#allocation1 + $0x20] sm:$0xff pattern:$0x73625140]
      %v2533 = vld.sshfl [vmem:[#allocation1 + $0x28] sm:$0xff pattern:$0x73625140]
      %v2535 = vld.sshfl [vmem:[#allocation1 + $0x30] sm:$0xff pattern:$0x73625140]
      %v2537 = vld.sshfl [vmem:[#allocation1 + $0x38] sm:$0xff pattern:$0x73625140]
      %2539 = vrot.lane.b32.xlu0 %v2523, 60
      %v2540 = vpop.permute.xlu0 %2539
      %2541 = vrot.lane.b32.xlu0 %v2525, 60
      %v2542 = vpop.permute.xlu0 %2541
      %2543 = vrot.lane.b32.xlu0 %v2527, 60
      %v2544 = vpop.permute.xlu0 %2543
      %2545 = vrot.lane.b32.xlu0 %v2529, 60
      %v2546 = vpop.permute.xlu0 %2545
      %2547 = vrot.lane.b32.xlu0 %v2531, 60
      %v2548 = vpop.permute.xlu0 %2547
      %2549 = vrot.lane.b32.xlu0 %v2533, 60
      %v2550 = vpop.permute.xlu0 %2549
      %2551 = vrot.lane.b32.xlu0 %v2535, 60
      %v2552 = vpop.permute.xlu0 %2551
      %2553 = vrot.lane.b32.xlu0 %v2537, 60
      %v2554 = vpop.permute.xlu0 %2553
      %vm2555 = vcmask 490496
      %v2556 = vsel %vm2555, %v2540, %v2542
      %v2557 = vsel %vm2555, %v2542, %v2544
      %v2558 = vsel %vm2555, %v2544, %v2546
      %v2559 = vsel %vm2555, %v2546, %v2548
      %v2560 = vsel %vm2555, %v2548, %v2550
      %v2561 = vsel %vm2555, %v2550, %v2552
      %v2562 = vsel %vm2555, %v2552, %v2554
      %v2564 = vsel %vm223, %v2517, 0
      %v2567 = vand.u32 %v2556, %v230
      %v2570 = vand.u32 %v2557, %v230
      %v2573 = vand.u32 %v2558, %v230
      %v2576 = vand.u32 %v2559, %v230
      %v2579 = vand.u32 %v2560, %v230
      %v2582 = vand.u32 %v2561, %v230
      %v2585 = vand.u32 %v2562, %v230
      %2587 = vmatpush.bf16.msra.mxu0 0
      %2588 = vmatpush.bf16.msra.mxu0 0
      %2589 = vmatpush.bf16.msra.mxu0 0
      %2590 = vmatpush.bf16.msra.mxu0 0
      %2591 = vmatpush.bf16.msra.mxu0 0
      %2592 = vmatpush.bf16.msra.mxu0 0
      %2593 = vmatpush.bf16.msra.mxu0 0
      %2594 = vmatpush.bf16.msra.mxu0 %v2567
      %2595 = vmatmul.bf16.gmra.mxu0 %v2564
      %v2596 = vpop.f32.mrf.mxu0
      %v2597 = vadd.f32 0.0, %v2596
      %v2598 = vpop.f32.mrf.mxu0
      %2599 = vdwg.mxu0
      %2600 = vmatpush.bf16.msra.mxu0 0
      %2601 = vmatpush.bf16.msra.mxu0 0
      %2602 = vmatpush.bf16.msra.mxu0 0
      %2603 = vmatpush.bf16.msra.mxu0 0
      %2604 = vmatpush.bf16.msra.mxu0 0
      %2605 = vmatpush.bf16.msra.mxu0 0
      %2606 = vmatpush.bf16.msra.mxu0 0
      %2607 = vmatpush.bf16.msra.mxu0 %v2570
      %2608 = vmatmul.bf16.gmra.mxu0 %v2564
      %v2609 = vpop.f32.mrf.mxu0
      %v2610 = vadd.f32 0.0, %v2609
      %v2611 = vpop.f32.mrf.mxu0
      %2612 = vdwg.mxu0
      %2613 = vmatpush.bf16.msra.mxu0 0
      %2614 = vmatpush.bf16.msra.mxu0 0
      %2615 = vmatpush.bf16.msra.mxu0 0
      %2616 = vmatpush.bf16.msra.mxu0 0
      %2617 = vmatpush.bf16.msra.mxu0 0
      %2618 = vmatpush.bf16.msra.mxu0 0
      %2619 = vmatpush.bf16.msra.mxu0 0
      %2620 = vmatpush.bf16.msra.mxu0 %v2573
      %2621 = vmatmul.bf16.gmra.mxu0 %v2564
      %v2622 = vpop.f32.mrf.mxu0
      %v2623 = vadd.f32 0.0, %v2622
      %v2624 = vpop.f32.mrf.mxu0
      %2625 = vdwg.mxu0
      %2626 = vmatpush.bf16.msra.mxu0 0
      %2627 = vmatpush.bf16.msra.mxu0 0
      %2628 = vmatpush.bf16.msra.mxu0 0
      %2629 = vmatpush.bf16.msra.mxu0 0
      %2630 = vmatpush.bf16.msra.mxu0 0
      %2631 = vmatpush.bf16.msra.mxu0 0
      %2632 = vmatpush.bf16.msra.mxu0 0
      %2633 = vmatpush.bf16.msra.mxu0 %v2576
      %2634 = vmatmul.bf16.gmra.mxu0 %v2564
      %v2635 = vpop.f32.mrf.mxu0
      %v2636 = vadd.f32 0.0, %v2635
      %v2637 = vpop.f32.mrf.mxu0
      %2638 = vdwg.mxu0
      %2639 = vmatpush.bf16.msra.mxu0 0
      %2640 = vmatpush.bf16.msra.mxu0 0
      %2641 = vmatpush.bf16.msra.mxu0 0
      %2642 = vmatpush.bf16.msra.mxu0 0
      %2643 = vmatpush.bf16.msra.mxu0 0
      %2644 = vmatpush.bf16.msra.mxu0 0
      %2645 = vmatpush.bf16.msra.mxu0 0
      %2646 = vmatpush.bf16.msra.mxu0 %v2579
      %2647 = vmatmul.bf16.gmra.mxu0 %v2564
      %v2648 = vpop.f32.mrf.mxu0
      %v2649 = vadd.f32 0.0, %v2648
      %v2650 = vpop.f32.mrf.mxu0
      %2651 = vdwg.mxu0
      %2652 = vmatpush.bf16.msra.mxu0 0
      %2653 = vmatpush.bf16.msra.mxu0 0
      %2654 = vmatpush.bf16.msra.mxu0 0
      %2655 = vmatpush.bf16.msra.mxu0 0
      %2656 = vmatpush.bf16.msra.mxu0 0
      %2657 = vmatpush.bf16.msra.mxu0 0
      %2658 = vmatpush.bf16.msra.mxu0 0
      %2659 = vmatpush.bf16.msra.mxu0 %v2582
      %2660 = vmatmul.bf16.gmra.mxu0 %v2564
      %v2661 = vpop.f32.mrf.mxu0
      %v2662 = vadd.f32 0.0, %v2661
      %v2663 = vpop.f32.mrf.mxu0
      %2664 = vdwg.mxu0
      %2665 = vmatpush.bf16.msra.mxu0 0
      %2666 = vmatpush.bf16.msra.mxu0 0
      %2667 = vmatpush.bf16.msra.mxu0 0
      %2668 = vmatpush.bf16.msra.mxu0 0
      %2669 = vmatpush.bf16.msra.mxu0 0
      %2670 = vmatpush.bf16.msra.mxu0 0
      %2671 = vmatpush.bf16.msra.mxu0 0
      %2672 = vmatpush.bf16.msra.mxu0 %v2585
      %2673 = vmatmul.bf16.gmra.mxu0 %v2564
      %v2674 = vpop.f32.mrf.mxu0
      %v2675 = vadd.f32 0.0, %v2674
      %v2676 = vpop.f32.mrf.mxu0
      %2677 = vdwg.mxu0
      %v2678 = vadd.f32 %v2507, %v2597
      %v2679 = vadd.f32 %v2508, %v2610
      %v2680 = vadd.f32 %v2509, %v2623
      %v2681 = vadd.f32 %v2510, %v2636
      %v2682 = vadd.f32 %v2511, %v2649
      %v2683 = vadd.f32 %v2512, %v2662
      %v2684 = vadd.f32 %v2513, %v2675
      %v2685 = vld [vmem:[%s165] sm:$0xff]
      %v2686 = vld [vmem:[%s165 + $0x8] sm:$0xff]
      %s2687 = scalar_lea.vmem %s0, 60
      %v2688 = vld [vmem:[%s2687] sm:$0x7]
      %2690 = vst [vmem:[#allocation1] ss:$4 sm:$0xff] %v2685
      %s2692 = scalar_lea.vmem [#allocation1], 32
      %2693 = vst [vmem:[%s2692] ss:$4 sm:$0xff] %v2686
      %v2694 = vld.sshfl [vmem:[#allocation1] sm:$0xff pattern:$0x73625140]
      %v2696 = vld.sshfl [vmem:[#allocation1 + $0x8] sm:$0xff pattern:$0x73625140]
      %v2698 = vld.sshfl [vmem:[#allocation1 + $0x10] sm:$0xff pattern:$0x73625140]
      %v2700 = vld.sshfl [vmem:[#allocation1 + $0x18] sm:$0xff pattern:$0x73625140]
      %v2702 = vld.sshfl [vmem:[#allocation1 + $0x20] sm:$0xff pattern:$0x73625140]
      %v2704 = vld.sshfl [vmem:[#allocation1 + $0x28] sm:$0xff pattern:$0x73625140]
      %v2706 = vld.sshfl [vmem:[#allocation1 + $0x30] sm:$0xff pattern:$0x73625140]
      %v2708 = vld.sshfl [vmem:[#allocation1 + $0x38] sm:$0xff pattern:$0x73625140]
      %2710 = vrot.lane.b32.xlu0 %v2694, 32
      %v2711 = vpop.permute.xlu0 %2710
      %2712 = vrot.lane.b32.xlu0 %v2696, 32
      %v2713 = vpop.permute.xlu0 %2712
      %2714 = vrot.lane.b32.xlu0 %v2698, 32
      %v2715 = vpop.permute.xlu0 %2714
      %2716 = vrot.lane.b32.xlu0 %v2700, 32
      %v2717 = vpop.permute.xlu0 %2716
      %2718 = vrot.lane.b32.xlu0 %v2702, 32
      %v2719 = vpop.permute.xlu0 %2718
      %2720 = vrot.lane.b32.xlu0 %v2704, 32
      %v2721 = vpop.permute.xlu0 %2720
      %2722 = vrot.lane.b32.xlu0 %v2706, 32
      %v2723 = vpop.permute.xlu0 %2722
      %2724 = vrot.lane.b32.xlu0 %v2708, 32
      %v2725 = vpop.permute.xlu0 %2724
      %vm2726 = vcmask 261120
      %v2727 = vsel %vm2726, %v2711, %v2713
      %v2728 = vsel %vm2726, %v2713, %v2715
      %v2729 = vsel %vm2726, %v2715, %v2717
      %v2730 = vsel %vm2726, %v2717, %v2719
      %v2731 = vsel %vm2726, %v2719, %v2721
      %v2732 = vsel %vm2726, %v2721, %v2723
      %v2733 = vsel %vm2726, %v2723, %v2725
      %v2735 = vsel %vm223, %v2688, 0
      %v2738 = vand.u32 %v2727, %v230
      %v2741 = vand.u32 %v2728, %v230
      %v2744 = vand.u32 %v2729, %v230
      %v2747 = vand.u32 %v2730, %v230
      %v2750 = vand.u32 %v2731, %v230
      %v2753 = vand.u32 %v2732, %v230
      %v2756 = vand.u32 %v2733, %v230
      %2758 = vmatpush.bf16.msra.mxu0 0
      %2759 = vmatpush.bf16.msra.mxu0 0
      %2760 = vmatpush.bf16.msra.mxu0 0
      %2761 = vmatpush.bf16.msra.mxu0 0
      %2762 = vmatpush.bf16.msra.mxu0 0
      %2763 = vmatpush.bf16.msra.mxu0 0
      %2764 = vmatpush.bf16.msra.mxu0 0
      %2765 = vmatpush.bf16.msra.mxu0 %v2738
      %2766 = vmatmul.bf16.gmra.mxu0 %v2735
      %v2767 = vpop.f32.mrf.mxu0
      %v2768 = vadd.f32 0.0, %v2767
      %v2769 = vpop.f32.mrf.mxu0
      %2770 = vdwg.mxu0
      %2771 = vmatpush.bf16.msra.mxu0 0
      %2772 = vmatpush.bf16.msra.mxu0 0
      %2773 = vmatpush.bf16.msra.mxu0 0
      %2774 = vmatpush.bf16.msra.mxu0 0
      %2775 = vmatpush.bf16.msra.mxu0 0
      %2776 = vmatpush.bf16.msra.mxu0 0
      %2777 = vmatpush.bf16.msra.mxu0 0
      %2778 = vmatpush.bf16.msra.mxu0 %v2741
      %2779 = vmatmul.bf16.gmra.mxu0 %v2735
      %v2780 = vpop.f32.mrf.mxu0
      %v2781 = vadd.f32 0.0, %v2780
      %v2782 = vpop.f32.mrf.mxu0
      %2783 = vdwg.mxu0
      %2784 = vmatpush.bf16.msra.mxu0 0
      %2785 = vmatpush.bf16.msra.mxu0 0
      %2786 = vmatpush.bf16.msra.mxu0 0
      %2787 = vmatpush.bf16.msra.mxu0 0
      %2788 = vmatpush.bf16.msra.mxu0 0
      %2789 = vmatpush.bf16.msra.mxu0 0
      %2790 = vmatpush.bf16.msra.mxu0 0
      %2791 = vmatpush.bf16.msra.mxu0 %v2744
      %2792 = vmatmul.bf16.gmra.mxu0 %v2735
      %v2793 = vpop.f32.mrf.mxu0
      %v2794 = vadd.f32 0.0, %v2793
      %v2795 = vpop.f32.mrf.mxu0
      %2796 = vdwg.mxu0
      %2797 = vmatpush.bf16.msra.mxu0 0
      %2798 = vmatpush.bf16.msra.mxu0 0
      %2799 = vmatpush.bf16.msra.mxu0 0
      %2800 = vmatpush.bf16.msra.mxu0 0
      %2801 = vmatpush.bf16.msra.mxu0 0
      %2802 = vmatpush.bf16.msra.mxu0 0
      %2803 = vmatpush.bf16.msra.mxu0 0
      %2804 = vmatpush.bf16.msra.mxu0 %v2747
      %2805 = vmatmul.bf16.gmra.mxu0 %v2735
      %v2806 = vpop.f32.mrf.mxu0
      %v2807 = vadd.f32 0.0, %v2806
      %v2808 = vpop.f32.mrf.mxu0
      %2809 = vdwg.mxu0
      %2810 = vmatpush.bf16.msra.mxu0 0
      %2811 = vmatpush.bf16.msra.mxu0 0
      %2812 = vmatpush.bf16.msra.mxu0 0
      %2813 = vmatpush.bf16.msra.mxu0 0
      %2814 = vmatpush.bf16.msra.mxu0 0
      %2815 = vmatpush.bf16.msra.mxu0 0
      %2816 = vmatpush.bf16.msra.mxu0 0
      %2817 = vmatpush.bf16.msra.mxu0 %v2750
      %2818 = vmatmul.bf16.gmra.mxu0 %v2735
      %v2819 = vpop.f32.mrf.mxu0
      %v2820 = vadd.f32 0.0, %v2819
      %v2821 = vpop.f32.mrf.mxu0
      %2822 = vdwg.mxu0
      %2823 = vmatpush.bf16.msra.mxu0 0
      %2824 = vmatpush.bf16.msra.mxu0 0
      %2825 = vmatpush.bf16.msra.mxu0 0
      %2826 = vmatpush.bf16.msra.mxu0 0
      %2827 = vmatpush.bf16.msra.mxu0 0
      %2828 = vmatpush.bf16.msra.mxu0 0
      %2829 = vmatpush.bf16.msra.mxu0 0
      %2830 = vmatpush.bf16.msra.mxu0 %v2753
      %2831 = vmatmul.bf16.gmra.mxu0 %v2735
      %v2832 = vpop.f32.mrf.mxu0
      %v2833 = vadd.f32 0.0, %v2832
      %v2834 = vpop.f32.mrf.mxu0
      %2835 = vdwg.mxu0
      %2836 = vmatpush.bf16.msra.mxu0 0
      %2837 = vmatpush.bf16.msra.mxu0 0
      %2838 = vmatpush.bf16.msra.mxu0 0
      %2839 = vmatpush.bf16.msra.mxu0 0
      %2840 = vmatpush.bf16.msra.mxu0 0
      %2841 = vmatpush.bf16.msra.mxu0 0
      %2842 = vmatpush.bf16.msra.mxu0 0
      %2843 = vmatpush.bf16.msra.mxu0 %v2756
      %2844 = vmatmul.bf16.gmra.mxu0 %v2735
      %v2845 = vpop.f32.mrf.mxu0
      %v2846 = vadd.f32 0.0, %v2845
      %v2847 = vpop.f32.mrf.mxu0
      %2848 = vdwg.mxu0
      %v2849 = vadd.f32 %v2678, %v2768
      %v2850 = vadd.f32 %v2679, %v2781
      %v2851 = vadd.f32 %v2680, %v2794
      %v2852 = vadd.f32 %v2681, %v2807
      %v2853 = vadd.f32 %v2682, %v2820
      %v2854 = vadd.f32 %v2683, %v2833
      %v2855 = vadd.f32 %v2684, %v2846
      %v2856 = vld [vmem:[%s165] sm:$0xff]
      %v2857 = vld [vmem:[%s165 + $0x8] sm:$0xff]
      %s2858 = scalar_lea.vmem %s0, 64
      %v2859 = vld [vmem:[%s2858] sm:$0x7]
      %2861 = vst [vmem:[#allocation1] ss:$4 sm:$0xff] %v2856
      %s2863 = scalar_lea.vmem [#allocation1], 32
      %2864 = vst [vmem:[%s2863] ss:$4 sm:$0xff] %v2857
      %v2865 = vld.sshfl [vmem:[#allocation1] sm:$0xff pattern:$0x73625140]
      %v2867 = vld.sshfl [vmem:[#allocation1 + $0x8] sm:$0xff pattern:$0x73625140]
      %v2869 = vld.sshfl [vmem:[#allocation1 + $0x10] sm:$0xff pattern:$0x73625140]
      %v2871 = vld.sshfl [vmem:[#allocation1 + $0x18] sm:$0xff pattern:$0x73625140]
      %v2873 = vld.sshfl [vmem:[#allocation1 + $0x20] sm:$0xff pattern:$0x73625140]
      %v2875 = vld.sshfl [vmem:[#allocation1 + $0x28] sm:$0xff pattern:$0x73625140]
      %v2877 = vld.sshfl [vmem:[#allocation1 + $0x30] sm:$0xff pattern:$0x73625140]
      %v2879 = vld.sshfl [vmem:[#allocation1 + $0x38] sm:$0xff pattern:$0x73625140]
      %2881 = vrot.lane.b32.xlu0 %v2865, 31
      %v2882 = vpop.permute.xlu0 %2881
      %2883 = vrot.lane.b32.xlu0 %v2867, 31
      %v2884 = vpop.permute.xlu0 %2883
      %2885 = vrot.lane.b32.xlu0 %v2869, 31
      %v2886 = vpop.permute.xlu0 %2885
      %2887 = vrot.lane.b32.xlu0 %v2871, 31
      %v2888 = vpop.permute.xlu0 %2887
      %2889 = vrot.lane.b32.xlu0 %v2873, 31
      %v2890 = vpop.permute.xlu0 %2889
      %2891 = vrot.lane.b32.xlu0 %v2875, 31
      %v2892 = vpop.permute.xlu0 %2891
      %2893 = vrot.lane.b32.xlu0 %v2877, 31
      %v2894 = vpop.permute.xlu0 %2893
      %2895 = vrot.lane.b32.xlu0 %v2879, 31
      %v2896 = vpop.permute.xlu0 %2895
      %vm2897 = vcmask 252928
      %v2898 = vsel %vm2897, %v2882, %v2884
      %v2899 = vsel %vm2897, %v2884, %v2886
      %v2900 = vsel %vm2897, %v2886, %v2888
      %v2901 = vsel %vm2897, %v2888, %v2890
      %v2902 = vsel %vm2897, %v2890, %v2892
      %v2903 = vsel %vm2897, %v2892, %v2894
      %v2904 = vsel %vm2897, %v2894, %v2896
      %v2906 = vsel %vm223, %v2859, 0
      %v2909 = vand.u32 %v2898, %v230
      %v2912 = vand.u32 %v2899, %v230
      %v2915 = vand.u32 %v2900, %v230
      %v2918 = vand.u32 %v2901, %v230
      %v2921 = vand.u32 %v2902, %v230
      %v2924 = vand.u32 %v2903, %v230
      %v2927 = vand.u32 %v2904, %v230
      %2929 = vmatpush.bf16.msra.mxu0 0
      %2930 = vmatpush.bf16.msra.mxu0 0
      %2931 = vmatpush.bf16.msra.mxu0 0
      %2932 = vmatpush.bf16.msra.mxu0 0
      %2933 = vmatpush.bf16.msra.mxu0 0
      %2934 = vmatpush.bf16.msra.mxu0 0
      %2935 = vmatpush.bf16.msra.mxu0 0
      %2936 = vmatpush.bf16.msra.mxu0 %v2909
      %2937 = vmatmul.bf16.gmra.mxu0 %v2906
      %v2938 = vpop.f32.mrf.mxu0
      %v2939 = vadd.f32 0.0, %v2938
      %v2940 = vpop.f32.mrf.mxu0
      %2941 = vdwg.mxu0
      %2942 = vmatpush.bf16.msra.mxu0 0
      %2943 = vmatpush.bf16.msra.mxu0 0
      %2944 = vmatpush.bf16.msra.mxu0 0
      %2945 = vmatpush.bf16.msra.mxu0 0
      %2946 = vmatpush.bf16.msra.mxu0 0
      %2947 = vmatpush.bf16.msra.mxu0 0
      %2948 = vmatpush.bf16.msra.mxu0 0
      %2949 = vmatpush.bf16.msra.mxu0 %v2912
      %2950 = vmatmul.bf16.gmra.mxu0 %v2906
      %v2951 = vpop.f32.mrf.mxu0
      %v2952 = vadd.f32 0.0, %v2951
      %v2953 = vpop.f32.mrf.mxu0
      %2954 = vdwg.mxu0
      %2955 = vmatpush.bf16.msra.mxu0 0
      %2956 = vmatpush.bf16.msra.mxu0 0
      %2957 = vmatpush.bf16.msra.mxu0 0
      %2958 = vmatpush.bf16.msra.mxu0 0
      %2959 = vmatpush.bf16.msra.mxu0 0
      %2960 = vmatpush.bf16.msra.mxu0 0
      %2961 = vmatpush.bf16.msra.mxu0 0
      %2962 = vmatpush.bf16.msra.mxu0 %v2915
      %2963 = vmatmul.bf16.gmra.mxu0 %v2906
      %v2964 = vpop.f32.mrf.mxu0
      %v2965 = vadd.f32 0.0, %v2964
      %v2966 = vpop.f32.mrf.mxu0
      %2967 = vdwg.mxu0
      %2968 = vmatpush.bf16.msra.mxu0 0
      %2969 = vmatpush.bf16.msra.mxu0 0
      %2970 = vmatpush.bf16.msra.mxu0 0
      %2971 = vmatpush.bf16.msra.mxu0 0
      %2972 = vmatpush.bf16.msra.mxu0 0
      %2973 = vmatpush.bf16.msra.mxu0 0
      %2974 = vmatpush.bf16.msra.mxu0 0
      %2975 = vmatpush.bf16.msra.mxu0 %v2918
      %2976 = vmatmul.bf16.gmra.mxu0 %v2906
      %v2977 = vpop.f32.mrf.mxu0
      %v2978 = vadd.f32 0.0, %v2977
      %v2979 = vpop.f32.mrf.mxu0
      %2980 = vdwg.mxu0
      %2981 = vmatpush.bf16.msra.mxu0 0
      %2982 = vmatpush.bf16.msra.mxu0 0
      %2983 = vmatpush.bf16.msra.mxu0 0
      %2984 = vmatpush.bf16.msra.mxu0 0
      %2985 = vmatpush.bf16.msra.mxu0 0
      %2986 = vmatpush.bf16.msra.mxu0 0
      %2987 = vmatpush.bf16.msra.mxu0 0
      %2988 = vmatpush.bf16.msra.mxu0 %v2921
      %2989 = vmatmul.bf16.gmra.mxu0 %v2906
      %v2990 = vpop.f32.mrf.mxu0
      %v2991 = vadd.f32 0.0, %v2990
      %v2992 = vpop.f32.mrf.mxu0
      %2993 = vdwg.mxu0
      %2994 = vmatpush.bf16.msra.mxu0 0
      %2995 = vmatpush.bf16.msra.mxu0 0
      %2996 = vmatpush.bf16.msra.mxu0 0
      %2997 = vmatpush.bf16.msra.mxu0 0
      %2998 = vmatpush.bf16.msra.mxu0 0
      %2999 = vmatpush.bf16.msra.mxu0 0
      %3000 = vmatpush.bf16.msra.mxu0 0
      %3001 = vmatpush.bf16.msra.mxu0 %v2924
      %3002 = vmatmul.bf16.gmra.mxu0 %v2906
      %v3003 = vpop.f32.mrf.mxu0
      %v3004 = vadd.f32 0.0, %v3003
      %v3005 = vpop.f32.mrf.mxu0
      %3006 = vdwg.mxu0
      %3007 = vmatpush.bf16.msra.mxu0 0
      %3008 = vmatpush.bf16.msra.mxu0 0
      %3009 = vmatpush.bf16.msra.mxu0 0
      %3010 = vmatpush.bf16.msra.mxu0 0
      %3011 = vmatpush.bf16.msra.mxu0 0
      %3012 = vmatpush.bf16.msra.mxu0 0
      %3013 = vmatpush.bf16.msra.mxu0 0
      %3014 = vmatpush.bf16.msra.mxu0 %v2927
      %3015 = vmatmul.bf16.gmra.mxu0 %v2906
      %v3016 = vpop.f32.mrf.mxu0
      %v3017 = vadd.f32 0.0, %v3016
      %v3018 = vpop.f32.mrf.mxu0
      %3019 = vdwg.mxu0
      %v3020 = vadd.f32 %v2849, %v2939
      %v3021 = vadd.f32 %v2850, %v2952
      %v3022 = vadd.f32 %v2851, %v2965
      %v3023 = vadd.f32 %v2852, %v2978
      %v3024 = vadd.f32 %v2853, %v2991
      %v3025 = vadd.f32 %v2854, %v3004
      %v3026 = vadd.f32 %v2855, %v3017
      %v3027 = vld [vmem:[%s165] sm:$0xff]
      %v3028 = vld [vmem:[%s165 + $0x8] sm:$0xff]
      %s3029 = scalar_lea.vmem %s0, 68
      %v3030 = vld [vmem:[%s3029] sm:$0x7]
      %3032 = vst [vmem:[#allocation1] ss:$4 sm:$0xff] %v3027
      %s3034 = scalar_lea.vmem [#allocation1], 32
      %3035 = vst [vmem:[%s3034] ss:$4 sm:$0xff] %v3028
      %v3036 = vld.sshfl [vmem:[#allocation1] sm:$0xff pattern:$0x73625140]
      %v3038 = vld.sshfl [vmem:[#allocation1 + $0x8] sm:$0xff pattern:$0x73625140]
      %v3040 = vld.sshfl [vmem:[#allocation1 + $0x10] sm:$0xff pattern:$0x73625140]
      %v3042 = vld.sshfl [vmem:[#allocation1 + $0x18] sm:$0xff pattern:$0x73625140]
      %v3044 = vld.sshfl [vmem:[#allocation1 + $0x20] sm:$0xff pattern:$0x73625140]
      %v3046 = vld.sshfl [vmem:[#allocation1 + $0x28] sm:$0xff pattern:$0x73625140]
      %v3048 = vld.sshfl [vmem:[#allocation1 + $0x30] sm:$0xff pattern:$0x73625140]
      %v3050 = vld.sshfl [vmem:[#allocation1 + $0x38] sm:$0xff pattern:$0x73625140]
      %3052 = vrot.lane.b32.xlu0 %v3036, 30
      %v3053 = vpop.permute.xlu0 %3052
      %3054 = vrot.lane.b32.xlu0 %v3038, 30
      %v3055 = vpop.permute.xlu0 %3054
      %3056 = vrot.lane.b32.xlu0 %v3040, 30
      %v3057 = vpop.permute.xlu0 %3056
      %3058 = vrot.lane.b32.xlu0 %v3042, 30
      %v3059 = vpop.permute.xlu0 %3058
      %3060 = vrot.lane.b32.xlu0 %v3044, 30
      %v3061 = vpop.permute.xlu0 %3060
      %3062 = vrot.lane.b32.xlu0 %v3046, 30
      %v3063 = vpop.permute.xlu0 %3062
      %3064 = vrot.lane.b32.xlu0 %v3048, 30
      %v3065 = vpop.permute.xlu0 %3064
      %3066 = vrot.lane.b32.xlu0 %v3050, 30
      %v3067 = vpop.permute.xlu0 %3066
      %vm3068 = vcmask 244736
      %v3069 = vsel %vm3068, %v3053, %v3055
      %v3070 = vsel %vm3068, %v3055, %v3057
      %v3071 = vsel %vm3068, %v3057, %v3059
      %v3072 = vsel %vm3068, %v3059, %v3061
      %v3073 = vsel %vm3068, %v3061, %v3063
      %v3074 = vsel %vm3068, %v3063, %v3065
      %v3075 = vsel %vm3068, %v3065, %v3067
      %v3077 = vsel %vm223, %v3030, 0
      %v3080 = vand.u32 %v3069, %v230
      %v3083 = vand.u32 %v3070, %v230
      %v3086 = vand.u32 %v3071, %v230
      %v3089 = vand.u32 %v3072, %v230
      %v3092 = vand.u32 %v3073, %v230
      %v3095 = vand.u32 %v3074, %v230
      %v3098 = vand.u32 %v3075, %v230
      %3100 = vmatpush.bf16.msra.mxu0 0
      %3101 = vmatpush.bf16.msra.mxu0 0
      %3102 = vmatpush.bf16.msra.mxu0 0
      %3103 = vmatpush.bf16.msra.mxu0 0
      %3104 = vmatpush.bf16.msra.mxu0 0
      %3105 = vmatpush.bf16.msra.mxu0 0
      %3106 = vmatpush.bf16.msra.mxu0 0
      %3107 = vmatpush.bf16.msra.mxu0 %v3080
      %3108 = vmatmul.bf16.gmra.mxu0 %v3077
      %v3109 = vpop.f32.mrf.mxu0
      %v3110 = vadd.f32 0.0, %v3109
      %v3111 = vpop.f32.mrf.mxu0
      %3112 = vdwg.mxu0
      %3113 = vmatpush.bf16.msra.mxu0 0
      %3114 = vmatpush.bf16.msra.mxu0 0
      %3115 = vmatpush.bf16.msra.mxu0 0
      %3116 = vmatpush.bf16.msra.mxu0 0
      %3117 = vmatpush.bf16.msra.mxu0 0
      %3118 = vmatpush.bf16.msra.mxu0 0
      %3119 = vmatpush.bf16.msra.mxu0 0
      %3120 = vmatpush.bf16.msra.mxu0 %v3083
      %3121 = vmatmul.bf16.gmra.mxu0 %v3077
      %v3122 = vpop.f32.mrf.mxu0
      %v3123 = vadd.f32 0.0, %v3122
      %v3124 = vpop.f32.mrf.mxu0
      %3125 = vdwg.mxu0
      %3126 = vmatpush.bf16.msra.mxu0 0
      %3127 = vmatpush.bf16.msra.mxu0 0
      %3128 = vmatpush.bf16.msra.mxu0 0
      %3129 = vmatpush.bf16.msra.mxu0 0
      %3130 = vmatpush.bf16.msra.mxu0 0
      %3131 = vmatpush.bf16.msra.mxu0 0
      %3132 = vmatpush.bf16.msra.mxu0 0
      %3133 = vmatpush.bf16.msra.mxu0 %v3086
      %3134 = vmatmul.bf16.gmra.mxu0 %v3077
      %v3135 = vpop.f32.mrf.mxu0
      %v3136 = vadd.f32 0.0, %v3135
      %v3137 = vpop.f32.mrf.mxu0
      %3138 = vdwg.mxu0
      %3139 = vmatpush.bf16.msra.mxu0 0
      %3140 = vmatpush.bf16.msra.mxu0 0
      %3141 = vmatpush.bf16.msra.mxu0 0
      %3142 = vmatpush.bf16.msra.mxu0 0
      %3143 = vmatpush.bf16.msra.mxu0 0
      %3144 = vmatpush.bf16.msra.mxu0 0
      %3145 = vmatpush.bf16.msra.mxu0 0
      %3146 = vmatpush.bf16.msra.mxu0 %v3089
      %3147 = vmatmul.bf16.gmra.mxu0 %v3077
      %v3148 = vpop.f32.mrf.mxu0
      %v3149 = vadd.f32 0.0, %v3148
      %v3150 = vpop.f32.mrf.mxu0
      %3151 = vdwg.mxu0
      %3152 = vmatpush.bf16.msra.mxu0 0
      %3153 = vmatpush.bf16.msra.mxu0 0
      %3154 = vmatpush.bf16.msra.mxu0 0
      %3155 = vmatpush.bf16.msra.mxu0 0
      %3156 = vmatpush.bf16.msra.mxu0 0
      %3157 = vmatpush.bf16.msra.mxu0 0
      %3158 = vmatpush.bf16.msra.mxu0 0
      %3159 = vmatpush.bf16.msra.mxu0 %v3092
      %3160 = vmatmul.bf16.gmra.mxu0 %v3077
      %v3161 = vpop.f32.mrf.mxu0
      %v3162 = vadd.f32 0.0, %v3161
      %v3163 = vpop.f32.mrf.mxu0
      %3164 = vdwg.mxu0
      %3165 = vmatpush.bf16.msra.mxu0 0
      %3166 = vmatpush.bf16.msra.mxu0 0
      %3167 = vmatpush.bf16.msra.mxu0 0
      %3168 = vmatpush.bf16.msra.mxu0 0
      %3169 = vmatpush.bf16.msra.mxu0 0
      %3170 = vmatpush.bf16.msra.mxu0 0
      %3171 = vmatpush.bf16.msra.mxu0 0
      %3172 = vmatpush.bf16.msra.mxu0 %v3095
      %3173 = vmatmul.bf16.gmra.mxu0 %v3077
      %v3174 = vpop.f32.mrf.mxu0
      %v3175 = vadd.f32 0.0, %v3174
      %v3176 = vpop.f32.mrf.mxu0
      %3177 = vdwg.mxu0
      %3178 = vmatpush.bf16.msra.mxu0 0
      %3179 = vmatpush.bf16.msra.mxu0 0
      %3180 = vmatpush.bf16.msra.mxu0 0
      %3181 = vmatpush.bf16.msra.mxu0 0
      %3182 = vmatpush.bf16.msra.mxu0 0
      %3183 = vmatpush.bf16.msra.mxu0 0
      %3184 = vmatpush.bf16.msra.mxu0 0
      %3185 = vmatpush.bf16.msra.mxu0 %v3098
      %3186 = vmatmul.bf16.gmra.mxu0 %v3077
      %v3187 = vpop.f32.mrf.mxu0
      %v3188 = vadd.f32 0.0, %v3187
      %v3189 = vpop.f32.mrf.mxu0
      %3190 = vdwg.mxu0
      %v3191 = vadd.f32 %v3020, %v3110
      %v3192 = vadd.f32 %v3021, %v3123
      %v3193 = vadd.f32 %v3022, %v3136
      %v3194 = vadd.f32 %v3023, %v3149
      %v3195 = vadd.f32 %v3024, %v3162
      %v3196 = vadd.f32 %v3025, %v3175
      %v3197 = vadd.f32 %v3026, %v3188
      %v3198 = vld [vmem:[%s165] sm:$0xff]
      %v3199 = vld [vmem:[%s165 + $0x8] sm:$0xff]
      %s3200 = scalar_lea.vmem %s0, 72
      %v3201 = vld [vmem:[%s3200] sm:$0x7]
      %3203 = vst [vmem:[#allocation1] ss:$4 sm:$0xff] %v3198
      %s3205 = scalar_lea.vmem [#allocation1], 32
      %3206 = vst [vmem:[%s3205] ss:$4 sm:$0xff] %v3199
      %v3207 = vld.sshfl [vmem:[#allocation1] sm:$0xff pattern:$0x73625140]
      %v3209 = vld.sshfl [vmem:[#allocation1 + $0x8] sm:$0xff pattern:$0x73625140]
      %v3211 = vld.sshfl [vmem:[#allocation1 + $0x10] sm:$0xff pattern:$0x73625140]
      %v3213 = vld.sshfl [vmem:[#allocation1 + $0x18] sm:$0xff pattern:$0x73625140]
      %v3215 = vld.sshfl [vmem:[#allocation1 + $0x20] sm:$0xff pattern:$0x73625140]
      %v3217 = vld.sshfl [vmem:[#allocation1 + $0x28] sm:$0xff pattern:$0x73625140]
      %v3219 = vld.sshfl [vmem:[#allocation1 + $0x30] sm:$0xff pattern:$0x73625140]
      %v3221 = vld.sshfl [vmem:[#allocation1 + $0x38] sm:$0xff pattern:$0x73625140]
      %3223 = vrot.lane.b32.xlu0 %v3207, 29
      %v3224 = vpop.permute.xlu0 %3223
      %3225 = vrot.lane.b32.xlu0 %v3209, 29
      %v3226 = vpop.permute.xlu0 %3225
      %3227 = vrot.lane.b32.xlu0 %v3211, 29
      %v3228 = vpop.permute.xlu0 %3227
      %3229 = vrot.lane.b32.xlu0 %v3213, 29
      %v3230 = vpop.permute.xlu0 %3229
      %3231 = vrot.lane.b32.xlu0 %v3215, 29
      %v3232 = vpop.permute.xlu0 %3231
      %3233 = vrot.lane.b32.xlu0 %v3217, 29
      %v3234 = vpop.permute.xlu0 %3233
      %3235 = vrot.lane.b32.xlu0 %v3219, 29
      %v3236 = vpop.permute.xlu0 %3235
      %3237 = vrot.lane.b32.xlu0 %v3221, 29
      %v3238 = vpop.permute.xlu0 %3237
      %vm3239 = vcmask 236544
      %v3240 = vsel %vm3239, %v3224, %v3226
      %v3241 = vsel %vm3239, %v3226, %v3228
      %v3242 = vsel %vm3239, %v3228, %v3230
      %v3243 = vsel %vm3239, %v3230, %v3232
      %v3244 = vsel %vm3239, %v3232, %v3234
      %v3245 = vsel %vm3239, %v3234, %v3236
      %v3246 = vsel %vm3239, %v3236, %v3238
      %v3248 = vsel %vm223, %v3201, 0
      %v3251 = vand.u32 %v3240, %v230
      %v3254 = vand.u32 %v3241, %v230
      %v3257 = vand.u32 %v3242, %v230
      %v3260 = vand.u32 %v3243, %v230
      %v3263 = vand.u32 %v3244, %v230
      %v3266 = vand.u32 %v3245, %v230
      %v3269 = vand.u32 %v3246, %v230
      %3271 = vmatpush.bf16.msra.mxu0 0
      %3272 = vmatpush.bf16.msra.mxu0 0
      %3273 = vmatpush.bf16.msra.mxu0 0
      %3274 = vmatpush.bf16.msra.mxu0 0
      %3275 = vmatpush.bf16.msra.mxu0 0
      %3276 = vmatpush.bf16.msra.mxu0 0
      %3277 = vmatpush.bf16.msra.mxu0 0
      %3278 = vmatpush.bf16.msra.mxu0 %v3251
      %3279 = vmatmul.bf16.gmra.mxu0 %v3248
      %v3280 = vpop.f32.mrf.mxu0
      %v3281 = vadd.f32 0.0, %v3280
      %v3282 = vpop.f32.mrf.mxu0
      %3283 = vdwg.mxu0
      %3284 = vmatpush.bf16.msra.mxu0 0
      %3285 = vmatpush.bf16.msra.mxu0 0
      %3286 = vmatpush.bf16.msra.mxu0 0
      %3287 = vmatpush.bf16.msra.mxu0 0
      %3288 = vmatpush.bf16.msra.mxu0 0
      %3289 = vmatpush.bf16.msra.mxu0 0
      %3290 = vmatpush.bf16.msra.mxu0 0
      %3291 = vmatpush.bf16.msra.mxu0 %v3254
      %3292 = vmatmul.bf16.gmra.mxu0 %v3248
      %v3293 = vpop.f32.mrf.mxu0
      %v3294 = vadd.f32 0.0, %v3293
      %v3295 = vpop.f32.mrf.mxu0
      %3296 = vdwg.mxu0
      %3297 = vmatpush.bf16.msra.mxu0 0
      %3298 = vmatpush.bf16.msra.mxu0 0
      %3299 = vmatpush.bf16.msra.mxu0 0
      %3300 = vmatpush.bf16.msra.mxu0 0
      %3301 = vmatpush.bf16.msra.mxu0 0
      %3302 = vmatpush.bf16.msra.mxu0 0
      %3303 = vmatpush.bf16.msra.mxu0 0
      %3304 = vmatpush.bf16.msra.mxu0 %v3257
      %3305 = vmatmul.bf16.gmra.mxu0 %v3248
      %v3306 = vpop.f32.mrf.mxu0
      %v3307 = vadd.f32 0.0, %v3306
      %v3308 = vpop.f32.mrf.mxu0
      %3309 = vdwg.mxu0
      %3310 = vmatpush.bf16.msra.mxu0 0
      %3311 = vmatpush.bf16.msra.mxu0 0
      %3312 = vmatpush.bf16.msra.mxu0 0
      %3313 = vmatpush.bf16.msra.mxu0 0
      %3314 = vmatpush.bf16.msra.mxu0 0
      %3315 = vmatpush.bf16.msra.mxu0 0
      %3316 = vmatpush.bf16.msra.mxu0 0
      %3317 = vmatpush.bf16.msra.mxu0 %v3260
      %3318 = vmatmul.bf16.gmra.mxu0 %v3248
      %v3319 = vpop.f32.mrf.mxu0
      %v3320 = vadd.f32 0.0, %v3319
      %v3321 = vpop.f32.mrf.mxu0
      %3322 = vdwg.mxu0
      %3323 = vmatpush.bf16.msra.mxu0 0
      %3324 = vmatpush.bf16.msra.mxu0 0
      %3325 = vmatpush.bf16.msra.mxu0 0
      %3326 = vmatpush.bf16.msra.mxu0 0
      %3327 = vmatpush.bf16.msra.mxu0 0
      %3328 = vmatpush.bf16.msra.mxu0 0
      %3329 = vmatpush.bf16.msra.mxu0 0
      %3330 = vmatpush.bf16.msra.mxu0 %v3263
      %3331 = vmatmul.bf16.gmra.mxu0 %v3248
      %v3332 = vpop.f32.mrf.mxu0
      %v3333 = vadd.f32 0.0, %v3332
      %v3334 = vpop.f32.mrf.mxu0
      %3335 = vdwg.mxu0
      %3336 = vmatpush.bf16.msra.mxu0 0
      %3337 = vmatpush.bf16.msra.mxu0 0
      %3338 = vmatpush.bf16.msra.mxu0 0
      %3339 = vmatpush.bf16.msra.mxu0 0
      %3340 = vmatpush.bf16.msra.mxu0 0
      %3341 = vmatpush.bf16.msra.mxu0 0
      %3342 = vmatpush.bf16.msra.mxu0 0
      %3343 = vmatpush.bf16.msra.mxu0 %v3266
      %3344 = vmatmul.bf16.gmra.mxu0 %v3248
      %v3345 = vpop.f32.mrf.mxu0
      %v3346 = vadd.f32 0.0, %v3345
      %v3347 = vpop.f32.mrf.mxu0
      %3348 = vdwg.mxu0
      %3349 = vmatpush.bf16.msra.mxu0 0
      %3350 = vmatpush.bf16.msra.mxu0 0
      %3351 = vmatpush.bf16.msra.mxu0 0
      %3352 = vmatpush.bf16.msra.mxu0 0
      %3353 = vmatpush.bf16.msra.mxu0 0
      %3354 = vmatpush.bf16.msra.mxu0 0
      %3355 = vmatpush.bf16.msra.mxu0 0
      %3356 = vmatpush.bf16.msra.mxu0 %v3269
      %3357 = vmatmul.bf16.gmra.mxu0 %v3248
      %v3358 = vpop.f32.mrf.mxu0
      %v3359 = vadd.f32 0.0, %v3358
      %v3360 = vpop.f32.mrf.mxu0
      %3361 = vdwg.mxu0
      %v3362 = vadd.f32 %v3191, %v3281
      %v3363 = vadd.f32 %v3192, %v3294
      %v3364 = vadd.f32 %v3193, %v3307
      %v3365 = vadd.f32 %v3194, %v3320
      %v3366 = vadd.f32 %v3195, %v3333
      %v3367 = vadd.f32 %v3196, %v3346
      %v3368 = vadd.f32 %v3197, %v3359
      %v3369 = vld [vmem:[%s165] sm:$0xff]
      %v3370 = vld [vmem:[%s165 + $0x8] sm:$0xff]
      %s3371 = scalar_lea.vmem %s0, 76
      %v3372 = vld [vmem:[%s3371] sm:$0x7]
      %3374 = vst [vmem:[#allocation1] ss:$4 sm:$0xff] %v3369
      %s3376 = scalar_lea.vmem [#allocation1], 32
      %3377 = vst [vmem:[%s3376] ss:$4 sm:$0xff] %v3370
      %v3378 = vld.sshfl [vmem:[#allocation1] sm:$0xff pattern:$0x73625140]
      %v3380 = vld.sshfl [vmem:[#allocation1 + $0x8] sm:$0xff pattern:$0x73625140]
      %v3382 = vld.sshfl [vmem:[#allocation1 + $0x10] sm:$0xff pattern:$0x73625140]
      %v3384 = vld.sshfl [vmem:[#allocation1 + $0x18] sm:$0xff pattern:$0x73625140]
      %v3386 = vld.sshfl [vmem:[#allocation1 + $0x20] sm:$0xff pattern:$0x73625140]
      %v3388 = vld.sshfl [vmem:[#allocation1 + $0x28] sm:$0xff pattern:$0x73625140]
      %v3390 = vld.sshfl [vmem:[#allocation1 + $0x30] sm:$0xff pattern:$0x73625140]
      %v3392 = vld.sshfl [vmem:[#allocation1 + $0x38] sm:$0xff pattern:$0x73625140]
      %3394 = vrot.lane.b32.xlu0 %v3378, 28
      %v3395 = vpop.permute.xlu0 %3394
      %3396 = vrot.lane.b32.xlu0 %v3380, 28
      %v3397 = vpop.permute.xlu0 %3396
      %3398 = vrot.lane.b32.xlu0 %v3382, 28
      %v3399 = vpop.permute.xlu0 %3398
      %3400 = vrot.lane.b32.xlu0 %v3384, 28
      %v3401 = vpop.permute.xlu0 %3400
      %3402 = vrot.lane.b32.xlu0 %v3386, 28
      %v3403 = vpop.permute.xlu0 %3402
      %3404 = vrot.lane.b32.xlu0 %v3388, 28
      %v3405 = vpop.permute.xlu0 %3404
      %3406 = vrot.lane.b32.xlu0 %v3390, 28
      %v3407 = vpop.permute.xlu0 %3406
      %3408 = vrot.lane.b32.xlu0 %v3392, 28
      %v3409 = vpop.permute.xlu0 %3408
      %vm3410 = vcmask 228352
      %v3411 = vsel %vm3410, %v3395, %v3397
      %v3412 = vsel %vm3410, %v3397, %v3399
      %v3413 = vsel %vm3410, %v3399, %v3401
      %v3414 = vsel %vm3410, %v3401, %v3403
      %v3415 = vsel %vm3410, %v3403, %v3405
      %v3416 = vsel %vm3410, %v3405, %v3407
      %v3417 = vsel %vm3410, %v3407, %v3409
      %v3419 = vsel %vm223, %v3372, 0
      %v3422 = vand.u32 %v3411, %v230
      %v3425 = vand.u32 %v3412, %v230
      %v3428 = vand.u32 %v3413, %v230
      %v3431 = vand.u32 %v3414, %v230
      %v3434 = vand.u32 %v3415, %v230
      %v3437 = vand.u32 %v3416, %v230
      %v3440 = vand.u32 %v3417, %v230
      %3442 = vmatpush.bf16.msra.mxu0 0
      %3443 = vmatpush.bf16.msra.mxu0 0
      %3444 = vmatpush.bf16.msra.mxu0 0
      %3445 = vmatpush.bf16.msra.mxu0 0
      %3446 = vmatpush.bf16.msra.mxu0 0
      %3447 = vmatpush.bf16.msra.mxu0 0
      %3448 = vmatpush.bf16.msra.mxu0 0
      %3449 = vmatpush.bf16.msra.mxu0 %v3422
      %3450 = vmatmul.bf16.gmra.mxu0 %v3419
      %v3451 = vpop.f32.mrf.mxu0
      %v3452 = vadd.f32 0.0, %v3451
      %v3453 = vpop.f32.mrf.mxu0
      %3454 = vdwg.mxu0
      %3455 = vmatpush.bf16.msra.mxu0 0
      %3456 = vmatpush.bf16.msra.mxu0 0
      %3457 = vmatpush.bf16.msra.mxu0 0
      %3458 = vmatpush.bf16.msra.mxu0 0
      %3459 = vmatpush.bf16.msra.mxu0 0
      %3460 = vmatpush.bf16.msra.mxu0 0
      %3461 = vmatpush.bf16.msra.mxu0 0
      %3462 = vmatpush.bf16.msra.mxu0 %v3425
      %3463 = vmatmul.bf16.gmra.mxu0 %v3419
      %v3464 = vpop.f32.mrf.mxu0
      %v3465 = vadd.f32 0.0, %v3464
      %v3466 = vpop.f32.mrf.mxu0
      %3467 = vdwg.mxu0
      %3468 = vmatpush.bf16.msra.mxu0 0
      %3469 = vmatpush.bf16.msra.mxu0 0
      %3470 = vmatpush.bf16.msra.mxu0 0
      %3471 = vmatpush.bf16.msra.mxu0 0
      %3472 = vmatpush.bf16.msra.mxu0 0
      %3473 = vmatpush.bf16.msra.mxu0 0
      %3474 = vmatpush.bf16.msra.mxu0 0
      %3475 = vmatpush.bf16.msra.mxu0 %v3428
      %3476 = vmatmul.bf16.gmra.mxu0 %v3419
      %v3477 = vpop.f32.mrf.mxu0
      %v3478 = vadd.f32 0.0, %v3477
      %v3479 = vpop.f32.mrf.mxu0
      %3480 = vdwg.mxu0
      %3481 = vmatpush.bf16.msra.mxu0 0
      %3482 = vmatpush.bf16.msra.mxu0 0
      %3483 = vmatpush.bf16.msra.mxu0 0
      %3484 = vmatpush.bf16.msra.mxu0 0
      %3485 = vmatpush.bf16.msra.mxu0 0
      %3486 = vmatpush.bf16.msra.mxu0 0
      %3487 = vmatpush.bf16.msra.mxu0 0
      %3488 = vmatpush.bf16.msra.mxu0 %v3431
      %3489 = vmatmul.bf16.gmra.mxu0 %v3419
      %v3490 = vpop.f32.mrf.mxu0
      %v3491 = vadd.f32 0.0, %v3490
      %v3492 = vpop.f32.mrf.mxu0
      %3493 = vdwg.mxu0
      %3494 = vmatpush.bf16.msra.mxu0 0
      %3495 = vmatpush.bf16.msra.mxu0 0
      %3496 = vmatpush.bf16.msra.mxu0 0
      %3497 = vmatpush.bf16.msra.mxu0 0
      %3498 = vmatpush.bf16.msra.mxu0 0
      %3499 = vmatpush.bf16.msra.mxu0 0
      %3500 = vmatpush.bf16.msra.mxu0 0
      %3501 = vmatpush.bf16.msra.mxu0 %v3434
      %3502 = vmatmul.bf16.gmra.mxu0 %v3419
      %v3503 = vpop.f32.mrf.mxu0
      %v3504 = vadd.f32 0.0, %v3503
      %v3505 = vpop.f32.mrf.mxu0
      %3506 = vdwg.mxu0
      %3507 = vmatpush.bf16.msra.mxu0 0
      %3508 = vmatpush.bf16.msra.mxu0 0
      %3509 = vmatpush.bf16.msra.mxu0 0
      %3510 = vmatpush.bf16.msra.mxu0 0
      %3511 = vmatpush.bf16.msra.mxu0 0
      %3512 = vmatpush.bf16.msra.mxu0 0
      %3513 = vmatpush.bf16.msra.mxu0 0
      %3514 = vmatpush.bf16.msra.mxu0 %v3437
      %3515 = vmatmul.bf16.gmra.mxu0 %v3419
      %v3516 = vpop.f32.mrf.mxu0
      %v3517 = vadd.f32 0.0, %v3516
      %v3518 = vpop.f32.mrf.mxu0
      %3519 = vdwg.mxu0
      %3520 = vmatpush.bf16.msra.mxu0 0
      %3521 = vmatpush.bf16.msra.mxu0 0
      %3522 = vmatpush.bf16.msra.mxu0 0
      %3523 = vmatpush.bf16.msra.mxu0 0
      %3524 = vmatpush.bf16.msra.mxu0 0
      %3525 = vmatpush.bf16.msra.mxu0 0
      %3526 = vmatpush.bf16.msra.mxu0 0
      %3527 = vmatpush.bf16.msra.mxu0 %v3440
      %3528 = vmatmul.bf16.gmra.mxu0 %v3419
      %v3529 = vpop.f32.mrf.mxu0
      %v3530 = vadd.f32 0.0, %v3529
      %v3531 = vpop.f32.mrf.mxu0
      %3532 = vdwg.mxu0
      %v3533 = vadd.f32 %v3362, %v3452
      %v3534 = vadd.f32 %v3363, %v3465
      %v3535 = vadd.f32 %v3364, %v3478
      %v3536 = vadd.f32 %v3365, %v3491
      %v3537 = vadd.f32 %v3366, %v3504
      %v3538 = vadd.f32 %v3367, %v3517
      %v3539 = vadd.f32 %v3368, %v3530
      %v3540 = vld [vmem:[%s165 + $0x2] sm:$0xff]
      %v3541 = vld [vmem:[%s165 + $0xa] sm:$0x3f]
      %s3542 = scalar_lea.vmem %s0, 80
      %v3543 = vld [vmem:[%s3542] sm:$0x7]
      %3545 = vst [vmem:[#allocation1] ss:$4 sm:$0xff] %v3540
      %s3547 = scalar_lea.vmem [#allocation1], 32
      %3548 = vst [vmem:[%s3547] ss:$4 sm:$0xff] %v3541
      %v3549 = vld.sshfl [vmem:[#allocation1] sm:$0xff pattern:$0x73625140]
      %v3550 = vld.sshfl [vmem:[#allocation1 + $0x8] sm:$0xff pattern:$0x73625140]
      %v3551 = vld.sshfl [vmem:[#allocation1 + $0x10] sm:$0xff pattern:$0x73625140]
      %v3552 = vld.sshfl [vmem:[#allocation1 + $0x18] sm:$0xff pattern:$0x73625140]
      %v3553 = vld.sshfl [vmem:[#allocation1 + $0x20] sm:$0xff pattern:$0x73625140]
      %v3554 = vld.sshfl [vmem:[#allocation1 + $0x28] sm:$0xff pattern:$0x73625140]
      %v3555 = vld.sshfl [vmem:[#allocation1 + $0x30] sm:$0xff pattern:$0x73625140]
      %v3557 = vsel %vm223, %v3543, 0
      %v3559 = vand.u32 %v3549, %v230
      %v3561 = vand.u32 %v3550, %v230
      %v3563 = vand.u32 %v3551, %v230
      %v3565 = vand.u32 %v3552, %v230
      %v3567 = vand.u32 %v3553, %v230
      %v3569 = vand.u32 %v3554, %v230
      %v3571 = vand.u32 %v3555, %v230
      %3573 = vmatpush.bf16.msra.mxu0 0
      %3574 = vmatpush.bf16.msra.mxu0 0
      %3575 = vmatpush.bf16.msra.mxu0 0
      %3576 = vmatpush.bf16.msra.mxu0 0
      %3577 = vmatpush.bf16.msra.mxu0 0
      %3578 = vmatpush.bf16.msra.mxu0 0
      %3579 = vmatpush.bf16.msra.mxu0 0
      %3580 = vmatpush.bf16.msra.mxu0 %v3559
      %3581 = vmatmul.bf16.gmra.mxu0 %v3557
      %v3582 = vpop.f32.mrf.mxu0
      %v3583 = vadd.f32 0.0, %v3582
      %v3584 = vpop.f32.mrf.mxu0
      %3585 = vdwg.mxu0
      %3586 = vmatpush.bf16.msra.mxu0 0
      %3587 = vmatpush.bf16.msra.mxu0 0
      %3588 = vmatpush.bf16.msra.mxu0 0
      %3589 = vmatpush.bf16.msra.mxu0 0
      %3590 = vmatpush.bf16.msra.mxu0 0
      %3591 = vmatpush.bf16.msra.mxu0 0
      %3592 = vmatpush.bf16.msra.mxu0 0
      %3593 = vmatpush.bf16.msra.mxu0 %v3561
      %3594 = vmatmul.bf16.gmra.mxu0 %v3557
      %v3595 = vpop.f32.mrf.mxu0
      %v3596 = vadd.f32 0.0, %v3595
      %v3597 = vpop.f32.mrf.mxu0
      %3598 = vdwg.mxu0
      %3599 = vmatpush.bf16.msra.mxu0 0
      %3600 = vmatpush.bf16.msra.mxu0 0
      %3601 = vmatpush.bf16.msra.mxu0 0
      %3602 = vmatpush.bf16.msra.mxu0 0
      %3603 = vmatpush.bf16.msra.mxu0 0
      %3604 = vmatpush.bf16.msra.mxu0 0
      %3605 = vmatpush.bf16.msra.mxu0 0
      %3606 = vmatpush.bf16.msra.mxu0 %v3563
      %3607 = vmatmul.bf16.gmra.mxu0 %v3557
      %v3608 = vpop.f32.mrf.mxu0
      %v3609 = vadd.f32 0.0, %v3608
      %v3610 = vpop.f32.mrf.mxu0
      %3611 = vdwg.mxu0
      %3612 = vmatpush.bf16.msra.mxu0 0
      %3613 = vmatpush.bf16.msra.mxu0 0
      %3614 = vmatpush.bf16.msra.mxu0 0
      %3615 = vmatpush.bf16.msra.mxu0 0
      %3616 = vmatpush.bf16.msra.mxu0 0
      %3617 = vmatpush.bf16.msra.mxu0 0
      %3618 = vmatpush.bf16.msra.mxu0 0
      %3619 = vmatpush.bf16.msra.mxu0 %v3565
      %3620 = vmatmul.bf16.gmra.mxu0 %v3557
      %v3621 = vpop.f32.mrf.mxu0
      %v3622 = vadd.f32 0.0, %v3621
      %v3623 = vpop.f32.mrf.mxu0
      %3624 = vdwg.mxu0
      %3625 = vmatpush.bf16.msra.mxu0 0
      %3626 = vmatpush.bf16.msra.mxu0 0
      %3627 = vmatpush.bf16.msra.mxu0 0
      %3628 = vmatpush.bf16.msra.mxu0 0
      %3629 = vmatpush.bf16.msra.mxu0 0
      %3630 = vmatpush.bf16.msra.mxu0 0
      %3631 = vmatpush.bf16.msra.mxu0 0
      %3632 = vmatpush.bf16.msra.mxu0 %v3567
      %3633 = vmatmul.bf16.gmra.mxu0 %v3557
      %v3634 = vpop.f32.mrf.mxu0
      %v3635 = vadd.f32 0.0, %v3634
      %v3636 = vpop.f32.mrf.mxu0
      %3637 = vdwg.mxu0
      %3638 = vmatpush.bf16.msra.mxu0 0
      %3639 = vmatpush.bf16.msra.mxu0 0
      %3640 = vmatpush.bf16.msra.mxu0 0
      %3641 = vmatpush.bf16.msra.mxu0 0
      %3642 = vmatpush.bf16.msra.mxu0 0
      %3643 = vmatpush.bf16.msra.mxu0 0
      %3644 = vmatpush.bf16.msra.mxu0 0
      %3645 = vmatpush.bf16.msra.mxu0 %v3569
      %3646 = vmatmul.bf16.gmra.mxu0 %v3557
      %v3647 = vpop.f32.mrf.mxu0
      %v3648 = vadd.f32 0.0, %v3647
      %v3649 = vpop.f32.mrf.mxu0
      %3650 = vdwg.mxu0
      %3651 = vmatpush.bf16.msra.mxu0 0
      %3652 = vmatpush.bf16.msra.mxu0 0
      %3653 = vmatpush.bf16.msra.mxu0 0
      %3654 = vmatpush.bf16.msra.mxu0 0
      %3655 = vmatpush.bf16.msra.mxu0 0
      %3656 = vmatpush.bf16.msra.mxu0 0
      %3657 = vmatpush.bf16.msra.mxu0 0
      %3658 = vmatpush.bf16.msra.mxu0 %v3571
      %3659 = vmatmul.bf16.gmra.mxu0 %v3557
      %v3660 = vpop.f32.mrf.mxu0
      %v3661 = vadd.f32 0.0, %v3660
      %v3662 = vpop.f32.mrf.mxu0
      %3663 = vdwg.mxu0
      %v3664 = vadd.f32 %v3533, %v3583
      %v3665 = vadd.f32 %v3534, %v3596
      %v3666 = vadd.f32 %v3535, %v3609
      %v3667 = vadd.f32 %v3536, %v3622
      %v3668 = vadd.f32 %v3537, %v3635
      %v3669 = vadd.f32 %v3538, %v3648
      %v3670 = vadd.f32 %v3539, %v3661
      %v3671 = vld [vmem:[%s165 + $0x2] sm:$0xff]
      %v3672 = vld [vmem:[%s165 + $0xa] sm:$0xff]
      %s3673 = scalar_lea.vmem %s0, 84
      %v3674 = vld [vmem:[%s3673] sm:$0x7]
      %3676 = vst [vmem:[#allocation1] ss:$4 sm:$0xff] %v3671
      %s3678 = scalar_lea.vmem [#allocation1], 32
      %3679 = vst [vmem:[%s3678] ss:$4 sm:$0xff] %v3672
      %v3680 = vld.sshfl [vmem:[#allocation1] sm:$0xff pattern:$0x73625140]
      %v3682 = vld.sshfl [vmem:[#allocation1 + $0x8] sm:$0xff pattern:$0x73625140]
      %v3684 = vld.sshfl [vmem:[#allocation1 + $0x10] sm:$0xff pattern:$0x73625140]
      %v3686 = vld.sshfl [vmem:[#allocation1 + $0x18] sm:$0xff pattern:$0x73625140]
      %v3688 = vld.sshfl [vmem:[#allocation1 + $0x20] sm:$0xff pattern:$0x73625140]
      %v3690 = vld.sshfl [vmem:[#allocation1 + $0x28] sm:$0xff pattern:$0x73625140]
      %v3692 = vld.sshfl [vmem:[#allocation1 + $0x30] sm:$0xff pattern:$0x73625140]
      %v3694 = vld.sshfl [vmem:[#allocation1 + $0x38] sm:$0xff pattern:$0x73625140]
      %3696 = vrot.lane.b32.xlu0 %v3680, 127
      %v3697 = vpop.permute.xlu0 %3696
      %3698 = vrot.lane.b32.xlu0 %v3682, 127
      %v3699 = vpop.permute.xlu0 %3698
      %3700 = vrot.lane.b32.xlu0 %v3684, 127
      %v3701 = vpop.permute.xlu0 %3700
      %3702 = vrot.lane.b32.xlu0 %v3686, 127
      %v3703 = vpop.permute.xlu0 %3702
      %3704 = vrot.lane.b32.xlu0 %v3688, 127
      %v3705 = vpop.permute.xlu0 %3704
      %3706 = vrot.lane.b32.xlu0 %v3690, 127
      %v3707 = vpop.permute.xlu0 %3706
      %3708 = vrot.lane.b32.xlu0 %v3692, 127
      %v3709 = vpop.permute.xlu0 %3708
      %3710 = vrot.lane.b32.xlu0 %v3694, 127
      %v3711 = vpop.permute.xlu0 %3710
      %v3712 = vsel %vm215, %v3697, %v3699
      %v3713 = vsel %vm215, %v3699, %v3701
      %v3714 = vsel %vm215, %v3701, %v3703
      %v3715 = vsel %vm215, %v3703, %v3705
      %v3716 = vsel %vm215, %v3705, %v3707
      %v3717 = vsel %vm215, %v3707, %v3709
      %v3718 = vsel %vm215, %v3709, %v3711
      %v3720 = vsel %vm223, %v3674, 0
      %v3723 = vand.u32 %v3712, %v230
      %v3726 = vand.u32 %v3713, %v230
      %v3729 = vand.u32 %v3714, %v230
      %v3732 = vand.u32 %v3715, %v230
      %v3735 = vand.u32 %v3716, %v230
      %v3738 = vand.u32 %v3717, %v230
      %v3741 = vand.u32 %v3718, %v230
      %3743 = vmatpush.bf16.msra.mxu0 0
      %3744 = vmatpush.bf16.msra.mxu0 0
      %3745 = vmatpush.bf16.msra.mxu0 0
      %3746 = vmatpush.bf16.msra.mxu0 0
      %3747 = vmatpush.bf16.msra.mxu0 0
      %3748 = vmatpush.bf16.msra.mxu0 0
      %3749 = vmatpush.bf16.msra.mxu0 0
      %3750 = vmatpush.bf16.msra.mxu0 %v3723
      %3751 = vmatmul.bf16.gmra.mxu0 %v3720
      %v3752 = vpop.f32.mrf.mxu0
      %v3753 = vadd.f32 0.0, %v3752
      %v3754 = vpop.f32.mrf.mxu0
      %3755 = vdwg.mxu0
      %3756 = vmatpush.bf16.msra.mxu0 0
      %3757 = vmatpush.bf16.msra.mxu0 0
      %3758 = vmatpush.bf16.msra.mxu0 0
      %3759 = vmatpush.bf16.msra.mxu0 0
      %3760 = vmatpush.bf16.msra.mxu0 0
      %3761 = vmatpush.bf16.msra.mxu0 0
      %3762 = vmatpush.bf16.msra.mxu0 0
      %3763 = vmatpush.bf16.msra.mxu0 %v3726
      %3764 = vmatmul.bf16.gmra.mxu0 %v3720
      %v3765 = vpop.f32.mrf.mxu0
      %v3766 = vadd.f32 0.0, %v3765
      %v3767 = vpop.f32.mrf.mxu0
      %3768 = vdwg.mxu0
      %3769 = vmatpush.bf16.msra.mxu0 0
      %3770 = vmatpush.bf16.msra.mxu0 0
      %3771 = vmatpush.bf16.msra.mxu0 0
      %3772 = vmatpush.bf16.msra.mxu0 0
      %3773 = vmatpush.bf16.msra.mxu0 0
      %3774 = vmatpush.bf16.msra.mxu0 0
      %3775 = vmatpush.bf16.msra.mxu0 0
      %3776 = vmatpush.bf16.msra.mxu0 %v3729
      %3777 = vmatmul.bf16.gmra.mxu0 %v3720
      %v3778 = vpop.f32.mrf.mxu0
      %v3779 = vadd.f32 0.0, %v3778
      %v3780 = vpop.f32.mrf.mxu0
      %3781 = vdwg.mxu0
      %3782 = vmatpush.bf16.msra.mxu0 0
      %3783 = vmatpush.bf16.msra.mxu0 0
      %3784 = vmatpush.bf16.msra.mxu0 0
      %3785 = vmatpush.bf16.msra.mxu0 0
      %3786 = vmatpush.bf16.msra.mxu0 0
      %3787 = vmatpush.bf16.msra.mxu0 0
      %3788 = vmatpush.bf16.msra.mxu0 0
      %3789 = vmatpush.bf16.msra.mxu0 %v3732
      %3790 = vmatmul.bf16.gmra.mxu0 %v3720
      %v3791 = vpop.f32.mrf.mxu0
      %v3792 = vadd.f32 0.0, %v3791
      %v3793 = vpop.f32.mrf.mxu0
      %3794 = vdwg.mxu0
      %3795 = vmatpush.bf16.msra.mxu0 0
      %3796 = vmatpush.bf16.msra.mxu0 0
      %3797 = vmatpush.bf16.msra.mxu0 0
      %3798 = vmatpush.bf16.msra.mxu0 0
      %3799 = vmatpush.bf16.msra.mxu0 0
      %3800 = vmatpush.bf16.msra.mxu0 0
      %3801 = vmatpush.bf16.msra.mxu0 0
      %3802 = vmatpush.bf16.msra.mxu0 %v3735
      %3803 = vmatmul.bf16.gmra.mxu0 %v3720
      %v3804 = vpop.f32.mrf.mxu0
      %v3805 = vadd.f32 0.0, %v3804
      %v3806 = vpop.f32.mrf.mxu0
      %3807 = vdwg.mxu0
      %3808 = vmatpush.bf16.msra.mxu0 0
      %3809 = vmatpush.bf16.msra.mxu0 0
      %3810 = vmatpush.bf16.msra.mxu0 0
      %3811 = vmatpush.bf16.msra.mxu0 0
      %3812 = vmatpush.bf16.msra.mxu0 0
      %3813 = vmatpush.bf16.msra.mxu0 0
      %3814 = vmatpush.bf16.msra.mxu0 0
      %3815 = vmatpush.bf16.msra.mxu0 %v3738
      %3816 = vmatmul.bf16.gmra.mxu0 %v3720
      %v3817 = vpop.f32.mrf.mxu0
      %v3818 = vadd.f32 0.0, %v3817
      %v3819 = vpop.f32.mrf.mxu0
      %3820 = vdwg.mxu0
      %3821 = vmatpush.bf16.msra.mxu0 0
      %3822 = vmatpush.bf16.msra.mxu0 0
      %3823 = vmatpush.bf16.msra.mxu0 0
      %3824 = vmatpush.bf16.msra.mxu0 0
      %3825 = vmatpush.bf16.msra.mxu0 0
      %3826 = vmatpush.bf16.msra.mxu0 0
      %3827 = vmatpush.bf16.msra.mxu0 0
      %3828 = vmatpush.bf16.msra.mxu0 %v3741
      %3829 = vmatmul.bf16.gmra.mxu0 %v3720
      %v3830 = vpop.f32.mrf.mxu0
      %v3831 = vadd.f32 0.0, %v3830
      %v3832 = vpop.f32.mrf.mxu0
      %3833 = vdwg.mxu0
      %v3834 = vadd.f32 %v3664, %v3753
      %v3835 = vadd.f32 %v3665, %v3766
      %v3836 = vadd.f32 %v3666, %v3779
      %v3837 = vadd.f32 %v3667, %v3792
      %v3838 = vadd.f32 %v3668, %v3805
      %v3839 = vadd.f32 %v3669, %v3818
      %v3840 = vadd.f32 %v3670, %v3831
      %v3841 = vld [vmem:[%s165 + $0x2] sm:$0xff]
      %v3842 = vld [vmem:[%s165 + $0xa] sm:$0xff]
      %s3843 = scalar_lea.vmem %s0, 88
      %v3844 = vld [vmem:[%s3843] sm:$0x7]
      %3846 = vst [vmem:[#allocation1] ss:$4 sm:$0xff] %v3841
      %s3848 = scalar_lea.vmem [#allocation1], 32
      %3849 = vst [vmem:[%s3848] ss:$4 sm:$0xff] %v3842
      %v3850 = vld.sshfl [vmem:[#allocation1] sm:$0xff pattern:$0x73625140]
      %v3852 = vld.sshfl [vmem:[#allocation1 + $0x8] sm:$0xff pattern:$0x73625140]
      %v3854 = vld.sshfl [vmem:[#allocation1 + $0x10] sm:$0xff pattern:$0x73625140]
      %v3856 = vld.sshfl [vmem:[#allocation1 + $0x18] sm:$0xff pattern:$0x73625140]
      %v3858 = vld.sshfl [vmem:[#allocation1 + $0x20] sm:$0xff pattern:$0x73625140]
      %v3860 = vld.sshfl [vmem:[#allocation1 + $0x28] sm:$0xff pattern:$0x73625140]
      %v3862 = vld.sshfl [vmem:[#allocation1 + $0x30] sm:$0xff pattern:$0x73625140]
      %v3864 = vld.sshfl [vmem:[#allocation1 + $0x38] sm:$0xff pattern:$0x73625140]
      %3866 = vrot.lane.b32.xlu0 %v3850, 126
      %v3867 = vpop.permute.xlu0 %3866
      %3868 = vrot.lane.b32.xlu0 %v3852, 126
      %v3869 = vpop.permute.xlu0 %3868
      %3870 = vrot.lane.b32.xlu0 %v3854, 126
      %v3871 = vpop.permute.xlu0 %3870
      %3872 = vrot.lane.b32.xlu0 %v3856, 126
      %v3873 = vpop.permute.xlu0 %3872
      %3874 = vrot.lane.b32.xlu0 %v3858, 126
      %v3875 = vpop.permute.xlu0 %3874
      %3876 = vrot.lane.b32.xlu0 %v3860, 126
      %v3877 = vpop.permute.xlu0 %3876
      %3878 = vrot.lane.b32.xlu0 %v3862, 126
      %v3879 = vpop.permute.xlu0 %3878
      %3880 = vrot.lane.b32.xlu0 %v3864, 126
      %v3881 = vpop.permute.xlu0 %3880
      %v3882 = vsel %vm503, %v3867, %v3869
      %v3883 = vsel %vm503, %v3869, %v3871
      %v3884 = vsel %vm503, %v3871, %v3873
      %v3885 = vsel %vm503, %v3873, %v3875
      %v3886 = vsel %vm503, %v3875, %v3877
      %v3887 = vsel %vm503, %v3877, %v3879
      %v3888 = vsel %vm503, %v3879, %v3881
      %v3890 = vsel %vm223, %v3844, 0
      %v3893 = vand.u32 %v3882, %v230
      %v3896 = vand.u32 %v3883, %v230
      %v3899 = vand.u32 %v3884, %v230
      %v3902 = vand.u32 %v3885, %v230
      %v3905 = vand.u32 %v3886, %v230
      %v3908 = vand.u32 %v3887, %v230
      %v3911 = vand.u32 %v3888, %v230
      %3913 = vmatpush.bf16.msra.mxu0 0
      %3914 = vmatpush.bf16.msra.mxu0 0
      %3915 = vmatpush.bf16.msra.mxu0 0
      %3916 = vmatpush.bf16.msra.mxu0 0
      %3917 = vmatpush.bf16.msra.mxu0 0
      %3918 = vmatpush.bf16.msra.mxu0 0
      %3919 = vmatpush.bf16.msra.mxu0 0
      %3920 = vmatpush.bf16.msra.mxu0 %v3893
      %3921 = vmatmul.bf16.gmra.mxu0 %v3890
      %v3922 = vpop.f32.mrf.mxu0
      %v3923 = vadd.f32 0.0, %v3922
      %v3924 = vpop.f32.mrf.mxu0
      %3925 = vdwg.mxu0
      %3926 = vmatpush.bf16.msra.mxu0 0
      %3927 = vmatpush.bf16.msra.mxu0 0
      %3928 = vmatpush.bf16.msra.mxu0 0
      %3929 = vmatpush.bf16.msra.mxu0 0
      %3930 = vmatpush.bf16.msra.mxu0 0
      %3931 = vmatpush.bf16.msra.mxu0 0
      %3932 = vmatpush.bf16.msra.mxu0 0
      %3933 = vmatpush.bf16.msra.mxu0 %v3896
      %3934 = vmatmul.bf16.gmra.mxu0 %v3890
      %v3935 = vpop.f32.mrf.mxu0
      %v3936 = vadd.f32 0.0, %v3935
      %v3937 = vpop.f32.mrf.mxu0
      %3938 = vdwg.mxu0
      %3939 = vmatpush.bf16.msra.mxu0 0
      %3940 = vmatpush.bf16.msra.mxu0 0
      %3941 = vmatpush.bf16.msra.mxu0 0
      %3942 = vmatpush.bf16.msra.mxu0 0
      %3943 = vmatpush.bf16.msra.mxu0 0
      %3944 = vmatpush.bf16.msra.mxu0 0
      %3945 = vmatpush.bf16.msra.mxu0 0
      %3946 = vmatpush.bf16.msra.mxu0 %v3899
      %3947 = vmatmul.bf16.gmra.mxu0 %v3890
      %v3948 = vpop.f32.mrf.mxu0
      %v3949 = vadd.f32 0.0, %v3948
      %v3950 = vpop.f32.mrf.mxu0
      %3951 = vdwg.mxu0
      %3952 = vmatpush.bf16.msra.mxu0 0
      %3953 = vmatpush.bf16.msra.mxu0 0
      %3954 = vmatpush.bf16.msra.mxu0 0
      %3955 = vmatpush.bf16.msra.mxu0 0
      %3956 = vmatpush.bf16.msra.mxu0 0
      %3957 = vmatpush.bf16.msra.mxu0 0
      %3958 = vmatpush.bf16.msra.mxu0 0
      %3959 = vmatpush.bf16.msra.mxu0 %v3902
      %3960 = vmatmul.bf16.gmra.mxu0 %v3890
      %v3961 = vpop.f32.mrf.mxu0
      %v3962 = vadd.f32 0.0, %v3961
      %v3963 = vpop.f32.mrf.mxu0
      %3964 = vdwg.mxu0
      %3965 = vmatpush.bf16.msra.mxu0 0
      %3966 = vmatpush.bf16.msra.mxu0 0
      %3967 = vmatpush.bf16.msra.mxu0 0
      %3968 = vmatpush.bf16.msra.mxu0 0
      %3969 = vmatpush.bf16.msra.mxu0 0
      %3970 = vmatpush.bf16.msra.mxu0 0
      %3971 = vmatpush.bf16.msra.mxu0 0
      %3972 = vmatpush.bf16.msra.mxu0 %v3905
      %3973 = vmatmul.bf16.gmra.mxu0 %v3890
      %v3974 = vpop.f32.mrf.mxu0
      %v3975 = vadd.f32 0.0, %v3974
      %v3976 = vpop.f32.mrf.mxu0
      %3977 = vdwg.mxu0
      %3978 = vmatpush.bf16.msra.mxu0 0
      %3979 = vmatpush.bf16.msra.mxu0 0
      %3980 = vmatpush.bf16.msra.mxu0 0
      %3981 = vmatpush.bf16.msra.mxu0 0
      %3982 = vmatpush.bf16.msra.mxu0 0
      %3983 = vmatpush.bf16.msra.mxu0 0
      %3984 = vmatpush.bf16.msra.mxu0 0
      %3985 = vmatpush.bf16.msra.mxu0 %v3908
      %3986 = vmatmul.bf16.gmra.mxu0 %v3890
      %v3987 = vpop.f32.mrf.mxu0
      %v3988 = vadd.f32 0.0, %v3987
      %v3989 = vpop.f32.mrf.mxu0
      %3990 = vdwg.mxu0
      %3991 = vmatpush.bf16.msra.mxu0 0
      %3992 = vmatpush.bf16.msra.mxu0 0
      %3993 = vmatpush.bf16.msra.mxu0 0
      %3994 = vmatpush.bf16.msra.mxu0 0
      %3995 = vmatpush.bf16.msra.mxu0 0
      %3996 = vmatpush.bf16.msra.mxu0 0
      %3997 = vmatpush.bf16.msra.mxu0 0
      %3998 = vmatpush.bf16.msra.mxu0 %v3911
      %3999 = vmatmul.bf16.gmra.mxu0 %v3890
      %v4000 = vpop.f32.mrf.mxu0
      %v4001 = vadd.f32 0.0, %v4000
      %v4002 = vpop.f32.mrf.mxu0
      %4003 = vdwg.mxu0
      %v4004 = vadd.f32 %v3834, %v3923
      %v4005 = vadd.f32 %v3835, %v3936
      %v4006 = vadd.f32 %v3836, %v3949
      %v4007 = vadd.f32 %v3837, %v3962
      %v4008 = vadd.f32 %v3838, %v3975
      %v4009 = vadd.f32 %v3839, %v3988
      %v4010 = vadd.f32 %v3840, %v4001
      %v4011 = vld [vmem:[%s165 + $0x2] sm:$0xff]
      %v4012 = vld [vmem:[%s165 + $0xa] sm:$0xff]
      %s4013 = scalar_lea.vmem %s0, 92
      %v4014 = vld [vmem:[%s4013] sm:$0x7]
      %4016 = vst [vmem:[#allocation1] ss:$4 sm:$0xff] %v4011
      %s4018 = scalar_lea.vmem [#allocation1], 32
      %4019 = vst [vmem:[%s4018] ss:$4 sm:$0xff] %v4012
      %v4020 = vld.sshfl [vmem:[#allocation1] sm:$0xff pattern:$0x73625140]
      %v4022 = vld.sshfl [vmem:[#allocation1 + $0x8] sm:$0xff pattern:$0x73625140]
      %v4024 = vld.sshfl [vmem:[#allocation1 + $0x10] sm:$0xff pattern:$0x73625140]
      %v4026 = vld.sshfl [vmem:[#allocation1 + $0x18] sm:$0xff pattern:$0x73625140]
      %v4028 = vld.sshfl [vmem:[#allocation1 + $0x20] sm:$0xff pattern:$0x73625140]
      %v4030 = vld.sshfl [vmem:[#allocation1 + $0x28] sm:$0xff pattern:$0x73625140]
      %v4032 = vld.sshfl [vmem:[#allocation1 + $0x30] sm:$0xff pattern:$0x73625140]
      %v4034 = vld.sshfl [vmem:[#allocation1 + $0x38] sm:$0xff pattern:$0x73625140]
      %4036 = vrot.lane.b32.xlu0 %v4020, 125
      %v4037 = vpop.permute.xlu0 %4036
      %4038 = vrot.lane.b32.xlu0 %v4022, 125
      %v4039 = vpop.permute.xlu0 %4038
      %4040 = vrot.lane.b32.xlu0 %v4024, 125
      %v4041 = vpop.permute.xlu0 %4040
      %4042 = vrot.lane.b32.xlu0 %v4026, 125
      %v4043 = vpop.permute.xlu0 %4042
      %4044 = vrot.lane.b32.xlu0 %v4028, 125
      %v4045 = vpop.permute.xlu0 %4044
      %4046 = vrot.lane.b32.xlu0 %v4030, 125
      %v4047 = vpop.permute.xlu0 %4046
      %4048 = vrot.lane.b32.xlu0 %v4032, 125
      %v4049 = vpop.permute.xlu0 %4048
      %4050 = vrot.lane.b32.xlu0 %v4034, 125
      %v4051 = vpop.permute.xlu0 %4050
      %v4052 = vsel %vm674, %v4037, %v4039
      %v4053 = vsel %vm674, %v4039, %v4041
      %v4054 = vsel %vm674, %v4041, %v4043
      %v4055 = vsel %vm674, %v4043, %v4045
      %v4056 = vsel %vm674, %v4045, %v4047
      %v4057 = vsel %vm674, %v4047, %v4049
      %v4058 = vsel %vm674, %v4049, %v4051
      %v4060 = vsel %vm223, %v4014, 0
      %v4063 = vand.u32 %v4052, %v230
      %v4066 = vand.u32 %v4053, %v230
      %v4069 = vand.u32 %v4054, %v230
      %v4072 = vand.u32 %v4055, %v230
      %v4075 = vand.u32 %v4056, %v230
      %v4078 = vand.u32 %v4057, %v230
      %v4081 = vand.u32 %v4058, %v230
      %4083 = vmatpush.bf16.msra.mxu0 0
      %4084 = vmatpush.bf16.msra.mxu0 0
      %4085 = vmatpush.bf16.msra.mxu0 0
      %4086 = vmatpush.bf16.msra.mxu0 0
      %4087 = vmatpush.bf16.msra.mxu0 0
      %4088 = vmatpush.bf16.msra.mxu0 0
      %4089 = vmatpush.bf16.msra.mxu0 0
      %4090 = vmatpush.bf16.msra.mxu0 %v4063
      %4091 = vmatmul.bf16.gmra.mxu0 %v4060
      %v4092 = vpop.f32.mrf.mxu0
      %v4093 = vadd.f32 0.0, %v4092
      %v4094 = vpop.f32.mrf.mxu0
      %4095 = vdwg.mxu0
      %4096 = vmatpush.bf16.msra.mxu0 0
      %4097 = vmatpush.bf16.msra.mxu0 0
      %4098 = vmatpush.bf16.msra.mxu0 0
      %4099 = vmatpush.bf16.msra.mxu0 0
      %4100 = vmatpush.bf16.msra.mxu0 0
      %4101 = vmatpush.bf16.msra.mxu0 0
      %4102 = vmatpush.bf16.msra.mxu0 0
      %4103 = vmatpush.bf16.msra.mxu0 %v4066
      %4104 = vmatmul.bf16.gmra.mxu0 %v4060
      %v4105 = vpop.f32.mrf.mxu0
      %v4106 = vadd.f32 0.0, %v4105
      %v4107 = vpop.f32.mrf.mxu0
      %4108 = vdwg.mxu0
      %4109 = vmatpush.bf16.msra.mxu0 0
      %4110 = vmatpush.bf16.msra.mxu0 0
      %4111 = vmatpush.bf16.msra.mxu0 0
      %4112 = vmatpush.bf16.msra.mxu0 0
      %4113 = vmatpush.bf16.msra.mxu0 0
      %4114 = vmatpush.bf16.msra.mxu0 0
      %4115 = vmatpush.bf16.msra.mxu0 0
      %4116 = vmatpush.bf16.msra.mxu0 %v4069
      %4117 = vmatmul.bf16.gmra.mxu0 %v4060
      %v4118 = vpop.f32.mrf.mxu0
      %v4119 = vadd.f32 0.0, %v4118
      %v4120 = vpop.f32.mrf.mxu0
      %4121 = vdwg.mxu0
      %4122 = vmatpush.bf16.msra.mxu0 0
      %4123 = vmatpush.bf16.msra.mxu0 0
      %4124 = vmatpush.bf16.msra.mxu0 0
      %4125 = vmatpush.bf16.msra.mxu0 0
      %4126 = vmatpush.bf16.msra.mxu0 0
      %4127 = vmatpush.bf16.msra.mxu0 0
      %4128 = vmatpush.bf16.msra.mxu0 0
      %4129 = vmatpush.bf16.msra.mxu0 %v4072
      %4130 = vmatmul.bf16.gmra.mxu0 %v4060
      %v4131 = vpop.f32.mrf.mxu0
      %v4132 = vadd.f32 0.0, %v4131
      %v4133 = vpop.f32.mrf.mxu0
      %4134 = vdwg.mxu0
      %4135 = vmatpush.bf16.msra.mxu0 0
      %4136 = vmatpush.bf16.msra.mxu0 0
      %4137 = vmatpush.bf16.msra.mxu0 0
      %4138 = vmatpush.bf16.msra.mxu0 0
      %4139 = vmatpush.bf16.msra.mxu0 0
      %4140 = vmatpush.bf16.msra.mxu0 0
      %4141 = vmatpush.bf16.msra.mxu0 0
      %4142 = vmatpush.bf16.msra.mxu0 %v4075
      %4143 = vmatmul.bf16.gmra.mxu0 %v4060
      %v4144 = vpop.f32.mrf.mxu0
      %v4145 = vadd.f32 0.0, %v4144
      %v4146 = vpop.f32.mrf.mxu0
      %4147 = vdwg.mxu0
      %4148 = vmatpush.bf16.msra.mxu0 0
      %4149 = vmatpush.bf16.msra.mxu0 0
      %4150 = vmatpush.bf16.msra.mxu0 0
      %4151 = vmatpush.bf16.msra.mxu0 0
      %4152 = vmatpush.bf16.msra.mxu0 0
      %4153 = vmatpush.bf16.msra.mxu0 0
      %4154 = vmatpush.bf16.msra.mxu0 0
      %4155 = vmatpush.bf16.msra.mxu0 %v4078
      %4156 = vmatmul.bf16.gmra.mxu0 %v4060
      %v4157 = vpop.f32.mrf.mxu0
      %v4158 = vadd.f32 0.0, %v4157
      %v4159 = vpop.f32.mrf.mxu0
      %4160 = vdwg.mxu0
      %4161 = vmatpush.bf16.msra.mxu0 0
      %4162 = vmatpush.bf16.msra.mxu0 0
      %4163 = vmatpush.bf16.msra.mxu0 0
      %4164 = vmatpush.bf16.msra.mxu0 0
      %4165 = vmatpush.bf16.msra.mxu0 0
      %4166 = vmatpush.bf16.msra.mxu0 0
      %4167 = vmatpush.bf16.msra.mxu0 0
      %4168 = vmatpush.bf16.msra.mxu0 %v4081
      %4169 = vmatmul.bf16.gmra.mxu0 %v4060
      %v4170 = vpop.f32.mrf.mxu0
      %v4171 = vadd.f32 0.0, %v4170
      %v4172 = vpop.f32.mrf.mxu0
      %4173 = vdwg.mxu0
      %v4174 = vadd.f32 %v4004, %v4093
      %v4175 = vadd.f32 %v4005, %v4106
      %v4176 = vadd.f32 %v4006, %v4119
      %v4177 = vadd.f32 %v4007, %v4132
      %v4178 = vadd.f32 %v4008, %v4145
      %v4179 = vadd.f32 %v4009, %v4158
      %v4180 = vadd.f32 %v4010, %v4171
      %v4181 = vld [vmem:[%s165 + $0x2] sm:$0xff]
      %v4182 = vld [vmem:[%s165 + $0xa] sm:$0xff]
      %s4183 = scalar_lea.vmem %s0, 96
      %v4184 = vld [vmem:[%s4183] sm:$0x7]
      %4186 = vst [vmem:[#allocation1] ss:$4 sm:$0xff] %v4181
      %s4188 = scalar_lea.vmem [#allocation1], 32
      %4189 = vst [vmem:[%s4188] ss:$4 sm:$0xff] %v4182
      %v4190 = vld.sshfl [vmem:[#allocation1] sm:$0xff pattern:$0x73625140]
      %v4192 = vld.sshfl [vmem:[#allocation1 + $0x8] sm:$0xff pattern:$0x73625140]
      %v4194 = vld.sshfl [vmem:[#allocation1 + $0x10] sm:$0xff pattern:$0x73625140]
      %v4196 = vld.sshfl [vmem:[#allocation1 + $0x18] sm:$0xff pattern:$0x73625140]
      %v4198 = vld.sshfl [vmem:[#allocation1 + $0x20] sm:$0xff pattern:$0x73625140]
      %v4200 = vld.sshfl [vmem:[#allocation1 + $0x28] sm:$0xff pattern:$0x73625140]
      %v4202 = vld.sshfl [vmem:[#allocation1 + $0x30] sm:$0xff pattern:$0x73625140]
      %v4204 = vld.sshfl [vmem:[#allocation1 + $0x38] sm:$0xff pattern:$0x73625140]
      %4206 = vrot.lane.b32.xlu0 %v4190, 124
      %v4207 = vpop.permute.xlu0 %4206
      %4208 = vrot.lane.b32.xlu0 %v4192, 124
      %v4209 = vpop.permute.xlu0 %4208
      %4210 = vrot.lane.b32.xlu0 %v4194, 124
      %v4211 = vpop.permute.xlu0 %4210
      %4212 = vrot.lane.b32.xlu0 %v4196, 124
      %v4213 = vpop.permute.xlu0 %4212
      %4214 = vrot.lane.b32.xlu0 %v4198, 124
      %v4215 = vpop.permute.xlu0 %4214
      %4216 = vrot.lane.b32.xlu0 %v4200, 124
      %v4217 = vpop.permute.xlu0 %4216
      %4218 = vrot.lane.b32.xlu0 %v4202, 124
      %v4219 = vpop.permute.xlu0 %4218
      %4220 = vrot.lane.b32.xlu0 %v4204, 124
      %v4221 = vpop.permute.xlu0 %4220
      %v4222 = vsel %vm845, %v4207, %v4209
      %v4223 = vsel %vm845, %v4209, %v4211
      %v4224 = vsel %vm845, %v4211, %v4213
      %v4225 = vsel %vm845, %v4213, %v4215
      %v4226 = vsel %vm845, %v4215, %v4217
      %v4227 = vsel %vm845, %v4217, %v4219
      %v4228 = vsel %vm845, %v4219, %v4221
      %v4230 = vsel %vm223, %v4184, 0
      %v4233 = vand.u32 %v4222, %v230
      %v4236 = vand.u32 %v4223, %v230
      %v4239 = vand.u32 %v4224, %v230
      %v4242 = vand.u32 %v4225, %v230
      %v4245 = vand.u32 %v4226, %v230
      %v4248 = vand.u32 %v4227, %v230
      %v4251 = vand.u32 %v4228, %v230
      %4253 = vmatpush.bf16.msra.mxu0 0
      %4254 = vmatpush.bf16.msra.mxu0 0
      %4255 = vmatpush.bf16.msra.mxu0 0
      %4256 = vmatpush.bf16.msra.mxu0 0
      %4257 = vmatpush.bf16.msra.mxu0 0
      %4258 = vmatpush.bf16.msra.mxu0 0
      %4259 = vmatpush.bf16.msra.mxu0 0
      %4260 = vmatpush.bf16.msra.mxu0 %v4233
      %4261 = vmatmul.bf16.gmra.mxu0 %v4230
      %v4262 = vpop.f32.mrf.mxu0
      %v4263 = vadd.f32 0.0, %v4262
      %v4264 = vpop.f32.mrf.mxu0
      %4265 = vdwg.mxu0
      %4266 = vmatpush.bf16.msra.mxu0 0
      %4267 = vmatpush.bf16.msra.mxu0 0
      %4268 = vmatpush.bf16.msra.mxu0 0
      %4269 = vmatpush.bf16.msra.mxu0 0
      %4270 = vmatpush.bf16.msra.mxu0 0
      %4271 = vmatpush.bf16.msra.mxu0 0
      %4272 = vmatpush.bf16.msra.mxu0 0
      %4273 = vmatpush.bf16.msra.mxu0 %v4236
      %4274 = vmatmul.bf16.gmra.mxu0 %v4230
      %v4275 = vpop.f32.mrf.mxu0
      %v4276 = vadd.f32 0.0, %v4275
      %v4277 = vpop.f32.mrf.mxu0
      %4278 = vdwg.mxu0
      %4279 = vmatpush.bf16.msra.mxu0 0
      %4280 = vmatpush.bf16.msra.mxu0 0
      %4281 = vmatpush.bf16.msra.mxu0 0
      %4282 = vmatpush.bf16.msra.mxu0 0
      %4283 = vmatpush.bf16.msra.mxu0 0
      %4284 = vmatpush.bf16.msra.mxu0 0
      %4285 = vmatpush.bf16.msra.mxu0 0
      %4286 = vmatpush.bf16.msra.mxu0 %v4239
      %4287 = vmatmul.bf16.gmra.mxu0 %v4230
      %v4288 = vpop.f32.mrf.mxu0
      %v4289 = vadd.f32 0.0, %v4288
      %v4290 = vpop.f32.mrf.mxu0
      %4291 = vdwg.mxu0
      %4292 = vmatpush.bf16.msra.mxu0 0
      %4293 = vmatpush.bf16.msra.mxu0 0
      %4294 = vmatpush.bf16.msra.mxu0 0
      %4295 = vmatpush.bf16.msra.mxu0 0
      %4296 = vmatpush.bf16.msra.mxu0 0
      %4297 = vmatpush.bf16.msra.mxu0 0
      %4298 = vmatpush.bf16.msra.mxu0 0
      %4299 = vmatpush.bf16.msra.mxu0 %v4242
      %4300 = vmatmul.bf16.gmra.mxu0 %v4230
      %v4301 = vpop.f32.mrf.mxu0
      %v4302 = vadd.f32 0.0, %v4301
      %v4303 = vpop.f32.mrf.mxu0
      %4304 = vdwg.mxu0
      %4305 = vmatpush.bf16.msra.mxu0 0
      %4306 = vmatpush.bf16.msra.mxu0 0
      %4307 = vmatpush.bf16.msra.mxu0 0
      %4308 = vmatpush.bf16.msra.mxu0 0
      %4309 = vmatpush.bf16.msra.mxu0 0
      %4310 = vmatpush.bf16.msra.mxu0 0
      %4311 = vmatpush.bf16.msra.mxu0 0
      %4312 = vmatpush.bf16.msra.mxu0 %v4245
      %4313 = vmatmul.bf16.gmra.mxu0 %v4230
      %v4314 = vpop.f32.mrf.mxu0
      %v4315 = vadd.f32 0.0, %v4314
      %v4316 = vpop.f32.mrf.mxu0
      %4317 = vdwg.mxu0
      %4318 = vmatpush.bf16.msra.mxu0 0
      %4319 = vmatpush.bf16.msra.mxu0 0
      %4320 = vmatpush.bf16.msra.mxu0 0
      %4321 = vmatpush.bf16.msra.mxu0 0
      %4322 = vmatpush.bf16.msra.mxu0 0
      %4323 = vmatpush.bf16.msra.mxu0 0
      %4324 = vmatpush.bf16.msra.mxu0 0
      %4325 = vmatpush.bf16.msra.mxu0 %v4248
      %4326 = vmatmul.bf16.gmra.mxu0 %v4230
      %v4327 = vpop.f32.mrf.mxu0
      %v4328 = vadd.f32 0.0, %v4327
      %v4329 = vpop.f32.mrf.mxu0
      %4330 = vdwg.mxu0
      %4331 = vmatpush.bf16.msra.mxu0 0
      %4332 = vmatpush.bf16.msra.mxu0 0
      %4333 = vmatpush.bf16.msra.mxu0 0
      %4334 = vmatpush.bf16.msra.mxu0 0
      %4335 = vmatpush.bf16.msra.mxu0 0
      %4336 = vmatpush.bf16.msra.mxu0 0
      %4337 = vmatpush.bf16.msra.mxu0 0
      %4338 = vmatpush.bf16.msra.mxu0 %v4251
      %4339 = vmatmul.bf16.gmra.mxu0 %v4230
      %v4340 = vpop.f32.mrf.mxu0
      %v4341 = vadd.f32 0.0, %v4340
      %v4342 = vpop.f32.mrf.mxu0
      %4343 = vdwg.mxu0
      %v4344 = vadd.f32 %v4174, %v4263
      %v4345 = vadd.f32 %v4175, %v4276
      %v4346 = vadd.f32 %v4176, %v4289
      %v4347 = vadd.f32 %v4177, %v4302
      %v4348 = vadd.f32 %v4178, %v4315
      %v4349 = vadd.f32 %v4179, %v4328
      %v4350 = vadd.f32 %v4180, %v4341
      %v4351 = vld [vmem:[%s1] sm:$0x3f]
      %4353 = vset.pattern.permute.xlu0 0
      %4354 = vperm.xlu0 %4353, %v4351
      %v4355 = vpop.permute.xlu0 %4354
      %v4357 = vadd.f32 %v4344, %v4355
      %v4358 = vadd.f32 %v4345, %v4355
      %v4359 = vadd.f32 %v4346, %v4355
      %v4360 = vadd.f32 %v4347, %v4355
      %v4361 = vadd.f32 %v4348, %v4355
      %v4362 = vadd.f32 %v4349, %v4355
      %v4363 = vadd.f32 %v4350, %v4355
      %v4364 = vmax.f32 %v4357, 0.0
      %v4365 = vmax.f32 %v4358, 0.0
      %v4366 = vmax.f32 %v4359, 0.0
      %v4367 = vmax.f32 %v4360, 0.0
      %v4368 = vmax.f32 %v4361, 0.0
      %v4369 = vmax.f32 %v4362, 0.0
      %v4370 = vmax.f32 %v4363, 0.0
      %v4371 = vpack.c.bf16 %v4365, %v4364
      %v4372 = vpack.c.bf16 %v4367, %v4366
      %v4373 = vpack.c.bf16 %v4369, %v4368
      %v4374 = vpack.c.bf16 %v4370, %v4370
      %4375 = vst [vmem:[%s170] sm:$0x77] %v4371
      %4376 = vst [vmem:[%s170 + $0x8] sm:$0x77] %v4372
      %4377 = vst [vmem:[%s170 + $0x10] sm:$0x77] %v4373
      %4378 = vst [vmem:[%s170 + $0x18] sm:$0x7] %v4374
      %p4379 = scmp.lt.s32.totalorder %s14, 1
      %s4380 = scalar_select %p4379, %s14, 1
      %s4381 = smul.addr %s4380, 7
      %s4382 = smul.addr %s4381, 4
      %s4383 = scalar_lea.vmem %s3, %s4382
      // Predicated region
      $region33: #{net_forward.3} parent=31 // pred_check
        %p4384 = pneg %p100
      $region34: #{net_forward.3} parent=31 // pred_check_branch
        %4386 = sbr.rel (%p4384) target = $region36
      $region35: #{net_forward.3} parent=31 // pred_region
        _
      $region36: #{net_forward.3} parent=31 // pred_fallthru
        _
    $region32: #{net_forward.3} parent=5 // pred_fallthru
      _
    %p4387 = scmp.le.s32.totalorder 2, %s9
    // Predicated region
    $region37: #{net_forward.3} parent=5 // pred_check
      %p4388 = pneg %p4387
    $region38: #{net_forward.3} parent=5 // pred_check_branch
      %4390 = sbr.rel (%p4388) target = $region40
    $region39: #{net_forward.3} parent=5 // pred_region
      %s4391 = ssub.s32 %s9, 2
      // Predicated region
      $region41: #{net_forward.3} parent=39 // pred_check
        %p4392 = pneg %p106
      $region42: #{net_forward.3} parent=39 // pred_check_branch
        %4394 = sbr.rel (%p4392) target = $region44
      $region43: #{net_forward.3} parent=39 // pred_region
        %p4395 = scmp.lt.s32.totalorder %s15, 1
        %s4396 = scalar_select %p4395, %s15, 1
        %s4397 = smul.addr %s4396, 7
        %s4398 = smul.addr %s4397, 4
        %s4399 = scalar_lea.vmem %s3, %s4398
      $region44: #{net_forward.3} parent=39 // pred_fallthru
        _
    $region40: #{net_forward.3} parent=5 // pred_fallthru
      _
  $region6: #{net_forward.3} parent=0 // loop_footer
    %s13 = sadd.s32 1, %s9
  $region7: #{net_forward.3} parent=0 // loop_footer_branch
    %8 = sbr.rel target = $region3
  $region8: #{net_forward.3} parent=0 // loop_exit
    _

// kernel: net_forward.5
$region0: #{net_forward.5}
  #allocation0 [shape = 'u32[]', space=smem, size = 0x4, offset = 0x4, fixed_abs, tag = 'smem constant byte address 0x4 - core index']
  #allocation1 [shape = 'u32[72,128]{1,0:T(1,128)}', space=vmem, size = 0x9000, scoped, tag = 'internal scratch']
  %s0 = inlined_call_operand.vmem [shape: bf16[2,400], index: 0, kind: input, shape index: {}]
  %s1 = inlined_call_operand.vmem [shape: bf16[400,120], index: 1, kind: input, shape index: {}]
  %s2 = inlined_call_operand.vmem [shape: f32[1,120], index: 2, kind: input, shape index: {}]
  %s3 = inlined_call_operand.vmem [shape: bf16[120,84], index: 3, kind: input, shape index: {}]
  %s4 = inlined_call_operand.vmem [shape: f32[1,84], index: 4, kind: input, shape index: {}]
  %s5 = inlined_call_operand.vmem [shape: bf16[84,10], index: 5, kind: input, shape index: {}]
  %s6 = inlined_call_operand.vmem [shape: f32[1,10], index: 6, kind: input, shape index: {}]
  %s7 = inlined_call_operand.hbm [shape: f32[2,10], index: 7, kind: output, shape index: {}]
  %s8 = sld [smem:[#allocation0]]
  $region38: #{net_forward.5} parent=0
    _
  %s10 = ssub.s32 1, %s8
  %s11 = scalar_select 0, %s10, %s8
  $region1: #{net_forward.5} parent=0
    #allocation2 [shape = 'u8[1024]{0}', space=vmem, size = 0x400, scoped, tag = 'output window, operand 0, single buffered']
    #allocation3 [shape = 's32[1]{0}', space=sflag, size = 0x4, scoped, tag = 'scoped memory for net_forward.5']
    %12 = vsyncpa [#allocation3], 0
    // Predicated region
    $region2: #{net_forward.5} parent=1 // pred_check
      _
    $region3: #{net_forward.5} parent=1 // pred_check_branch
      %14 = sbr.rel (0) target = $region5
    $region4: #{net_forward.5} parent=1 // pred_region
      _
    $region5: #{net_forward.5} parent=1 // pred_fallthru
      _
    // Predicated region
    $region6: #{net_forward.5} parent=1 // pred_check
      _
    $region7: #{net_forward.5} parent=1 // pred_check_branch
      %16 = sbr.rel (0) target = $region9
    $region8: #{net_forward.5} parent=1 // pred_region
      _
    $region9: #{net_forward.5} parent=1 // pred_fallthru
      _
    // Predicated region
    $region10: #{net_forward.5} parent=1 // pred_check
      _
    $region11: #{net_forward.5} parent=1 // pred_check_branch
      %18 = sbr.rel (0) target = $region13
    $region12: #{net_forward.5} parent=1 // pred_region
      _
    $region13: #{net_forward.5} parent=1 // pred_fallthru
      _
    // Predicated region
    $region14: #{net_forward.5} parent=1 // pred_check
      _
    $region15: #{net_forward.5} parent=1 // pred_check_branch
      %20 = sbr.rel (0) target = $region17
    $region16: #{net_forward.5} parent=1 // pred_region
      _
    $region17: #{net_forward.5} parent=1 // pred_fallthru
      _
    // Predicated region
    $region18: #{net_forward.5} parent=1 // pred_check
      _
    $region19: #{net_forward.5} parent=1 // pred_check_branch
      %22 = sbr.rel (0) target = $region21
    $region20: #{net_forward.5} parent=1 // pred_region
      _
    $region21: #{net_forward.5} parent=1 // pred_fallthru
      _
    // Predicated region
    $region22: #{net_forward.5} parent=1 // pred_check
      _
    $region23: #{net_forward.5} parent=1 // pred_check_branch
      %24 = sbr.rel (0) target = $region25
    $region24: #{net_forward.5} parent=1 // pred_region
      _
    $region25: #{net_forward.5} parent=1 // pred_fallthru
      _
    // Predicated region
    $region26: #{net_forward.5} parent=1 // pred_check
      _
    $region27: #{net_forward.5} parent=1 // pred_check_branch
      %26 = sbr.rel (0) target = $region29
    $region28: #{net_forward.5} parent=1 // pred_region
      _
    $region29: #{net_forward.5} parent=1 // pred_fallthru
      _
    %v28 = vld [vmem:[%s0] sm:$0xf]
    %v29 = vld [vmem:[%s1] sm:$0xf]
    %v30 = vld [vmem:[%s1 + $0x4] sm:$0xf]
    %v31 = vld [vmem:[%s1 + $0x8] sm:$0xf]
    %v32 = vld [vmem:[%s1 + $0xc] sm:$0xf]
    %v33 = vld [vmem:[%s1 + $0x10] sm:$0xf]
    %v34 = vld [vmem:[%s1 + $0x14] sm:$0xf]
    %v35 = vld [vmem:[%s1 + $0x18] sm:$0xf]
    %v36 = vld [vmem:[%s1 + $0x1c] sm:$0xf]
    %v37 = vld [vmem:[%s1 + $0x20] sm:$0xf]
    %v38 = vld [vmem:[%s1 + $0x24] sm:$0xf]
    %v39 = vld [vmem:[%s1 + $0x28] sm:$0xf]
    %v40 = vld [vmem:[%s1 + $0x2c] sm:$0xf]
    %v41 = vld [vmem:[%s1 + $0x30] sm:$0xf]
    %v42 = vld [vmem:[%s1 + $0x34] sm:$0xf]
    %v43 = vld [vmem:[%s1 + $0x38] sm:$0xf]
    %v44 = vld [vmem:[%s1 + $0x3c] sm:$0xf]
    %v45 = vld [vmem:[%s1 + $0x40] sm:$0xf]
    %v46 = vld [vmem:[%s1 + $0x44] sm:$0xf]
    %v47 = vld [vmem:[%s1 + $0x48] sm:$0xf]
    %v48 = vld [vmem:[%s1 + $0x4c] sm:$0xf]
    %v49 = vld [vmem:[%s1 + $0x50] sm:$0xf]
    %v50 = vld [vmem:[%s1 + $0x54] sm:$0xf]
    %v51 = vld [vmem:[%s1 + $0x58] sm:$0xf]
    %v52 = vld [vmem:[%s1 + $0x5c] sm:$0xf]
    %v53 = vld [vmem:[%s1 + $0x60] sm:$0xf]
    %v54 = vld [vmem:[%s1 + $0x64] sm:$0xf]
    %v55 = vld [vmem:[%s1 + $0x68] sm:$0xf]
    %v56 = vld [vmem:[%s1 + $0x6c] sm:$0xf]
    %v57 = vld [vmem:[%s1 + $0x70] sm:$0xf]
    %v58 = vld [vmem:[%s1 + $0x74] sm:$0xf]
    %v59 = vld [vmem:[%s1 + $0x78] sm:$0xf]
    %v60 = vld [vmem:[%s1 + $0x7c] sm:$0xf]
    %v61 = vld [vmem:[%s1 + $0x80] sm:$0xf]
    %v62 = vld [vmem:[%s1 + $0x84] sm:$0xf]
    %v63 = vld [vmem:[%s1 + $0x88] sm:$0xf]
    %v64 = vld [vmem:[%s1 + $0x8c] sm:$0xf]
    %v65 = vld [vmem:[%s1 + $0x90] sm:$0xf]
    %v66 = vld [vmem:[%s1 + $0x94] sm:$0xf]
    %v67 = vld [vmem:[%s1 + $0x98] sm:$0xf]
    %v68 = vld [vmem:[%s1 + $0x9c] sm:$0xf]
    %v69 = vld [vmem:[%s1 + $0xa0] sm:$0xf]
    %v70 = vld [vmem:[%s1 + $0xa4] sm:$0xf]
    %v71 = vld [vmem:[%s1 + $0xa8] sm:$0xf]
    %v72 = vld [vmem:[%s1 + $0xac] sm:$0xf]
    %v73 = vld [vmem:[%s1 + $0xb0] sm:$0xf]
    %v74 = vld [vmem:[%s1 + $0xb4] sm:$0xf]
    %v75 = vld [vmem:[%s1 + $0xb8] sm:$0xf]
    %v76 = vld [vmem:[%s1 + $0xbc] sm:$0xf]
    %v77 = vld [vmem:[%s1 + $0xc0] sm:$0xf]
    %v78 = vld [vmem:[%s1 + $0xc4] sm:$0xf]
    %v79 = vld [vmem:[%s2] sm:$0x1]
    %v81 = vperm.slane %v79, 0
    %84 = vst [vmem:[#allocation1] ss:$9 sm:$0xff] %v28
    %v85 = vld [vmem:[#allocation1] sm:$0xff]
    %v86 = vld [vmem:[#allocation1 + $0x9] sm:$0xff]
    %v87 = vld [vmem:[#allocation1 + $0x12] sm:$0xff]
    %v88 = vld [vmem:[#allocation1 + $0x1b] sm:$0xff]
    %v142 = vunpack.c.l.b16 %v29
    %v143 = vunpack.c.l.b16 %v30
    %v144 = vunpack.c.l.b16 %v31
    %v145 = vunpack.c.l.b16 %v32
    %v146 = vunpack.c.l.b16 %v33
    %v147 = vunpack.c.l.b16 %v34
    %v148 = vunpack.c.l.b16 %v35
    %v149 = vunpack.c.l.b16 %v36
    %v150 = vunpack.c.l.b16 %v37
    %v151 = vunpack.c.l.b16 %v38
    %v152 = vunpack.c.l.b16 %v39
    %v153 = vunpack.c.l.b16 %v40
    %v154 = vunpack.c.l.b16 %v41
    %v155 = vunpack.c.l.b16 %v42
    %v156 = vunpack.c.l.b16 %v43
    %v157 = vunpack.c.l.b16 %v44
    %v158 = vunpack.c.l.b16 %v45
    %v159 = vunpack.c.l.b16 %v46
    %v160 = vunpack.c.l.b16 %v47
    %v161 = vunpack.c.l.b16 %v48
    %v162 = vunpack.c.l.b16 %v49
    %v163 = vunpack.c.l.b16 %v50
    %v164 = vunpack.c.l.b16 %v51
    %v165 = vunpack.c.l.b16 %v52
    %v166 = vunpack.c.l.b16 %v53
    %v167 = vunpack.c.l.b16 %v54
    %v168 = vunpack.c.l.b16 %v55
    %v169 = vunpack.c.l.b16 %v56
    %v170 = vunpack.c.l.b16 %v57
    %v171 = vunpack.c.l.b16 %v58
    %v172 = vunpack.c.l.b16 %v59
    %v173 = vunpack.c.l.b16 %v60
    %v174 = vunpack.c.l.b16 %v61
    %v175 = vunpack.c.l.b16 %v62
    %v176 = vunpack.c.l.b16 %v63
    %v177 = vunpack.c.l.b16 %v64
    %v178 = vunpack.c.l.b16 %v65
    %v179 = vunpack.c.l.b16 %v66
    %v180 = vunpack.c.l.b16 %v67
    %v181 = vunpack.c.l.b16 %v68
    %v182 = vunpack.c.l.b16 %v69
    %v183 = vunpack.c.l.b16 %v70
    %v184 = vunpack.c.l.b16 %v71
    %v185 = vunpack.c.l.b16 %v72
    %v186 = vunpack.c.l.b16 %v73
    %v187 = vunpack.c.l.b16 %v74
    %v188 = vunpack.c.l.b16 %v75
    %v189 = vunpack.c.l.b16 %v76
    %v190 = vunpack.c.l.b16 %v77
    %v191 = vunpack.c.l.b16 %v78
    %v192 = vpack.c.b16 %v143, %v142
    %v193 = vpack.c.b16 %v145, %v144
    %v194 = vpack.c.b16 %v147, %v146
    %v195 = vpack.c.b16 %v149, %v148
    %v196 = vpack.c.b16 %v151, %v150
    %v197 = vpack.c.b16 %v153, %v152
    %v198 = vpack.c.b16 %v155, %v154
    %v199 = vpack.c.b16 %v157, %v156
    %v200 = vpack.c.b16 %v159, %v158
    %v201 = vpack.c.b16 %v161, %v160
    %v202 = vpack.c.b16 %v163, %v162
    %v203 = vpack.c.b16 %v165, %v164
    %v204 = vpack.c.b16 %v167, %v166
    %v205 = vpack.c.b16 %v169, %v168
    %v206 = vpack.c.b16 %v171, %v170
    %v207 = vpack.c.b16 %v173, %v172
    %v208 = vpack.c.b16 %v175, %v174
    %v209 = vpack.c.b16 %v177, %v176
    %v210 = vpack.c.b16 %v179, %v178
    %v211 = vpack.c.b16 %v181, %v180
    %v212 = vpack.c.b16 %v183, %v182
    %v213 = vpack.c.b16 %v185, %v184
    %v214 = vpack.c.b16 %v187, %v186
    %v215 = vpack.c.b16 %v189, %v188
    %v216 = vpack.c.b16 %v191, %v190
    %vm242 = vcmask 130048
    %v243 = vsel %vm242, %v88, 0
    %245 = vmatpush.bf16.msra.mxu0 %v199
    %246 = vmatpush.bf16.msra.mxu0 %v198
    %247 = vmatpush.bf16.msra.mxu0 %v197
    %248 = vmatpush.bf16.msra.mxu0 %v196
    %249 = vmatpush.bf16.msra.mxu0 %v195
    %250 = vmatpush.bf16.msra.mxu0 %v194
    %251 = vmatpush.bf16.msra.mxu0 %v193
    %252 = vmatpush.bf16.msra.mxu0 %v192
    %253 = vmatmul.bf16.gmra.mxu0 %v85
    %v254 = vpop.f32.mrf.mxu0
    %v255 = vadd.f32 %v81, %v254
    %v256 = vpop.f32.mrf.mxu0
    %257 = vdwg.mxu0
    %258 = vmatpush.bf16.msra.mxu0 %v207
    %259 = vmatpush.bf16.msra.mxu0 %v206
    %260 = vmatpush.bf16.msra.mxu0 %v205
    %261 = vmatpush.bf16.msra.mxu0 %v204
    %262 = vmatpush.bf16.msra.mxu0 %v203
    %263 = vmatpush.bf16.msra.mxu0 %v202
    %264 = vmatpush.bf16.msra.mxu0 %v201
    %265 = vmatpush.bf16.msra.mxu0 %v200
    %266 = vmatmul.bf16.gmra.mxu0 %v86
    %v267 = vpop.f32.mrf.mxu0
    %v268 = vadd.f32 %v255, %v267
    %v269 = vpop.f32.mrf.mxu0
    %270 = vdwg.mxu0
    %271 = vmatpush.bf16.msra.mxu0 %v215
    %272 = vmatpush.bf16.msra.mxu0 %v214
    %273 = vmatpush.bf16.msra.mxu0 %v213
    %274 = vmatpush.bf16.msra.mxu0 %v212
    %275 = vmatpush.bf16.msra.mxu0 %v211
    %276 = vmatpush.bf16.msra.mxu0 %v210
    %277 = vmatpush.bf16.msra.mxu0 %v209
    %278 = vmatpush.bf16.msra.mxu0 %v208
    %279 = vmatmul.bf16.gmra.mxu0 %v87
    %v280 = vpop.f32.mrf.mxu0
    %v281 = vadd.f32 %v268, %v280
    %v282 = vpop.f32.mrf.mxu0
    %283 = vdwg.mxu0
    %284 = vmatpush.bf16.msra.mxu0 0
    %285 = vmatpush.bf16.msra.mxu0 0
    %286 = vmatpush.bf16.msra.mxu0 0
    %287 = vmatpush.bf16.msra.mxu0 0
    %288 = vmatpush.bf16.msra.mxu0 0
    %289 = vmatpush.bf16.msra.mxu0 0
    %290 = vmatpush.bf16.msra.mxu0 0
    %291 = vmatpush.bf16.msra.mxu0 %v216
    %292 = vmatmul.bf16.gmra.mxu0 %v243
    %v293 = vpop.f32.mrf.mxu0
    %v294 = vadd.f32 %v281, %v293
    %v295 = vpop.f32.mrf.mxu0
    %296 = vdwg.mxu0
    %v297 = vmax.f32 %v294, 0.0
    %v298 = vpack.c.bf16 %v297, %v297
    %v299 = vld [vmem:[%s3] sm:$0xf]
    %v300 = vld [vmem:[%s3 + $0x4] sm:$0xf]
    %v301 = vld [vmem:[%s3 + $0x8] sm:$0xf]
    %v302 = vld [vmem:[%s3 + $0xc] sm:$0xf]
    %v303 = vld [vmem:[%s3 + $0x10] sm:$0xf]
    %v304 = vld [vmem:[%s3 + $0x14] sm:$0xf]
    %v305 = vld [vmem:[%s3 + $0x18] sm:$0xf]
    %v306 = vld [vmem:[%s3 + $0x1c] sm:$0xf]
    %v307 = vld [vmem:[%s3 + $0x20] sm:$0xf]
    %v308 = vld [vmem:[%s3 + $0x24] sm:$0xf]
    %v309 = vld [vmem:[%s3 + $0x28] sm:$0xf]
    %v310 = vld [vmem:[%s3 + $0x2c] sm:$0xf]
    %v311 = vld [vmem:[%s3 + $0x30] sm:$0xf]
    %v312 = vld [vmem:[%s3 + $0x34] sm:$0xf]
    %v313 = vld [vmem:[%s3 + $0x38] sm:$0xf]
    %v314 = vld [vmem:[%s4] sm:$0x1]
    %v316 = vperm.slane %v314, 0
    %v333 = vunpack.c.l.b16 %v299
    %v334 = vunpack.c.l.b16 %v300
    %v335 = vunpack.c.l.b16 %v301
    %v336 = vunpack.c.l.b16 %v302
    %v337 = vunpack.c.l.b16 %v303
    %v338 = vunpack.c.l.b16 %v304
    %v339 = vunpack.c.l.b16 %v305
    %v340 = vunpack.c.l.b16 %v306
    %v341 = vunpack.c.l.b16 %v307
    %v342 = vunpack.c.l.b16 %v308
    %v343 = vunpack.c.l.b16 %v309
    %v344 = vunpack.c.l.b16 %v310
    %v345 = vunpack.c.l.b16 %v311
    %v346 = vunpack.c.l.b16 %v312
    %v347 = vunpack.c.l.b16 %v313
    %v348 = vpack.c.b16 %v334, %v333
    %v349 = vpack.c.b16 %v336, %v335
    %v350 = vpack.c.b16 %v338, %v337
    %v351 = vpack.c.b16 %v340, %v339
    %v352 = vpack.c.b16 %v342, %v341
    %v353 = vpack.c.b16 %v344, %v343
    %v354 = vpack.c.b16 %v346, %v345
    %v355 = vpack.c.b16 %v347, %v347
    %vm363 = vcmask 982016
    %v365 = vsel %vm363, %v298, 0
    %vm367 = vcmask 1043456
    %v369 = vsel %vm367, %v355, 0
    %371 = vmatpush.bf16.msra.mxu0 %v369
    %372 = vmatpush.bf16.msra.mxu0 %v354
    %373 = vmatpush.bf16.msra.mxu0 %v353
    %374 = vmatpush.bf16.msra.mxu0 %v352
    %375 = vmatpush.bf16.msra.mxu0 %v351
    %376 = vmatpush.bf16.msra.mxu0 %v350
    %377 = vmatpush.bf16.msra.mxu0 %v349
    %378 = vmatpush.bf16.msra.mxu0 %v348
    %379 = vmatmul.bf16.gmra.mxu0 %v365
    %v380 = vpop.f32.mrf.mxu0
    %v381 = vadd.f32 %v316, %v380
    %v382 = vpop.f32.mrf.mxu0
    %383 = vdwg.mxu0
    %v384 = vmax.f32 %v381, 0.0
    %v385 = vpack.c.bf16 %v384, %v384
    %v386 = vld [vmem:[%s5] sm:$0xf]
    %v387 = vld [vmem:[%s5 + $0x4] sm:$0xf]
    %v388 = vld [vmem:[%s5 + $0x8] sm:$0xf]
    %v389 = vld [vmem:[%s5 + $0xc] sm:$0xf]
    %v390 = vld [vmem:[%s5 + $0x10] sm:$0xf]
    %v391 = vld [vmem:[%s5 + $0x14] sm:$0xf]
    %v392 = vld [vmem:[%s5 + $0x18] sm:$0xf]
    %v393 = vld [vmem:[%s5 + $0x1c] sm:$0xf]
    %v394 = vld [vmem:[%s5 + $0x20] sm:$0xf]
    %v395 = vld [vmem:[%s5 + $0x24] sm:$0xf]
    %v396 = vld [vmem:[%s5 + $0x28] sm:$0x3]
    %v397 = vld [vmem:[%s6] sm:$0x1]
    %v399 = vperm.slane %v397, 0
    %v412 = vunpack.c.l.b16 %v386
    %v413 = vunpack.c.l.b16 %v387
    %v414 = vunpack.c.l.b16 %v388
    %v415 = vunpack.c.l.b16 %v389
    %v416 = vunpack.c.l.b16 %v390
    %v417 = vunpack.c.l.b16 %v391
    %v418 = vunpack.c.l.b16 %v392
    %v419 = vunpack.c.l.b16 %v393
    %v420 = vunpack.c.l.b16 %v394
    %v421 = vunpack.c.l.b16 %v395
    %v422 = vunpack.c.l.b16 %v396
    %v423 = vpack.c.b16 %v413, %v412
    %v424 = vpack.c.b16 %v415, %v414
    %v425 = vpack.c.b16 %v417, %v416
    %v426 = vpack.c.b16 %v419, %v418
    %v427 = vpack.c.b16 %v421, %v420
    %v428 = vpack.c.b16 %v422, %v422
    %vm434 = vcmask 687104
    %v436 = vsel %vm434, %v385, 0
    %vm438 = vcmask 1041408
    %v440 = vsel %vm438, %v428, 0
    %442 = vmatpush.bf16.msra.mxu0 0
    %443 = vmatpush.bf16.msra.mxu0 0
    %444 = vmatpush.bf16.msra.mxu0 %v440
    %445 = vmatpush.bf16.msra.mxu0 %v427
    %446 = vmatpush.bf16.msra.mxu0 %v426
    %447 = vmatpush.bf16.msra.mxu0 %v425
    %448 = vmatpush.bf16.msra.mxu0 %v424
    %449 = vmatpush.bf16.msra.mxu0 %v423
    %450 = vmatmul.bf16.gmra.mxu0 %v436
    %v451 = vpop.f32.mrf.mxu0
    %v452 = vadd.f32 %v399, %v451
    %v453 = vpop.f32.mrf.mxu0
    %454 = vdwg.mxu0
    %vm455 = vcmask 74752
    %456 = vst.msk [vmem:[#allocation2] sm:$0x3] %vm455, %v452
    // Predicated region
    $region30: #{net_forward.5} parent=1 // pred_check
      _
    $region31: #{net_forward.5} parent=1 // pred_check_branch
      %458 = sbr.rel (0) target = $region33
    $region32: #{net_forward.5} parent=1 // pred_region
      %460 = vsyncadd [#allocation3], 0
      %s462 = sshll.u32 [#allocation2], 4
      %s463 = int_to_ptr.vmem [resolvable:$true] %s462
      %s464 = sshll.u32 %s7, 4
      %s465 = int_to_ptr.hbm [resolvable:$true] %s464
      %467 = dma.vmem_to_hbm [thread:$0]  %s463, 32, %s465, [#allocation3]
    $region33: #{net_forward.5} parent=1 // pred_fallthru
      _
    // Predicated region
    $region34: #{net_forward.5} parent=1 // pred_check
      _
    $region35: #{net_forward.5} parent=1 // pred_check_branch
      %469 = sbr.rel (0) target = $region37
    $region36: #{net_forward.5} parent=1 // pred_region
      %471 = dma.done [#allocation3], 32
    $region37: #{net_forward.5} parent=1 // pred_fallthru
      _
    %472 = vsyncpa [#allocation3], 1

</llo_original>
